<compile_context>
chip_gen: v7x
topology: tpu7x:2x2x1
jax: 0.10.0
libtpu: 0.0.40
codegen_flags: <defaults>
</compile_context>

<pallas_src>
from functools import partial

import numpy as np
import jax
import jax.numpy as jnp
from jax.experimental import pallas as pl
from jax.experimental.pallas import tpu as pltpu


# ----------------------------------------------------------------------------
# Fused USConv kernel: one grid step == TB batch samples.
# ----------------------------------------------------------------------------
def _usconv_kernel(x_ref, wtab_ref, brow_ref, vmask_ref, gpre_ref, bpre_ref,
                   perm_ref, proj_ref, alpha_ref,
                   o_ref, xp_ref, zbuf_ref,
                   *, TB, Cin, Cout, H, Wlow, Whigh, eps):
    """x_ref    : (TB*Cin*H, W)        VMEM  input rows (b, ci, h) flattened
       wtab_ref : (Cout*Cin*9, Wa)     VMEM  lane-varying conv weight rows
       brow_ref : (Cout, Wa)           VMEM  lane-varying conv bias rows
       vmask_ref: (1, Wa)              VMEM  1.0 on valid columns, 0 on seams
       gpre_ref : (1, Wa)              VMEM  LayerNorm gamma, pre-permuted
       bpre_ref : (1, Wa)              VMEM  LayerNorm beta,  pre-permuted
       perm_ref : (Wa, Wout)           VMEM  0/1 interleave+concat matrix
       proj_ref : (B*Cout,)            SMEM  precomputed t_proj(temb), flat
       alpha_ref: (Cout,)              SMEM  PReLU slopes
       o_ref    : (TB*Cout*H, Wout)    VMEM  output rows (b, c, h) flattened
       xp_ref   : (Cin, H+2, Wp)       VMEM  packed zero-padded input scratch
       zbuf_ref : (TB*Cout*H, Wa)      VMEM  normalized pre-permutation planes"""
    Wp = (Wlow + 2) + 3 * (Whigh + 2)
    Wa = Wp - 2
    n_valid = Cout * (Wlow + 3 * Whigh)
    g = pl.program_id(0)
    starts = (0, Wlow + 2, Wlow + Whigh + 4, Wlow + 2 * Whigh + 6)

    # Zero the packed padded scratch once per grid step (amortized over TB
    # samples).  Interiors are rewritten per sample below; the 1-element zero
    # borders / block seams are never touched afterwards.
    xp_ref[...] = jnp.zeros_like(xp_ref)

    vmask = vmask_ref[...]                       # (1, Wa)
    gpre = gpre_ref[...]                         # (1, Wa)
    bpre = bpre_ref[...]                         # (1, Wa)

    for tb in range(TB):
        # ---- pack [low_pad | high_pad x3] along lanes for this sample -------
        for ci in range(Cin):
            r0 = (tb * Cin + ci) * H
            xc = x_ref[r0:r0 + H, :].astype(jnp.float32)          # (H, W)
            xl = xc[:, :Wlow]
            xh = xc[:, Wlow:]
            xp_ref[ci, 1:H + 1, 1:1 + Wlow] = xl
            for r in range(3):
                s = starts[r + 1]
                xp_ref[ci, 1:H + 1, s + 1:s + 1 + Whigh] = xh

        # ---- both 3x3 convs (+bias +temb) as packed full-width VPU FMAs -----
        # Accumulators start as bias row + temb*valid_mask (seams stay 0).
        accs = []
        for c in range(Cout):
            pco = proj_ref[(g * TB + tb) * Cout + c]
            accs.append(brow_ref[c:c + 1, :] + pco * vmask)        # (1, Wa)
        for ci in range(Cin):
            for kh in range(3):
                for kw in range(3):
                    # one window slice, reused across all Cout output channels
                    win = xp_ref[ci, kh:kh + H, kw:kw + Wa]        # (H, Wa)
                    for c in range(Cout):
                        ridx = (c * Cin + ci) * 9 + kh * 3 + kw
                        accs[c] = accs[c] + win * wtab_ref[ridx:ridx + 1, :]

        # ---- one-pass LayerNorm stats over (channel, freq); seams are 0 -----
        s1 = jnp.zeros((H, 1), jnp.float32)
        s2 = jnp.zeros((H, 1), jnp.float32)
        for c in range(Cout):
            z = accs[c]
            s1 = s1 + jnp.sum(z, axis=-1, keepdims=True)
            s2 = s2 + jnp.sum(z * z, axis=-1, keepdims=True)
        inv_n = 1.0 / float(n_valid)
        mu = s1 * inv_n
        var = jnp.maximum(s2 * inv_n - mu * mu, 0.0)               # clamp >= 0
        inv = jax.lax.rsqrt(var + eps)

        # ---- normalize + pre-permuted affine + PReLU, stage into zbuf -------
        # (stats / affine / PReLU commute with the freq permutation, so the
        #  expensive interleave happens exactly once, on the MXU, below)
        for c in range(Cout):
            yn = (accs[c] - mu) * inv * gpre + bpre
            a = alpha_ref[c]
            yn = jnp.where(yn > 0, yn, a * yn)
            z0 = (tb * Cout + c) * H
            zbuf_ref[z0:z0 + H, :] = yn

    # ---- single MXU matmul: low copy + r=3 sub-pixel interleave + seam drop --
    o_ref[...] = jnp.dot(zbuf_ref[...], perm_ref[...],
                         preferred_element_type=jnp.float32).astype(o_ref.dtype)


def _pick_tb(B, max_tb=8):
    """Largest divisor of B <= max_tb, preferring >= 2 grid steps (megacore)."""
    cands = [d for d in range(1, min(B, max_tb) + 1) if B % d == 0]
    multi = [d for d in cands if B // d >= 2]
    return max(multi) if multi else max(cands)


# ----------------------------------------------------------------------------
# Wrapper: NCHW in, NCHW out, single pallas_call.
# ----------------------------------------------------------------------------
def usconv_forward(x_nchw, temb, params, n_freqs, eps=1e-5, max_tb=8):
    B, Cin, H, W = x_nchw.shape
    assert W == n_freqs
    assert n_freqs % 2 == 0, "USConv / CustomLayerNorm assume even n_freqs"
    Wlow = n_freqs // 2
    Whigh = n_freqs - Wlow
    Wout = Wlow + 3 * Whigh                       # == 2 * n_freqs
    Cout = params["low_w"].shape[-1]
    Wp = (Wlow + 2) + 3 * (Whigh + 2)             # packed padded width
    Wa = Wp - 2                                   # packed accumulator width
    TB = _pick_tb(B, max_tb)
    G = B // TB

    # ---- static layout constants (trace-time numpy) -------------------------
    starts = [0, Wlow + 2, Wlow + Whigh + 4, Wlow + 2 * Whigh + 6]
    widths = [Wlow, Whigh, Whigh, Whigh]
    masks = np.zeros((4, Wa), np.float32)
    for j in range(4):
        masks[j, starts[j]:starts[j] + widths[j]] = 1.0
    vmask = masks.sum(0, keepdims=True)                           # (1, Wa)

    # 0/1 matrix: output col w <- low col w ; col Wlow+3w+r <- high_r col w.
    perm = np.zeros((Wa, Wout), np.float32)
    for w in range(Wlow):
        perm[w, w] = 1.0
    for r in range(3):
        for w in range(Whigh):
            perm[starts[r + 1] + w, Wlow + 3 * w + r] = 1.0

    # ---- tiny one-off parameter preprocessing (hoisted out of the kernel) ---
    # lane-varying weight rows: row ((c*Cin+ci)*9 + kh*3 + kw) carries the low
    # weight on the low block lanes and the 3 sub-pixel weights on the high
    # block lanes (zeros on the seams).
    lw = jnp.transpose(params["low_w"], (3, 2, 0, 1)).reshape(Cout * Cin * 9, 1)
    wtab = lw * masks[0]
    for r in range(3):
        hwr = jnp.transpose(params["high_w"][..., r * Cout:(r + 1) * Cout],
                            (3, 2, 0, 1)).reshape(Cout * Cin * 9, 1)
        wtab = wtab + hwr * masks[r + 1]
    wtab = wtab.astype(jnp.float32)

    brow = (params["low_b"][:, None] * masks[0]
            + params["high_b"][0 * Cout:1 * Cout][:, None] * masks[1]
            + params["high_b"][1 * Cout:2 * Cout][:, None] * masks[2]
            + params["high_b"][2 * Cout:3 * Cout][:, None] * masks[3]
            ).astype(jnp.float32)                                  # (Cout, Wa)

    gamma = params["gamma"].reshape(Wout).astype(jnp.float32)
    beta = params["beta"].reshape(Wout).astype(jnp.float32)
    perm_j = jnp.asarray(perm)
    gpre = (perm_j @ gamma).reshape(1, Wa)        # gamma pulled back through P
    bpre = (perm_j @ beta).reshape(1, Wa)

    # Hoisted (tiny) temb projection: (B, T) @ (T, C) + (C,)
    proj = (temb.astype(jnp.float32) @ params["t_w"]
            + params["t_b"]).reshape(-1).astype(jnp.float32)       # (B*Cout,)
    alpha = params["alpha"].astype(jnp.float32)                    # (Cout,)

    # Free reshapes (contiguous), no dtype cast of x in the wrapper.
    x2 = x_nchw.reshape(B * Cin * H, W)

    kernel = partial(_usconv_kernel, TB=TB, Cin=Cin, Cout=Cout, H=H,
                     Wlow=Wlow, Whigh=Whigh, eps=eps)
    smem = pl.BlockSpec(memory_space=pltpu.MemorySpace.SMEM)
    const2 = lambda g: (0, 0)

    out2 = pl.pallas_call(
        kernel,
        out_shape=jax.ShapeDtypeStruct((B * Cout * H, Wout), jnp.float32),
        grid_spec=pltpu.PrefetchScalarGridSpec(
            num_scalar_prefetch=0,
            grid=(G,),
            in_specs=[
                pl.BlockSpec((TB * Cin * H, W), lambda g: (g, 0)),   # x rows
                pl.BlockSpec((Cout * Cin * 9, Wa), const2),          # wtab
                pl.BlockSpec((Cout, Wa), const2),                    # bias rows
                pl.BlockSpec((1, Wa), const2),                       # valid mask
                pl.BlockSpec((1, Wa), const2),                       # gamma (pre)
                pl.BlockSpec((1, Wa), const2),                       # beta  (pre)
                pl.BlockSpec((Wa, Wout), const2),                    # perm matrix
                smem,                                                # proj (flat)
                smem,                                                # alpha
            ],
            out_specs=pl.BlockSpec((TB * Cout * H, Wout), lambda g: (g, 0)),
            scratch_shapes=[
                pltpu.VMEM((Cin, H + 2, Wp), jnp.float32),           # packed pad
                pltpu.VMEM((TB * Cout * H, Wa), jnp.float32),        # staging
            ],
        ),
        compiler_params=pltpu.CompilerParams(
            dimension_semantics=("parallel",),      # batch blocks independent
            vmem_limit_bytes=48 * 1024 * 1024,      # <= v7x physical 64 MiB
        ),
    )(x2, wtab, brow, jnp.asarray(vmask), gpre, bpre, perm_j, proj, alpha)

    return out2.reshape(B, Cout, H, Wout)


# ----------------------------------------------------------------------------
# Pure-JAX reference (same weight conventions) for correctness checking.
# ----------------------------------------------------------------------------
def reference(x_nchw, temb, params, n_freqs, eps=1e-5):
    low = n_freqs // 2
    x = jnp.transpose(x_nchw, (0, 2, 3, 1))
    x_low, x_high = x[:, :, :low, :], x[:, :, low:, :]
    dn = ("NHWC", "HWIO", "NHWC")
    y_low = jax.lax.conv_general_dilated(
        x_low, params["low_w"], (1, 1), ((1, 1), (1, 1)),
        dimension_numbers=dn) + params["low_b"]
    y_high = jax.lax.conv_general_dilated(
        x_high, params["high_w"], (1, 1), ((1, 1), (1, 1)),
        dimension_numbers=dn) + params["high_b"]
    B, H, Wh, rC = y_high.shape
    C = rC // 3
    y_high = y_high.reshape(B, H, Wh, 3, C).reshape(B, H, Wh * 3, C)
    y = jnp.concatenate([y_low, y_high], axis=2)
    proj = temb @ params["t_w"] + params["t_b"]
    y = y + proj[:, None, None, :]
    mu = jnp.mean(y, axis=(2, 3), keepdims=True)
    var = jnp.mean((y - mu) ** 2, axis=(2, 3), keepdims=True)
    yn = (y - mu) * jax.lax.rsqrt(var + eps)
    yn = yn * params["gamma"][None, None, :, None] + params["beta"][None, None, :, None]
    a = params["alpha"][None, None, None, :]
    yn = jnp.where(yn > 0, yn, a * yn)
    return jnp.transpose(yn, (0, 3, 1, 2))


if __name__ == "__main__":
    B, Cin, Cout, H, n_freqs, temb_dim = 4, 4, 4, 16, 16, 8

    key = jax.random.PRNGKey(0)
    ks = jax.random.split(key, 10)
    x = jax.random.normal(ks[0], (B, Cin, H, n_freqs), jnp.float32)     # NCHW
    temb = jax.random.normal(ks[1], (B, temb_dim), jnp.float32)

    params = {
        # low_conv: Conv2d(Cin, Cout, 3, pad=1), weights in HWIO
        "low_w": 0.1 * jax.random.normal(ks[2], (3, 3, Cin, Cout), jnp.float32),
        "low_b": 0.1 * jax.random.normal(ks[3], (Cout,), jnp.float32),
        # high_conv (SPConvTranspose2d, r=3): Conv2d(Cin, 3*Cout, 3), HWIO
        "high_w": 0.1 * jax.random.normal(ks[4], (3, 3, Cin, 3 * Cout), jnp.float32),
        "high_b": 0.1 * jax.random.normal(ks[5], (3 * Cout,), jnp.float32),
        # t_proj: Linear(temb_dim, Cout)
        "t_w": 0.1 * jax.random.normal(ks[6], (temb_dim, Cout), jnp.float32),
        "t_b": 0.1 * jax.random.normal(ks[7], (Cout,), jnp.float32),
        # CustomLayerNorm affine params of logical shape (1, 2*n_freqs)
        "gamma": 1.0 + 0.1 * jax.random.normal(ks[8], (2 * n_freqs,), jnp.float32),
        "beta": 0.1 * jax.random.normal(ks[9], (2 * n_freqs,), jnp.float32),
        # PReLU per-channel slope (PyTorch default init 0.25)
        "alpha": jnp.full((Cout,), 0.25, jnp.float32),
    }

    out = usconv_forward(x, temb, params, n_freqs)
    out = jax.block_until_ready(out)

    assert out.shape == (B, Cout, H, 2 * n_freqs), out.shape
    ref = reference(x, temb, params, n_freqs)
    np.testing.assert_allclose(np.asarray(out), np.asarray(ref),
                               rtol=1e-4, atol=2e-4)
    print("KERNEL_OK")
</pallas_src>

<mosaic_0001>
module attributes {stable_mosaic.version = 11 : i64} {
  func.func @_usconv_kernel(%arg0: i32, %arg1: memref<128x16xf32, #tpu.memory_space<vmem>>, %arg2: memref<144x38xf32, #tpu.memory_space<vmem>>, %arg3: memref<4x38xf32, #tpu.memory_space<vmem>>, %arg4: memref<1x38xf32, #tpu.memory_space<vmem>>, %arg5: memref<1x38xf32, #tpu.memory_space<vmem>>, %arg6: memref<1x38xf32, #tpu.memory_space<vmem>>, %arg7: memref<38x32xf32, #tpu.memory_space<vmem>>, %arg8: memref<16xf32, #tpu.memory_space<smem>>, %arg9: memref<4xf32, #tpu.memory_space<smem>>, %arg10: memref<128x32xf32, #tpu.memory_space<vmem>>, %arg11: memref<4x18x40xf32, #tpu.memory_space<vmem>>, %arg12: memref<128x38xf32, #tpu.memory_space<vmem>>) attributes {dimension_semantics = [#tpu.dimension_semantics<parallel>], iteration_bounds = array<i64: 2>, scalar_prefetch = 0 : i64, scratch_operands = 2 : i64, tpu.core_type = #tpu.core_type<tc>, window_params = [{transform_indices = @transform_0, window_bounds = array<i64: 128, 16>}, {pipeline_mode = #tpu.pipeline_mode<synchronous>, transform_indices = @transform_1, window_bounds = array<i64: 144, 38>}, {pipeline_mode = #tpu.pipeline_mode<synchronous>, transform_indices = @transform_2, window_bounds = array<i64: 4, 38>}, {pipeline_mode = #tpu.pipeline_mode<synchronous>, transform_indices = @transform_3, window_bounds = array<i64: 1, 38>}, {pipeline_mode = #tpu.pipeline_mode<synchronous>, transform_indices = @transform_4, window_bounds = array<i64: 1, 38>}, {pipeline_mode = #tpu.pipeline_mode<synchronous>, transform_indices = @transform_5, window_bounds = array<i64: 1, 38>}, {pipeline_mode = #tpu.pipeline_mode<synchronous>, transform_indices = @transform_6, window_bounds = array<i64: 38, 32>}, {transform_indices = @transform_7, window_bounds = array<i64: 16>}, {transform_indices = @transform_8, window_bounds = array<i64: 4>}, {transform_indices = @transform_9, window_bounds = array<i64: 128, 32>}]} {
    %cst = arith.constant 0.000000e+00 : f32
    %0 = vector.broadcast %cst : f32 to vector<4x18x40xf32>
    %c0 = arith.constant 0 : index
    %c0_0 = arith.constant 0 : index
    %c0_1 = arith.constant 0 : index
    %1 = vector.load %arg11[%c0, %c0_0, %c0_1] : memref<4x18x40xf32, #tpu.memory_space<vmem>>, vector<4x18x40xf32>
    tpu.vector_store %arg11[%c0, %c0_0, %c0_1], %0 {strides = array<i32>} : memref<4x18x40xf32, #tpu.memory_space<vmem>>, vector<4x18x40xf32>,
    %c0_2 = arith.constant 0 : index
    %c0_3 = arith.constant 0 : index
    %2 = vector.load %arg4[%c0_2, %c0_3] : memref<1x38xf32, #tpu.memory_space<vmem>>, vector<1x38xf32>
    %c0_4 = arith.constant 0 : index
    %c0_5 = arith.constant 0 : index
    %3 = vector.load %arg5[%c0_4, %c0_5] : memref<1x38xf32, #tpu.memory_space<vmem>>, vector<1x38xf32>
    %c0_6 = arith.constant 0 : index
    %c0_7 = arith.constant 0 : index
    %4 = vector.load %arg6[%c0_6, %c0_7] : memref<1x38xf32, #tpu.memory_space<vmem>>, vector<1x38xf32>
    %c0_8 = arith.constant 0 : index
    %c0_9 = arith.constant 0 : index
    %5 = vector.load %arg1[%c0_8, %c0_9] : memref<128x16xf32, #tpu.memory_space<vmem>>, vector<16x16xf32>
    %6 = vector.extract_strided_slice %5 {offsets = [0, 0], sizes = [16, 8], strides = [1, 1]} : vector<16x16xf32> to vector<16x8xf32>
    %7 = vector.extract_strided_slice %5 {offsets = [0, 8], sizes = [16, 8], strides = [1, 1]} : vector<16x16xf32> to vector<16x8xf32>
    %c0_10 = arith.constant 0 : index
    %c1 = arith.constant 1 : index
    %c1_11 = arith.constant 1 : index
    %8 = vector.load %arg11[%c0_10, %c1, %c1_11] : memref<4x18x40xf32, #tpu.memory_space<vmem>>, vector<1x16x8xf32>
    %9 = vector.shape_cast %8 : vector<1x16x8xf32> to vector<16x8xf32>
    %10 = vector.shape_cast %6 : vector<16x8xf32> to vector<1x16x8xf32>
    tpu.vector_store %arg11[%c0_10, %c1, %c1_11], %10 {strides = array<i32>} : memref<4x18x40xf32, #tpu.memory_space<vmem>>, vector<1x16x8xf32>,
    %c0_12 = arith.constant 0 : index
    %c1_13 = arith.constant 1 : index
    %c11 = arith.constant 11 : index
    %11 = vector.load %arg11[%c0_12, %c1_13, %c11] : memref<4x18x40xf32, #tpu.memory_space<vmem>>, vector<1x16x8xf32>
    %12 = vector.shape_cast %11 : vector<1x16x8xf32> to vector<16x8xf32>
    %13 = vector.shape_cast %7 : vector<16x8xf32> to vector<1x16x8xf32>
    tpu.vector_store %arg11[%c0_12, %c1_13, %c11], %13 {strides = array<i32>} : memref<4x18x40xf32, #tpu.memory_space<vmem>>, vector<1x16x8xf32>,
    %c0_14 = arith.constant 0 : index
    %c1_15 = arith.constant 1 : index
    %c21 = arith.constant 21 : index
    %14 = vector.load %arg11[%c0_14, %c1_15, %c21] : memref<4x18x40xf32, #tpu.memory_space<vmem>>, vector<1x16x8xf32>
    %15 = vector.shape_cast %14 : vector<1x16x8xf32> to vector<16x8xf32>
    %16 = vector.shape_cast %7 : vector<16x8xf32> to vector<1x16x8xf32>
    tpu.vector_store %arg11[%c0_14, %c1_15, %c21], %16 {strides = array<i32>} : memref<4x18x40xf32, #tpu.memory_space<vmem>>, vector<1x16x8xf32>,
    %c0_16 = arith.constant 0 : index
    %c1_17 = arith.constant 1 : index
    %c31 = arith.constant 31 : index
    %17 = vector.load %arg11[%c0_16, %c1_17, %c31] : memref<4x18x40xf32, #tpu.memory_space<vmem>>, vector<1x16x8xf32>
    %18 = vector.shape_cast %17 : vector<1x16x8xf32> to vector<16x8xf32>
    %19 = vector.shape_cast %7 : vector<16x8xf32> to vector<1x16x8xf32>
    tpu.vector_store %arg11[%c0_16, %c1_17, %c31], %19 {strides = array<i32>} : memref<4x18x40xf32, #tpu.memory_space<vmem>>, vector<1x16x8xf32>,
    %c16 = arith.constant 16 : index
    %c0_18 = arith.constant 0 : index
    %20 = vector.load %arg1[%c16, %c0_18] : memref<128x16xf32, #tpu.memory_space<vmem>>, vector<16x16xf32>
    %21 = vector.extract_strided_slice %20 {offsets = [0, 0], sizes = [16, 8], strides = [1, 1]} : vector<16x16xf32> to vector<16x8xf32>
    %22 = vector.extract_strided_slice %20 {offsets = [0, 8], sizes = [16, 8], strides = [1, 1]} : vector<16x16xf32> to vector<16x8xf32>
    %c1_19 = arith.constant 1 : index
    %c1_20 = arith.constant 1 : index
    %c1_21 = arith.constant 1 : index
    %23 = vector.load %arg11[%c1_19, %c1_20, %c1_21] : memref<4x18x40xf32, #tpu.memory_space<vmem>>, vector<1x16x8xf32>
    %24 = vector.shape_cast %23 : vector<1x16x8xf32> to vector<16x8xf32>
    %25 = vector.shape_cast %21 : vector<16x8xf32> to vector<1x16x8xf32>
    tpu.vector_store %arg11[%c1_19, %c1_20, %c1_21], %25 {strides = array<i32>} : memref<4x18x40xf32, #tpu.memory_space<vmem>>, vector<1x16x8xf32>,
    %c1_22 = arith.constant 1 : index
    %c1_23 = arith.constant 1 : index
    %c11_24 = arith.constant 11 : index
    %26 = vector.load %arg11[%c1_22, %c1_23, %c11_24] : memref<4x18x40xf32, #tpu.memory_space<vmem>>, vector<1x16x8xf32>
    %27 = vector.shape_cast %26 : vector<1x16x8xf32> to vector<16x8xf32>
    %28 = vector.shape_cast %22 : vector<16x8xf32> to vector<1x16x8xf32>
    tpu.vector_store %arg11[%c1_22, %c1_23, %c11_24], %28 {strides = array<i32>} : memref<4x18x40xf32, #tpu.memory_space<vmem>>, vector<1x16x8xf32>,
    %c1_25 = arith.constant 1 : index
    %c1_26 = arith.constant 1 : index
    %c21_27 = arith.constant 21 : index
    %29 = vector.load %arg11[%c1_25, %c1_26, %c21_27] : memref<4x18x40xf32, #tpu.memory_space<vmem>>, vector<1x16x8xf32>
    %30 = vector.shape_cast %29 : vector<1x16x8xf32> to vector<16x8xf32>
    %31 = vector.shape_cast %22 : vector<16x8xf32> to vector<1x16x8xf32>
    tpu.vector_store %arg11[%c1_25, %c1_26, %c21_27], %31 {strides = array<i32>} : memref<4x18x40xf32, #tpu.memory_space<vmem>>, vector<1x16x8xf32>,
    %c1_28 = arith.constant 1 : index
    %c1_29 = arith.constant 1 : index
    %c31_30 = arith.constant 31 : index
    %32 = vector.load %arg11[%c1_28, %c1_29, %c31_30] : memref<4x18x40xf32, #tpu.memory_space<vmem>>, vector<1x16x8xf32>
    %33 = vector.shape_cast %32 : vector<1x16x8xf32> to vector<16x8xf32>
    %34 = vector.shape_cast %22 : vector<16x8xf32> to vector<1x16x8xf32>
    tpu.vector_store %arg11[%c1_28, %c1_29, %c31_30], %34 {strides = array<i32>} : memref<4x18x40xf32, #tpu.memory_space<vmem>>, vector<1x16x8xf32>,
    %c32 = arith.constant 32 : index
    %c0_31 = arith.constant 0 : index
    %35 = vector.load %arg1[%c32, %c0_31] : memref<128x16xf32, #tpu.memory_space<vmem>>, vector<16x16xf32>
    %36 = vector.extract_strided_slice %35 {offsets = [0, 0], sizes = [16, 8], strides = [1, 1]} : vector<16x16xf32> to vector<16x8xf32>
    %37 = vector.extract_strided_slice %35 {offsets = [0, 8], sizes = [16, 8], strides = [1, 1]} : vector<16x16xf32> to vector<16x8xf32>
    %c2 = arith.constant 2 : index
    %c1_32 = arith.constant 1 : index
    %c1_33 = arith.constant 1 : index
    %38 = vector.load %arg11[%c2, %c1_32, %c1_33] : memref<4x18x40xf32, #tpu.memory_space<vmem>>, vector<1x16x8xf32>
    %39 = vector.shape_cast %38 : vector<1x16x8xf32> to vector<16x8xf32>
    %40 = vector.shape_cast %36 : vector<16x8xf32> to vector<1x16x8xf32>
    tpu.vector_store %arg11[%c2, %c1_32, %c1_33], %40 {strides = array<i32>} : memref<4x18x40xf32, #tpu.memory_space<vmem>>, vector<1x16x8xf32>,
    %c2_34 = arith.constant 2 : index
    %c1_35 = arith.constant 1 : index
    %c11_36 = arith.constant 11 : index
    %41 = vector.load %arg11[%c2_34, %c1_35, %c11_36] : memref<4x18x40xf32, #tpu.memory_space<vmem>>, vector<1x16x8xf32>
    %42 = vector.shape_cast %41 : vector<1x16x8xf32> to vector<16x8xf32>
    %43 = vector.shape_cast %37 : vector<16x8xf32> to vector<1x16x8xf32>
    tpu.vector_store %arg11[%c2_34, %c1_35, %c11_36], %43 {strides = array<i32>} : memref<4x18x40xf32, #tpu.memory_space<vmem>>, vector<1x16x8xf32>,
    %c2_37 = arith.constant 2 : index
    %c1_38 = arith.constant 1 : index
    %c21_39 = arith.constant 21 : index
    %44 = vector.load %arg11[%c2_37, %c1_38, %c21_39] : memref<4x18x40xf32, #tpu.memory_space<vmem>>, vector<1x16x8xf32>
    %45 = vector.shape_cast %44 : vector<1x16x8xf32> to vector<16x8xf32>
    %46 = vector.shape_cast %37 : vector<16x8xf32> to vector<1x16x8xf32>
    tpu.vector_store %arg11[%c2_37, %c1_38, %c21_39], %46 {strides = array<i32>} : memref<4x18x40xf32, #tpu.memory_space<vmem>>, vector<1x16x8xf32>,
    %c2_40 = arith.constant 2 : index
    %c1_41 = arith.constant 1 : index
    %c31_42 = arith.constant 31 : index
    %47 = vector.load %arg11[%c2_40, %c1_41, %c31_42] : memref<4x18x40xf32, #tpu.memory_space<vmem>>, vector<1x16x8xf32>
    %48 = vector.shape_cast %47 : vector<1x16x8xf32> to vector<16x8xf32>
    %49 = vector.shape_cast %37 : vector<16x8xf32> to vector<1x16x8xf32>
    tpu.vector_store %arg11[%c2_40, %c1_41, %c31_42], %49 {strides = array<i32>} : memref<4x18x40xf32, #tpu.memory_space<vmem>>, vector<1x16x8xf32>,
    %c48 = arith.constant 48 : index
    %c0_43 = arith.constant 0 : index
    %50 = vector.load %arg1[%c48, %c0_43] : memref<128x16xf32, #tpu.memory_space<vmem>>, vector<16x16xf32>
    %51 = vector.extract_strided_slice %50 {offsets = [0, 0], sizes = [16, 8], strides = [1, 1]} : vector<16x16xf32> to vector<16x8xf32>
    %52 = vector.extract_strided_slice %50 {offsets = [0, 8], sizes = [16, 8], strides = [1, 1]} : vector<16x16xf32> to vector<16x8xf32>
    %c3 = arith.constant 3 : index
    %c1_44 = arith.constant 1 : index
    %c1_45 = arith.constant 1 : index
    %53 = vector.load %arg11[%c3, %c1_44, %c1_45] : memref<4x18x40xf32, #tpu.memory_space<vmem>>, vector<1x16x8xf32>
    %54 = vector.shape_cast %53 : vector<1x16x8xf32> to vector<16x8xf32>
    %55 = vector.shape_cast %51 : vector<16x8xf32> to vector<1x16x8xf32>
    tpu.vector_store %arg11[%c3, %c1_44, %c1_45], %55 {strides = array<i32>} : memref<4x18x40xf32, #tpu.memory_space<vmem>>, vector<1x16x8xf32>,
    %c3_46 = arith.constant 3 : index
    %c1_47 = arith.constant 1 : index
    %c11_48 = arith.constant 11 : index
    %56 = vector.load %arg11[%c3_46, %c1_47, %c11_48] : memref<4x18x40xf32, #tpu.memory_space<vmem>>, vector<1x16x8xf32>
    %57 = vector.shape_cast %56 : vector<1x16x8xf32> to vector<16x8xf32>
    %58 = vector.shape_cast %52 : vector<16x8xf32> to vector<1x16x8xf32>
    tpu.vector_store %arg11[%c3_46, %c1_47, %c11_48], %58 {strides = array<i32>} : memref<4x18x40xf32, #tpu.memory_space<vmem>>, vector<1x16x8xf32>,
    %c3_49 = arith.constant 3 : index
    %c1_50 = arith.constant 1 : index
    %c21_51 = arith.constant 21 : index
    %59 = vector.load %arg11[%c3_49, %c1_50, %c21_51] : memref<4x18x40xf32, #tpu.memory_space<vmem>>, vector<1x16x8xf32>
    %60 = vector.shape_cast %59 : vector<1x16x8xf32> to vector<16x8xf32>
    %61 = vector.shape_cast %52 : vector<16x8xf32> to vector<1x16x8xf32>
    tpu.vector_store %arg11[%c3_49, %c1_50, %c21_51], %61 {strides = array<i32>} : memref<4x18x40xf32, #tpu.memory_space<vmem>>, vector<1x16x8xf32>,
    %c3_52 = arith.constant 3 : index
    %c1_53 = arith.constant 1 : index
    %c31_54 = arith.constant 31 : index
    %62 = vector.load %arg11[%c3_52, %c1_53, %c31_54] : memref<4x18x40xf32, #tpu.memory_space<vmem>>, vector<1x16x8xf32>
    %63 = vector.shape_cast %62 : vector<1x16x8xf32> to vector<16x8xf32>
    %64 = vector.shape_cast %52 : vector<16x8xf32> to vector<1x16x8xf32>
    tpu.vector_store %arg11[%c3_52, %c1_53, %c31_54], %64 {strides = array<i32>} : memref<4x18x40xf32, #tpu.memory_space<vmem>>, vector<1x16x8xf32>,
    %c2_i32 = arith.constant 2 : i32
    %65 = arith.muli %arg0, %c2_i32 : i32
    %c0_i32 = arith.constant 0 : i32
    %66 = arith.addi %65, %c0_i32 : i32
    %c4_i32 = arith.constant 4 : i32
    %67 = arith.muli %66, %c4_i32 : i32
    %c0_i32_55 = arith.constant 0 : i32
    %68 = arith.addi %67, %c0_i32_55 : i32
    %69 = arith.index_cast %68 : i32 to index
    %70 = memref.load %arg8[%69] : memref<16xf32, #tpu.memory_space<smem>>
    %c0_56 = arith.constant 0 : index
    %c0_57 = arith.constant 0 : index
    %71 = vector.load %arg3[%c0_56, %c0_57] : memref<4x38xf32, #tpu.memory_space<vmem>>, vector<1x38xf32>
    %72 = vector.broadcast %70 : f32 to vector<1x38xf32>
    %73 = arith.mulf %72, %2 : vector<1x38xf32>
    %74 = arith.addf %71, %73 : vector<1x38xf32>
    %c2_i32_58 = arith.constant 2 : i32
    %75 = arith.muli %arg0, %c2_i32_58 : i32
    %c0_i32_59 = arith.constant 0 : i32
    %76 = arith.addi %75, %c0_i32_59 : i32
    %c4_i32_60 = arith.constant 4 : i32
    %77 = arith.muli %76, %c4_i32_60 : i32
    %c1_i32 = arith.constant 1 : i32
    %78 = arith.addi %77, %c1_i32 : i32
    %79 = arith.index_cast %78 : i32 to index
    %80 = memref.load %arg8[%79] : memref<16xf32, #tpu.memory_space<smem>>
    %c1_61 = arith.constant 1 : index
    %c0_62 = arith.constant 0 : index
    %81 = vector.load %arg3[%c1_61, %c0_62] : memref<4x38xf32, #tpu.memory_space<vmem>>, vector<1x38xf32>
    %82 = vector.broadcast %80 : f32 to vector<1x38xf32>
    %83 = arith.mulf %82, %2 : vector<1x38xf32>
    %84 = arith.addf %81, %83 : vector<1x38xf32>
    %c2_i32_63 = arith.constant 2 : i32
    %85 = arith.muli %arg0, %c2_i32_63 : i32
    %c0_i32_64 = arith.constant 0 : i32
    %86 = arith.addi %85, %c0_i32_64 : i32
    %c4_i32_65 = arith.constant 4 : i32
    %87 = arith.muli %86, %c4_i32_65 : i32
    %c2_i32_66 = arith.constant 2 : i32
    %88 = arith.addi %87, %c2_i32_66 : i32
    %89 = arith.index_cast %88 : i32 to index
    %90 = memref.load %arg8[%89] : memref<16xf32, #tpu.memory_space<smem>>
    %c2_67 = arith.constant 2 : index
    %c0_68 = arith.constant 0 : index
    %91 = vector.load %arg3[%c2_67, %c0_68] : memref<4x38xf32, #tpu.memory_space<vmem>>, vector<1x38xf32>
    %92 = vector.broadcast %90 : f32 to vector<1x38xf32>
    %93 = arith.mulf %92, %2 : vector<1x38xf32>
    %94 = arith.addf %91, %93 : vector<1x38xf32>
    %c2_i32_69 = arith.constant 2 : i32
    %95 = arith.muli %arg0, %c2_i32_69 : i32
    %c0_i32_70 = arith.constant 0 : i32
    %96 = arith.addi %95, %c0_i32_70 : i32
    %c4_i32_71 = arith.constant 4 : i32
    %97 = arith.muli %96, %c4_i32_71 : i32
    %c3_i32 = arith.constant 3 : i32
    %98 = arith.addi %97, %c3_i32 : i32
    %99 = arith.index_cast %98 : i32 to index
    %100 = memref.load %arg8[%99] : memref<16xf32, #tpu.memory_space<smem>>
    %c3_72 = arith.constant 3 : index
    %c0_73 = arith.constant 0 : index
    %101 = vector.load %arg3[%c3_72, %c0_73] : memref<4x38xf32, #tpu.memory_space<vmem>>, vector<1x38xf32>
    %102 = vector.broadcast %100 : f32 to vector<1x38xf32>
    %103 = arith.mulf %102, %2 : vector<1x38xf32>
    %104 = arith.addf %101, %103 : vector<1x38xf32>
    %c0_74 = arith.constant 0 : index
    %c0_75 = arith.constant 0 : index
    %c0_76 = arith.constant 0 : index
    %105 = vector.load %arg11[%c0_74, %c0_75, %c0_76] : memref<4x18x40xf32, #tpu.memory_space<vmem>>, vector<1x16x38xf32>
    %106 = vector.shape_cast %105 : vector<1x16x38xf32> to vector<16x38xf32>
    %c0_77 = arith.constant 0 : index
    %c0_78 = arith.constant 0 : index
    %107 = vector.load %arg2[%c0_77, %c0_78] : memref<144x38xf32, #tpu.memory_space<vmem>>, vector<1x38xf32>
    %108 = vector.broadcast %107 : vector<1x38xf32> to vector<16x38xf32>
    %109 = arith.mulf %106, %108 : vector<16x38xf32>
    %110 = vector.broadcast %74 : vector<1x38xf32> to vector<16x38xf32>
    %111 = arith.addf %110, %109 : vector<16x38xf32>
    %c36 = arith.constant 36 : index
    %c0_79 = arith.constant 0 : index
    %112 = vector.load %arg2[%c36, %c0_79] : memref<144x38xf32, #tpu.memory_space<vmem>>, vector<1x38xf32>
    %113 = vector.broadcast %112 : vector<1x38xf32> to vector<16x38xf32>
    %114 = arith.mulf %106, %113 : vector<16x38xf32>
    %115 = vector.broadcast %84 : vector<1x38xf32> to vector<16x38xf32>
    %116 = arith.addf %115, %114 : vector<16x38xf32>
    %c72 = arith.constant 72 : index
    %c0_80 = arith.constant 0 : index
    %117 = vector.load %arg2[%c72, %c0_80] : memref<144x38xf32, #tpu.memory_space<vmem>>, vector<1x38xf32>
    %118 = vector.broadcast %117 : vector<1x38xf32> to vector<16x38xf32>
    %119 = arith.mulf %106, %118 : vector<16x38xf32>
    %120 = vector.broadcast %94 : vector<1x38xf32> to vector<16x38xf32>
    %121 = arith.addf %120, %119 : vector<16x38xf32>
    %c108 = arith.constant 108 : index
    %c0_81 = arith.constant 0 : index
    %122 = vector.load %arg2[%c108, %c0_81] : memref<144x38xf32, #tpu.memory_space<vmem>>, vector<1x38xf32>
    %123 = vector.broadcast %122 : vector<1x38xf32> to vector<16x38xf32>
    %124 = arith.mulf %106, %123 : vector<16x38xf32>
    %125 = vector.broadcast %104 : vector<1x38xf32> to vector<16x38xf32>
    %126 = arith.addf %125, %124 : vector<16x38xf32>
    %c0_82 = arith.constant 0 : index
    %c0_83 = arith.constant 0 : index
    %c1_84 = arith.constant 1 : index
    %127 = vector.load %arg11[%c0_82, %c0_83, %c1_84] : memref<4x18x40xf32, #tpu.memory_space<vmem>>, vector<1x16x38xf32>
    %128 = vector.shape_cast %127 : vector<1x16x38xf32> to vector<16x38xf32>
    %c1_85 = arith.constant 1 : index
    %c0_86 = arith.constant 0 : index
    %129 = vector.load %arg2[%c1_85, %c0_86] : memref<144x38xf32, #tpu.memory_space<vmem>>, vector<1x38xf32>
    %130 = vector.broadcast %129 : vector<1x38xf32> to vector<16x38xf32>
    %131 = arith.mulf %128, %130 : vector<16x38xf32>
    %132 = arith.addf %111, %131 : vector<16x38xf32>
    %c37 = arith.constant 37 : index
    %c0_87 = arith.constant 0 : index
    %133 = vector.load %arg2[%c37, %c0_87] : memref<144x38xf32, #tpu.memory_space<vmem>>, vector<1x38xf32>
    %134 = vector.broadcast %133 : vector<1x38xf32> to vector<16x38xf32>
    %135 = arith.mulf %128, %134 : vector<16x38xf32>
    %136 = arith.addf %116, %135 : vector<16x38xf32>
    %c73 = arith.constant 73 : index
    %c0_88 = arith.constant 0 : index
    %137 = vector.load %arg2[%c73, %c0_88] : memref<144x38xf32, #tpu.memory_space<vmem>>, vector<1x38xf32>
    %138 = vector.broadcast %137 : vector<1x38xf32> to vector<16x38xf32>
    %139 = arith.mulf %128, %138 : vector<16x38xf32>
    %140 = arith.addf %121, %139 : vector<16x38xf32>
    %c109 = arith.constant 109 : index
    %c0_89 = arith.constant 0 : index
    %141 = vector.load %arg2[%c109, %c0_89] : memref<144x38xf32, #tpu.memory_space<vmem>>, vector<1x38xf32>
    %142 = vector.broadcast %141 : vector<1x38xf32> to vector<16x38xf32>
    %143 = arith.mulf %128, %142 : vector<16x38xf32>
    %144 = arith.addf %126, %143 : vector<16x38xf32>
    %c0_90 = arith.constant 0 : index
    %c0_91 = arith.constant 0 : index
    %c2_92 = arith.constant 2 : index
    %145 = vector.load %arg11[%c0_90, %c0_91, %c2_92] : memref<4x18x40xf32, #tpu.memory_space<vmem>>, vector<1x16x38xf32>
    %146 = vector.shape_cast %145 : vector<1x16x38xf32> to vector<16x38xf32>
    %c2_93 = arith.constant 2 : index
    %c0_94 = arith.constant 0 : index
    %147 = vector.load %arg2[%c2_93, %c0_94] : memref<144x38xf32, #tpu.memory_space<vmem>>, vector<1x38xf32>
    %148 = vector.broadcast %147 : vector<1x38xf32> to vector<16x38xf32>
    %149 = arith.mulf %146, %148 : vector<16x38xf32>
    %150 = arith.addf %132, %149 : vector<16x38xf32>
    %c38 = arith.constant 38 : index
    %c0_95 = arith.constant 0 : index
    %151 = vector.load %arg2[%c38, %c0_95] : memref<144x38xf32, #tpu.memory_space<vmem>>, vector<1x38xf32>
    %152 = vector.broadcast %151 : vector<1x38xf32> to vector<16x38xf32>
    %153 = arith.mulf %146, %152 : vector<16x38xf32>
    %154 = arith.addf %136, %153 : vector<16x38xf32>
    %c74 = arith.constant 74 : index
    %c0_96 = arith.constant 0 : index
    %155 = vector.load %arg2[%c74, %c0_96] : memref<144x38xf32, #tpu.memory_space<vmem>>, vector<1x38xf32>
    %156 = vector.broadcast %155 : vector<1x38xf32> to vector<16x38xf32>
    %157 = arith.mulf %146, %156 : vector<16x38xf32>
    %158 = arith.addf %140, %157 : vector<16x38xf32>
    %c110 = arith.constant 110 : index
    %c0_97 = arith.constant 0 : index
    %159 = vector.load %arg2[%c110, %c0_97] : memref<144x38xf32, #tpu.memory_space<vmem>>, vector<1x38xf32>
    %160 = vector.broadcast %159 : vector<1x38xf32> to vector<16x38xf32>
    %161 = arith.mulf %146, %160 : vector<16x38xf32>
    %162 = arith.addf %144, %161 : vector<16x38xf32>
    %c0_98 = arith.constant 0 : index
    %c1_99 = arith.constant 1 : index
    %c0_100 = arith.constant 0 : index
    %163 = vector.load %arg11[%c0_98, %c1_99, %c0_100] : memref<4x18x40xf32, #tpu.memory_space<vmem>>, vector<1x16x38xf32>
    %164 = vector.shape_cast %163 : vector<1x16x38xf32> to vector<16x38xf32>
    %c3_101 = arith.constant 3 : index
    %c0_102 = arith.constant 0 : index
    %165 = vector.load %arg2[%c3_101, %c0_102] : memref<144x38xf32, #tpu.memory_space<vmem>>, vector<1x38xf32>
    %166 = vector.broadcast %165 : vector<1x38xf32> to vector<16x38xf32>
    %167 = arith.mulf %164, %166 : vector<16x38xf32>
    %168 = arith.addf %150, %167 : vector<16x38xf32>
    %c39 = arith.constant 39 : index
    %c0_103 = arith.constant 0 : index
    %169 = vector.load %arg2[%c39, %c0_103] : memref<144x38xf32, #tpu.memory_space<vmem>>, vector<1x38xf32>
    %170 = vector.broadcast %169 : vector<1x38xf32> to vector<16x38xf32>
    %171 = arith.mulf %164, %170 : vector<16x38xf32>
    %172 = arith.addf %154, %171 : vector<16x38xf32>
    %c75 = arith.constant 75 : index
    %c0_104 = arith.constant 0 : index
    %173 = vector.load %arg2[%c75, %c0_104] : memref<144x38xf32, #tpu.memory_space<vmem>>, vector<1x38xf32>
    %174 = vector.broadcast %173 : vector<1x38xf32> to vector<16x38xf32>
    %175 = arith.mulf %164, %174 : vector<16x38xf32>
    %176 = arith.addf %158, %175 : vector<16x38xf32>
    %c111 = arith.constant 111 : index
    %c0_105 = arith.constant 0 : index
    %177 = vector.load %arg2[%c111, %c0_105] : memref<144x38xf32, #tpu.memory_space<vmem>>, vector<1x38xf32>
    %178 = vector.broadcast %177 : vector<1x38xf32> to vector<16x38xf32>
    %179 = arith.mulf %164, %178 : vector<16x38xf32>
    %180 = arith.addf %162, %179 : vector<16x38xf32>
    %c0_106 = arith.constant 0 : index
    %c1_107 = arith.constant 1 : index
    %c1_108 = arith.constant 1 : index
    %181 = vector.load %arg11[%c0_106, %c1_107, %c1_108] : memref<4x18x40xf32, #tpu.memory_space<vmem>>, vector<1x16x38xf32>
    %182 = vector.shape_cast %181 : vector<1x16x38xf32> to vector<16x38xf32>
    %c4 = arith.constant 4 : index
    %c0_109 = arith.constant 0 : index
    %183 = vector.load %arg2[%c4, %c0_109] : memref<144x38xf32, #tpu.memory_space<vmem>>, vector<1x38xf32>
    %184 = vector.broadcast %183 : vector<1x38xf32> to vector<16x38xf32>
    %185 = arith.mulf %182, %184 : vector<16x38xf32>
    %186 = arith.addf %168, %185 : vector<16x38xf32>
    %c40 = arith.constant 40 : index
    %c0_110 = arith.constant 0 : index
    %187 = vector.load %arg2[%c40, %c0_110] : memref<144x38xf32, #tpu.memory_space<vmem>>, vector<1x38xf32>
    %188 = vector.broadcast %187 : vector<1x38xf32> to vector<16x38xf32>
    %189 = arith.mulf %182, %188 : vector<16x38xf32>
    %190 = arith.addf %172, %189 : vector<16x38xf32>
    %c76 = arith.constant 76 : index
    %c0_111 = arith.constant 0 : index
    %191 = vector.load %arg2[%c76, %c0_111] : memref<144x38xf32, #tpu.memory_space<vmem>>, vector<1x38xf32>
    %192 = vector.broadcast %191 : vector<1x38xf32> to vector<16x38xf32>
    %193 = arith.mulf %182, %192 : vector<16x38xf32>
    %194 = arith.addf %176, %193 : vector<16x38xf32>
    %c112 = arith.constant 112 : index
    %c0_112 = arith.constant 0 : index
    %195 = vector.load %arg2[%c112, %c0_112] : memref<144x38xf32, #tpu.memory_space<vmem>>, vector<1x38xf32>
    %196 = vector.broadcast %195 : vector<1x38xf32> to vector<16x38xf32>
    %197 = arith.mulf %182, %196 : vector<16x38xf32>
    %198 = arith.addf %180, %197 : vector<16x38xf32>
    %c0_113 = arith.constant 0 : index
    %c1_114 = arith.constant 1 : index
    %c2_115 = arith.constant 2 : index
    %199 = vector.load %arg11[%c0_113, %c1_114, %c2_115] : memref<4x18x40xf32, #tpu.memory_space<vmem>>, vector<1x16x38xf32>
    %200 = vector.shape_cast %199 : vector<1x16x38xf32> to vector<16x38xf32>
    %c5 = arith.constant 5 : index
    %c0_116 = arith.constant 0 : index
    %201 = vector.load %arg2[%c5, %c0_116] : memref<144x38xf32, #tpu.memory_space<vmem>>, vector<1x38xf32>
    %202 = vector.broadcast %201 : vector<1x38xf32> to vector<16x38xf32>
    %203 = arith.mulf %200, %202 : vector<16x38xf32>
    %204 = arith.addf %186, %203 : vector<16x38xf32>
    %c41 = arith.constant 41 : index
    %c0_117 = arith.constant 0 : index
    %205 = vector.load %arg2[%c41, %c0_117] : memref<144x38xf32, #tpu.memory_space<vmem>>, vector<1x38xf32>
    %206 = vector.broadcast %205 : vector<1x38xf32> to vector<16x38xf32>
    %207 = arith.mulf %200, %206 : vector<16x38xf32>
    %208 = arith.addf %190, %207 : vector<16x38xf32>
    %c77 = arith.constant 77 : index
    %c0_118 = arith.constant 0 : index
    %209 = vector.load %arg2[%c77, %c0_118] : memref<144x38xf32, #tpu.memory_space<vmem>>, vector<1x38xf32>
    %210 = vector.broadcast %209 : vector<1x38xf32> to vector<16x38xf32>
    %211 = arith.mulf %200, %210 : vector<16x38xf32>
    %212 = arith.addf %194, %211 : vector<16x38xf32>
    %c113 = arith.constant 113 : index
    %c0_119 = arith.constant 0 : index
    %213 = vector.load %arg2[%c113, %c0_119] : memref<144x38xf32, #tpu.memory_space<vmem>>, vector<1x38xf32>
    %214 = vector.broadcast %213 : vector<1x38xf32> to vector<16x38xf32>
    %215 = arith.mulf %200, %214 : vector<16x38xf32>
    %216 = arith.addf %198, %215 : vector<16x38xf32>
    %c0_120 = arith.constant 0 : index
    %c2_121 = arith.constant 2 : index
    %c0_122 = arith.constant 0 : index
    %217 = vector.load %arg11[%c0_120, %c2_121, %c0_122] : memref<4x18x40xf32, #tpu.memory_space<vmem>>, vector<1x16x38xf32>
    %218 = vector.shape_cast %217 : vector<1x16x38xf32> to vector<16x38xf32>
    %c6 = arith.constant 6 : index
    %c0_123 = arith.constant 0 : index
    %219 = vector.load %arg2[%c6, %c0_123] : memref<144x38xf32, #tpu.memory_space<vmem>>, vector<1x38xf32>
    %220 = vector.broadcast %219 : vector<1x38xf32> to vector<16x38xf32>
    %221 = arith.mulf %218, %220 : vector<16x38xf32>
    %222 = arith.addf %204, %221 : vector<16x38xf32>
    %c42 = arith.constant 42 : index
    %c0_124 = arith.constant 0 : index
    %223 = vector.load %arg2[%c42, %c0_124] : memref<144x38xf32, #tpu.memory_space<vmem>>, vector<1x38xf32>
    %224 = vector.broadcast %223 : vector<1x38xf32> to vector<16x38xf32>
    %225 = arith.mulf %218, %224 : vector<16x38xf32>
    %226 = arith.addf %208, %225 : vector<16x38xf32>
    %c78 = arith.constant 78 : index
    %c0_125 = arith.constant 0 : index
    %227 = vector.load %arg2[%c78, %c0_125] : memref<144x38xf32, #tpu.memory_space<vmem>>, vector<1x38xf32>
    %228 = vector.broadcast %227 : vector<1x38xf32> to vector<16x38xf32>
    %229 = arith.mulf %218, %228 : vector<16x38xf32>
    %230 = arith.addf %212, %229 : vector<16x38xf32>
    %c114 = arith.constant 114 : index
    %c0_126 = arith.constant 0 : index
    %231 = vector.load %arg2[%c114, %c0_126] : memref<144x38xf32, #tpu.memory_space<vmem>>, vector<1x38xf32>
    %232 = vector.broadcast %231 : vector<1x38xf32> to vector<16x38xf32>
    %233 = arith.mulf %218, %232 : vector<16x38xf32>
    %234 = arith.addf %216, %233 : vector<16x38xf32>
    %c0_127 = arith.constant 0 : index
    %c2_128 = arith.constant 2 : index
    %c1_129 = arith.constant 1 : index
    %235 = vector.load %arg11[%c0_127, %c2_128, %c1_129] : memref<4x18x40xf32, #tpu.memory_space<vmem>>, vector<1x16x38xf32>
    %236 = vector.shape_cast %235 : vector<1x16x38xf32> to vector<16x38xf32>
    %c7 = arith.constant 7 : index
    %c0_130 = arith.constant 0 : index
    %237 = vector.load %arg2[%c7, %c0_130] : memref<144x38xf32, #tpu.memory_space<vmem>>, vector<1x38xf32>
    %238 = vector.broadcast %237 : vector<1x38xf32> to vector<16x38xf32>
    %239 = arith.mulf %236, %238 : vector<16x38xf32>
    %240 = arith.addf %222, %239 : vector<16x38xf32>
    %c43 = arith.constant 43 : index
    %c0_131 = arith.constant 0 : index
    %241 = vector.load %arg2[%c43, %c0_131] : memref<144x38xf32, #tpu.memory_space<vmem>>, vector<1x38xf32>
    %242 = vector.broadcast %241 : vector<1x38xf32> to vector<16x38xf32>
    %243 = arith.mulf %236, %242 : vector<16x38xf32>
    %244 = arith.addf %226, %243 : vector<16x38xf32>
    %c79 = arith.constant 79 : index
    %c0_132 = arith.constant 0 : index
    %245 = vector.load %arg2[%c79, %c0_132] : memref<144x38xf32, #tpu.memory_space<vmem>>, vector<1x38xf32>
    %246 = vector.broadcast %245 : vector<1x38xf32> to vector<16x38xf32>
    %247 = arith.mulf %236, %246 : vector<16x38xf32>
    %248 = arith.addf %230, %247 : vector<16x38xf32>
    %c115 = arith.constant 115 : index
    %c0_133 = arith.constant 0 : index
    %249 = vector.load %arg2[%c115, %c0_133] : memref<144x38xf32, #tpu.memory_space<vmem>>, vector<1x38xf32>
    %250 = vector.broadcast %249 : vector<1x38xf32> to vector<16x38xf32>
    %251 = arith.mulf %236, %250 : vector<16x38xf32>
    %252 = arith.addf %234, %251 : vector<16x38xf32>
    %c0_134 = arith.constant 0 : index
    %c2_135 = arith.constant 2 : index
    %c2_136 = arith.constant 2 : index
    %253 = vector.load %arg11[%c0_134, %c2_135, %c2_136] : memref<4x18x40xf32, #tpu.memory_space<vmem>>, vector<1x16x38xf32>
    %254 = vector.shape_cast %253 : vector<1x16x38xf32> to vector<16x38xf32>
    %c8 = arith.constant 8 : index
    %c0_137 = arith.constant 0 : index
    %255 = vector.load %arg2[%c8, %c0_137] : memref<144x38xf32, #tpu.memory_space<vmem>>, vector<1x38xf32>
    %256 = vector.broadcast %255 : vector<1x38xf32> to vector<16x38xf32>
    %257 = arith.mulf %254, %256 : vector<16x38xf32>
    %258 = arith.addf %240, %257 : vector<16x38xf32>
    %c44 = arith.constant 44 : index
    %c0_138 = arith.constant 0 : index
    %259 = vector.load %arg2[%c44, %c0_138] : memref<144x38xf32, #tpu.memory_space<vmem>>, vector<1x38xf32>
    %260 = vector.broadcast %259 : vector<1x38xf32> to vector<16x38xf32>
    %261 = arith.mulf %254, %260 : vector<16x38xf32>
    %262 = arith.addf %244, %261 : vector<16x38xf32>
    %c80 = arith.constant 80 : index
    %c0_139 = arith.constant 0 : index
    %263 = vector.load %arg2[%c80, %c0_139] : memref<144x38xf32, #tpu.memory_space<vmem>>, vector<1x38xf32>
    %264 = vector.broadcast %263 : vector<1x38xf32> to vector<16x38xf32>
    %265 = arith.mulf %254, %264 : vector<16x38xf32>
    %266 = arith.addf %248, %265 : vector<16x38xf32>
    %c116 = arith.constant 116 : index
    %c0_140 = arith.constant 0 : index
    %267 = vector.load %arg2[%c116, %c0_140] : memref<144x38xf32, #tpu.memory_space<vmem>>, vector<1x38xf32>
    %268 = vector.broadcast %267 : vector<1x38xf32> to vector<16x38xf32>
    %269 = arith.mulf %254, %268 : vector<16x38xf32>
    %270 = arith.addf %252, %269 : vector<16x38xf32>
    %c1_141 = arith.constant 1 : index
    %c0_142 = arith.constant 0 : index
    %c0_143 = arith.constant 0 : index
    %271 = vector.load %arg11[%c1_141, %c0_142, %c0_143] : memref<4x18x40xf32, #tpu.memory_space<vmem>>, vector<1x16x38xf32>
    %272 = vector.shape_cast %271 : vector<1x16x38xf32> to vector<16x38xf32>
    %c9 = arith.constant 9 : index
    %c0_144 = arith.constant 0 : index
    %273 = vector.load %arg2[%c9, %c0_144] : memref<144x38xf32, #tpu.memory_space<vmem>>, vector<1x38xf32>
    %274 = vector.broadcast %273 : vector<1x38xf32> to vector<16x38xf32>
    %275 = arith.mulf %272, %274 : vector<16x38xf32>
    %276 = arith.addf %258, %275 : vector<16x38xf32>
    %c45 = arith.constant 45 : index
    %c0_145 = arith.constant 0 : index
    %277 = vector.load %arg2[%c45, %c0_145] : memref<144x38xf32, #tpu.memory_space<vmem>>, vector<1x38xf32>
    %278 = vector.broadcast %277 : vector<1x38xf32> to vector<16x38xf32>
    %279 = arith.mulf %272, %278 : vector<16x38xf32>
    %280 = arith.addf %262, %279 : vector<16x38xf32>
    %c81 = arith.constant 81 : index
    %c0_146 = arith.constant 0 : index
    %281 = vector.load %arg2[%c81, %c0_146] : memref<144x38xf32, #tpu.memory_space<vmem>>, vector<1x38xf32>
    %282 = vector.broadcast %281 : vector<1x38xf32> to vector<16x38xf32>
    %283 = arith.mulf %272, %282 : vector<16x38xf32>
    %284 = arith.addf %266, %283 : vector<16x38xf32>
    %c117 = arith.constant 117 : index
    %c0_147 = arith.constant 0 : index
    %285 = vector.load %arg2[%c117, %c0_147] : memref<144x38xf32, #tpu.memory_space<vmem>>, vector<1x38xf32>
    %286 = vector.broadcast %285 : vector<1x38xf32> to vector<16x38xf32>
    %287 = arith.mulf %272, %286 : vector<16x38xf32>
    %288 = arith.addf %270, %287 : vector<16x38xf32>
    %c1_148 = arith.constant 1 : index
    %c0_149 = arith.constant 0 : index
    %c1_150 = arith.constant 1 : index
    %289 = vector.load %arg11[%c1_148, %c0_149, %c1_150] : memref<4x18x40xf32, #tpu.memory_space<vmem>>, vector<1x16x38xf32>
    %290 = vector.shape_cast %289 : vector<1x16x38xf32> to vector<16x38xf32>
    %c10 = arith.constant 10 : index
    %c0_151 = arith.constant 0 : index
    %291 = vector.load %arg2[%c10, %c0_151] : memref<144x38xf32, #tpu.memory_space<vmem>>, vector<1x38xf32>
    %292 = vector.broadcast %291 : vector<1x38xf32> to vector<16x38xf32>
    %293 = arith.mulf %290, %292 : vector<16x38xf32>
    %294 = arith.addf %276, %293 : vector<16x38xf32>
    %c46 = arith.constant 46 : index
    %c0_152 = arith.constant 0 : index
    %295 = vector.load %arg2[%c46, %c0_152] : memref<144x38xf32, #tpu.memory_space<vmem>>, vector<1x38xf32>
    %296 = vector.broadcast %295 : vector<1x38xf32> to vector<16x38xf32>
    %297 = arith.mulf %290, %296 : vector<16x38xf32>
    %298 = arith.addf %280, %297 : vector<16x38xf32>
    %c82 = arith.constant 82 : index
    %c0_153 = arith.constant 0 : index
    %299 = vector.load %arg2[%c82, %c0_153] : memref<144x38xf32, #tpu.memory_space<vmem>>, vector<1x38xf32>
    %300 = vector.broadcast %299 : vector<1x38xf32> to vector<16x38xf32>
    %301 = arith.mulf %290, %300 : vector<16x38xf32>
    %302 = arith.addf %284, %301 : vector<16x38xf32>
    %c118 = arith.constant 118 : index
    %c0_154 = arith.constant 0 : index
    %303 = vector.load %arg2[%c118, %c0_154] : memref<144x38xf32, #tpu.memory_space<vmem>>, vector<1x38xf32>
    %304 = vector.broadcast %303 : vector<1x38xf32> to vector<16x38xf32>
    %305 = arith.mulf %290, %304 : vector<16x38xf32>
    %306 = arith.addf %288, %305 : vector<16x38xf32>
    %c1_155 = arith.constant 1 : index
    %c0_156 = arith.constant 0 : index
    %c2_157 = arith.constant 2 : index
    %307 = vector.load %arg11[%c1_155, %c0_156, %c2_157] : memref<4x18x40xf32, #tpu.memory_space<vmem>>, vector<1x16x38xf32>
    %308 = vector.shape_cast %307 : vector<1x16x38xf32> to vector<16x38xf32>
    %c11_158 = arith.constant 11 : index
    %c0_159 = arith.constant 0 : index
    %309 = vector.load %arg2[%c11_158, %c0_159] : memref<144x38xf32, #tpu.memory_space<vmem>>, vector<1x38xf32>
    %310 = vector.broadcast %309 : vector<1x38xf32> to vector<16x38xf32>
    %311 = arith.mulf %308, %310 : vector<16x38xf32>
    %312 = arith.addf %294, %311 : vector<16x38xf32>
    %c47 = arith.constant 47 : index
    %c0_160 = arith.constant 0 : index
    %313 = vector.load %arg2[%c47, %c0_160] : memref<144x38xf32, #tpu.memory_space<vmem>>, vector<1x38xf32>
    %314 = vector.broadcast %313 : vector<1x38xf32> to vector<16x38xf32>
    %315 = arith.mulf %308, %314 : vector<16x38xf32>
    %316 = arith.addf %298, %315 : vector<16x38xf32>
    %c83 = arith.constant 83 : index
    %c0_161 = arith.constant 0 : index
    %317 = vector.load %arg2[%c83, %c0_161] : memref<144x38xf32, #tpu.memory_space<vmem>>, vector<1x38xf32>
    %318 = vector.broadcast %317 : vector<1x38xf32> to vector<16x38xf32>
    %319 = arith.mulf %308, %318 : vector<16x38xf32>
    %320 = arith.addf %302, %319 : vector<16x38xf32>
    %c119 = arith.constant 119 : index
    %c0_162 = arith.constant 0 : index
    %321 = vector.load %arg2[%c119, %c0_162] : memref<144x38xf32, #tpu.memory_space<vmem>>, vector<1x38xf32>
    %322 = vector.broadcast %321 : vector<1x38xf32> to vector<16x38xf32>
    %323 = arith.mulf %308, %322 : vector<16x38xf32>
    %324 = arith.addf %306, %323 : vector<16x38xf32>
    %c1_163 = arith.constant 1 : index
    %c1_164 = arith.constant 1 : index
    %c0_165 = arith.constant 0 : index
    %325 = vector.load %arg11[%c1_163, %c1_164, %c0_165] : memref<4x18x40xf32, #tpu.memory_space<vmem>>, vector<1x16x38xf32>
    %326 = vector.shape_cast %325 : vector<1x16x38xf32> to vector<16x38xf32>
    %c12 = arith.constant 12 : index
    %c0_166 = arith.constant 0 : index
    %327 = vector.load %arg2[%c12, %c0_166] : memref<144x38xf32, #tpu.memory_space<vmem>>, vector<1x38xf32>
    %328 = vector.broadcast %327 : vector<1x38xf32> to vector<16x38xf32>
    %329 = arith.mulf %326, %328 : vector<16x38xf32>
    %330 = arith.addf %312, %329 : vector<16x38xf32>
    %c48_167 = arith.constant 48 : index
    %c0_168 = arith.constant 0 : index
    %331 = vector.load %arg2[%c48_167, %c0_168] : memref<144x38xf32, #tpu.memory_space<vmem>>, vector<1x38xf32>
    %332 = vector.broadcast %331 : vector<1x38xf32> to vector<16x38xf32>
    %333 = arith.mulf %326, %332 : vector<16x38xf32>
    %334 = arith.addf %316, %333 : vector<16x38xf32>
    %c84 = arith.constant 84 : index
    %c0_169 = arith.constant 0 : index
    %335 = vector.load %arg2[%c84, %c0_169] : memref<144x38xf32, #tpu.memory_space<vmem>>, vector<1x38xf32>
    %336 = vector.broadcast %335 : vector<1x38xf32> to vector<16x38xf32>
    %337 = arith.mulf %326, %336 : vector<16x38xf32>
    %338 = arith.addf %320, %337 : vector<16x38xf32>
    %c120 = arith.constant 120 : index
    %c0_170 = arith.constant 0 : index
    %339 = vector.load %arg2[%c120, %c0_170] : memref<144x38xf32, #tpu.memory_space<vmem>>, vector<1x38xf32>
    %340 = vector.broadcast %339 : vector<1x38xf32> to vector<16x38xf32>
    %341 = arith.mulf %326, %340 : vector<16x38xf32>
    %342 = arith.addf %324, %341 : vector<16x38xf32>
    %c1_171 = arith.constant 1 : index
    %c1_172 = arith.constant 1 : index
    %c1_173 = arith.constant 1 : index
    %343 = vector.load %arg11[%c1_171, %c1_172, %c1_173] : memref<4x18x40xf32, #tpu.memory_space<vmem>>, vector<1x16x38xf32>
    %344 = vector.shape_cast %343 : vector<1x16x38xf32> to vector<16x38xf32>
    %c13 = arith.constant 13 : index
    %c0_174 = arith.constant 0 : index
    %345 = vector.load %arg2[%c13, %c0_174] : memref<144x38xf32, #tpu.memory_space<vmem>>, vector<1x38xf32>
    %346 = vector.broadcast %345 : vector<1x38xf32> to vector<16x38xf32>
    %347 = arith.mulf %344, %346 : vector<16x38xf32>
    %348 = arith.addf %330, %347 : vector<16x38xf32>
    %c49 = arith.constant 49 : index
    %c0_175 = arith.constant 0 : index
    %349 = vector.load %arg2[%c49, %c0_175] : memref<144x38xf32, #tpu.memory_space<vmem>>, vector<1x38xf32>
    %350 = vector.broadcast %349 : vector<1x38xf32> to vector<16x38xf32>
    %351 = arith.mulf %344, %350 : vector<16x38xf32>
    %352 = arith.addf %334, %351 : vector<16x38xf32>
    %c85 = arith.constant 85 : index
    %c0_176 = arith.constant 0 : index
    %353 = vector.load %arg2[%c85, %c0_176] : memref<144x38xf32, #tpu.memory_space<vmem>>, vector<1x38xf32>
    %354 = vector.broadcast %353 : vector<1x38xf32> to vector<16x38xf32>
    %355 = arith.mulf %344, %354 : vector<16x38xf32>
    %356 = arith.addf %338, %355 : vector<16x38xf32>
    %c121 = arith.constant 121 : index
    %c0_177 = arith.constant 0 : index
    %357 = vector.load %arg2[%c121, %c0_177] : memref<144x38xf32, #tpu.memory_space<vmem>>, vector<1x38xf32>
    %358 = vector.broadcast %357 : vector<1x38xf32> to vector<16x38xf32>
    %359 = arith.mulf %344, %358 : vector<16x38xf32>
    %360 = arith.addf %342, %359 : vector<16x38xf32>
    %c1_178 = arith.constant 1 : index
    %c1_179 = arith.constant 1 : index
    %c2_180 = arith.constant 2 : index
    %361 = vector.load %arg11[%c1_178, %c1_179, %c2_180] : memref<4x18x40xf32, #tpu.memory_space<vmem>>, vector<1x16x38xf32>
    %362 = vector.shape_cast %361 : vector<1x16x38xf32> to vector<16x38xf32>
    %c14 = arith.constant 14 : index
    %c0_181 = arith.constant 0 : index
    %363 = vector.load %arg2[%c14, %c0_181] : memref<144x38xf32, #tpu.memory_space<vmem>>, vector<1x38xf32>
    %364 = vector.broadcast %363 : vector<1x38xf32> to vector<16x38xf32>
    %365 = arith.mulf %362, %364 : vector<16x38xf32>
    %366 = arith.addf %348, %365 : vector<16x38xf32>
    %c50 = arith.constant 50 : index
    %c0_182 = arith.constant 0 : index
    %367 = vector.load %arg2[%c50, %c0_182] : memref<144x38xf32, #tpu.memory_space<vmem>>, vector<1x38xf32>
    %368 = vector.broadcast %367 : vector<1x38xf32> to vector<16x38xf32>
    %369 = arith.mulf %362, %368 : vector<16x38xf32>
    %370 = arith.addf %352, %369 : vector<16x38xf32>
    %c86 = arith.constant 86 : index
    %c0_183 = arith.constant 0 : index
    %371 = vector.load %arg2[%c86, %c0_183] : memref<144x38xf32, #tpu.memory_space<vmem>>, vector<1x38xf32>
    %372 = vector.broadcast %371 : vector<1x38xf32> to vector<16x38xf32>
    %373 = arith.mulf %362, %372 : vector<16x38xf32>
    %374 = arith.addf %356, %373 : vector<16x38xf32>
    %c122 = arith.constant 122 : index
    %c0_184 = arith.constant 0 : index
    %375 = vector.load %arg2[%c122, %c0_184] : memref<144x38xf32, #tpu.memory_space<vmem>>, vector<1x38xf32>
    %376 = vector.broadcast %375 : vector<1x38xf32> to vector<16x38xf32>
    %377 = arith.mulf %362, %376 : vector<16x38xf32>
    %378 = arith.addf %360, %377 : vector<16x38xf32>
    %c1_185 = arith.constant 1 : index
    %c2_186 = arith.constant 2 : index
    %c0_187 = arith.constant 0 : index
    %379 = vector.load %arg11[%c1_185, %c2_186, %c0_187] : memref<4x18x40xf32, #tpu.memory_space<vmem>>, vector<1x16x38xf32>
    %380 = vector.shape_cast %379 : vector<1x16x38xf32> to vector<16x38xf32>
    %c15 = arith.constant 15 : index
    %c0_188 = arith.constant 0 : index
    %381 = vector.load %arg2[%c15, %c0_188] : memref<144x38xf32, #tpu.memory_space<vmem>>, vector<1x38xf32>
    %382 = vector.broadcast %381 : vector<1x38xf32> to vector<16x38xf32>
    %383 = arith.mulf %380, %382 : vector<16x38xf32>
    %384 = arith.addf %366, %383 : vector<16x38xf32>
    %c51 = arith.constant 51 : index
    %c0_189 = arith.constant 0 : index
    %385 = vector.load %arg2[%c51, %c0_189] : memref<144x38xf32, #tpu.memory_space<vmem>>, vector<1x38xf32>
    %386 = vector.broadcast %385 : vector<1x38xf32> to vector<16x38xf32>
    %387 = arith.mulf %380, %386 : vector<16x38xf32>
    %388 = arith.addf %370, %387 : vector<16x38xf32>
    %c87 = arith.constant 87 : index
    %c0_190 = arith.constant 0 : index
    %389 = vector.load %arg2[%c87, %c0_190] : memref<144x38xf32, #tpu.memory_space<vmem>>, vector<1x38xf32>
    %390 = vector.broadcast %389 : vector<1x38xf32> to vector<16x38xf32>
    %391 = arith.mulf %380, %390 : vector<16x38xf32>
    %392 = arith.addf %374, %391 : vector<16x38xf32>
    %c123 = arith.constant 123 : index
    %c0_191 = arith.constant 0 : index
    %393 = vector.load %arg2[%c123, %c0_191] : memref<144x38xf32, #tpu.memory_space<vmem>>, vector<1x38xf32>
    %394 = vector.broadcast %393 : vector<1x38xf32> to vector<16x38xf32>
    %395 = arith.mulf %380, %394 : vector<16x38xf32>
    %396 = arith.addf %378, %395 : vector<16x38xf32>
    %c1_192 = arith.constant 1 : index
    %c2_193 = arith.constant 2 : index
    %c1_194 = arith.constant 1 : index
    %397 = vector.load %arg11[%c1_192, %c2_193, %c1_194] : memref<4x18x40xf32, #tpu.memory_space<vmem>>, vector<1x16x38xf32>
    %398 = vector.shape_cast %397 : vector<1x16x38xf32> to vector<16x38xf32>
    %c16_195 = arith.constant 16 : index
    %c0_196 = arith.constant 0 : index
    %399 = vector.load %arg2[%c16_195, %c0_196] : memref<144x38xf32, #tpu.memory_space<vmem>>, vector<1x38xf32>
    %400 = vector.broadcast %399 : vector<1x38xf32> to vector<16x38xf32>
    %401 = arith.mulf %398, %400 : vector<16x38xf32>
    %402 = arith.addf %384, %401 : vector<16x38xf32>
    %c52 = arith.constant 52 : index
    %c0_197 = arith.constant 0 : index
    %403 = vector.load %arg2[%c52, %c0_197] : memref<144x38xf32, #tpu.memory_space<vmem>>, vector<1x38xf32>
    %404 = vector.broadcast %403 : vector<1x38xf32> to vector<16x38xf32>
    %405 = arith.mulf %398, %404 : vector<16x38xf32>
    %406 = arith.addf %388, %405 : vector<16x38xf32>
    %c88 = arith.constant 88 : index
    %c0_198 = arith.constant 0 : index
    %407 = vector.load %arg2[%c88, %c0_198] : memref<144x38xf32, #tpu.memory_space<vmem>>, vector<1x38xf32>
    %408 = vector.broadcast %407 : vector<1x38xf32> to vector<16x38xf32>
    %409 = arith.mulf %398, %408 : vector<16x38xf32>
    %410 = arith.addf %392, %409 : vector<16x38xf32>
    %c124 = arith.constant 124 : index
    %c0_199 = arith.constant 0 : index
    %411 = vector.load %arg2[%c124, %c0_199] : memref<144x38xf32, #tpu.memory_space<vmem>>, vector<1x38xf32>
    %412 = vector.broadcast %411 : vector<1x38xf32> to vector<16x38xf32>
    %413 = arith.mulf %398, %412 : vector<16x38xf32>
    %414 = arith.addf %396, %413 : vector<16x38xf32>
    %c1_200 = arith.constant 1 : index
    %c2_201 = arith.constant 2 : index
    %c2_202 = arith.constant 2 : index
    %415 = vector.load %arg11[%c1_200, %c2_201, %c2_202] : memref<4x18x40xf32, #tpu.memory_space<vmem>>, vector<1x16x38xf32>
    %416 = vector.shape_cast %415 : vector<1x16x38xf32> to vector<16x38xf32>
    %c17 = arith.constant 17 : index
    %c0_203 = arith.constant 0 : index
    %417 = vector.load %arg2[%c17, %c0_203] : memref<144x38xf32, #tpu.memory_space<vmem>>, vector<1x38xf32>
    %418 = vector.broadcast %417 : vector<1x38xf32> to vector<16x38xf32>
    %419 = arith.mulf %416, %418 : vector<16x38xf32>
    %420 = arith.addf %402, %419 : vector<16x38xf32>
    %c53 = arith.constant 53 : index
    %c0_204 = arith.constant 0 : index
    %421 = vector.load %arg2[%c53, %c0_204] : memref<144x38xf32, #tpu.memory_space<vmem>>, vector<1x38xf32>
    %422 = vector.broadcast %421 : vector<1x38xf32> to vector<16x38xf32>
    %423 = arith.mulf %416, %422 : vector<16x38xf32>
    %424 = arith.addf %406, %423 : vector<16x38xf32>
    %c89 = arith.constant 89 : index
    %c0_205 = arith.constant 0 : index
    %425 = vector.load %arg2[%c89, %c0_205] : memref<144x38xf32, #tpu.memory_space<vmem>>, vector<1x38xf32>
    %426 = vector.broadcast %425 : vector<1x38xf32> to vector<16x38xf32>
    %427 = arith.mulf %416, %426 : vector<16x38xf32>
    %428 = arith.addf %410, %427 : vector<16x38xf32>
    %c125 = arith.constant 125 : index
    %c0_206 = arith.constant 0 : index
    %429 = vector.load %arg2[%c125, %c0_206] : memref<144x38xf32, #tpu.memory_space<vmem>>, vector<1x38xf32>
    %430 = vector.broadcast %429 : vector<1x38xf32> to vector<16x38xf32>
    %431 = arith.mulf %416, %430 : vector<16x38xf32>
    %432 = arith.addf %414, %431 : vector<16x38xf32>
    %c2_207 = arith.constant 2 : index
    %c0_208 = arith.constant 0 : index
    %c0_209 = arith.constant 0 : index
    %433 = vector.load %arg11[%c2_207, %c0_208, %c0_209] : memref<4x18x40xf32, #tpu.memory_space<vmem>>, vector<1x16x38xf32>
    %434 = vector.shape_cast %433 : vector<1x16x38xf32> to vector<16x38xf32>
    %c18 = arith.constant 18 : index
    %c0_210 = arith.constant 0 : index
    %435 = vector.load %arg2[%c18, %c0_210] : memref<144x38xf32, #tpu.memory_space<vmem>>, vector<1x38xf32>
    %436 = vector.broadcast %435 : vector<1x38xf32> to vector<16x38xf32>
    %437 = arith.mulf %434, %436 : vector<16x38xf32>
    %438 = arith.addf %420, %437 : vector<16x38xf32>
    %c54 = arith.constant 54 : index
    %c0_211 = arith.constant 0 : index
    %439 = vector.load %arg2[%c54, %c0_211] : memref<144x38xf32, #tpu.memory_space<vmem>>, vector<1x38xf32>
    %440 = vector.broadcast %439 : vector<1x38xf32> to vector<16x38xf32>
    %441 = arith.mulf %434, %440 : vector<16x38xf32>
    %442 = arith.addf %424, %441 : vector<16x38xf32>
    %c90 = arith.constant 90 : index
    %c0_212 = arith.constant 0 : index
    %443 = vector.load %arg2[%c90, %c0_212] : memref<144x38xf32, #tpu.memory_space<vmem>>, vector<1x38xf32>
    %444 = vector.broadcast %443 : vector<1x38xf32> to vector<16x38xf32>
    %445 = arith.mulf %434, %444 : vector<16x38xf32>
    %446 = arith.addf %428, %445 : vector<16x38xf32>
    %c126 = arith.constant 126 : index
    %c0_213 = arith.constant 0 : index
    %447 = vector.load %arg2[%c126, %c0_213] : memref<144x38xf32, #tpu.memory_space<vmem>>, vector<1x38xf32>
    %448 = vector.broadcast %447 : vector<1x38xf32> to vector<16x38xf32>
    %449 = arith.mulf %434, %448 : vector<16x38xf32>
    %450 = arith.addf %432, %449 : vector<16x38xf32>
    %c2_214 = arith.constant 2 : index
    %c0_215 = arith.constant 0 : index
    %c1_216 = arith.constant 1 : index
    %451 = vector.load %arg11[%c2_214, %c0_215, %c1_216] : memref<4x18x40xf32, #tpu.memory_space<vmem>>, vector<1x16x38xf32>
    %452 = vector.shape_cast %451 : vector<1x16x38xf32> to vector<16x38xf32>
    %c19 = arith.constant 19 : index
    %c0_217 = arith.constant 0 : index
    %453 = vector.load %arg2[%c19, %c0_217] : memref<144x38xf32, #tpu.memory_space<vmem>>, vector<1x38xf32>
    %454 = vector.broadcast %453 : vector<1x38xf32> to vector<16x38xf32>
    %455 = arith.mulf %452, %454 : vector<16x38xf32>
    %456 = arith.addf %438, %455 : vector<16x38xf32>
    %c55 = arith.constant 55 : index
    %c0_218 = arith.constant 0 : index
    %457 = vector.load %arg2[%c55, %c0_218] : memref<144x38xf32, #tpu.memory_space<vmem>>, vector<1x38xf32>
    %458 = vector.broadcast %457 : vector<1x38xf32> to vector<16x38xf32>
    %459 = arith.mulf %452, %458 : vector<16x38xf32>
    %460 = arith.addf %442, %459 : vector<16x38xf32>
    %c91 = arith.constant 91 : index
    %c0_219 = arith.constant 0 : index
    %461 = vector.load %arg2[%c91, %c0_219] : memref<144x38xf32, #tpu.memory_space<vmem>>, vector<1x38xf32>
    %462 = vector.broadcast %461 : vector<1x38xf32> to vector<16x38xf32>
    %463 = arith.mulf %452, %462 : vector<16x38xf32>
    %464 = arith.addf %446, %463 : vector<16x38xf32>
    %c127 = arith.constant 127 : index
    %c0_220 = arith.constant 0 : index
    %465 = vector.load %arg2[%c127, %c0_220] : memref<144x38xf32, #tpu.memory_space<vmem>>, vector<1x38xf32>
    %466 = vector.broadcast %465 : vector<1x38xf32> to vector<16x38xf32>
    %467 = arith.mulf %452, %466 : vector<16x38xf32>
    %468 = arith.addf %450, %467 : vector<16x38xf32>
    %c2_221 = arith.constant 2 : index
    %c0_222 = arith.constant 0 : index
    %c2_223 = arith.constant 2 : index
    %469 = vector.load %arg11[%c2_221, %c0_222, %c2_223] : memref<4x18x40xf32, #tpu.memory_space<vmem>>, vector<1x16x38xf32>
    %470 = vector.shape_cast %469 : vector<1x16x38xf32> to vector<16x38xf32>
    %c20 = arith.constant 20 : index
    %c0_224 = arith.constant 0 : index
    %471 = vector.load %arg2[%c20, %c0_224] : memref<144x38xf32, #tpu.memory_space<vmem>>, vector<1x38xf32>
    %472 = vector.broadcast %471 : vector<1x38xf32> to vector<16x38xf32>
    %473 = arith.mulf %470, %472 : vector<16x38xf32>
    %474 = arith.addf %456, %473 : vector<16x38xf32>
    %c56 = arith.constant 56 : index
    %c0_225 = arith.constant 0 : index
    %475 = vector.load %arg2[%c56, %c0_225] : memref<144x38xf32, #tpu.memory_space<vmem>>, vector<1x38xf32>
    %476 = vector.broadcast %475 : vector<1x38xf32> to vector<16x38xf32>
    %477 = arith.mulf %470, %476 : vector<16x38xf32>
    %478 = arith.addf %460, %477 : vector<16x38xf32>
    %c92 = arith.constant 92 : index
    %c0_226 = arith.constant 0 : index
    %479 = vector.load %arg2[%c92, %c0_226] : memref<144x38xf32, #tpu.memory_space<vmem>>, vector<1x38xf32>
    %480 = vector.broadcast %479 : vector<1x38xf32> to vector<16x38xf32>
    %481 = arith.mulf %470, %480 : vector<16x38xf32>
    %482 = arith.addf %464, %481 : vector<16x38xf32>
    %c128 = arith.constant 128 : index
    %c0_227 = arith.constant 0 : index
    %483 = vector.load %arg2[%c128, %c0_227] : memref<144x38xf32, #tpu.memory_space<vmem>>, vector<1x38xf32>
    %484 = vector.broadcast %483 : vector<1x38xf32> to vector<16x38xf32>
    %485 = arith.mulf %470, %484 : vector<16x38xf32>
    %486 = arith.addf %468, %485 : vector<16x38xf32>
    %c2_228 = arith.constant 2 : index
    %c1_229 = arith.constant 1 : index
    %c0_230 = arith.constant 0 : index
    %487 = vector.load %arg11[%c2_228, %c1_229, %c0_230] : memref<4x18x40xf32, #tpu.memory_space<vmem>>, vector<1x16x38xf32>
    %488 = vector.shape_cast %487 : vector<1x16x38xf32> to vector<16x38xf32>
    %c21_231 = arith.constant 21 : index
    %c0_232 = arith.constant 0 : index
    %489 = vector.load %arg2[%c21_231, %c0_232] : memref<144x38xf32, #tpu.memory_space<vmem>>, vector<1x38xf32>
    %490 = vector.broadcast %489 : vector<1x38xf32> to vector<16x38xf32>
    %491 = arith.mulf %488, %490 : vector<16x38xf32>
    %492 = arith.addf %474, %491 : vector<16x38xf32>
    %c57 = arith.constant 57 : index
    %c0_233 = arith.constant 0 : index
    %493 = vector.load %arg2[%c57, %c0_233] : memref<144x38xf32, #tpu.memory_space<vmem>>, vector<1x38xf32>
    %494 = vector.broadcast %493 : vector<1x38xf32> to vector<16x38xf32>
    %495 = arith.mulf %488, %494 : vector<16x38xf32>
    %496 = arith.addf %478, %495 : vector<16x38xf32>
    %c93 = arith.constant 93 : index
    %c0_234 = arith.constant 0 : index
    %497 = vector.load %arg2[%c93, %c0_234] : memref<144x38xf32, #tpu.memory_space<vmem>>, vector<1x38xf32>
    %498 = vector.broadcast %497 : vector<1x38xf32> to vector<16x38xf32>
    %499 = arith.mulf %488, %498 : vector<16x38xf32>
    %500 = arith.addf %482, %499 : vector<16x38xf32>
    %c129 = arith.constant 129 : index
    %c0_235 = arith.constant 0 : index
    %501 = vector.load %arg2[%c129, %c0_235] : memref<144x38xf32, #tpu.memory_space<vmem>>, vector<1x38xf32>
    %502 = vector.broadcast %501 : vector<1x38xf32> to vector<16x38xf32>
    %503 = arith.mulf %488, %502 : vector<16x38xf32>
    %504 = arith.addf %486, %503 : vector<16x38xf32>
    %c2_236 = arith.constant 2 : index
    %c1_237 = arith.constant 1 : index
    %c1_238 = arith.constant 1 : index
    %505 = vector.load %arg11[%c2_236, %c1_237, %c1_238] : memref<4x18x40xf32, #tpu.memory_space<vmem>>, vector<1x16x38xf32>
    %506 = vector.shape_cast %505 : vector<1x16x38xf32> to vector<16x38xf32>
    %c22 = arith.constant 22 : index
    %c0_239 = arith.constant 0 : index
    %507 = vector.load %arg2[%c22, %c0_239] : memref<144x38xf32, #tpu.memory_space<vmem>>, vector<1x38xf32>
    %508 = vector.broadcast %507 : vector<1x38xf32> to vector<16x38xf32>
    %509 = arith.mulf %506, %508 : vector<16x38xf32>
    %510 = arith.addf %492, %509 : vector<16x38xf32>
    %c58 = arith.constant 58 : index
    %c0_240 = arith.constant 0 : index
    %511 = vector.load %arg2[%c58, %c0_240] : memref<144x38xf32, #tpu.memory_space<vmem>>, vector<1x38xf32>
    %512 = vector.broadcast %511 : vector<1x38xf32> to vector<16x38xf32>
    %513 = arith.mulf %506, %512 : vector<16x38xf32>
    %514 = arith.addf %496, %513 : vector<16x38xf32>
    %c94 = arith.constant 94 : index
    %c0_241 = arith.constant 0 : index
    %515 = vector.load %arg2[%c94, %c0_241] : memref<144x38xf32, #tpu.memory_space<vmem>>, vector<1x38xf32>
    %516 = vector.broadcast %515 : vector<1x38xf32> to vector<16x38xf32>
    %517 = arith.mulf %506, %516 : vector<16x38xf32>
    %518 = arith.addf %500, %517 : vector<16x38xf32>
    %c130 = arith.constant 130 : index
    %c0_242 = arith.constant 0 : index
    %519 = vector.load %arg2[%c130, %c0_242] : memref<144x38xf32, #tpu.memory_space<vmem>>, vector<1x38xf32>
    %520 = vector.broadcast %519 : vector<1x38xf32> to vector<16x38xf32>
    %521 = arith.mulf %506, %520 : vector<16x38xf32>
    %522 = arith.addf %504, %521 : vector<16x38xf32>
    %c2_243 = arith.constant 2 : index
    %c1_244 = arith.constant 1 : index
    %c2_245 = arith.constant 2 : index
    %523 = vector.load %arg11[%c2_243, %c1_244, %c2_245] : memref<4x18x40xf32, #tpu.memory_space<vmem>>, vector<1x16x38xf32>
    %524 = vector.shape_cast %523 : vector<1x16x38xf32> to vector<16x38xf32>
    %c23 = arith.constant 23 : index
    %c0_246 = arith.constant 0 : index
    %525 = vector.load %arg2[%c23, %c0_246] : memref<144x38xf32, #tpu.memory_space<vmem>>, vector<1x38xf32>
    %526 = vector.broadcast %525 : vector<1x38xf32> to vector<16x38xf32>
    %527 = arith.mulf %524, %526 : vector<16x38xf32>
    %528 = arith.addf %510, %527 : vector<16x38xf32>
    %c59 = arith.constant 59 : index
    %c0_247 = arith.constant 0 : index
    %529 = vector.load %arg2[%c59, %c0_247] : memref<144x38xf32, #tpu.memory_space<vmem>>, vector<1x38xf32>
    %530 = vector.broadcast %529 : vector<1x38xf32> to vector<16x38xf32>
    %531 = arith.mulf %524, %530 : vector<16x38xf32>
    %532 = arith.addf %514, %531 : vector<16x38xf32>
    %c95 = arith.constant 95 : index
    %c0_248 = arith.constant 0 : index
    %533 = vector.load %arg2[%c95, %c0_248] : memref<144x38xf32, #tpu.memory_space<vmem>>, vector<1x38xf32>
    %534 = vector.broadcast %533 : vector<1x38xf32> to vector<16x38xf32>
    %535 = arith.mulf %524, %534 : vector<16x38xf32>
    %536 = arith.addf %518, %535 : vector<16x38xf32>
    %c131 = arith.constant 131 : index
    %c0_249 = arith.constant 0 : index
    %537 = vector.load %arg2[%c131, %c0_249] : memref<144x38xf32, #tpu.memory_space<vmem>>, vector<1x38xf32>
    %538 = vector.broadcast %537 : vector<1x38xf32> to vector<16x38xf32>
    %539 = arith.mulf %524, %538 : vector<16x38xf32>
    %540 = arith.addf %522, %539 : vector<16x38xf32>
    %c2_250 = arith.constant 2 : index
    %c2_251 = arith.constant 2 : index
    %c0_252 = arith.constant 0 : index
    %541 = vector.load %arg11[%c2_250, %c2_251, %c0_252] : memref<4x18x40xf32, #tpu.memory_space<vmem>>, vector<1x16x38xf32>
    %542 = vector.shape_cast %541 : vector<1x16x38xf32> to vector<16x38xf32>
    %c24 = arith.constant 24 : index
    %c0_253 = arith.constant 0 : index
    %543 = vector.load %arg2[%c24, %c0_253] : memref<144x38xf32, #tpu.memory_space<vmem>>, vector<1x38xf32>
    %544 = vector.broadcast %543 : vector<1x38xf32> to vector<16x38xf32>
    %545 = arith.mulf %542, %544 : vector<16x38xf32>
    %546 = arith.addf %528, %545 : vector<16x38xf32>
    %c60 = arith.constant 60 : index
    %c0_254 = arith.constant 0 : index
    %547 = vector.load %arg2[%c60, %c0_254] : memref<144x38xf32, #tpu.memory_space<vmem>>, vector<1x38xf32>
    %548 = vector.broadcast %547 : vector<1x38xf32> to vector<16x38xf32>
    %549 = arith.mulf %542, %548 : vector<16x38xf32>
    %550 = arith.addf %532, %549 : vector<16x38xf32>
    %c96 = arith.constant 96 : index
    %c0_255 = arith.constant 0 : index
    %551 = vector.load %arg2[%c96, %c0_255] : memref<144x38xf32, #tpu.memory_space<vmem>>, vector<1x38xf32>
    %552 = vector.broadcast %551 : vector<1x38xf32> to vector<16x38xf32>
    %553 = arith.mulf %542, %552 : vector<16x38xf32>
    %554 = arith.addf %536, %553 : vector<16x38xf32>
    %c132 = arith.constant 132 : index
    %c0_256 = arith.constant 0 : index
    %555 = vector.load %arg2[%c132, %c0_256] : memref<144x38xf32, #tpu.memory_space<vmem>>, vector<1x38xf32>
    %556 = vector.broadcast %555 : vector<1x38xf32> to vector<16x38xf32>
    %557 = arith.mulf %542, %556 : vector<16x38xf32>
    %558 = arith.addf %540, %557 : vector<16x38xf32>
    %c2_257 = arith.constant 2 : index
    %c2_258 = arith.constant 2 : index
    %c1_259 = arith.constant 1 : index
    %559 = vector.load %arg11[%c2_257, %c2_258, %c1_259] : memref<4x18x40xf32, #tpu.memory_space<vmem>>, vector<1x16x38xf32>
    %560 = vector.shape_cast %559 : vector<1x16x38xf32> to vector<16x38xf32>
    %c25 = arith.constant 25 : index
    %c0_260 = arith.constant 0 : index
    %561 = vector.load %arg2[%c25, %c0_260] : memref<144x38xf32, #tpu.memory_space<vmem>>, vector<1x38xf32>
    %562 = vector.broadcast %561 : vector<1x38xf32> to vector<16x38xf32>
    %563 = arith.mulf %560, %562 : vector<16x38xf32>
    %564 = arith.addf %546, %563 : vector<16x38xf32>
    %c61 = arith.constant 61 : index
    %c0_261 = arith.constant 0 : index
    %565 = vector.load %arg2[%c61, %c0_261] : memref<144x38xf32, #tpu.memory_space<vmem>>, vector<1x38xf32>
    %566 = vector.broadcast %565 : vector<1x38xf32> to vector<16x38xf32>
    %567 = arith.mulf %560, %566 : vector<16x38xf32>
    %568 = arith.addf %550, %567 : vector<16x38xf32>
    %c97 = arith.constant 97 : index
    %c0_262 = arith.constant 0 : index
    %569 = vector.load %arg2[%c97, %c0_262] : memref<144x38xf32, #tpu.memory_space<vmem>>, vector<1x38xf32>
    %570 = vector.broadcast %569 : vector<1x38xf32> to vector<16x38xf32>
    %571 = arith.mulf %560, %570 : vector<16x38xf32>
    %572 = arith.addf %554, %571 : vector<16x38xf32>
    %c133 = arith.constant 133 : index
    %c0_263 = arith.constant 0 : index
    %573 = vector.load %arg2[%c133, %c0_263] : memref<144x38xf32, #tpu.memory_space<vmem>>, vector<1x38xf32>
    %574 = vector.broadcast %573 : vector<1x38xf32> to vector<16x38xf32>
    %575 = arith.mulf %560, %574 : vector<16x38xf32>
    %576 = arith.addf %558, %575 : vector<16x38xf32>
    %c2_264 = arith.constant 2 : index
    %c2_265 = arith.constant 2 : index
    %c2_266 = arith.constant 2 : index
    %577 = vector.load %arg11[%c2_264, %c2_265, %c2_266] : memref<4x18x40xf32, #tpu.memory_space<vmem>>, vector<1x16x38xf32>
    %578 = vector.shape_cast %577 : vector<1x16x38xf32> to vector<16x38xf32>
    %c26 = arith.constant 26 : index
    %c0_267 = arith.constant 0 : index
    %579 = vector.load %arg2[%c26, %c0_267] : memref<144x38xf32, #tpu.memory_space<vmem>>, vector<1x38xf32>
    %580 = vector.broadcast %579 : vector<1x38xf32> to vector<16x38xf32>
    %581 = arith.mulf %578, %580 : vector<16x38xf32>
    %582 = arith.addf %564, %581 : vector<16x38xf32>
    %c62 = arith.constant 62 : index
    %c0_268 = arith.constant 0 : index
    %583 = vector.load %arg2[%c62, %c0_268] : memref<144x38xf32, #tpu.memory_space<vmem>>, vector<1x38xf32>
    %584 = vector.broadcast %583 : vector<1x38xf32> to vector<16x38xf32>
    %585 = arith.mulf %578, %584 : vector<16x38xf32>
    %586 = arith.addf %568, %585 : vector<16x38xf32>
    %c98 = arith.constant 98 : index
    %c0_269 = arith.constant 0 : index
    %587 = vector.load %arg2[%c98, %c0_269] : memref<144x38xf32, #tpu.memory_space<vmem>>, vector<1x38xf32>
    %588 = vector.broadcast %587 : vector<1x38xf32> to vector<16x38xf32>
    %589 = arith.mulf %578, %588 : vector<16x38xf32>
    %590 = arith.addf %572, %589 : vector<16x38xf32>
    %c134 = arith.constant 134 : index
    %c0_270 = arith.constant 0 : index
    %591 = vector.load %arg2[%c134, %c0_270] : memref<144x38xf32, #tpu.memory_space<vmem>>, vector<1x38xf32>
    %592 = vector.broadcast %591 : vector<1x38xf32> to vector<16x38xf32>
    %593 = arith.mulf %578, %592 : vector<16x38xf32>
    %594 = arith.addf %576, %593 : vector<16x38xf32>
    %c3_271 = arith.constant 3 : index
    %c0_272 = arith.constant 0 : index
    %c0_273 = arith.constant 0 : index
    %595 = vector.load %arg11[%c3_271, %c0_272, %c0_273] : memref<4x18x40xf32, #tpu.memory_space<vmem>>, vector<1x16x38xf32>
    %596 = vector.shape_cast %595 : vector<1x16x38xf32> to vector<16x38xf32>
    %c27 = arith.constant 27 : index
    %c0_274 = arith.constant 0 : index
    %597 = vector.load %arg2[%c27, %c0_274] : memref<144x38xf32, #tpu.memory_space<vmem>>, vector<1x38xf32>
    %598 = vector.broadcast %597 : vector<1x38xf32> to vector<16x38xf32>
    %599 = arith.mulf %596, %598 : vector<16x38xf32>
    %600 = arith.addf %582, %599 : vector<16x38xf32>
    %c63 = arith.constant 63 : index
    %c0_275 = arith.constant 0 : index
    %601 = vector.load %arg2[%c63, %c0_275] : memref<144x38xf32, #tpu.memory_space<vmem>>, vector<1x38xf32>
    %602 = vector.broadcast %601 : vector<1x38xf32> to vector<16x38xf32>
    %603 = arith.mulf %596, %602 : vector<16x38xf32>
    %604 = arith.addf %586, %603 : vector<16x38xf32>
    %c99 = arith.constant 99 : index
    %c0_276 = arith.constant 0 : index
    %605 = vector.load %arg2[%c99, %c0_276] : memref<144x38xf32, #tpu.memory_space<vmem>>, vector<1x38xf32>
    %606 = vector.broadcast %605 : vector<1x38xf32> to vector<16x38xf32>
    %607 = arith.mulf %596, %606 : vector<16x38xf32>
    %608 = arith.addf %590, %607 : vector<16x38xf32>
    %c135 = arith.constant 135 : index
    %c0_277 = arith.constant 0 : index
    %609 = vector.load %arg2[%c135, %c0_277] : memref<144x38xf32, #tpu.memory_space<vmem>>, vector<1x38xf32>
    %610 = vector.broadcast %609 : vector<1x38xf32> to vector<16x38xf32>
    %611 = arith.mulf %596, %610 : vector<16x38xf32>
    %612 = arith.addf %594, %611 : vector<16x38xf32>
    %c3_278 = arith.constant 3 : index
    %c0_279 = arith.constant 0 : index
    %c1_280 = arith.constant 1 : index
    %613 = vector.load %arg11[%c3_278, %c0_279, %c1_280] : memref<4x18x40xf32, #tpu.memory_space<vmem>>, vector<1x16x38xf32>
    %614 = vector.shape_cast %613 : vector<1x16x38xf32> to vector<16x38xf32>
    %c28 = arith.constant 28 : index
    %c0_281 = arith.constant 0 : index
    %615 = vector.load %arg2[%c28, %c0_281] : memref<144x38xf32, #tpu.memory_space<vmem>>, vector<1x38xf32>
    %616 = vector.broadcast %615 : vector<1x38xf32> to vector<16x38xf32>
    %617 = arith.mulf %614, %616 : vector<16x38xf32>
    %618 = arith.addf %600, %617 : vector<16x38xf32>
    %c64 = arith.constant 64 : index
    %c0_282 = arith.constant 0 : index
    %619 = vector.load %arg2[%c64, %c0_282] : memref<144x38xf32, #tpu.memory_space<vmem>>, vector<1x38xf32>
    %620 = vector.broadcast %619 : vector<1x38xf32> to vector<16x38xf32>
    %621 = arith.mulf %614, %620 : vector<16x38xf32>
    %622 = arith.addf %604, %621 : vector<16x38xf32>
    %c100 = arith.constant 100 : index
    %c0_283 = arith.constant 0 : index
    %623 = vector.load %arg2[%c100, %c0_283] : memref<144x38xf32, #tpu.memory_space<vmem>>, vector<1x38xf32>
    %624 = vector.broadcast %623 : vector<1x38xf32> to vector<16x38xf32>
    %625 = arith.mulf %614, %624 : vector<16x38xf32>
    %626 = arith.addf %608, %625 : vector<16x38xf32>
    %c136 = arith.constant 136 : index
    %c0_284 = arith.constant 0 : index
    %627 = vector.load %arg2[%c136, %c0_284] : memref<144x38xf32, #tpu.memory_space<vmem>>, vector<1x38xf32>
    %628 = vector.broadcast %627 : vector<1x38xf32> to vector<16x38xf32>
    %629 = arith.mulf %614, %628 : vector<16x38xf32>
    %630 = arith.addf %612, %629 : vector<16x38xf32>
    %c3_285 = arith.constant 3 : index
    %c0_286 = arith.constant 0 : index
    %c2_287 = arith.constant 2 : index
    %631 = vector.load %arg11[%c3_285, %c0_286, %c2_287] : memref<4x18x40xf32, #tpu.memory_space<vmem>>, vector<1x16x38xf32>
    %632 = vector.shape_cast %631 : vector<1x16x38xf32> to vector<16x38xf32>
    %c29 = arith.constant 29 : index
    %c0_288 = arith.constant 0 : index
    %633 = vector.load %arg2[%c29, %c0_288] : memref<144x38xf32, #tpu.memory_space<vmem>>, vector<1x38xf32>
    %634 = vector.broadcast %633 : vector<1x38xf32> to vector<16x38xf32>
    %635 = arith.mulf %632, %634 : vector<16x38xf32>
    %636 = arith.addf %618, %635 : vector<16x38xf32>
    %c65 = arith.constant 65 : index
    %c0_289 = arith.constant 0 : index
    %637 = vector.load %arg2[%c65, %c0_289] : memref<144x38xf32, #tpu.memory_space<vmem>>, vector<1x38xf32>
    %638 = vector.broadcast %637 : vector<1x38xf32> to vector<16x38xf32>
    %639 = arith.mulf %632, %638 : vector<16x38xf32>
    %640 = arith.addf %622, %639 : vector<16x38xf32>
    %c101 = arith.constant 101 : index
    %c0_290 = arith.constant 0 : index
    %641 = vector.load %arg2[%c101, %c0_290] : memref<144x38xf32, #tpu.memory_space<vmem>>, vector<1x38xf32>
    %642 = vector.broadcast %641 : vector<1x38xf32> to vector<16x38xf32>
    %643 = arith.mulf %632, %642 : vector<16x38xf32>
    %644 = arith.addf %626, %643 : vector<16x38xf32>
    %c137 = arith.constant 137 : index
    %c0_291 = arith.constant 0 : index
    %645 = vector.load %arg2[%c137, %c0_291] : memref<144x38xf32, #tpu.memory_space<vmem>>, vector<1x38xf32>
    %646 = vector.broadcast %645 : vector<1x38xf32> to vector<16x38xf32>
    %647 = arith.mulf %632, %646 : vector<16x38xf32>
    %648 = arith.addf %630, %647 : vector<16x38xf32>
    %c3_292 = arith.constant 3 : index
    %c1_293 = arith.constant 1 : index
    %c0_294 = arith.constant 0 : index
    %649 = vector.load %arg11[%c3_292, %c1_293, %c0_294] : memref<4x18x40xf32, #tpu.memory_space<vmem>>, vector<1x16x38xf32>
    %650 = vector.shape_cast %649 : vector<1x16x38xf32> to vector<16x38xf32>
    %c30 = arith.constant 30 : index
    %c0_295 = arith.constant 0 : index
    %651 = vector.load %arg2[%c30, %c0_295] : memref<144x38xf32, #tpu.memory_space<vmem>>, vector<1x38xf32>
    %652 = vector.broadcast %651 : vector<1x38xf32> to vector<16x38xf32>
    %653 = arith.mulf %650, %652 : vector<16x38xf32>
    %654 = arith.addf %636, %653 : vector<16x38xf32>
    %c66 = arith.constant 66 : index
    %c0_296 = arith.constant 0 : index
    %655 = vector.load %arg2[%c66, %c0_296] : memref<144x38xf32, #tpu.memory_space<vmem>>, vector<1x38xf32>
    %656 = vector.broadcast %655 : vector<1x38xf32> to vector<16x38xf32>
    %657 = arith.mulf %650, %656 : vector<16x38xf32>
    %658 = arith.addf %640, %657 : vector<16x38xf32>
    %c102 = arith.constant 102 : index
    %c0_297 = arith.constant 0 : index
    %659 = vector.load %arg2[%c102, %c0_297] : memref<144x38xf32, #tpu.memory_space<vmem>>, vector<1x38xf32>
    %660 = vector.broadcast %659 : vector<1x38xf32> to vector<16x38xf32>
    %661 = arith.mulf %650, %660 : vector<16x38xf32>
    %662 = arith.addf %644, %661 : vector<16x38xf32>
    %c138 = arith.constant 138 : index
    %c0_298 = arith.constant 0 : index
    %663 = vector.load %arg2[%c138, %c0_298] : memref<144x38xf32, #tpu.memory_space<vmem>>, vector<1x38xf32>
    %664 = vector.broadcast %663 : vector<1x38xf32> to vector<16x38xf32>
    %665 = arith.mulf %650, %664 : vector<16x38xf32>
    %666 = arith.addf %648, %665 : vector<16x38xf32>
    %c3_299 = arith.constant 3 : index
    %c1_300 = arith.constant 1 : index
    %c1_301 = arith.constant 1 : index
    %667 = vector.load %arg11[%c3_299, %c1_300, %c1_301] : memref<4x18x40xf32, #tpu.memory_space<vmem>>, vector<1x16x38xf32>
    %668 = vector.shape_cast %667 : vector<1x16x38xf32> to vector<16x38xf32>
    %c31_302 = arith.constant 31 : index
    %c0_303 = arith.constant 0 : index
    %669 = vector.load %arg2[%c31_302, %c0_303] : memref<144x38xf32, #tpu.memory_space<vmem>>, vector<1x38xf32>
    %670 = vector.broadcast %669 : vector<1x38xf32> to vector<16x38xf32>
    %671 = arith.mulf %668, %670 : vector<16x38xf32>
    %672 = arith.addf %654, %671 : vector<16x38xf32>
    %c67 = arith.constant 67 : index
    %c0_304 = arith.constant 0 : index
    %673 = vector.load %arg2[%c67, %c0_304] : memref<144x38xf32, #tpu.memory_space<vmem>>, vector<1x38xf32>
    %674 = vector.broadcast %673 : vector<1x38xf32> to vector<16x38xf32>
    %675 = arith.mulf %668, %674 : vector<16x38xf32>
    %676 = arith.addf %658, %675 : vector<16x38xf32>
    %c103 = arith.constant 103 : index
    %c0_305 = arith.constant 0 : index
    %677 = vector.load %arg2[%c103, %c0_305] : memref<144x38xf32, #tpu.memory_space<vmem>>, vector<1x38xf32>
    %678 = vector.broadcast %677 : vector<1x38xf32> to vector<16x38xf32>
    %679 = arith.mulf %668, %678 : vector<16x38xf32>
    %680 = arith.addf %662, %679 : vector<16x38xf32>
    %c139 = arith.constant 139 : index
    %c0_306 = arith.constant 0 : index
    %681 = vector.load %arg2[%c139, %c0_306] : memref<144x38xf32, #tpu.memory_space<vmem>>, vector<1x38xf32>
    %682 = vector.broadcast %681 : vector<1x38xf32> to vector<16x38xf32>
    %683 = arith.mulf %668, %682 : vector<16x38xf32>
    %684 = arith.addf %666, %683 : vector<16x38xf32>
    %c3_307 = arith.constant 3 : index
    %c1_308 = arith.constant 1 : index
    %c2_309 = arith.constant 2 : index
    %685 = vector.load %arg11[%c3_307, %c1_308, %c2_309] : memref<4x18x40xf32, #tpu.memory_space<vmem>>, vector<1x16x38xf32>
    %686 = vector.shape_cast %685 : vector<1x16x38xf32> to vector<16x38xf32>
    %c32_310 = arith.constant 32 : index
    %c0_311 = arith.constant 0 : index
    %687 = vector.load %arg2[%c32_310, %c0_311] : memref<144x38xf32, #tpu.memory_space<vmem>>, vector<1x38xf32>
    %688 = vector.broadcast %687 : vector<1x38xf32> to vector<16x38xf32>
    %689 = arith.mulf %686, %688 : vector<16x38xf32>
    %690 = arith.addf %672, %689 : vector<16x38xf32>
    %c68 = arith.constant 68 : index
    %c0_312 = arith.constant 0 : index
    %691 = vector.load %arg2[%c68, %c0_312] : memref<144x38xf32, #tpu.memory_space<vmem>>, vector<1x38xf32>
    %692 = vector.broadcast %691 : vector<1x38xf32> to vector<16x38xf32>
    %693 = arith.mulf %686, %692 : vector<16x38xf32>
    %694 = arith.addf %676, %693 : vector<16x38xf32>
    %c104 = arith.constant 104 : index
    %c0_313 = arith.constant 0 : index
    %695 = vector.load %arg2[%c104, %c0_313] : memref<144x38xf32, #tpu.memory_space<vmem>>, vector<1x38xf32>
    %696 = vector.broadcast %695 : vector<1x38xf32> to vector<16x38xf32>
    %697 = arith.mulf %686, %696 : vector<16x38xf32>
    %698 = arith.addf %680, %697 : vector<16x38xf32>
    %c140 = arith.constant 140 : index
    %c0_314 = arith.constant 0 : index
    %699 = vector.load %arg2[%c140, %c0_314] : memref<144x38xf32, #tpu.memory_space<vmem>>, vector<1x38xf32>
    %700 = vector.broadcast %699 : vector<1x38xf32> to vector<16x38xf32>
    %701 = arith.mulf %686, %700 : vector<16x38xf32>
    %702 = arith.addf %684, %701 : vector<16x38xf32>
    %c3_315 = arith.constant 3 : index
    %c2_316 = arith.constant 2 : index
    %c0_317 = arith.constant 0 : index
    %703 = vector.load %arg11[%c3_315, %c2_316, %c0_317] : memref<4x18x40xf32, #tpu.memory_space<vmem>>, vector<1x16x38xf32>
    %704 = vector.shape_cast %703 : vector<1x16x38xf32> to vector<16x38xf32>
    %c33 = arith.constant 33 : index
    %c0_318 = arith.constant 0 : index
    %705 = vector.load %arg2[%c33, %c0_318] : memref<144x38xf32, #tpu.memory_space<vmem>>, vector<1x38xf32>
    %706 = vector.broadcast %705 : vector<1x38xf32> to vector<16x38xf32>
    %707 = arith.mulf %704, %706 : vector<16x38xf32>
    %708 = arith.addf %690, %707 : vector<16x38xf32>
    %c69 = arith.constant 69 : index
    %c0_319 = arith.constant 0 : index
    %709 = vector.load %arg2[%c69, %c0_319] : memref<144x38xf32, #tpu.memory_space<vmem>>, vector<1x38xf32>
    %710 = vector.broadcast %709 : vector<1x38xf32> to vector<16x38xf32>
    %711 = arith.mulf %704, %710 : vector<16x38xf32>
    %712 = arith.addf %694, %711 : vector<16x38xf32>
    %c105 = arith.constant 105 : index
    %c0_320 = arith.constant 0 : index
    %713 = vector.load %arg2[%c105, %c0_320] : memref<144x38xf32, #tpu.memory_space<vmem>>, vector<1x38xf32>
    %714 = vector.broadcast %713 : vector<1x38xf32> to vector<16x38xf32>
    %715 = arith.mulf %704, %714 : vector<16x38xf32>
    %716 = arith.addf %698, %715 : vector<16x38xf32>
    %c141 = arith.constant 141 : index
    %c0_321 = arith.constant 0 : index
    %717 = vector.load %arg2[%c141, %c0_321] : memref<144x38xf32, #tpu.memory_space<vmem>>, vector<1x38xf32>
    %718 = vector.broadcast %717 : vector<1x38xf32> to vector<16x38xf32>
    %719 = arith.mulf %704, %718 : vector<16x38xf32>
    %720 = arith.addf %702, %719 : vector<16x38xf32>
    %c3_322 = arith.constant 3 : index
    %c2_323 = arith.constant 2 : index
    %c1_324 = arith.constant 1 : index
    %721 = vector.load %arg11[%c3_322, %c2_323, %c1_324] : memref<4x18x40xf32, #tpu.memory_space<vmem>>, vector<1x16x38xf32>
    %722 = vector.shape_cast %721 : vector<1x16x38xf32> to vector<16x38xf32>
    %c34 = arith.constant 34 : index
    %c0_325 = arith.constant 0 : index
    %723 = vector.load %arg2[%c34, %c0_325] : memref<144x38xf32, #tpu.memory_space<vmem>>, vector<1x38xf32>
    %724 = vector.broadcast %723 : vector<1x38xf32> to vector<16x38xf32>
    %725 = arith.mulf %722, %724 : vector<16x38xf32>
    %726 = arith.addf %708, %725 : vector<16x38xf32>
    %c70 = arith.constant 70 : index
    %c0_326 = arith.constant 0 : index
    %727 = vector.load %arg2[%c70, %c0_326] : memref<144x38xf32, #tpu.memory_space<vmem>>, vector<1x38xf32>
    %728 = vector.broadcast %727 : vector<1x38xf32> to vector<16x38xf32>
    %729 = arith.mulf %722, %728 : vector<16x38xf32>
    %730 = arith.addf %712, %729 : vector<16x38xf32>
    %c106 = arith.constant 106 : index
    %c0_327 = arith.constant 0 : index
    %731 = vector.load %arg2[%c106, %c0_327] : memref<144x38xf32, #tpu.memory_space<vmem>>, vector<1x38xf32>
    %732 = vector.broadcast %731 : vector<1x38xf32> to vector<16x38xf32>
    %733 = arith.mulf %722, %732 : vector<16x38xf32>
    %734 = arith.addf %716, %733 : vector<16x38xf32>
    %c142 = arith.constant 142 : index
    %c0_328 = arith.constant 0 : index
    %735 = vector.load %arg2[%c142, %c0_328] : memref<144x38xf32, #tpu.memory_space<vmem>>, vector<1x38xf32>
    %736 = vector.broadcast %735 : vector<1x38xf32> to vector<16x38xf32>
    %737 = arith.mulf %722, %736 : vector<16x38xf32>
    %738 = arith.addf %720, %737 : vector<16x38xf32>
    %c3_329 = arith.constant 3 : index
    %c2_330 = arith.constant 2 : index
    %c2_331 = arith.constant 2 : index
    %739 = vector.load %arg11[%c3_329, %c2_330, %c2_331] : memref<4x18x40xf32, #tpu.memory_space<vmem>>, vector<1x16x38xf32>
    %740 = vector.shape_cast %739 : vector<1x16x38xf32> to vector<16x38xf32>
    %c35 = arith.constant 35 : index
    %c0_332 = arith.constant 0 : index
    %741 = vector.load %arg2[%c35, %c0_332] : memref<144x38xf32, #tpu.memory_space<vmem>>, vector<1x38xf32>
    %742 = vector.broadcast %741 : vector<1x38xf32> to vector<16x38xf32>
    %743 = arith.mulf %740, %742 : vector<16x38xf32>
    %744 = arith.addf %726, %743 : vector<16x38xf32>
    %c71 = arith.constant 71 : index
    %c0_333 = arith.constant 0 : index
    %745 = vector.load %arg2[%c71, %c0_333] : memref<144x38xf32, #tpu.memory_space<vmem>>, vector<1x38xf32>
    %746 = vector.broadcast %745 : vector<1x38xf32> to vector<16x38xf32>
    %747 = arith.mulf %740, %746 : vector<16x38xf32>
    %748 = arith.addf %730, %747 : vector<16x38xf32>
    %c107 = arith.constant 107 : index
    %c0_334 = arith.constant 0 : index
    %749 = vector.load %arg2[%c107, %c0_334] : memref<144x38xf32, #tpu.memory_space<vmem>>, vector<1x38xf32>
    %750 = vector.broadcast %749 : vector<1x38xf32> to vector<16x38xf32>
    %751 = arith.mulf %740, %750 : vector<16x38xf32>
    %752 = arith.addf %734, %751 : vector<16x38xf32>
    %c143 = arith.constant 143 : index
    %c0_335 = arith.constant 0 : index
    %753 = vector.load %arg2[%c143, %c0_335] : memref<144x38xf32, #tpu.memory_space<vmem>>, vector<1x38xf32>
    %754 = vector.broadcast %753 : vector<1x38xf32> to vector<16x38xf32>
    %755 = arith.mulf %740, %754 : vector<16x38xf32>
    %756 = arith.addf %738, %755 : vector<16x38xf32>
    %cst_336 = arith.constant 0.000000e+00 : f32
    %757 = vector.broadcast %cst_336 : f32 to vector<16x1xf32>
    %cst_337 = arith.constant 0.000000e+00 : f32
    %758 = vector.broadcast %cst_337 : f32 to vector<16x1xf32>
    %cst_338 = arith.constant dense<0.000000e+00> : vector<16xf32>
    %759 = vector.multi_reduction <add>, %744, %cst_338 [1] : vector<16x38xf32> to vector<16xf32>
    %760 = vector.shape_cast %759 : vector<16xf32> to vector<16x1xf32>
    %761 = arith.addf %757, %760 : vector<16x1xf32>
    %762 = arith.mulf %744, %744 : vector<16x38xf32>
    %cst_339 = arith.constant dense<0.000000e+00> : vector<16xf32>
    %763 = vector.multi_reduction <add>, %762, %cst_339 [1] : vector<16x38xf32> to vector<16xf32>
    %764 = vector.shape_cast %763 : vector<16xf32> to vector<16x1xf32>
    %765 = arith.addf %758, %764 : vector<16x1xf32>
    %cst_340 = arith.constant dense<0.000000e+00> : vector<16xf32>
    %766 = vector.multi_reduction <add>, %748, %cst_340 [1] : vector<16x38xf32> to vector<16xf32>
    %767 = vector.shape_cast %766 : vector<16xf32> to vector<16x1xf32>
    %768 = arith.addf %761, %767 : vector<16x1xf32>
    %769 = arith.mulf %748, %748 : vector<16x38xf32>
    %cst_341 = arith.constant dense<0.000000e+00> : vector<16xf32>
    %770 = vector.multi_reduction <add>, %769, %cst_341 [1] : vector<16x38xf32> to vector<16xf32>
    %771 = vector.shape_cast %770 : vector<16xf32> to vector<16x1xf32>
    %772 = arith.addf %765, %771 : vector<16x1xf32>
    %cst_342 = arith.constant dense<0.000000e+00> : vector<16xf32>
    %773 = vector.multi_reduction <add>, %752, %cst_342 [1] : vector<16x38xf32> to vector<16xf32>
    %774 = vector.shape_cast %773 : vector<16xf32> to vector<16x1xf32>
    %775 = arith.addf %768, %774 : vector<16x1xf32>
    %776 = arith.mulf %752, %752 : vector<16x38xf32>
    %cst_343 = arith.constant dense<0.000000e+00> : vector<16xf32>
    %777 = vector.multi_reduction <add>, %776, %cst_343 [1] : vector<16x38xf32> to vector<16xf32>
    %778 = vector.shape_cast %777 : vector<16xf32> to vector<16x1xf32>
    %779 = arith.addf %772, %778 : vector<16x1xf32>
    %cst_344 = arith.constant dense<0.000000e+00> : vector<16xf32>
    %780 = vector.multi_reduction <add>, %756, %cst_344 [1] : vector<16x38xf32> to vector<16xf32>
    %781 = vector.shape_cast %780 : vector<16xf32> to vector<16x1xf32>
    %782 = arith.addf %775, %781 : vector<16x1xf32>
    %783 = arith.mulf %756, %756 : vector<16x38xf32>
    %cst_345 = arith.constant dense<0.000000e+00> : vector<16xf32>
    %784 = vector.multi_reduction <add>, %783, %cst_345 [1] : vector<16x38xf32> to vector<16xf32>
    %785 = vector.shape_cast %784 : vector<16xf32> to vector<16x1xf32>
    %786 = arith.addf %779, %785 : vector<16x1xf32>
    %cst_346 = arith.constant 7.812500e-03 : f32
    %787 = vector.broadcast %cst_346 : f32 to vector<16x1xf32>
    %788 = arith.mulf %782, %787 : vector<16x1xf32>
    %cst_347 = arith.constant 7.812500e-03 : f32
    %789 = vector.broadcast %cst_347 : f32 to vector<16x1xf32>
    %790 = arith.mulf %786, %789 : vector<16x1xf32>
    %791 = arith.mulf %788, %788 : vector<16x1xf32>
    %792 = arith.subf %790, %791 : vector<16x1xf32>
    %cst_348 = arith.constant 0.000000e+00 : f32
    %793 = vector.broadcast %cst_348 : f32 to vector<16x1xf32>
    %794 = arith.maximumf %792, %793 : vector<16x1xf32>
    %cst_349 = arith.constant 9.99999974E-6 : f32
    %795 = vector.broadcast %cst_349 : f32 to vector<16x1xf32>
    %796 = arith.addf %794, %795 : vector<16x1xf32>
    %797 = math.rsqrt %796 : vector<16x1xf32>
    %798 = vector.broadcast %788 : vector<16x1xf32> to vector<16x38xf32>
    %799 = arith.subf %744, %798 : vector<16x38xf32>
    %800 = vector.broadcast %797 : vector<16x1xf32> to vector<16x38xf32>
    %801 = arith.mulf %799, %800 : vector<16x38xf32>
    %802 = vector.broadcast %3 : vector<1x38xf32> to vector<16x38xf32>
    %803 = arith.mulf %801, %802 : vector<16x38xf32>
    %804 = vector.broadcast %4 : vector<1x38xf32> to vector<16x38xf32>
    %805 = arith.addf %803, %804 : vector<16x38xf32>
    %c0_350 = arith.constant 0 : index
    %806 = memref.load %arg9[%c0_350] : memref<4xf32, #tpu.memory_space<smem>>
    %cst_351 = arith.constant 0.000000e+00 : f32
    %807 = vector.broadcast %cst_351 : f32 to vector<16x38xf32>
    %808 = arith.cmpf ogt, %805, %807 : vector<16x38xf32>
    %809 = vector.broadcast %806 : f32 to vector<16x38xf32>
    %810 = arith.mulf %809, %805 : vector<16x38xf32>
    %811 = arith.select %808, %805, %810 : vector<16x38xi1>, vector<16x38xf32>
    %c0_352 = arith.constant 0 : index
    %c0_353 = arith.constant 0 : index
    %812 = vector.load %arg12[%c0_352, %c0_353] : memref<128x38xf32, #tpu.memory_space<vmem>>, vector<16x38xf32>
    tpu.vector_store %arg12[%c0_352, %c0_353], %811 {strides = array<i32>} : memref<128x38xf32, #tpu.memory_space<vmem>>, vector<16x38xf32>,
    %813 = vector.broadcast %788 : vector<16x1xf32> to vector<16x38xf32>
    %814 = arith.subf %748, %813 : vector<16x38xf32>
    %815 = vector.broadcast %797 : vector<16x1xf32> to vector<16x38xf32>
    %816 = arith.mulf %814, %815 : vector<16x38xf32>
    %817 = vector.broadcast %3 : vector<1x38xf32> to vector<16x38xf32>
    %818 = arith.mulf %816, %817 : vector<16x38xf32>
    %819 = vector.broadcast %4 : vector<1x38xf32> to vector<16x38xf32>
    %820 = arith.addf %818, %819 : vector<16x38xf32>
    %c1_354 = arith.constant 1 : index
    %821 = memref.load %arg9[%c1_354] : memref<4xf32, #tpu.memory_space<smem>>
    %cst_355 = arith.constant 0.000000e+00 : f32
    %822 = vector.broadcast %cst_355 : f32 to vector<16x38xf32>
    %823 = arith.cmpf ogt, %820, %822 : vector<16x38xf32>
    %824 = vector.broadcast %821 : f32 to vector<16x38xf32>
    %825 = arith.mulf %824, %820 : vector<16x38xf32>
    %826 = arith.select %823, %820, %825 : vector<16x38xi1>, vector<16x38xf32>
    %c16_356 = arith.constant 16 : index
    %c0_357 = arith.constant 0 : index
    %827 = vector.load %arg12[%c16_356, %c0_357] : memref<128x38xf32, #tpu.memory_space<vmem>>, vector<16x38xf32>
    tpu.vector_store %arg12[%c16_356, %c0_357], %826 {strides = array<i32>} : memref<128x38xf32, #tpu.memory_space<vmem>>, vector<16x38xf32>,
    %828 = vector.broadcast %788 : vector<16x1xf32> to vector<16x38xf32>
    %829 = arith.subf %752, %828 : vector<16x38xf32>
    %830 = vector.broadcast %797 : vector<16x1xf32> to vector<16x38xf32>
    %831 = arith.mulf %829, %830 : vector<16x38xf32>
    %832 = vector.broadcast %3 : vector<1x38xf32> to vector<16x38xf32>
    %833 = arith.mulf %831, %832 : vector<16x38xf32>
    %834 = vector.broadcast %4 : vector<1x38xf32> to vector<16x38xf32>
    %835 = arith.addf %833, %834 : vector<16x38xf32>
    %c2_358 = arith.constant 2 : index
    %836 = memref.load %arg9[%c2_358] : memref<4xf32, #tpu.memory_space<smem>>
    %cst_359 = arith.constant 0.000000e+00 : f32
    %837 = vector.broadcast %cst_359 : f32 to vector<16x38xf32>
    %838 = arith.cmpf ogt, %835, %837 : vector<16x38xf32>
    %839 = vector.broadcast %836 : f32 to vector<16x38xf32>
    %840 = arith.mulf %839, %835 : vector<16x38xf32>
    %841 = arith.select %838, %835, %840 : vector<16x38xi1>, vector<16x38xf32>
    %c32_360 = arith.constant 32 : index
    %c0_361 = arith.constant 0 : index
    %842 = vector.load %arg12[%c32_360, %c0_361] : memref<128x38xf32, #tpu.memory_space<vmem>>, vector<16x38xf32>
    tpu.vector_store %arg12[%c32_360, %c0_361], %841 {strides = array<i32>} : memref<128x38xf32, #tpu.memory_space<vmem>>, vector<16x38xf32>,
    %843 = vector.broadcast %788 : vector<16x1xf32> to vector<16x38xf32>
    %844 = arith.subf %756, %843 : vector<16x38xf32>
    %845 = vector.broadcast %797 : vector<16x1xf32> to vector<16x38xf32>
    %846 = arith.mulf %844, %845 : vector<16x38xf32>
    %847 = vector.broadcast %3 : vector<1x38xf32> to vector<16x38xf32>
    %848 = arith.mulf %846, %847 : vector<16x38xf32>
    %849 = vector.broadcast %4 : vector<1x38xf32> to vector<16x38xf32>
    %850 = arith.addf %848, %849 : vector<16x38xf32>
    %c3_362 = arith.constant 3 : index
    %851 = memref.load %arg9[%c3_362] : memref<4xf32, #tpu.memory_space<smem>>
    %cst_363 = arith.constant 0.000000e+00 : f32
    %852 = vector.broadcast %cst_363 : f32 to vector<16x38xf32>
    %853 = arith.cmpf ogt, %850, %852 : vector<16x38xf32>
    %854 = vector.broadcast %851 : f32 to vector<16x38xf32>
    %855 = arith.mulf %854, %850 : vector<16x38xf32>
    %856 = arith.select %853, %850, %855 : vector<16x38xi1>, vector<16x38xf32>
    %c48_364 = arith.constant 48 : index
    %c0_365 = arith.constant 0 : index
    %857 = vector.load %arg12[%c48_364, %c0_365] : memref<128x38xf32, #tpu.memory_space<vmem>>, vector<16x38xf32>
    tpu.vector_store %arg12[%c48_364, %c0_365], %856 {strides = array<i32>} : memref<128x38xf32, #tpu.memory_space<vmem>>, vector<16x38xf32>,
    %c64_366 = arith.constant 64 : index
    %c0_367 = arith.constant 0 : index
    %858 = vector.load %arg1[%c64_366, %c0_367] : memref<128x16xf32, #tpu.memory_space<vmem>>, vector<16x16xf32>
    %859 = vector.extract_strided_slice %858 {offsets = [0, 0], sizes = [16, 8], strides = [1, 1]} : vector<16x16xf32> to vector<16x8xf32>
    %860 = vector.extract_strided_slice %858 {offsets = [0, 8], sizes = [16, 8], strides = [1, 1]} : vector<16x16xf32> to vector<16x8xf32>
    %c0_368 = arith.constant 0 : index
    %c1_369 = arith.constant 1 : index
    %c1_370 = arith.constant 1 : index
    %861 = vector.load %arg11[%c0_368, %c1_369, %c1_370] : memref<4x18x40xf32, #tpu.memory_space<vmem>>, vector<1x16x8xf32>
    %862 = vector.shape_cast %861 : vector<1x16x8xf32> to vector<16x8xf32>
    %863 = vector.shape_cast %859 : vector<16x8xf32> to vector<1x16x8xf32>
    tpu.vector_store %arg11[%c0_368, %c1_369, %c1_370], %863 {strides = array<i32>} : memref<4x18x40xf32, #tpu.memory_space<vmem>>, vector<1x16x8xf32>,
    %c0_371 = arith.constant 0 : index
    %c1_372 = arith.constant 1 : index
    %c11_373 = arith.constant 11 : index
    %864 = vector.load %arg11[%c0_371, %c1_372, %c11_373] : memref<4x18x40xf32, #tpu.memory_space<vmem>>, vector<1x16x8xf32>
    %865 = vector.shape_cast %864 : vector<1x16x8xf32> to vector<16x8xf32>
    %866 = vector.shape_cast %860 : vector<16x8xf32> to vector<1x16x8xf32>
    tpu.vector_store %arg11[%c0_371, %c1_372, %c11_373], %866 {strides = array<i32>} : memref<4x18x40xf32, #tpu.memory_space<vmem>>, vector<1x16x8xf32>,
    %c0_374 = arith.constant 0 : index
    %c1_375 = arith.constant 1 : index
    %c21_376 = arith.constant 21 : index
    %867 = vector.load %arg11[%c0_374, %c1_375, %c21_376] : memref<4x18x40xf32, #tpu.memory_space<vmem>>, vector<1x16x8xf32>
    %868 = vector.shape_cast %867 : vector<1x16x8xf32> to vector<16x8xf32>
    %869 = vector.shape_cast %860 : vector<16x8xf32> to vector<1x16x8xf32>
    tpu.vector_store %arg11[%c0_374, %c1_375, %c21_376], %869 {strides = array<i32>} : memref<4x18x40xf32, #tpu.memory_space<vmem>>, vector<1x16x8xf32>,
    %c0_377 = arith.constant 0 : index
    %c1_378 = arith.constant 1 : index
    %c31_379 = arith.constant 31 : index
    %870 = vector.load %arg11[%c0_377, %c1_378, %c31_379] : memref<4x18x40xf32, #tpu.memory_space<vmem>>, vector<1x16x8xf32>
    %871 = vector.shape_cast %870 : vector<1x16x8xf32> to vector<16x8xf32>
    %872 = vector.shape_cast %860 : vector<16x8xf32> to vector<1x16x8xf32>
    tpu.vector_store %arg11[%c0_377, %c1_378, %c31_379], %872 {strides = array<i32>} : memref<4x18x40xf32, #tpu.memory_space<vmem>>, vector<1x16x8xf32>,
    %c80_380 = arith.constant 80 : index
    %c0_381 = arith.constant 0 : index
    %873 = vector.load %arg1[%c80_380, %c0_381] : memref<128x16xf32, #tpu.memory_space<vmem>>, vector<16x16xf32>
    %874 = vector.extract_strided_slice %873 {offsets = [0, 0], sizes = [16, 8], strides = [1, 1]} : vector<16x16xf32> to vector<16x8xf32>
    %875 = vector.extract_strided_slice %873 {offsets = [0, 8], sizes = [16, 8], strides = [1, 1]} : vector<16x16xf32> to vector<16x8xf32>
    %c1_382 = arith.constant 1 : index
    %c1_383 = arith.constant 1 : index
    %c1_384 = arith.constant 1 : index
    %876 = vector.load %arg11[%c1_382, %c1_383, %c1_384] : memref<4x18x40xf32, #tpu.memory_space<vmem>>, vector<1x16x8xf32>
    %877 = vector.shape_cast %876 : vector<1x16x8xf32> to vector<16x8xf32>
    %878 = vector.shape_cast %874 : vector<16x8xf32> to vector<1x16x8xf32>
    tpu.vector_store %arg11[%c1_382, %c1_383, %c1_384], %878 {strides = array<i32>} : memref<4x18x40xf32, #tpu.memory_space<vmem>>, vector<1x16x8xf32>,
    %c1_385 = arith.constant 1 : index
    %c1_386 = arith.constant 1 : index
    %c11_387 = arith.constant 11 : index
    %879 = vector.load %arg11[%c1_385, %c1_386, %c11_387] : memref<4x18x40xf32, #tpu.memory_space<vmem>>, vector<1x16x8xf32>
    %880 = vector.shape_cast %879 : vector<1x16x8xf32> to vector<16x8xf32>
    %881 = vector.shape_cast %875 : vector<16x8xf32> to vector<1x16x8xf32>
    tpu.vector_store %arg11[%c1_385, %c1_386, %c11_387], %881 {strides = array<i32>} : memref<4x18x40xf32, #tpu.memory_space<vmem>>, vector<1x16x8xf32>,
    %c1_388 = arith.constant 1 : index
    %c1_389 = arith.constant 1 : index
    %c21_390 = arith.constant 21 : index
    %882 = vector.load %arg11[%c1_388, %c1_389, %c21_390] : memref<4x18x40xf32, #tpu.memory_space<vmem>>, vector<1x16x8xf32>
    %883 = vector.shape_cast %882 : vector<1x16x8xf32> to vector<16x8xf32>
    %884 = vector.shape_cast %875 : vector<16x8xf32> to vector<1x16x8xf32>
    tpu.vector_store %arg11[%c1_388, %c1_389, %c21_390], %884 {strides = array<i32>} : memref<4x18x40xf32, #tpu.memory_space<vmem>>, vector<1x16x8xf32>,
    %c1_391 = arith.constant 1 : index
    %c1_392 = arith.constant 1 : index
    %c31_393 = arith.constant 31 : index
    %885 = vector.load %arg11[%c1_391, %c1_392, %c31_393] : memref<4x18x40xf32, #tpu.memory_space<vmem>>, vector<1x16x8xf32>
    %886 = vector.shape_cast %885 : vector<1x16x8xf32> to vector<16x8xf32>
    %887 = vector.shape_cast %875 : vector<16x8xf32> to vector<1x16x8xf32>
    tpu.vector_store %arg11[%c1_391, %c1_392, %c31_393], %887 {strides = array<i32>} : memref<4x18x40xf32, #tpu.memory_space<vmem>>, vector<1x16x8xf32>,
    %c96_394 = arith.constant 96 : index
    %c0_395 = arith.constant 0 : index
    %888 = vector.load %arg1[%c96_394, %c0_395] : memref<128x16xf32, #tpu.memory_space<vmem>>, vector<16x16xf32>
    %889 = vector.extract_strided_slice %888 {offsets = [0, 0], sizes = [16, 8], strides = [1, 1]} : vector<16x16xf32> to vector<16x8xf32>
    %890 = vector.extract_strided_slice %888 {offsets = [0, 8], sizes = [16, 8], strides = [1, 1]} : vector<16x16xf32> to vector<16x8xf32>
    %c2_396 = arith.constant 2 : index
    %c1_397 = arith.constant 1 : index
    %c1_398 = arith.constant 1 : index
    %891 = vector.load %arg11[%c2_396, %c1_397, %c1_398] : memref<4x18x40xf32, #tpu.memory_space<vmem>>, vector<1x16x8xf32>
    %892 = vector.shape_cast %891 : vector<1x16x8xf32> to vector<16x8xf32>
    %893 = vector.shape_cast %889 : vector<16x8xf32> to vector<1x16x8xf32>
    tpu.vector_store %arg11[%c2_396, %c1_397, %c1_398], %893 {strides = array<i32>} : memref<4x18x40xf32, #tpu.memory_space<vmem>>, vector<1x16x8xf32>,
    %c2_399 = arith.constant 2 : index
    %c1_400 = arith.constant 1 : index
    %c11_401 = arith.constant 11 : index
    %894 = vector.load %arg11[%c2_399, %c1_400, %c11_401] : memref<4x18x40xf32, #tpu.memory_space<vmem>>, vector<1x16x8xf32>
    %895 = vector.shape_cast %894 : vector<1x16x8xf32> to vector<16x8xf32>
    %896 = vector.shape_cast %890 : vector<16x8xf32> to vector<1x16x8xf32>
    tpu.vector_store %arg11[%c2_399, %c1_400, %c11_401], %896 {strides = array<i32>} : memref<4x18x40xf32, #tpu.memory_space<vmem>>, vector<1x16x8xf32>,
    %c2_402 = arith.constant 2 : index
    %c1_403 = arith.constant 1 : index
    %c21_404 = arith.constant 21 : index
    %897 = vector.load %arg11[%c2_402, %c1_403, %c21_404] : memref<4x18x40xf32, #tpu.memory_space<vmem>>, vector<1x16x8xf32>
    %898 = vector.shape_cast %897 : vector<1x16x8xf32> to vector<16x8xf32>
    %899 = vector.shape_cast %890 : vector<16x8xf32> to vector<1x16x8xf32>
    tpu.vector_store %arg11[%c2_402, %c1_403, %c21_404], %899 {strides = array<i32>} : memref<4x18x40xf32, #tpu.memory_space<vmem>>, vector<1x16x8xf32>,
    %c2_405 = arith.constant 2 : index
    %c1_406 = arith.constant 1 : index
    %c31_407 = arith.constant 31 : index
    %900 = vector.load %arg11[%c2_405, %c1_406, %c31_407] : memref<4x18x40xf32, #tpu.memory_space<vmem>>, vector<1x16x8xf32>
    %901 = vector.shape_cast %900 : vector<1x16x8xf32> to vector<16x8xf32>
    %902 = vector.shape_cast %890 : vector<16x8xf32> to vector<1x16x8xf32>
    tpu.vector_store %arg11[%c2_405, %c1_406, %c31_407], %902 {strides = array<i32>} : memref<4x18x40xf32, #tpu.memory_space<vmem>>, vector<1x16x8xf32>,
    %c112_408 = arith.constant 112 : index
    %c0_409 = arith.constant 0 : index
    %903 = vector.load %arg1[%c112_408, %c0_409] : memref<128x16xf32, #tpu.memory_space<vmem>>, vector<16x16xf32>
    %904 = vector.extract_strided_slice %903 {offsets = [0, 0], sizes = [16, 8], strides = [1, 1]} : vector<16x16xf32> to vector<16x8xf32>
    %905 = vector.extract_strided_slice %903 {offsets = [0, 8], sizes = [16, 8], strides = [1, 1]} : vector<16x16xf32> to vector<16x8xf32>
    %c3_410 = arith.constant 3 : index
    %c1_411 = arith.constant 1 : index
    %c1_412 = arith.constant 1 : index
    %906 = vector.load %arg11[%c3_410, %c1_411, %c1_412] : memref<4x18x40xf32, #tpu.memory_space<vmem>>, vector<1x16x8xf32>
    %907 = vector.shape_cast %906 : vector<1x16x8xf32> to vector<16x8xf32>
    %908 = vector.shape_cast %904 : vector<16x8xf32> to vector<1x16x8xf32>
    tpu.vector_store %arg11[%c3_410, %c1_411, %c1_412], %908 {strides = array<i32>} : memref<4x18x40xf32, #tpu.memory_space<vmem>>, vector<1x16x8xf32>,
    %c3_413 = arith.constant 3 : index
    %c1_414 = arith.constant 1 : index
    %c11_415 = arith.constant 11 : index
    %909 = vector.load %arg11[%c3_413, %c1_414, %c11_415] : memref<4x18x40xf32, #tpu.memory_space<vmem>>, vector<1x16x8xf32>
    %910 = vector.shape_cast %909 : vector<1x16x8xf32> to vector<16x8xf32>
    %911 = vector.shape_cast %905 : vector<16x8xf32> to vector<1x16x8xf32>
    tpu.vector_store %arg11[%c3_413, %c1_414, %c11_415], %911 {strides = array<i32>} : memref<4x18x40xf32, #tpu.memory_space<vmem>>, vector<1x16x8xf32>,
    %c3_416 = arith.constant 3 : index
    %c1_417 = arith.constant 1 : index
    %c21_418 = arith.constant 21 : index
    %912 = vector.load %arg11[%c3_416, %c1_417, %c21_418] : memref<4x18x40xf32, #tpu.memory_space<vmem>>, vector<1x16x8xf32>
    %913 = vector.shape_cast %912 : vector<1x16x8xf32> to vector<16x8xf32>
    %914 = vector.shape_cast %905 : vector<16x8xf32> to vector<1x16x8xf32>
    tpu.vector_store %arg11[%c3_416, %c1_417, %c21_418], %914 {strides = array<i32>} : memref<4x18x40xf32, #tpu.memory_space<vmem>>, vector<1x16x8xf32>,
    %c3_419 = arith.constant 3 : index
    %c1_420 = arith.constant 1 : index
    %c31_421 = arith.constant 31 : index
    %915 = vector.load %arg11[%c3_419, %c1_420, %c31_421] : memref<4x18x40xf32, #tpu.memory_space<vmem>>, vector<1x16x8xf32>
    %916 = vector.shape_cast %915 : vector<1x16x8xf32> to vector<16x8xf32>
    %917 = vector.shape_cast %905 : vector<16x8xf32> to vector<1x16x8xf32>
    tpu.vector_store %arg11[%c3_419, %c1_420, %c31_421], %917 {strides = array<i32>} : memref<4x18x40xf32, #tpu.memory_space<vmem>>, vector<1x16x8xf32>,
    %c2_i32_422 = arith.constant 2 : i32
    %918 = arith.muli %arg0, %c2_i32_422 : i32
    %c1_i32_423 = arith.constant 1 : i32
    %919 = arith.addi %918, %c1_i32_423 : i32
    %c4_i32_424 = arith.constant 4 : i32
    %920 = arith.muli %919, %c4_i32_424 : i32
    %c0_i32_425 = arith.constant 0 : i32
    %921 = arith.addi %920, %c0_i32_425 : i32
    %922 = arith.index_cast %921 : i32 to index
    %923 = memref.load %arg8[%922] : memref<16xf32, #tpu.memory_space<smem>>
    %c0_426 = arith.constant 0 : index
    %c0_427 = arith.constant 0 : index
    %924 = vector.load %arg3[%c0_426, %c0_427] : memref<4x38xf32, #tpu.memory_space<vmem>>, vector<1x38xf32>
    %925 = vector.broadcast %923 : f32 to vector<1x38xf32>
    %926 = arith.mulf %925, %2 : vector<1x38xf32>
    %927 = arith.addf %924, %926 : vector<1x38xf32>
    %c2_i32_428 = arith.constant 2 : i32
    %928 = arith.muli %arg0, %c2_i32_428 : i32
    %c1_i32_429 = arith.constant 1 : i32
    %929 = arith.addi %928, %c1_i32_429 : i32
    %c4_i32_430 = arith.constant 4 : i32
    %930 = arith.muli %929, %c4_i32_430 : i32
    %c1_i32_431 = arith.constant 1 : i32
    %931 = arith.addi %930, %c1_i32_431 : i32
    %932 = arith.index_cast %931 : i32 to index
    %933 = memref.load %arg8[%932] : memref<16xf32, #tpu.memory_space<smem>>
    %c1_432 = arith.constant 1 : index
    %c0_433 = arith.constant 0 : index
    %934 = vector.load %arg3[%c1_432, %c0_433] : memref<4x38xf32, #tpu.memory_space<vmem>>, vector<1x38xf32>
    %935 = vector.broadcast %933 : f32 to vector<1x38xf32>
    %936 = arith.mulf %935, %2 : vector<1x38xf32>
    %937 = arith.addf %934, %936 : vector<1x38xf32>
    %c2_i32_434 = arith.constant 2 : i32
    %938 = arith.muli %arg0, %c2_i32_434 : i32
    %c1_i32_435 = arith.constant 1 : i32
    %939 = arith.addi %938, %c1_i32_435 : i32
    %c4_i32_436 = arith.constant 4 : i32
    %940 = arith.muli %939, %c4_i32_436 : i32
    %c2_i32_437 = arith.constant 2 : i32
    %941 = arith.addi %940, %c2_i32_437 : i32
    %942 = arith.index_cast %941 : i32 to index
    %943 = memref.load %arg8[%942] : memref<16xf32, #tpu.memory_space<smem>>
    %c2_438 = arith.constant 2 : index
    %c0_439 = arith.constant 0 : index
    %944 = vector.load %arg3[%c2_438, %c0_439] : memref<4x38xf32, #tpu.memory_space<vmem>>, vector<1x38xf32>
    %945 = vector.broadcast %943 : f32 to vector<1x38xf32>
    %946 = arith.mulf %945, %2 : vector<1x38xf32>
    %947 = arith.addf %944, %946 : vector<1x38xf32>
    %c2_i32_440 = arith.constant 2 : i32
    %948 = arith.muli %arg0, %c2_i32_440 : i32
    %c1_i32_441 = arith.constant 1 : i32
    %949 = arith.addi %948, %c1_i32_441 : i32
    %c4_i32_442 = arith.constant 4 : i32
    %950 = arith.muli %949, %c4_i32_442 : i32
    %c3_i32_443 = arith.constant 3 : i32
    %951 = arith.addi %950, %c3_i32_443 : i32
    %952 = arith.index_cast %951 : i32 to index
    %953 = memref.load %arg8[%952] : memref<16xf32, #tpu.memory_space<smem>>
    %c3_444 = arith.constant 3 : index
    %c0_445 = arith.constant 0 : index
    %954 = vector.load %arg3[%c3_444, %c0_445] : memref<4x38xf32, #tpu.memory_space<vmem>>, vector<1x38xf32>
    %955 = vector.broadcast %953 : f32 to vector<1x38xf32>
    %956 = arith.mulf %955, %2 : vector<1x38xf32>
    %957 = arith.addf %954, %956 : vector<1x38xf32>
    %c0_446 = arith.constant 0 : index
    %c0_447 = arith.constant 0 : index
    %c0_448 = arith.constant 0 : index
    %958 = vector.load %arg11[%c0_446, %c0_447, %c0_448] : memref<4x18x40xf32, #tpu.memory_space<vmem>>, vector<1x16x38xf32>
    %959 = vector.shape_cast %958 : vector<1x16x38xf32> to vector<16x38xf32>
    %c0_449 = arith.constant 0 : index
    %c0_450 = arith.constant 0 : index
    %960 = vector.load %arg2[%c0_449, %c0_450] : memref<144x38xf32, #tpu.memory_space<vmem>>, vector<1x38xf32>
    %961 = vector.broadcast %960 : vector<1x38xf32> to vector<16x38xf32>
    %962 = arith.mulf %959, %961 : vector<16x38xf32>
    %963 = vector.broadcast %927 : vector<1x38xf32> to vector<16x38xf32>
    %964 = arith.addf %963, %962 : vector<16x38xf32>
    %c36_451 = arith.constant 36 : index
    %c0_452 = arith.constant 0 : index
    %965 = vector.load %arg2[%c36_451, %c0_452] : memref<144x38xf32, #tpu.memory_space<vmem>>, vector<1x38xf32>
    %966 = vector.broadcast %965 : vector<1x38xf32> to vector<16x38xf32>
    %967 = arith.mulf %959, %966 : vector<16x38xf32>
    %968 = vector.broadcast %937 : vector<1x38xf32> to vector<16x38xf32>
    %969 = arith.addf %968, %967 : vector<16x38xf32>
    %c72_453 = arith.constant 72 : index
    %c0_454 = arith.constant 0 : index
    %970 = vector.load %arg2[%c72_453, %c0_454] : memref<144x38xf32, #tpu.memory_space<vmem>>, vector<1x38xf32>
    %971 = vector.broadcast %970 : vector<1x38xf32> to vector<16x38xf32>
    %972 = arith.mulf %959, %971 : vector<16x38xf32>
    %973 = vector.broadcast %947 : vector<1x38xf32> to vector<16x38xf32>
    %974 = arith.addf %973, %972 : vector<16x38xf32>
    %c108_455 = arith.constant 108 : index
    %c0_456 = arith.constant 0 : index
    %975 = vector.load %arg2[%c108_455, %c0_456] : memref<144x38xf32, #tpu.memory_space<vmem>>, vector<1x38xf32>
    %976 = vector.broadcast %975 : vector<1x38xf32> to vector<16x38xf32>
    %977 = arith.mulf %959, %976 : vector<16x38xf32>
    %978 = vector.broadcast %957 : vector<1x38xf32> to vector<16x38xf32>
    %979 = arith.addf %978, %977 : vector<16x38xf32>
    %c0_457 = arith.constant 0 : index
    %c0_458 = arith.constant 0 : index
    %c1_459 = arith.constant 1 : index
    %980 = vector.load %arg11[%c0_457, %c0_458, %c1_459] : memref<4x18x40xf32, #tpu.memory_space<vmem>>, vector<1x16x38xf32>
    %981 = vector.shape_cast %980 : vector<1x16x38xf32> to vector<16x38xf32>
    %c1_460 = arith.constant 1 : index
    %c0_461 = arith.constant 0 : index
    %982 = vector.load %arg2[%c1_460, %c0_461] : memref<144x38xf32, #tpu.memory_space<vmem>>, vector<1x38xf32>
    %983 = vector.broadcast %982 : vector<1x38xf32> to vector<16x38xf32>
    %984 = arith.mulf %981, %983 : vector<16x38xf32>
    %985 = arith.addf %964, %984 : vector<16x38xf32>
    %c37_462 = arith.constant 37 : index
    %c0_463 = arith.constant 0 : index
    %986 = vector.load %arg2[%c37_462, %c0_463] : memref<144x38xf32, #tpu.memory_space<vmem>>, vector<1x38xf32>
    %987 = vector.broadcast %986 : vector<1x38xf32> to vector<16x38xf32>
    %988 = arith.mulf %981, %987 : vector<16x38xf32>
    %989 = arith.addf %969, %988 : vector<16x38xf32>
    %c73_464 = arith.constant 73 : index
    %c0_465 = arith.constant 0 : index
    %990 = vector.load %arg2[%c73_464, %c0_465] : memref<144x38xf32, #tpu.memory_space<vmem>>, vector<1x38xf32>
    %991 = vector.broadcast %990 : vector<1x38xf32> to vector<16x38xf32>
    %992 = arith.mulf %981, %991 : vector<16x38xf32>
    %993 = arith.addf %974, %992 : vector<16x38xf32>
    %c109_466 = arith.constant 109 : index
    %c0_467 = arith.constant 0 : index
    %994 = vector.load %arg2[%c109_466, %c0_467] : memref<144x38xf32, #tpu.memory_space<vmem>>, vector<1x38xf32>
    %995 = vector.broadcast %994 : vector<1x38xf32> to vector<16x38xf32>
    %996 = arith.mulf %981, %995 : vector<16x38xf32>
    %997 = arith.addf %979, %996 : vector<16x38xf32>
    %c0_468 = arith.constant 0 : index
    %c0_469 = arith.constant 0 : index
    %c2_470 = arith.constant 2 : index
    %998 = vector.load %arg11[%c0_468, %c0_469, %c2_470] : memref<4x18x40xf32, #tpu.memory_space<vmem>>, vector<1x16x38xf32>
    %999 = vector.shape_cast %998 : vector<1x16x38xf32> to vector<16x38xf32>
    %c2_471 = arith.constant 2 : index
    %c0_472 = arith.constant 0 : index
    %1000 = vector.load %arg2[%c2_471, %c0_472] : memref<144x38xf32, #tpu.memory_space<vmem>>, vector<1x38xf32>
    %1001 = vector.broadcast %1000 : vector<1x38xf32> to vector<16x38xf32>
    %1002 = arith.mulf %999, %1001 : vector<16x38xf32>
    %1003 = arith.addf %985, %1002 : vector<16x38xf32>
    %c38_473 = arith.constant 38 : index
    %c0_474 = arith.constant 0 : index
    %1004 = vector.load %arg2[%c38_473, %c0_474] : memref<144x38xf32, #tpu.memory_space<vmem>>, vector<1x38xf32>
    %1005 = vector.broadcast %1004 : vector<1x38xf32> to vector<16x38xf32>
    %1006 = arith.mulf %999, %1005 : vector<16x38xf32>
    %1007 = arith.addf %989, %1006 : vector<16x38xf32>
    %c74_475 = arith.constant 74 : index
    %c0_476 = arith.constant 0 : index
    %1008 = vector.load %arg2[%c74_475, %c0_476] : memref<144x38xf32, #tpu.memory_space<vmem>>, vector<1x38xf32>
    %1009 = vector.broadcast %1008 : vector<1x38xf32> to vector<16x38xf32>
    %1010 = arith.mulf %999, %1009 : vector<16x38xf32>
    %1011 = arith.addf %993, %1010 : vector<16x38xf32>
    %c110_477 = arith.constant 110 : index
    %c0_478 = arith.constant 0 : index
    %1012 = vector.load %arg2[%c110_477, %c0_478] : memref<144x38xf32, #tpu.memory_space<vmem>>, vector<1x38xf32>
    %1013 = vector.broadcast %1012 : vector<1x38xf32> to vector<16x38xf32>
    %1014 = arith.mulf %999, %1013 : vector<16x38xf32>
    %1015 = arith.addf %997, %1014 : vector<16x38xf32>
    %c0_479 = arith.constant 0 : index
    %c1_480 = arith.constant 1 : index
    %c0_481 = arith.constant 0 : index
    %1016 = vector.load %arg11[%c0_479, %c1_480, %c0_481] : memref<4x18x40xf32, #tpu.memory_space<vmem>>, vector<1x16x38xf32>
    %1017 = vector.shape_cast %1016 : vector<1x16x38xf32> to vector<16x38xf32>
    %c3_482 = arith.constant 3 : index
    %c0_483 = arith.constant 0 : index
    %1018 = vector.load %arg2[%c3_482, %c0_483] : memref<144x38xf32, #tpu.memory_space<vmem>>, vector<1x38xf32>
    %1019 = vector.broadcast %1018 : vector<1x38xf32> to vector<16x38xf32>
    %1020 = arith.mulf %1017, %1019 : vector<16x38xf32>
    %1021 = arith.addf %1003, %1020 : vector<16x38xf32>
    %c39_484 = arith.constant 39 : index
    %c0_485 = arith.constant 0 : index
    %1022 = vector.load %arg2[%c39_484, %c0_485] : memref<144x38xf32, #tpu.memory_space<vmem>>, vector<1x38xf32>
    %1023 = vector.broadcast %1022 : vector<1x38xf32> to vector<16x38xf32>
    %1024 = arith.mulf %1017, %1023 : vector<16x38xf32>
    %1025 = arith.addf %1007, %1024 : vector<16x38xf32>
    %c75_486 = arith.constant 75 : index
    %c0_487 = arith.constant 0 : index
    %1026 = vector.load %arg2[%c75_486, %c0_487] : memref<144x38xf32, #tpu.memory_space<vmem>>, vector<1x38xf32>
    %1027 = vector.broadcast %1026 : vector<1x38xf32> to vector<16x38xf32>
    %1028 = arith.mulf %1017, %1027 : vector<16x38xf32>
    %1029 = arith.addf %1011, %1028 : vector<16x38xf32>
    %c111_488 = arith.constant 111 : index
    %c0_489 = arith.constant 0 : index
    %1030 = vector.load %arg2[%c111_488, %c0_489] : memref<144x38xf32, #tpu.memory_space<vmem>>, vector<1x38xf32>
    %1031 = vector.broadcast %1030 : vector<1x38xf32> to vector<16x38xf32>
    %1032 = arith.mulf %1017, %1031 : vector<16x38xf32>
    %1033 = arith.addf %1015, %1032 : vector<16x38xf32>
    %c0_490 = arith.constant 0 : index
    %c1_491 = arith.constant 1 : index
    %c1_492 = arith.constant 1 : index
    %1034 = vector.load %arg11[%c0_490, %c1_491, %c1_492] : memref<4x18x40xf32, #tpu.memory_space<vmem>>, vector<1x16x38xf32>
    %1035 = vector.shape_cast %1034 : vector<1x16x38xf32> to vector<16x38xf32>
    %c4_493 = arith.constant 4 : index
    %c0_494 = arith.constant 0 : index
    %1036 = vector.load %arg2[%c4_493, %c0_494] : memref<144x38xf32, #tpu.memory_space<vmem>>, vector<1x38xf32>
    %1037 = vector.broadcast %1036 : vector<1x38xf32> to vector<16x38xf32>
    %1038 = arith.mulf %1035, %1037 : vector<16x38xf32>
    %1039 = arith.addf %1021, %1038 : vector<16x38xf32>
    %c40_495 = arith.constant 40 : index
    %c0_496 = arith.constant 0 : index
    %1040 = vector.load %arg2[%c40_495, %c0_496] : memref<144x38xf32, #tpu.memory_space<vmem>>, vector<1x38xf32>
    %1041 = vector.broadcast %1040 : vector<1x38xf32> to vector<16x38xf32>
    %1042 = arith.mulf %1035, %1041 : vector<16x38xf32>
    %1043 = arith.addf %1025, %1042 : vector<16x38xf32>
    %c76_497 = arith.constant 76 : index
    %c0_498 = arith.constant 0 : index
    %1044 = vector.load %arg2[%c76_497, %c0_498] : memref<144x38xf32, #tpu.memory_space<vmem>>, vector<1x38xf32>
    %1045 = vector.broadcast %1044 : vector<1x38xf32> to vector<16x38xf32>
    %1046 = arith.mulf %1035, %1045 : vector<16x38xf32>
    %1047 = arith.addf %1029, %1046 : vector<16x38xf32>
    %c112_499 = arith.constant 112 : index
    %c0_500 = arith.constant 0 : index
    %1048 = vector.load %arg2[%c112_499, %c0_500] : memref<144x38xf32, #tpu.memory_space<vmem>>, vector<1x38xf32>
    %1049 = vector.broadcast %1048 : vector<1x38xf32> to vector<16x38xf32>
    %1050 = arith.mulf %1035, %1049 : vector<16x38xf32>
    %1051 = arith.addf %1033, %1050 : vector<16x38xf32>
    %c0_501 = arith.constant 0 : index
    %c1_502 = arith.constant 1 : index
    %c2_503 = arith.constant 2 : index
    %1052 = vector.load %arg11[%c0_501, %c1_502, %c2_503] : memref<4x18x40xf32, #tpu.memory_space<vmem>>, vector<1x16x38xf32>
    %1053 = vector.shape_cast %1052 : vector<1x16x38xf32> to vector<16x38xf32>
    %c5_504 = arith.constant 5 : index
    %c0_505 = arith.constant 0 : index
    %1054 = vector.load %arg2[%c5_504, %c0_505] : memref<144x38xf32, #tpu.memory_space<vmem>>, vector<1x38xf32>
    %1055 = vector.broadcast %1054 : vector<1x38xf32> to vector<16x38xf32>
    %1056 = arith.mulf %1053, %1055 : vector<16x38xf32>
    %1057 = arith.addf %1039, %1056 : vector<16x38xf32>
    %c41_506 = arith.constant 41 : index
    %c0_507 = arith.constant 0 : index
    %1058 = vector.load %arg2[%c41_506, %c0_507] : memref<144x38xf32, #tpu.memory_space<vmem>>, vector<1x38xf32>
    %1059 = vector.broadcast %1058 : vector<1x38xf32> to vector<16x38xf32>
    %1060 = arith.mulf %1053, %1059 : vector<16x38xf32>
    %1061 = arith.addf %1043, %1060 : vector<16x38xf32>
    %c77_508 = arith.constant 77 : index
    %c0_509 = arith.constant 0 : index
    %1062 = vector.load %arg2[%c77_508, %c0_509] : memref<144x38xf32, #tpu.memory_space<vmem>>, vector<1x38xf32>
    %1063 = vector.broadcast %1062 : vector<1x38xf32> to vector<16x38xf32>
    %1064 = arith.mulf %1053, %1063 : vector<16x38xf32>
    %1065 = arith.addf %1047, %1064 : vector<16x38xf32>
    %c113_510 = arith.constant 113 : index
    %c0_511 = arith.constant 0 : index
    %1066 = vector.load %arg2[%c113_510, %c0_511] : memref<144x38xf32, #tpu.memory_space<vmem>>, vector<1x38xf32>
    %1067 = vector.broadcast %1066 : vector<1x38xf32> to vector<16x38xf32>
    %1068 = arith.mulf %1053, %1067 : vector<16x38xf32>
    %1069 = arith.addf %1051, %1068 : vector<16x38xf32>
    %c0_512 = arith.constant 0 : index
    %c2_513 = arith.constant 2 : index
    %c0_514 = arith.constant 0 : index
    %1070 = vector.load %arg11[%c0_512, %c2_513, %c0_514] : memref<4x18x40xf32, #tpu.memory_space<vmem>>, vector<1x16x38xf32>
    %1071 = vector.shape_cast %1070 : vector<1x16x38xf32> to vector<16x38xf32>
    %c6_515 = arith.constant 6 : index
    %c0_516 = arith.constant 0 : index
    %1072 = vector.load %arg2[%c6_515, %c0_516] : memref<144x38xf32, #tpu.memory_space<vmem>>, vector<1x38xf32>
    %1073 = vector.broadcast %1072 : vector<1x38xf32> to vector<16x38xf32>
    %1074 = arith.mulf %1071, %1073 : vector<16x38xf32>
    %1075 = arith.addf %1057, %1074 : vector<16x38xf32>
    %c42_517 = arith.constant 42 : index
    %c0_518 = arith.constant 0 : index
    %1076 = vector.load %arg2[%c42_517, %c0_518] : memref<144x38xf32, #tpu.memory_space<vmem>>, vector<1x38xf32>
    %1077 = vector.broadcast %1076 : vector<1x38xf32> to vector<16x38xf32>
    %1078 = arith.mulf %1071, %1077 : vector<16x38xf32>
    %1079 = arith.addf %1061, %1078 : vector<16x38xf32>
    %c78_519 = arith.constant 78 : index
    %c0_520 = arith.constant 0 : index
    %1080 = vector.load %arg2[%c78_519, %c0_520] : memref<144x38xf32, #tpu.memory_space<vmem>>, vector<1x38xf32>
    %1081 = vector.broadcast %1080 : vector<1x38xf32> to vector<16x38xf32>
    %1082 = arith.mulf %1071, %1081 : vector<16x38xf32>
    %1083 = arith.addf %1065, %1082 : vector<16x38xf32>
    %c114_521 = arith.constant 114 : index
    %c0_522 = arith.constant 0 : index
    %1084 = vector.load %arg2[%c114_521, %c0_522] : memref<144x38xf32, #tpu.memory_space<vmem>>, vector<1x38xf32>
    %1085 = vector.broadcast %1084 : vector<1x38xf32> to vector<16x38xf32>
    %1086 = arith.mulf %1071, %1085 : vector<16x38xf32>
    %1087 = arith.addf %1069, %1086 : vector<16x38xf32>
    %c0_523 = arith.constant 0 : index
    %c2_524 = arith.constant 2 : index
    %c1_525 = arith.constant 1 : index
    %1088 = vector.load %arg11[%c0_523, %c2_524, %c1_525] : memref<4x18x40xf32, #tpu.memory_space<vmem>>, vector<1x16x38xf32>
    %1089 = vector.shape_cast %1088 : vector<1x16x38xf32> to vector<16x38xf32>
    %c7_526 = arith.constant 7 : index
    %c0_527 = arith.constant 0 : index
    %1090 = vector.load %arg2[%c7_526, %c0_527] : memref<144x38xf32, #tpu.memory_space<vmem>>, vector<1x38xf32>
    %1091 = vector.broadcast %1090 : vector<1x38xf32> to vector<16x38xf32>
    %1092 = arith.mulf %1089, %1091 : vector<16x38xf32>
    %1093 = arith.addf %1075, %1092 : vector<16x38xf32>
    %c43_528 = arith.constant 43 : index
    %c0_529 = arith.constant 0 : index
    %1094 = vector.load %arg2[%c43_528, %c0_529] : memref<144x38xf32, #tpu.memory_space<vmem>>, vector<1x38xf32>
    %1095 = vector.broadcast %1094 : vector<1x38xf32> to vector<16x38xf32>
    %1096 = arith.mulf %1089, %1095 : vector<16x38xf32>
    %1097 = arith.addf %1079, %1096 : vector<16x38xf32>
    %c79_530 = arith.constant 79 : index
    %c0_531 = arith.constant 0 : index
    %1098 = vector.load %arg2[%c79_530, %c0_531] : memref<144x38xf32, #tpu.memory_space<vmem>>, vector<1x38xf32>
    %1099 = vector.broadcast %1098 : vector<1x38xf32> to vector<16x38xf32>
    %1100 = arith.mulf %1089, %1099 : vector<16x38xf32>
    %1101 = arith.addf %1083, %1100 : vector<16x38xf32>
    %c115_532 = arith.constant 115 : index
    %c0_533 = arith.constant 0 : index
    %1102 = vector.load %arg2[%c115_532, %c0_533] : memref<144x38xf32, #tpu.memory_space<vmem>>, vector<1x38xf32>
    %1103 = vector.broadcast %1102 : vector<1x38xf32> to vector<16x38xf32>
    %1104 = arith.mulf %1089, %1103 : vector<16x38xf32>
    %1105 = arith.addf %1087, %1104 : vector<16x38xf32>
    %c0_534 = arith.constant 0 : index
    %c2_535 = arith.constant 2 : index
    %c2_536 = arith.constant 2 : index
    %1106 = vector.load %arg11[%c0_534, %c2_535, %c2_536] : memref<4x18x40xf32, #tpu.memory_space<vmem>>, vector<1x16x38xf32>
    %1107 = vector.shape_cast %1106 : vector<1x16x38xf32> to vector<16x38xf32>
    %c8_537 = arith.constant 8 : index
    %c0_538 = arith.constant 0 : index
    %1108 = vector.load %arg2[%c8_537, %c0_538] : memref<144x38xf32, #tpu.memory_space<vmem>>, vector<1x38xf32>
    %1109 = vector.broadcast %1108 : vector<1x38xf32> to vector<16x38xf32>
    %1110 = arith.mulf %1107, %1109 : vector<16x38xf32>
    %1111 = arith.addf %1093, %1110 : vector<16x38xf32>
    %c44_539 = arith.constant 44 : index
    %c0_540 = arith.constant 0 : index
    %1112 = vector.load %arg2[%c44_539, %c0_540] : memref<144x38xf32, #tpu.memory_space<vmem>>, vector<1x38xf32>
    %1113 = vector.broadcast %1112 : vector<1x38xf32> to vector<16x38xf32>
    %1114 = arith.mulf %1107, %1113 : vector<16x38xf32>
    %1115 = arith.addf %1097, %1114 : vector<16x38xf32>
    %c80_541 = arith.constant 80 : index
    %c0_542 = arith.constant 0 : index
    %1116 = vector.load %arg2[%c80_541, %c0_542] : memref<144x38xf32, #tpu.memory_space<vmem>>, vector<1x38xf32>
    %1117 = vector.broadcast %1116 : vector<1x38xf32> to vector<16x38xf32>
    %1118 = arith.mulf %1107, %1117 : vector<16x38xf32>
    %1119 = arith.addf %1101, %1118 : vector<16x38xf32>
    %c116_543 = arith.constant 116 : index
    %c0_544 = arith.constant 0 : index
    %1120 = vector.load %arg2[%c116_543, %c0_544] : memref<144x38xf32, #tpu.memory_space<vmem>>, vector<1x38xf32>
    %1121 = vector.broadcast %1120 : vector<1x38xf32> to vector<16x38xf32>
    %1122 = arith.mulf %1107, %1121 : vector<16x38xf32>
    %1123 = arith.addf %1105, %1122 : vector<16x38xf32>
    %c1_545 = arith.constant 1 : index
    %c0_546 = arith.constant 0 : index
    %c0_547 = arith.constant 0 : index
    %1124 = vector.load %arg11[%c1_545, %c0_546, %c0_547] : memref<4x18x40xf32, #tpu.memory_space<vmem>>, vector<1x16x38xf32>
    %1125 = vector.shape_cast %1124 : vector<1x16x38xf32> to vector<16x38xf32>
    %c9_548 = arith.constant 9 : index
    %c0_549 = arith.constant 0 : index
    %1126 = vector.load %arg2[%c9_548, %c0_549] : memref<144x38xf32, #tpu.memory_space<vmem>>, vector<1x38xf32>
    %1127 = vector.broadcast %1126 : vector<1x38xf32> to vector<16x38xf32>
    %1128 = arith.mulf %1125, %1127 : vector<16x38xf32>
    %1129 = arith.addf %1111, %1128 : vector<16x38xf32>
    %c45_550 = arith.constant 45 : index
    %c0_551 = arith.constant 0 : index
    %1130 = vector.load %arg2[%c45_550, %c0_551] : memref<144x38xf32, #tpu.memory_space<vmem>>, vector<1x38xf32>
    %1131 = vector.broadcast %1130 : vector<1x38xf32> to vector<16x38xf32>
    %1132 = arith.mulf %1125, %1131 : vector<16x38xf32>
    %1133 = arith.addf %1115, %1132 : vector<16x38xf32>
    %c81_552 = arith.constant 81 : index
    %c0_553 = arith.constant 0 : index
    %1134 = vector.load %arg2[%c81_552, %c0_553] : memref<144x38xf32, #tpu.memory_space<vmem>>, vector<1x38xf32>
    %1135 = vector.broadcast %1134 : vector<1x38xf32> to vector<16x38xf32>
    %1136 = arith.mulf %1125, %1135 : vector<16x38xf32>
    %1137 = arith.addf %1119, %1136 : vector<16x38xf32>
    %c117_554 = arith.constant 117 : index
    %c0_555 = arith.constant 0 : index
    %1138 = vector.load %arg2[%c117_554, %c0_555] : memref<144x38xf32, #tpu.memory_space<vmem>>, vector<1x38xf32>
    %1139 = vector.broadcast %1138 : vector<1x38xf32> to vector<16x38xf32>
    %1140 = arith.mulf %1125, %1139 : vector<16x38xf32>
    %1141 = arith.addf %1123, %1140 : vector<16x38xf32>
    %c1_556 = arith.constant 1 : index
    %c0_557 = arith.constant 0 : index
    %c1_558 = arith.constant 1 : index
    %1142 = vector.load %arg11[%c1_556, %c0_557, %c1_558] : memref<4x18x40xf32, #tpu.memory_space<vmem>>, vector<1x16x38xf32>
    %1143 = vector.shape_cast %1142 : vector<1x16x38xf32> to vector<16x38xf32>
    %c10_559 = arith.constant 10 : index
    %c0_560 = arith.constant 0 : index
    %1144 = vector.load %arg2[%c10_559, %c0_560] : memref<144x38xf32, #tpu.memory_space<vmem>>, vector<1x38xf32>
    %1145 = vector.broadcast %1144 : vector<1x38xf32> to vector<16x38xf32>
    %1146 = arith.mulf %1143, %1145 : vector<16x38xf32>
    %1147 = arith.addf %1129, %1146 : vector<16x38xf32>
    %c46_561 = arith.constant 46 : index
    %c0_562 = arith.constant 0 : index
    %1148 = vector.load %arg2[%c46_561, %c0_562] : memref<144x38xf32, #tpu.memory_space<vmem>>, vector<1x38xf32>
    %1149 = vector.broadcast %1148 : vector<1x38xf32> to vector<16x38xf32>
    %1150 = arith.mulf %1143, %1149 : vector<16x38xf32>
    %1151 = arith.addf %1133, %1150 : vector<16x38xf32>
    %c82_563 = arith.constant 82 : index
    %c0_564 = arith.constant 0 : index
    %1152 = vector.load %arg2[%c82_563, %c0_564] : memref<144x38xf32, #tpu.memory_space<vmem>>, vector<1x38xf32>
    %1153 = vector.broadcast %1152 : vector<1x38xf32> to vector<16x38xf32>
    %1154 = arith.mulf %1143, %1153 : vector<16x38xf32>
    %1155 = arith.addf %1137, %1154 : vector<16x38xf32>
    %c118_565 = arith.constant 118 : index
    %c0_566 = arith.constant 0 : index
    %1156 = vector.load %arg2[%c118_565, %c0_566] : memref<144x38xf32, #tpu.memory_space<vmem>>, vector<1x38xf32>
    %1157 = vector.broadcast %1156 : vector<1x38xf32> to vector<16x38xf32>
    %1158 = arith.mulf %1143, %1157 : vector<16x38xf32>
    %1159 = arith.addf %1141, %1158 : vector<16x38xf32>
    %c1_567 = arith.constant 1 : index
    %c0_568 = arith.constant 0 : index
    %c2_569 = arith.constant 2 : index
    %1160 = vector.load %arg11[%c1_567, %c0_568, %c2_569] : memref<4x18x40xf32, #tpu.memory_space<vmem>>, vector<1x16x38xf32>
    %1161 = vector.shape_cast %1160 : vector<1x16x38xf32> to vector<16x38xf32>
    %c11_570 = arith.constant 11 : index
    %c0_571 = arith.constant 0 : index
    %1162 = vector.load %arg2[%c11_570, %c0_571] : memref<144x38xf32, #tpu.memory_space<vmem>>, vector<1x38xf32>
    %1163 = vector.broadcast %1162 : vector<1x38xf32> to vector<16x38xf32>
    %1164 = arith.mulf %1161, %1163 : vector<16x38xf32>
    %1165 = arith.addf %1147, %1164 : vector<16x38xf32>
    %c47_572 = arith.constant 47 : index
    %c0_573 = arith.constant 0 : index
    %1166 = vector.load %arg2[%c47_572, %c0_573] : memref<144x38xf32, #tpu.memory_space<vmem>>, vector<1x38xf32>
    %1167 = vector.broadcast %1166 : vector<1x38xf32> to vector<16x38xf32>
    %1168 = arith.mulf %1161, %1167 : vector<16x38xf32>
    %1169 = arith.addf %1151, %1168 : vector<16x38xf32>
    %c83_574 = arith.constant 83 : index
    %c0_575 = arith.constant 0 : index
    %1170 = vector.load %arg2[%c83_574, %c0_575] : memref<144x38xf32, #tpu.memory_space<vmem>>, vector<1x38xf32>
    %1171 = vector.broadcast %1170 : vector<1x38xf32> to vector<16x38xf32>
    %1172 = arith.mulf %1161, %1171 : vector<16x38xf32>
    %1173 = arith.addf %1155, %1172 : vector<16x38xf32>
    %c119_576 = arith.constant 119 : index
    %c0_577 = arith.constant 0 : index
    %1174 = vector.load %arg2[%c119_576, %c0_577] : memref<144x38xf32, #tpu.memory_space<vmem>>, vector<1x38xf32>
    %1175 = vector.broadcast %1174 : vector<1x38xf32> to vector<16x38xf32>
    %1176 = arith.mulf %1161, %1175 : vector<16x38xf32>
    %1177 = arith.addf %1159, %1176 : vector<16x38xf32>
    %c1_578 = arith.constant 1 : index
    %c1_579 = arith.constant 1 : index
    %c0_580 = arith.constant 0 : index
    %1178 = vector.load %arg11[%c1_578, %c1_579, %c0_580] : memref<4x18x40xf32, #tpu.memory_space<vmem>>, vector<1x16x38xf32>
    %1179 = vector.shape_cast %1178 : vector<1x16x38xf32> to vector<16x38xf32>
    %c12_581 = arith.constant 12 : index
    %c0_582 = arith.constant 0 : index
    %1180 = vector.load %arg2[%c12_581, %c0_582] : memref<144x38xf32, #tpu.memory_space<vmem>>, vector<1x38xf32>
    %1181 = vector.broadcast %1180 : vector<1x38xf32> to vector<16x38xf32>
    %1182 = arith.mulf %1179, %1181 : vector<16x38xf32>
    %1183 = arith.addf %1165, %1182 : vector<16x38xf32>
    %c48_583 = arith.constant 48 : index
    %c0_584 = arith.constant 0 : index
    %1184 = vector.load %arg2[%c48_583, %c0_584] : memref<144x38xf32, #tpu.memory_space<vmem>>, vector<1x38xf32>
    %1185 = vector.broadcast %1184 : vector<1x38xf32> to vector<16x38xf32>
    %1186 = arith.mulf %1179, %1185 : vector<16x38xf32>
    %1187 = arith.addf %1169, %1186 : vector<16x38xf32>
    %c84_585 = arith.constant 84 : index
    %c0_586 = arith.constant 0 : index
    %1188 = vector.load %arg2[%c84_585, %c0_586] : memref<144x38xf32, #tpu.memory_space<vmem>>, vector<1x38xf32>
    %1189 = vector.broadcast %1188 : vector<1x38xf32> to vector<16x38xf32>
    %1190 = arith.mulf %1179, %1189 : vector<16x38xf32>
    %1191 = arith.addf %1173, %1190 : vector<16x38xf32>
    %c120_587 = arith.constant 120 : index
    %c0_588 = arith.constant 0 : index
    %1192 = vector.load %arg2[%c120_587, %c0_588] : memref<144x38xf32, #tpu.memory_space<vmem>>, vector<1x38xf32>
    %1193 = vector.broadcast %1192 : vector<1x38xf32> to vector<16x38xf32>
    %1194 = arith.mulf %1179, %1193 : vector<16x38xf32>
    %1195 = arith.addf %1177, %1194 : vector<16x38xf32>
    %c1_589 = arith.constant 1 : index
    %c1_590 = arith.constant 1 : index
    %c1_591 = arith.constant 1 : index
    %1196 = vector.load %arg11[%c1_589, %c1_590, %c1_591] : memref<4x18x40xf32, #tpu.memory_space<vmem>>, vector<1x16x38xf32>
    %1197 = vector.shape_cast %1196 : vector<1x16x38xf32> to vector<16x38xf32>
    %c13_592 = arith.constant 13 : index
    %c0_593 = arith.constant 0 : index
    %1198 = vector.load %arg2[%c13_592, %c0_593] : memref<144x38xf32, #tpu.memory_space<vmem>>, vector<1x38xf32>
    %1199 = vector.broadcast %1198 : vector<1x38xf32> to vector<16x38xf32>
    %1200 = arith.mulf %1197, %1199 : vector<16x38xf32>
    %1201 = arith.addf %1183, %1200 : vector<16x38xf32>
    %c49_594 = arith.constant 49 : index
    %c0_595 = arith.constant 0 : index
    %1202 = vector.load %arg2[%c49_594, %c0_595] : memref<144x38xf32, #tpu.memory_space<vmem>>, vector<1x38xf32>
    %1203 = vector.broadcast %1202 : vector<1x38xf32> to vector<16x38xf32>
    %1204 = arith.mulf %1197, %1203 : vector<16x38xf32>
    %1205 = arith.addf %1187, %1204 : vector<16x38xf32>
    %c85_596 = arith.constant 85 : index
    %c0_597 = arith.constant 0 : index
    %1206 = vector.load %arg2[%c85_596, %c0_597] : memref<144x38xf32, #tpu.memory_space<vmem>>, vector<1x38xf32>
    %1207 = vector.broadcast %1206 : vector<1x38xf32> to vector<16x38xf32>
    %1208 = arith.mulf %1197, %1207 : vector<16x38xf32>
    %1209 = arith.addf %1191, %1208 : vector<16x38xf32>
    %c121_598 = arith.constant 121 : index
    %c0_599 = arith.constant 0 : index
    %1210 = vector.load %arg2[%c121_598, %c0_599] : memref<144x38xf32, #tpu.memory_space<vmem>>, vector<1x38xf32>
    %1211 = vector.broadcast %1210 : vector<1x38xf32> to vector<16x38xf32>
    %1212 = arith.mulf %1197, %1211 : vector<16x38xf32>
    %1213 = arith.addf %1195, %1212 : vector<16x38xf32>
    %c1_600 = arith.constant 1 : index
    %c1_601 = arith.constant 1 : index
    %c2_602 = arith.constant 2 : index
    %1214 = vector.load %arg11[%c1_600, %c1_601, %c2_602] : memref<4x18x40xf32, #tpu.memory_space<vmem>>, vector<1x16x38xf32>
    %1215 = vector.shape_cast %1214 : vector<1x16x38xf32> to vector<16x38xf32>
    %c14_603 = arith.constant 14 : index
    %c0_604 = arith.constant 0 : index
    %1216 = vector.load %arg2[%c14_603, %c0_604] : memref<144x38xf32, #tpu.memory_space<vmem>>, vector<1x38xf32>
    %1217 = vector.broadcast %1216 : vector<1x38xf32> to vector<16x38xf32>
    %1218 = arith.mulf %1215, %1217 : vector<16x38xf32>
    %1219 = arith.addf %1201, %1218 : vector<16x38xf32>
    %c50_605 = arith.constant 50 : index
    %c0_606 = arith.constant 0 : index
    %1220 = vector.load %arg2[%c50_605, %c0_606] : memref<144x38xf32, #tpu.memory_space<vmem>>, vector<1x38xf32>
    %1221 = vector.broadcast %1220 : vector<1x38xf32> to vector<16x38xf32>
    %1222 = arith.mulf %1215, %1221 : vector<16x38xf32>
    %1223 = arith.addf %1205, %1222 : vector<16x38xf32>
    %c86_607 = arith.constant 86 : index
    %c0_608 = arith.constant 0 : index
    %1224 = vector.load %arg2[%c86_607, %c0_608] : memref<144x38xf32, #tpu.memory_space<vmem>>, vector<1x38xf32>
    %1225 = vector.broadcast %1224 : vector<1x38xf32> to vector<16x38xf32>
    %1226 = arith.mulf %1215, %1225 : vector<16x38xf32>
    %1227 = arith.addf %1209, %1226 : vector<16x38xf32>
    %c122_609 = arith.constant 122 : index
    %c0_610 = arith.constant 0 : index
    %1228 = vector.load %arg2[%c122_609, %c0_610] : memref<144x38xf32, #tpu.memory_space<vmem>>, vector<1x38xf32>
    %1229 = vector.broadcast %1228 : vector<1x38xf32> to vector<16x38xf32>
    %1230 = arith.mulf %1215, %1229 : vector<16x38xf32>
    %1231 = arith.addf %1213, %1230 : vector<16x38xf32>
    %c1_611 = arith.constant 1 : index
    %c2_612 = arith.constant 2 : index
    %c0_613 = arith.constant 0 : index
    %1232 = vector.load %arg11[%c1_611, %c2_612, %c0_613] : memref<4x18x40xf32, #tpu.memory_space<vmem>>, vector<1x16x38xf32>
    %1233 = vector.shape_cast %1232 : vector<1x16x38xf32> to vector<16x38xf32>
    %c15_614 = arith.constant 15 : index
    %c0_615 = arith.constant 0 : index
    %1234 = vector.load %arg2[%c15_614, %c0_615] : memref<144x38xf32, #tpu.memory_space<vmem>>, vector<1x38xf32>
    %1235 = vector.broadcast %1234 : vector<1x38xf32> to vector<16x38xf32>
    %1236 = arith.mulf %1233, %1235 : vector<16x38xf32>
    %1237 = arith.addf %1219, %1236 : vector<16x38xf32>
    %c51_616 = arith.constant 51 : index
    %c0_617 = arith.constant 0 : index
    %1238 = vector.load %arg2[%c51_616, %c0_617] : memref<144x38xf32, #tpu.memory_space<vmem>>, vector<1x38xf32>
    %1239 = vector.broadcast %1238 : vector<1x38xf32> to vector<16x38xf32>
    %1240 = arith.mulf %1233, %1239 : vector<16x38xf32>
    %1241 = arith.addf %1223, %1240 : vector<16x38xf32>
    %c87_618 = arith.constant 87 : index
    %c0_619 = arith.constant 0 : index
    %1242 = vector.load %arg2[%c87_618, %c0_619] : memref<144x38xf32, #tpu.memory_space<vmem>>, vector<1x38xf32>
    %1243 = vector.broadcast %1242 : vector<1x38xf32> to vector<16x38xf32>
    %1244 = arith.mulf %1233, %1243 : vector<16x38xf32>
    %1245 = arith.addf %1227, %1244 : vector<16x38xf32>
    %c123_620 = arith.constant 123 : index
    %c0_621 = arith.constant 0 : index
    %1246 = vector.load %arg2[%c123_620, %c0_621] : memref<144x38xf32, #tpu.memory_space<vmem>>, vector<1x38xf32>
    %1247 = vector.broadcast %1246 : vector<1x38xf32> to vector<16x38xf32>
    %1248 = arith.mulf %1233, %1247 : vector<16x38xf32>
    %1249 = arith.addf %1231, %1248 : vector<16x38xf32>
    %c1_622 = arith.constant 1 : index
    %c2_623 = arith.constant 2 : index
    %c1_624 = arith.constant 1 : index
    %1250 = vector.load %arg11[%c1_622, %c2_623, %c1_624] : memref<4x18x40xf32, #tpu.memory_space<vmem>>, vector<1x16x38xf32>
    %1251 = vector.shape_cast %1250 : vector<1x16x38xf32> to vector<16x38xf32>
    %c16_625 = arith.constant 16 : index
    %c0_626 = arith.constant 0 : index
    %1252 = vector.load %arg2[%c16_625, %c0_626] : memref<144x38xf32, #tpu.memory_space<vmem>>, vector<1x38xf32>
    %1253 = vector.broadcast %1252 : vector<1x38xf32> to vector<16x38xf32>
    %1254 = arith.mulf %1251, %1253 : vector<16x38xf32>
    %1255 = arith.addf %1237, %1254 : vector<16x38xf32>
    %c52_627 = arith.constant 52 : index
    %c0_628 = arith.constant 0 : index
    %1256 = vector.load %arg2[%c52_627, %c0_628] : memref<144x38xf32, #tpu.memory_space<vmem>>, vector<1x38xf32>
    %1257 = vector.broadcast %1256 : vector<1x38xf32> to vector<16x38xf32>
    %1258 = arith.mulf %1251, %1257 : vector<16x38xf32>
    %1259 = arith.addf %1241, %1258 : vector<16x38xf32>
    %c88_629 = arith.constant 88 : index
    %c0_630 = arith.constant 0 : index
    %1260 = vector.load %arg2[%c88_629, %c0_630] : memref<144x38xf32, #tpu.memory_space<vmem>>, vector<1x38xf32>
    %1261 = vector.broadcast %1260 : vector<1x38xf32> to vector<16x38xf32>
    %1262 = arith.mulf %1251, %1261 : vector<16x38xf32>
    %1263 = arith.addf %1245, %1262 : vector<16x38xf32>
    %c124_631 = arith.constant 124 : index
    %c0_632 = arith.constant 0 : index
    %1264 = vector.load %arg2[%c124_631, %c0_632] : memref<144x38xf32, #tpu.memory_space<vmem>>, vector<1x38xf32>
    %1265 = vector.broadcast %1264 : vector<1x38xf32> to vector<16x38xf32>
    %1266 = arith.mulf %1251, %1265 : vector<16x38xf32>
    %1267 = arith.addf %1249, %1266 : vector<16x38xf32>
    %c1_633 = arith.constant 1 : index
    %c2_634 = arith.constant 2 : index
    %c2_635 = arith.constant 2 : index
    %1268 = vector.load %arg11[%c1_633, %c2_634, %c2_635] : memref<4x18x40xf32, #tpu.memory_space<vmem>>, vector<1x16x38xf32>
    %1269 = vector.shape_cast %1268 : vector<1x16x38xf32> to vector<16x38xf32>
    %c17_636 = arith.constant 17 : index
    %c0_637 = arith.constant 0 : index
    %1270 = vector.load %arg2[%c17_636, %c0_637] : memref<144x38xf32, #tpu.memory_space<vmem>>, vector<1x38xf32>
    %1271 = vector.broadcast %1270 : vector<1x38xf32> to vector<16x38xf32>
    %1272 = arith.mulf %1269, %1271 : vector<16x38xf32>
    %1273 = arith.addf %1255, %1272 : vector<16x38xf32>
    %c53_638 = arith.constant 53 : index
    %c0_639 = arith.constant 0 : index
    %1274 = vector.load %arg2[%c53_638, %c0_639] : memref<144x38xf32, #tpu.memory_space<vmem>>, vector<1x38xf32>
    %1275 = vector.broadcast %1274 : vector<1x38xf32> to vector<16x38xf32>
    %1276 = arith.mulf %1269, %1275 : vector<16x38xf32>
    %1277 = arith.addf %1259, %1276 : vector<16x38xf32>
    %c89_640 = arith.constant 89 : index
    %c0_641 = arith.constant 0 : index
    %1278 = vector.load %arg2[%c89_640, %c0_641] : memref<144x38xf32, #tpu.memory_space<vmem>>, vector<1x38xf32>
    %1279 = vector.broadcast %1278 : vector<1x38xf32> to vector<16x38xf32>
    %1280 = arith.mulf %1269, %1279 : vector<16x38xf32>
    %1281 = arith.addf %1263, %1280 : vector<16x38xf32>
    %c125_642 = arith.constant 125 : index
    %c0_643 = arith.constant 0 : index
    %1282 = vector.load %arg2[%c125_642, %c0_643] : memref<144x38xf32, #tpu.memory_space<vmem>>, vector<1x38xf32>
    %1283 = vector.broadcast %1282 : vector<1x38xf32> to vector<16x38xf32>
    %1284 = arith.mulf %1269, %1283 : vector<16x38xf32>
    %1285 = arith.addf %1267, %1284 : vector<16x38xf32>
    %c2_644 = arith.constant 2 : index
    %c0_645 = arith.constant 0 : index
    %c0_646 = arith.constant 0 : index
    %1286 = vector.load %arg11[%c2_644, %c0_645, %c0_646] : memref<4x18x40xf32, #tpu.memory_space<vmem>>, vector<1x16x38xf32>
    %1287 = vector.shape_cast %1286 : vector<1x16x38xf32> to vector<16x38xf32>
    %c18_647 = arith.constant 18 : index
    %c0_648 = arith.constant 0 : index
    %1288 = vector.load %arg2[%c18_647, %c0_648] : memref<144x38xf32, #tpu.memory_space<vmem>>, vector<1x38xf32>
    %1289 = vector.broadcast %1288 : vector<1x38xf32> to vector<16x38xf32>
    %1290 = arith.mulf %1287, %1289 : vector<16x38xf32>
    %1291 = arith.addf %1273, %1290 : vector<16x38xf32>
    %c54_649 = arith.constant 54 : index
    %c0_650 = arith.constant 0 : index
    %1292 = vector.load %arg2[%c54_649, %c0_650] : memref<144x38xf32, #tpu.memory_space<vmem>>, vector<1x38xf32>
    %1293 = vector.broadcast %1292 : vector<1x38xf32> to vector<16x38xf32>
    %1294 = arith.mulf %1287, %1293 : vector<16x38xf32>
    %1295 = arith.addf %1277, %1294 : vector<16x38xf32>
    %c90_651 = arith.constant 90 : index
    %c0_652 = arith.constant 0 : index
    %1296 = vector.load %arg2[%c90_651, %c0_652] : memref<144x38xf32, #tpu.memory_space<vmem>>, vector<1x38xf32>
    %1297 = vector.broadcast %1296 : vector<1x38xf32> to vector<16x38xf32>
    %1298 = arith.mulf %1287, %1297 : vector<16x38xf32>
    %1299 = arith.addf %1281, %1298 : vector<16x38xf32>
    %c126_653 = arith.constant 126 : index
    %c0_654 = arith.constant 0 : index
    %1300 = vector.load %arg2[%c126_653, %c0_654] : memref<144x38xf32, #tpu.memory_space<vmem>>, vector<1x38xf32>
    %1301 = vector.broadcast %1300 : vector<1x38xf32> to vector<16x38xf32>
    %1302 = arith.mulf %1287, %1301 : vector<16x38xf32>
    %1303 = arith.addf %1285, %1302 : vector<16x38xf32>
    %c2_655 = arith.constant 2 : index
    %c0_656 = arith.constant 0 : index
    %c1_657 = arith.constant 1 : index
    %1304 = vector.load %arg11[%c2_655, %c0_656, %c1_657] : memref<4x18x40xf32, #tpu.memory_space<vmem>>, vector<1x16x38xf32>
    %1305 = vector.shape_cast %1304 : vector<1x16x38xf32> to vector<16x38xf32>
    %c19_658 = arith.constant 19 : index
    %c0_659 = arith.constant 0 : index
    %1306 = vector.load %arg2[%c19_658, %c0_659] : memref<144x38xf32, #tpu.memory_space<vmem>>, vector<1x38xf32>
    %1307 = vector.broadcast %1306 : vector<1x38xf32> to vector<16x38xf32>
    %1308 = arith.mulf %1305, %1307 : vector<16x38xf32>
    %1309 = arith.addf %1291, %1308 : vector<16x38xf32>
    %c55_660 = arith.constant 55 : index
    %c0_661 = arith.constant 0 : index
    %1310 = vector.load %arg2[%c55_660, %c0_661] : memref<144x38xf32, #tpu.memory_space<vmem>>, vector<1x38xf32>
    %1311 = vector.broadcast %1310 : vector<1x38xf32> to vector<16x38xf32>
    %1312 = arith.mulf %1305, %1311 : vector<16x38xf32>
    %1313 = arith.addf %1295, %1312 : vector<16x38xf32>
    %c91_662 = arith.constant 91 : index
    %c0_663 = arith.constant 0 : index
    %1314 = vector.load %arg2[%c91_662, %c0_663] : memref<144x38xf32, #tpu.memory_space<vmem>>, vector<1x38xf32>
    %1315 = vector.broadcast %1314 : vector<1x38xf32> to vector<16x38xf32>
    %1316 = arith.mulf %1305, %1315 : vector<16x38xf32>
    %1317 = arith.addf %1299, %1316 : vector<16x38xf32>
    %c127_664 = arith.constant 127 : index
    %c0_665 = arith.constant 0 : index
    %1318 = vector.load %arg2[%c127_664, %c0_665] : memref<144x38xf32, #tpu.memory_space<vmem>>, vector<1x38xf32>
    %1319 = vector.broadcast %1318 : vector<1x38xf32> to vector<16x38xf32>
    %1320 = arith.mulf %1305, %1319 : vector<16x38xf32>
    %1321 = arith.addf %1303, %1320 : vector<16x38xf32>
    %c2_666 = arith.constant 2 : index
    %c0_667 = arith.constant 0 : index
    %c2_668 = arith.constant 2 : index
    %1322 = vector.load %arg11[%c2_666, %c0_667, %c2_668] : memref<4x18x40xf32, #tpu.memory_space<vmem>>, vector<1x16x38xf32>
    %1323 = vector.shape_cast %1322 : vector<1x16x38xf32> to vector<16x38xf32>
    %c20_669 = arith.constant 20 : index
    %c0_670 = arith.constant 0 : index
    %1324 = vector.load %arg2[%c20_669, %c0_670] : memref<144x38xf32, #tpu.memory_space<vmem>>, vector<1x38xf32>
    %1325 = vector.broadcast %1324 : vector<1x38xf32> to vector<16x38xf32>
    %1326 = arith.mulf %1323, %1325 : vector<16x38xf32>
    %1327 = arith.addf %1309, %1326 : vector<16x38xf32>
    %c56_671 = arith.constant 56 : index
    %c0_672 = arith.constant 0 : index
    %1328 = vector.load %arg2[%c56_671, %c0_672] : memref<144x38xf32, #tpu.memory_space<vmem>>, vector<1x38xf32>
    %1329 = vector.broadcast %1328 : vector<1x38xf32> to vector<16x38xf32>
    %1330 = arith.mulf %1323, %1329 : vector<16x38xf32>
    %1331 = arith.addf %1313, %1330 : vector<16x38xf32>
    %c92_673 = arith.constant 92 : index
    %c0_674 = arith.constant 0 : index
    %1332 = vector.load %arg2[%c92_673, %c0_674] : memref<144x38xf32, #tpu.memory_space<vmem>>, vector<1x38xf32>
    %1333 = vector.broadcast %1332 : vector<1x38xf32> to vector<16x38xf32>
    %1334 = arith.mulf %1323, %1333 : vector<16x38xf32>
    %1335 = arith.addf %1317, %1334 : vector<16x38xf32>
    %c128_675 = arith.constant 128 : index
    %c0_676 = arith.constant 0 : index
    %1336 = vector.load %arg2[%c128_675, %c0_676] : memref<144x38xf32, #tpu.memory_space<vmem>>, vector<1x38xf32>
    %1337 = vector.broadcast %1336 : vector<1x38xf32> to vector<16x38xf32>
    %1338 = arith.mulf %1323, %1337 : vector<16x38xf32>
    %1339 = arith.addf %1321, %1338 : vector<16x38xf32>
    %c2_677 = arith.constant 2 : index
    %c1_678 = arith.constant 1 : index
    %c0_679 = arith.constant 0 : index
    %1340 = vector.load %arg11[%c2_677, %c1_678, %c0_679] : memref<4x18x40xf32, #tpu.memory_space<vmem>>, vector<1x16x38xf32>
    %1341 = vector.shape_cast %1340 : vector<1x16x38xf32> to vector<16x38xf32>
    %c21_680 = arith.constant 21 : index
    %c0_681 = arith.constant 0 : index
    %1342 = vector.load %arg2[%c21_680, %c0_681] : memref<144x38xf32, #tpu.memory_space<vmem>>, vector<1x38xf32>
    %1343 = vector.broadcast %1342 : vector<1x38xf32> to vector<16x38xf32>
    %1344 = arith.mulf %1341, %1343 : vector<16x38xf32>
    %1345 = arith.addf %1327, %1344 : vector<16x38xf32>
    %c57_682 = arith.constant 57 : index
    %c0_683 = arith.constant 0 : index
    %1346 = vector.load %arg2[%c57_682, %c0_683] : memref<144x38xf32, #tpu.memory_space<vmem>>, vector<1x38xf32>
    %1347 = vector.broadcast %1346 : vector<1x38xf32> to vector<16x38xf32>
    %1348 = arith.mulf %1341, %1347 : vector<16x38xf32>
    %1349 = arith.addf %1331, %1348 : vector<16x38xf32>
    %c93_684 = arith.constant 93 : index
    %c0_685 = arith.constant 0 : index
    %1350 = vector.load %arg2[%c93_684, %c0_685] : memref<144x38xf32, #tpu.memory_space<vmem>>, vector<1x38xf32>
    %1351 = vector.broadcast %1350 : vector<1x38xf32> to vector<16x38xf32>
    %1352 = arith.mulf %1341, %1351 : vector<16x38xf32>
    %1353 = arith.addf %1335, %1352 : vector<16x38xf32>
    %c129_686 = arith.constant 129 : index
    %c0_687 = arith.constant 0 : index
    %1354 = vector.load %arg2[%c129_686, %c0_687] : memref<144x38xf32, #tpu.memory_space<vmem>>, vector<1x38xf32>
    %1355 = vector.broadcast %1354 : vector<1x38xf32> to vector<16x38xf32>
    %1356 = arith.mulf %1341, %1355 : vector<16x38xf32>
    %1357 = arith.addf %1339, %1356 : vector<16x38xf32>
    %c2_688 = arith.constant 2 : index
    %c1_689 = arith.constant 1 : index
    %c1_690 = arith.constant 1 : index
    %1358 = vector.load %arg11[%c2_688, %c1_689, %c1_690] : memref<4x18x40xf32, #tpu.memory_space<vmem>>, vector<1x16x38xf32>
    %1359 = vector.shape_cast %1358 : vector<1x16x38xf32> to vector<16x38xf32>
    %c22_691 = arith.constant 22 : index
    %c0_692 = arith.constant 0 : index
    %1360 = vector.load %arg2[%c22_691, %c0_692] : memref<144x38xf32, #tpu.memory_space<vmem>>, vector<1x38xf32>
    %1361 = vector.broadcast %1360 : vector<1x38xf32> to vector<16x38xf32>
    %1362 = arith.mulf %1359, %1361 : vector<16x38xf32>
    %1363 = arith.addf %1345, %1362 : vector<16x38xf32>
    %c58_693 = arith.constant 58 : index
    %c0_694 = arith.constant 0 : index
    %1364 = vector.load %arg2[%c58_693, %c0_694] : memref<144x38xf32, #tpu.memory_space<vmem>>, vector<1x38xf32>
    %1365 = vector.broadcast %1364 : vector<1x38xf32> to vector<16x38xf32>
    %1366 = arith.mulf %1359, %1365 : vector<16x38xf32>
    %1367 = arith.addf %1349, %1366 : vector<16x38xf32>
    %c94_695 = arith.constant 94 : index
    %c0_696 = arith.constant 0 : index
    %1368 = vector.load %arg2[%c94_695, %c0_696] : memref<144x38xf32, #tpu.memory_space<vmem>>, vector<1x38xf32>
    %1369 = vector.broadcast %1368 : vector<1x38xf32> to vector<16x38xf32>
    %1370 = arith.mulf %1359, %1369 : vector<16x38xf32>
    %1371 = arith.addf %1353, %1370 : vector<16x38xf32>
    %c130_697 = arith.constant 130 : index
    %c0_698 = arith.constant 0 : index
    %1372 = vector.load %arg2[%c130_697, %c0_698] : memref<144x38xf32, #tpu.memory_space<vmem>>, vector<1x38xf32>
    %1373 = vector.broadcast %1372 : vector<1x38xf32> to vector<16x38xf32>
    %1374 = arith.mulf %1359, %1373 : vector<16x38xf32>
    %1375 = arith.addf %1357, %1374 : vector<16x38xf32>
    %c2_699 = arith.constant 2 : index
    %c1_700 = arith.constant 1 : index
    %c2_701 = arith.constant 2 : index
    %1376 = vector.load %arg11[%c2_699, %c1_700, %c2_701] : memref<4x18x40xf32, #tpu.memory_space<vmem>>, vector<1x16x38xf32>
    %1377 = vector.shape_cast %1376 : vector<1x16x38xf32> to vector<16x38xf32>
    %c23_702 = arith.constant 23 : index
    %c0_703 = arith.constant 0 : index
    %1378 = vector.load %arg2[%c23_702, %c0_703] : memref<144x38xf32, #tpu.memory_space<vmem>>, vector<1x38xf32>
    %1379 = vector.broadcast %1378 : vector<1x38xf32> to vector<16x38xf32>
    %1380 = arith.mulf %1377, %1379 : vector<16x38xf32>
    %1381 = arith.addf %1363, %1380 : vector<16x38xf32>
    %c59_704 = arith.constant 59 : index
    %c0_705 = arith.constant 0 : index
    %1382 = vector.load %arg2[%c59_704, %c0_705] : memref<144x38xf32, #tpu.memory_space<vmem>>, vector<1x38xf32>
    %1383 = vector.broadcast %1382 : vector<1x38xf32> to vector<16x38xf32>
    %1384 = arith.mulf %1377, %1383 : vector<16x38xf32>
    %1385 = arith.addf %1367, %1384 : vector<16x38xf32>
    %c95_706 = arith.constant 95 : index
    %c0_707 = arith.constant 0 : index
    %1386 = vector.load %arg2[%c95_706, %c0_707] : memref<144x38xf32, #tpu.memory_space<vmem>>, vector<1x38xf32>
    %1387 = vector.broadcast %1386 : vector<1x38xf32> to vector<16x38xf32>
    %1388 = arith.mulf %1377, %1387 : vector<16x38xf32>
    %1389 = arith.addf %1371, %1388 : vector<16x38xf32>
    %c131_708 = arith.constant 131 : index
    %c0_709 = arith.constant 0 : index
    %1390 = vector.load %arg2[%c131_708, %c0_709] : memref<144x38xf32, #tpu.memory_space<vmem>>, vector<1x38xf32>
    %1391 = vector.broadcast %1390 : vector<1x38xf32> to vector<16x38xf32>
    %1392 = arith.mulf %1377, %1391 : vector<16x38xf32>
    %1393 = arith.addf %1375, %1392 : vector<16x38xf32>
    %c2_710 = arith.constant 2 : index
    %c2_711 = arith.constant 2 : index
    %c0_712 = arith.constant 0 : index
    %1394 = vector.load %arg11[%c2_710, %c2_711, %c0_712] : memref<4x18x40xf32, #tpu.memory_space<vmem>>, vector<1x16x38xf32>
    %1395 = vector.shape_cast %1394 : vector<1x16x38xf32> to vector<16x38xf32>
    %c24_713 = arith.constant 24 : index
    %c0_714 = arith.constant 0 : index
    %1396 = vector.load %arg2[%c24_713, %c0_714] : memref<144x38xf32, #tpu.memory_space<vmem>>, vector<1x38xf32>
    %1397 = vector.broadcast %1396 : vector<1x38xf32> to vector<16x38xf32>
    %1398 = arith.mulf %1395, %1397 : vector<16x38xf32>
    %1399 = arith.addf %1381, %1398 : vector<16x38xf32>
    %c60_715 = arith.constant 60 : index
    %c0_716 = arith.constant 0 : index
    %1400 = vector.load %arg2[%c60_715, %c0_716] : memref<144x38xf32, #tpu.memory_space<vmem>>, vector<1x38xf32>
    %1401 = vector.broadcast %1400 : vector<1x38xf32> to vector<16x38xf32>
    %1402 = arith.mulf %1395, %1401 : vector<16x38xf32>
    %1403 = arith.addf %1385, %1402 : vector<16x38xf32>
    %c96_717 = arith.constant 96 : index
    %c0_718 = arith.constant 0 : index
    %1404 = vector.load %arg2[%c96_717, %c0_718] : memref<144x38xf32, #tpu.memory_space<vmem>>, vector<1x38xf32>
    %1405 = vector.broadcast %1404 : vector<1x38xf32> to vector<16x38xf32>
    %1406 = arith.mulf %1395, %1405 : vector<16x38xf32>
    %1407 = arith.addf %1389, %1406 : vector<16x38xf32>
    %c132_719 = arith.constant 132 : index
    %c0_720 = arith.constant 0 : index
    %1408 = vector.load %arg2[%c132_719, %c0_720] : memref<144x38xf32, #tpu.memory_space<vmem>>, vector<1x38xf32>
    %1409 = vector.broadcast %1408 : vector<1x38xf32> to vector<16x38xf32>
    %1410 = arith.mulf %1395, %1409 : vector<16x38xf32>
    %1411 = arith.addf %1393, %1410 : vector<16x38xf32>
    %c2_721 = arith.constant 2 : index
    %c2_722 = arith.constant 2 : index
    %c1_723 = arith.constant 1 : index
    %1412 = vector.load %arg11[%c2_721, %c2_722, %c1_723] : memref<4x18x40xf32, #tpu.memory_space<vmem>>, vector<1x16x38xf32>
    %1413 = vector.shape_cast %1412 : vector<1x16x38xf32> to vector<16x38xf32>
    %c25_724 = arith.constant 25 : index
    %c0_725 = arith.constant 0 : index
    %1414 = vector.load %arg2[%c25_724, %c0_725] : memref<144x38xf32, #tpu.memory_space<vmem>>, vector<1x38xf32>
    %1415 = vector.broadcast %1414 : vector<1x38xf32> to vector<16x38xf32>
    %1416 = arith.mulf %1413, %1415 : vector<16x38xf32>
    %1417 = arith.addf %1399, %1416 : vector<16x38xf32>
    %c61_726 = arith.constant 61 : index
    %c0_727 = arith.constant 0 : index
    %1418 = vector.load %arg2[%c61_726, %c0_727] : memref<144x38xf32, #tpu.memory_space<vmem>>, vector<1x38xf32>
    %1419 = vector.broadcast %1418 : vector<1x38xf32> to vector<16x38xf32>
    %1420 = arith.mulf %1413, %1419 : vector<16x38xf32>
    %1421 = arith.addf %1403, %1420 : vector<16x38xf32>
    %c97_728 = arith.constant 97 : index
    %c0_729 = arith.constant 0 : index
    %1422 = vector.load %arg2[%c97_728, %c0_729] : memref<144x38xf32, #tpu.memory_space<vmem>>, vector<1x38xf32>
    %1423 = vector.broadcast %1422 : vector<1x38xf32> to vector<16x38xf32>
    %1424 = arith.mulf %1413, %1423 : vector<16x38xf32>
    %1425 = arith.addf %1407, %1424 : vector<16x38xf32>
    %c133_730 = arith.constant 133 : index
    %c0_731 = arith.constant 0 : index
    %1426 = vector.load %arg2[%c133_730, %c0_731] : memref<144x38xf32, #tpu.memory_space<vmem>>, vector<1x38xf32>
    %1427 = vector.broadcast %1426 : vector<1x38xf32> to vector<16x38xf32>
    %1428 = arith.mulf %1413, %1427 : vector<16x38xf32>
    %1429 = arith.addf %1411, %1428 : vector<16x38xf32>
    %c2_732 = arith.constant 2 : index
    %c2_733 = arith.constant 2 : index
    %c2_734 = arith.constant 2 : index
    %1430 = vector.load %arg11[%c2_732, %c2_733, %c2_734] : memref<4x18x40xf32, #tpu.memory_space<vmem>>, vector<1x16x38xf32>
    %1431 = vector.shape_cast %1430 : vector<1x16x38xf32> to vector<16x38xf32>
    %c26_735 = arith.constant 26 : index
    %c0_736 = arith.constant 0 : index
    %1432 = vector.load %arg2[%c26_735, %c0_736] : memref<144x38xf32, #tpu.memory_space<vmem>>, vector<1x38xf32>
    %1433 = vector.broadcast %1432 : vector<1x38xf32> to vector<16x38xf32>
    %1434 = arith.mulf %1431, %1433 : vector<16x38xf32>
    %1435 = arith.addf %1417, %1434 : vector<16x38xf32>
    %c62_737 = arith.constant 62 : index
    %c0_738 = arith.constant 0 : index
    %1436 = vector.load %arg2[%c62_737, %c0_738] : memref<144x38xf32, #tpu.memory_space<vmem>>, vector<1x38xf32>
    %1437 = vector.broadcast %1436 : vector<1x38xf32> to vector<16x38xf32>
    %1438 = arith.mulf %1431, %1437 : vector<16x38xf32>
    %1439 = arith.addf %1421, %1438 : vector<16x38xf32>
    %c98_739 = arith.constant 98 : index
    %c0_740 = arith.constant 0 : index
    %1440 = vector.load %arg2[%c98_739, %c0_740] : memref<144x38xf32, #tpu.memory_space<vmem>>, vector<1x38xf32>
    %1441 = vector.broadcast %1440 : vector<1x38xf32> to vector<16x38xf32>
    %1442 = arith.mulf %1431, %1441 : vector<16x38xf32>
    %1443 = arith.addf %1425, %1442 : vector<16x38xf32>
    %c134_741 = arith.constant 134 : index
    %c0_742 = arith.constant 0 : index
    %1444 = vector.load %arg2[%c134_741, %c0_742] : memref<144x38xf32, #tpu.memory_space<vmem>>, vector<1x38xf32>
    %1445 = vector.broadcast %1444 : vector<1x38xf32> to vector<16x38xf32>
    %1446 = arith.mulf %1431, %1445 : vector<16x38xf32>
    %1447 = arith.addf %1429, %1446 : vector<16x38xf32>
    %c3_743 = arith.constant 3 : index
    %c0_744 = arith.constant 0 : index
    %c0_745 = arith.constant 0 : index
    %1448 = vector.load %arg11[%c3_743, %c0_744, %c0_745] : memref<4x18x40xf32, #tpu.memory_space<vmem>>, vector<1x16x38xf32>
    %1449 = vector.shape_cast %1448 : vector<1x16x38xf32> to vector<16x38xf32>
    %c27_746 = arith.constant 27 : index
    %c0_747 = arith.constant 0 : index
    %1450 = vector.load %arg2[%c27_746, %c0_747] : memref<144x38xf32, #tpu.memory_space<vmem>>, vector<1x38xf32>
    %1451 = vector.broadcast %1450 : vector<1x38xf32> to vector<16x38xf32>
    %1452 = arith.mulf %1449, %1451 : vector<16x38xf32>
    %1453 = arith.addf %1435, %1452 : vector<16x38xf32>
    %c63_748 = arith.constant 63 : index
    %c0_749 = arith.constant 0 : index
    %1454 = vector.load %arg2[%c63_748, %c0_749] : memref<144x38xf32, #tpu.memory_space<vmem>>, vector<1x38xf32>
    %1455 = vector.broadcast %1454 : vector<1x38xf32> to vector<16x38xf32>
    %1456 = arith.mulf %1449, %1455 : vector<16x38xf32>
    %1457 = arith.addf %1439, %1456 : vector<16x38xf32>
    %c99_750 = arith.constant 99 : index
    %c0_751 = arith.constant 0 : index
    %1458 = vector.load %arg2[%c99_750, %c0_751] : memref<144x38xf32, #tpu.memory_space<vmem>>, vector<1x38xf32>
    %1459 = vector.broadcast %1458 : vector<1x38xf32> to vector<16x38xf32>
    %1460 = arith.mulf %1449, %1459 : vector<16x38xf32>
    %1461 = arith.addf %1443, %1460 : vector<16x38xf32>
    %c135_752 = arith.constant 135 : index
    %c0_753 = arith.constant 0 : index
    %1462 = vector.load %arg2[%c135_752, %c0_753] : memref<144x38xf32, #tpu.memory_space<vmem>>, vector<1x38xf32>
    %1463 = vector.broadcast %1462 : vector<1x38xf32> to vector<16x38xf32>
    %1464 = arith.mulf %1449, %1463 : vector<16x38xf32>
    %1465 = arith.addf %1447, %1464 : vector<16x38xf32>
    %c3_754 = arith.constant 3 : index
    %c0_755 = arith.constant 0 : index
    %c1_756 = arith.constant 1 : index
    %1466 = vector.load %arg11[%c3_754, %c0_755, %c1_756] : memref<4x18x40xf32, #tpu.memory_space<vmem>>, vector<1x16x38xf32>
    %1467 = vector.shape_cast %1466 : vector<1x16x38xf32> to vector<16x38xf32>
    %c28_757 = arith.constant 28 : index
    %c0_758 = arith.constant 0 : index
    %1468 = vector.load %arg2[%c28_757, %c0_758] : memref<144x38xf32, #tpu.memory_space<vmem>>, vector<1x38xf32>
    %1469 = vector.broadcast %1468 : vector<1x38xf32> to vector<16x38xf32>
    %1470 = arith.mulf %1467, %1469 : vector<16x38xf32>
    %1471 = arith.addf %1453, %1470 : vector<16x38xf32>
    %c64_759 = arith.constant 64 : index
    %c0_760 = arith.constant 0 : index
    %1472 = vector.load %arg2[%c64_759, %c0_760] : memref<144x38xf32, #tpu.memory_space<vmem>>, vector<1x38xf32>
    %1473 = vector.broadcast %1472 : vector<1x38xf32> to vector<16x38xf32>
    %1474 = arith.mulf %1467, %1473 : vector<16x38xf32>
    %1475 = arith.addf %1457, %1474 : vector<16x38xf32>
    %c100_761 = arith.constant 100 : index
    %c0_762 = arith.constant 0 : index
    %1476 = vector.load %arg2[%c100_761, %c0_762] : memref<144x38xf32, #tpu.memory_space<vmem>>, vector<1x38xf32>
    %1477 = vector.broadcast %1476 : vector<1x38xf32> to vector<16x38xf32>
    %1478 = arith.mulf %1467, %1477 : vector<16x38xf32>
    %1479 = arith.addf %1461, %1478 : vector<16x38xf32>
    %c136_763 = arith.constant 136 : index
    %c0_764 = arith.constant 0 : index
    %1480 = vector.load %arg2[%c136_763, %c0_764] : memref<144x38xf32, #tpu.memory_space<vmem>>, vector<1x38xf32>
    %1481 = vector.broadcast %1480 : vector<1x38xf32> to vector<16x38xf32>
    %1482 = arith.mulf %1467, %1481 : vector<16x38xf32>
    %1483 = arith.addf %1465, %1482 : vector<16x38xf32>
    %c3_765 = arith.constant 3 : index
    %c0_766 = arith.constant 0 : index
    %c2_767 = arith.constant 2 : index
    %1484 = vector.load %arg11[%c3_765, %c0_766, %c2_767] : memref<4x18x40xf32, #tpu.memory_space<vmem>>, vector<1x16x38xf32>
    %1485 = vector.shape_cast %1484 : vector<1x16x38xf32> to vector<16x38xf32>
    %c29_768 = arith.constant 29 : index
    %c0_769 = arith.constant 0 : index
    %1486 = vector.load %arg2[%c29_768, %c0_769] : memref<144x38xf32, #tpu.memory_space<vmem>>, vector<1x38xf32>
    %1487 = vector.broadcast %1486 : vector<1x38xf32> to vector<16x38xf32>
    %1488 = arith.mulf %1485, %1487 : vector<16x38xf32>
    %1489 = arith.addf %1471, %1488 : vector<16x38xf32>
    %c65_770 = arith.constant 65 : index
    %c0_771 = arith.constant 0 : index
    %1490 = vector.load %arg2[%c65_770, %c0_771] : memref<144x38xf32, #tpu.memory_space<vmem>>, vector<1x38xf32>
    %1491 = vector.broadcast %1490 : vector<1x38xf32> to vector<16x38xf32>
    %1492 = arith.mulf %1485, %1491 : vector<16x38xf32>
    %1493 = arith.addf %1475, %1492 : vector<16x38xf32>
    %c101_772 = arith.constant 101 : index
    %c0_773 = arith.constant 0 : index
    %1494 = vector.load %arg2[%c101_772, %c0_773] : memref<144x38xf32, #tpu.memory_space<vmem>>, vector<1x38xf32>
    %1495 = vector.broadcast %1494 : vector<1x38xf32> to vector<16x38xf32>
    %1496 = arith.mulf %1485, %1495 : vector<16x38xf32>
    %1497 = arith.addf %1479, %1496 : vector<16x38xf32>
    %c137_774 = arith.constant 137 : index
    %c0_775 = arith.constant 0 : index
    %1498 = vector.load %arg2[%c137_774, %c0_775] : memref<144x38xf32, #tpu.memory_space<vmem>>, vector<1x38xf32>
    %1499 = vector.broadcast %1498 : vector<1x38xf32> to vector<16x38xf32>
    %1500 = arith.mulf %1485, %1499 : vector<16x38xf32>
    %1501 = arith.addf %1483, %1500 : vector<16x38xf32>
    %c3_776 = arith.constant 3 : index
    %c1_777 = arith.constant 1 : index
    %c0_778 = arith.constant 0 : index
    %1502 = vector.load %arg11[%c3_776, %c1_777, %c0_778] : memref<4x18x40xf32, #tpu.memory_space<vmem>>, vector<1x16x38xf32>
    %1503 = vector.shape_cast %1502 : vector<1x16x38xf32> to vector<16x38xf32>
    %c30_779 = arith.constant 30 : index
    %c0_780 = arith.constant 0 : index
    %1504 = vector.load %arg2[%c30_779, %c0_780] : memref<144x38xf32, #tpu.memory_space<vmem>>, vector<1x38xf32>
    %1505 = vector.broadcast %1504 : vector<1x38xf32> to vector<16x38xf32>
    %1506 = arith.mulf %1503, %1505 : vector<16x38xf32>
    %1507 = arith.addf %1489, %1506 : vector<16x38xf32>
    %c66_781 = arith.constant 66 : index
    %c0_782 = arith.constant 0 : index
    %1508 = vector.load %arg2[%c66_781, %c0_782] : memref<144x38xf32, #tpu.memory_space<vmem>>, vector<1x38xf32>
    %1509 = vector.broadcast %1508 : vector<1x38xf32> to vector<16x38xf32>
    %1510 = arith.mulf %1503, %1509 : vector<16x38xf32>
    %1511 = arith.addf %1493, %1510 : vector<16x38xf32>
    %c102_783 = arith.constant 102 : index
    %c0_784 = arith.constant 0 : index
    %1512 = vector.load %arg2[%c102_783, %c0_784] : memref<144x38xf32, #tpu.memory_space<vmem>>, vector<1x38xf32>
    %1513 = vector.broadcast %1512 : vector<1x38xf32> to vector<16x38xf32>
    %1514 = arith.mulf %1503, %1513 : vector<16x38xf32>
    %1515 = arith.addf %1497, %1514 : vector<16x38xf32>
    %c138_785 = arith.constant 138 : index
    %c0_786 = arith.constant 0 : index
    %1516 = vector.load %arg2[%c138_785, %c0_786] : memref<144x38xf32, #tpu.memory_space<vmem>>, vector<1x38xf32>
    %1517 = vector.broadcast %1516 : vector<1x38xf32> to vector<16x38xf32>
    %1518 = arith.mulf %1503, %1517 : vector<16x38xf32>
    %1519 = arith.addf %1501, %1518 : vector<16x38xf32>
    %c3_787 = arith.constant 3 : index
    %c1_788 = arith.constant 1 : index
    %c1_789 = arith.constant 1 : index
    %1520 = vector.load %arg11[%c3_787, %c1_788, %c1_789] : memref<4x18x40xf32, #tpu.memory_space<vmem>>, vector<1x16x38xf32>
    %1521 = vector.shape_cast %1520 : vector<1x16x38xf32> to vector<16x38xf32>
    %c31_790 = arith.constant 31 : index
    %c0_791 = arith.constant 0 : index
    %1522 = vector.load %arg2[%c31_790, %c0_791] : memref<144x38xf32, #tpu.memory_space<vmem>>, vector<1x38xf32>
    %1523 = vector.broadcast %1522 : vector<1x38xf32> to vector<16x38xf32>
    %1524 = arith.mulf %1521, %1523 : vector<16x38xf32>
    %1525 = arith.addf %1507, %1524 : vector<16x38xf32>
    %c67_792 = arith.constant 67 : index
    %c0_793 = arith.constant 0 : index
    %1526 = vector.load %arg2[%c67_792, %c0_793] : memref<144x38xf32, #tpu.memory_space<vmem>>, vector<1x38xf32>
    %1527 = vector.broadcast %1526 : vector<1x38xf32> to vector<16x38xf32>
    %1528 = arith.mulf %1521, %1527 : vector<16x38xf32>
    %1529 = arith.addf %1511, %1528 : vector<16x38xf32>
    %c103_794 = arith.constant 103 : index
    %c0_795 = arith.constant 0 : index
    %1530 = vector.load %arg2[%c103_794, %c0_795] : memref<144x38xf32, #tpu.memory_space<vmem>>, vector<1x38xf32>
    %1531 = vector.broadcast %1530 : vector<1x38xf32> to vector<16x38xf32>
    %1532 = arith.mulf %1521, %1531 : vector<16x38xf32>
    %1533 = arith.addf %1515, %1532 : vector<16x38xf32>
    %c139_796 = arith.constant 139 : index
    %c0_797 = arith.constant 0 : index
    %1534 = vector.load %arg2[%c139_796, %c0_797] : memref<144x38xf32, #tpu.memory_space<vmem>>, vector<1x38xf32>
    %1535 = vector.broadcast %1534 : vector<1x38xf32> to vector<16x38xf32>
    %1536 = arith.mulf %1521, %1535 : vector<16x38xf32>
    %1537 = arith.addf %1519, %1536 : vector<16x38xf32>
    %c3_798 = arith.constant 3 : index
    %c1_799 = arith.constant 1 : index
    %c2_800 = arith.constant 2 : index
    %1538 = vector.load %arg11[%c3_798, %c1_799, %c2_800] : memref<4x18x40xf32, #tpu.memory_space<vmem>>, vector<1x16x38xf32>
    %1539 = vector.shape_cast %1538 : vector<1x16x38xf32> to vector<16x38xf32>
    %c32_801 = arith.constant 32 : index
    %c0_802 = arith.constant 0 : index
    %1540 = vector.load %arg2[%c32_801, %c0_802] : memref<144x38xf32, #tpu.memory_space<vmem>>, vector<1x38xf32>
    %1541 = vector.broadcast %1540 : vector<1x38xf32> to vector<16x38xf32>
    %1542 = arith.mulf %1539, %1541 : vector<16x38xf32>
    %1543 = arith.addf %1525, %1542 : vector<16x38xf32>
    %c68_803 = arith.constant 68 : index
    %c0_804 = arith.constant 0 : index
    %1544 = vector.load %arg2[%c68_803, %c0_804] : memref<144x38xf32, #tpu.memory_space<vmem>>, vector<1x38xf32>
    %1545 = vector.broadcast %1544 : vector<1x38xf32> to vector<16x38xf32>
    %1546 = arith.mulf %1539, %1545 : vector<16x38xf32>
    %1547 = arith.addf %1529, %1546 : vector<16x38xf32>
    %c104_805 = arith.constant 104 : index
    %c0_806 = arith.constant 0 : index
    %1548 = vector.load %arg2[%c104_805, %c0_806] : memref<144x38xf32, #tpu.memory_space<vmem>>, vector<1x38xf32>
    %1549 = vector.broadcast %1548 : vector<1x38xf32> to vector<16x38xf32>
    %1550 = arith.mulf %1539, %1549 : vector<16x38xf32>
    %1551 = arith.addf %1533, %1550 : vector<16x38xf32>
    %c140_807 = arith.constant 140 : index
    %c0_808 = arith.constant 0 : index
    %1552 = vector.load %arg2[%c140_807, %c0_808] : memref<144x38xf32, #tpu.memory_space<vmem>>, vector<1x38xf32>
    %1553 = vector.broadcast %1552 : vector<1x38xf32> to vector<16x38xf32>
    %1554 = arith.mulf %1539, %1553 : vector<16x38xf32>
    %1555 = arith.addf %1537, %1554 : vector<16x38xf32>
    %c3_809 = arith.constant 3 : index
    %c2_810 = arith.constant 2 : index
    %c0_811 = arith.constant 0 : index
    %1556 = vector.load %arg11[%c3_809, %c2_810, %c0_811] : memref<4x18x40xf32, #tpu.memory_space<vmem>>, vector<1x16x38xf32>
    %1557 = vector.shape_cast %1556 : vector<1x16x38xf32> to vector<16x38xf32>
    %c33_812 = arith.constant 33 : index
    %c0_813 = arith.constant 0 : index
    %1558 = vector.load %arg2[%c33_812, %c0_813] : memref<144x38xf32, #tpu.memory_space<vmem>>, vector<1x38xf32>
    %1559 = vector.broadcast %1558 : vector<1x38xf32> to vector<16x38xf32>
    %1560 = arith.mulf %1557, %1559 : vector<16x38xf32>
    %1561 = arith.addf %1543, %1560 : vector<16x38xf32>
    %c69_814 = arith.constant 69 : index
    %c0_815 = arith.constant 0 : index
    %1562 = vector.load %arg2[%c69_814, %c0_815] : memref<144x38xf32, #tpu.memory_space<vmem>>, vector<1x38xf32>
    %1563 = vector.broadcast %1562 : vector<1x38xf32> to vector<16x38xf32>
    %1564 = arith.mulf %1557, %1563 : vector<16x38xf32>
    %1565 = arith.addf %1547, %1564 : vector<16x38xf32>
    %c105_816 = arith.constant 105 : index
    %c0_817 = arith.constant 0 : index
    %1566 = vector.load %arg2[%c105_816, %c0_817] : memref<144x38xf32, #tpu.memory_space<vmem>>, vector<1x38xf32>
    %1567 = vector.broadcast %1566 : vector<1x38xf32> to vector<16x38xf32>
    %1568 = arith.mulf %1557, %1567 : vector<16x38xf32>
    %1569 = arith.addf %1551, %1568 : vector<16x38xf32>
    %c141_818 = arith.constant 141 : index
    %c0_819 = arith.constant 0 : index
    %1570 = vector.load %arg2[%c141_818, %c0_819] : memref<144x38xf32, #tpu.memory_space<vmem>>, vector<1x38xf32>
    %1571 = vector.broadcast %1570 : vector<1x38xf32> to vector<16x38xf32>
    %1572 = arith.mulf %1557, %1571 : vector<16x38xf32>
    %1573 = arith.addf %1555, %1572 : vector<16x38xf32>
    %c3_820 = arith.constant 3 : index
    %c2_821 = arith.constant 2 : index
    %c1_822 = arith.constant 1 : index
    %1574 = vector.load %arg11[%c3_820, %c2_821, %c1_822] : memref<4x18x40xf32, #tpu.memory_space<vmem>>, vector<1x16x38xf32>
    %1575 = vector.shape_cast %1574 : vector<1x16x38xf32> to vector<16x38xf32>
    %c34_823 = arith.constant 34 : index
    %c0_824 = arith.constant 0 : index
    %1576 = vector.load %arg2[%c34_823, %c0_824] : memref<144x38xf32, #tpu.memory_space<vmem>>, vector<1x38xf32>
    %1577 = vector.broadcast %1576 : vector<1x38xf32> to vector<16x38xf32>
    %1578 = arith.mulf %1575, %1577 : vector<16x38xf32>
    %1579 = arith.addf %1561, %1578 : vector<16x38xf32>
    %c70_825 = arith.constant 70 : index
    %c0_826 = arith.constant 0 : index
    %1580 = vector.load %arg2[%c70_825, %c0_826] : memref<144x38xf32, #tpu.memory_space<vmem>>, vector<1x38xf32>
    %1581 = vector.broadcast %1580 : vector<1x38xf32> to vector<16x38xf32>
    %1582 = arith.mulf %1575, %1581 : vector<16x38xf32>
    %1583 = arith.addf %1565, %1582 : vector<16x38xf32>
    %c106_827 = arith.constant 106 : index
    %c0_828 = arith.constant 0 : index
    %1584 = vector.load %arg2[%c106_827, %c0_828] : memref<144x38xf32, #tpu.memory_space<vmem>>, vector<1x38xf32>
    %1585 = vector.broadcast %1584 : vector<1x38xf32> to vector<16x38xf32>
    %1586 = arith.mulf %1575, %1585 : vector<16x38xf32>
    %1587 = arith.addf %1569, %1586 : vector<16x38xf32>
    %c142_829 = arith.constant 142 : index
    %c0_830 = arith.constant 0 : index
    %1588 = vector.load %arg2[%c142_829, %c0_830] : memref<144x38xf32, #tpu.memory_space<vmem>>, vector<1x38xf32>
    %1589 = vector.broadcast %1588 : vector<1x38xf32> to vector<16x38xf32>
    %1590 = arith.mulf %1575, %1589 : vector<16x38xf32>
    %1591 = arith.addf %1573, %1590 : vector<16x38xf32>
    %c3_831 = arith.constant 3 : index
    %c2_832 = arith.constant 2 : index
    %c2_833 = arith.constant 2 : index
    %1592 = vector.load %arg11[%c3_831, %c2_832, %c2_833] : memref<4x18x40xf32, #tpu.memory_space<vmem>>, vector<1x16x38xf32>
    %1593 = vector.shape_cast %1592 : vector<1x16x38xf32> to vector<16x38xf32>
    %c35_834 = arith.constant 35 : index
    %c0_835 = arith.constant 0 : index
    %1594 = vector.load %arg2[%c35_834, %c0_835] : memref<144x38xf32, #tpu.memory_space<vmem>>, vector<1x38xf32>
    %1595 = vector.broadcast %1594 : vector<1x38xf32> to vector<16x38xf32>
    %1596 = arith.mulf %1593, %1595 : vector<16x38xf32>
    %1597 = arith.addf %1579, %1596 : vector<16x38xf32>
    %c71_836 = arith.constant 71 : index
    %c0_837 = arith.constant 0 : index
    %1598 = vector.load %arg2[%c71_836, %c0_837] : memref<144x38xf32, #tpu.memory_space<vmem>>, vector<1x38xf32>
    %1599 = vector.broadcast %1598 : vector<1x38xf32> to vector<16x38xf32>
    %1600 = arith.mulf %1593, %1599 : vector<16x38xf32>
    %1601 = arith.addf %1583, %1600 : vector<16x38xf32>
    %c107_838 = arith.constant 107 : index
    %c0_839 = arith.constant 0 : index
    %1602 = vector.load %arg2[%c107_838, %c0_839] : memref<144x38xf32, #tpu.memory_space<vmem>>, vector<1x38xf32>
    %1603 = vector.broadcast %1602 : vector<1x38xf32> to vector<16x38xf32>
    %1604 = arith.mulf %1593, %1603 : vector<16x38xf32>
    %1605 = arith.addf %1587, %1604 : vector<16x38xf32>
    %c143_840 = arith.constant 143 : index
    %c0_841 = arith.constant 0 : index
    %1606 = vector.load %arg2[%c143_840, %c0_841] : memref<144x38xf32, #tpu.memory_space<vmem>>, vector<1x38xf32>
    %1607 = vector.broadcast %1606 : vector<1x38xf32> to vector<16x38xf32>
    %1608 = arith.mulf %1593, %1607 : vector<16x38xf32>
    %1609 = arith.addf %1591, %1608 : vector<16x38xf32>
    %cst_842 = arith.constant 0.000000e+00 : f32
    %1610 = vector.broadcast %cst_842 : f32 to vector<16x1xf32>
    %cst_843 = arith.constant 0.000000e+00 : f32
    %1611 = vector.broadcast %cst_843 : f32 to vector<16x1xf32>
    %cst_844 = arith.constant dense<0.000000e+00> : vector<16xf32>
    %1612 = vector.multi_reduction <add>, %1597, %cst_844 [1] : vector<16x38xf32> to vector<16xf32>
    %1613 = vector.shape_cast %1612 : vector<16xf32> to vector<16x1xf32>
    %1614 = arith.addf %1610, %1613 : vector<16x1xf32>
    %1615 = arith.mulf %1597, %1597 : vector<16x38xf32>
    %cst_845 = arith.constant dense<0.000000e+00> : vector<16xf32>
    %1616 = vector.multi_reduction <add>, %1615, %cst_845 [1] : vector<16x38xf32> to vector<16xf32>
    %1617 = vector.shape_cast %1616 : vector<16xf32> to vector<16x1xf32>
    %1618 = arith.addf %1611, %1617 : vector<16x1xf32>
    %cst_846 = arith.constant dense<0.000000e+00> : vector<16xf32>
    %1619 = vector.multi_reduction <add>, %1601, %cst_846 [1] : vector<16x38xf32> to vector<16xf32>
    %1620 = vector.shape_cast %1619 : vector<16xf32> to vector<16x1xf32>
    %1621 = arith.addf %1614, %1620 : vector<16x1xf32>
    %1622 = arith.mulf %1601, %1601 : vector<16x38xf32>
    %cst_847 = arith.constant dense<0.000000e+00> : vector<16xf32>
    %1623 = vector.multi_reduction <add>, %1622, %cst_847 [1] : vector<16x38xf32> to vector<16xf32>
    %1624 = vector.shape_cast %1623 : vector<16xf32> to vector<16x1xf32>
    %1625 = arith.addf %1618, %1624 : vector<16x1xf32>
    %cst_848 = arith.constant dense<0.000000e+00> : vector<16xf32>
    %1626 = vector.multi_reduction <add>, %1605, %cst_848 [1] : vector<16x38xf32> to vector<16xf32>
    %1627 = vector.shape_cast %1626 : vector<16xf32> to vector<16x1xf32>
    %1628 = arith.addf %1621, %1627 : vector<16x1xf32>
    %1629 = arith.mulf %1605, %1605 : vector<16x38xf32>
    %cst_849 = arith.constant dense<0.000000e+00> : vector<16xf32>
    %1630 = vector.multi_reduction <add>, %1629, %cst_849 [1] : vector<16x38xf32> to vector<16xf32>
    %1631 = vector.shape_cast %1630 : vector<16xf32> to vector<16x1xf32>
    %1632 = arith.addf %1625, %1631 : vector<16x1xf32>
    %cst_850 = arith.constant dense<0.000000e+00> : vector<16xf32>
    %1633 = vector.multi_reduction <add>, %1609, %cst_850 [1] : vector<16x38xf32> to vector<16xf32>
    %1634 = vector.shape_cast %1633 : vector<16xf32> to vector<16x1xf32>
    %1635 = arith.addf %1628, %1634 : vector<16x1xf32>
    %1636 = arith.mulf %1609, %1609 : vector<16x38xf32>
    %cst_851 = arith.constant dense<0.000000e+00> : vector<16xf32>
    %1637 = vector.multi_reduction <add>, %1636, %cst_851 [1] : vector<16x38xf32> to vector<16xf32>
    %1638 = vector.shape_cast %1637 : vector<16xf32> to vector<16x1xf32>
    %1639 = arith.addf %1632, %1638 : vector<16x1xf32>
    %cst_852 = arith.constant 7.812500e-03 : f32
    %1640 = vector.broadcast %cst_852 : f32 to vector<16x1xf32>
    %1641 = arith.mulf %1635, %1640 : vector<16x1xf32>
    %cst_853 = arith.constant 7.812500e-03 : f32
    %1642 = vector.broadcast %cst_853 : f32 to vector<16x1xf32>
    %1643 = arith.mulf %1639, %1642 : vector<16x1xf32>
    %1644 = arith.mulf %1641, %1641 : vector<16x1xf32>
    %1645 = arith.subf %1643, %1644 : vector<16x1xf32>
    %cst_854 = arith.constant 0.000000e+00 : f32
    %1646 = vector.broadcast %cst_854 : f32 to vector<16x1xf32>
    %1647 = arith.maximumf %1645, %1646 : vector<16x1xf32>
    %cst_855 = arith.constant 9.99999974E-6 : f32
    %1648 = vector.broadcast %cst_855 : f32 to vector<16x1xf32>
    %1649 = arith.addf %1647, %1648 : vector<16x1xf32>
    %1650 = math.rsqrt %1649 : vector<16x1xf32>
    %1651 = vector.broadcast %1641 : vector<16x1xf32> to vector<16x38xf32>
    %1652 = arith.subf %1597, %1651 : vector<16x38xf32>
    %1653 = vector.broadcast %1650 : vector<16x1xf32> to vector<16x38xf32>
    %1654 = arith.mulf %1652, %1653 : vector<16x38xf32>
    %1655 = vector.broadcast %3 : vector<1x38xf32> to vector<16x38xf32>
    %1656 = arith.mulf %1654, %1655 : vector<16x38xf32>
    %1657 = vector.broadcast %4 : vector<1x38xf32> to vector<16x38xf32>
    %1658 = arith.addf %1656, %1657 : vector<16x38xf32>
    %c0_856 = arith.constant 0 : index
    %1659 = memref.load %arg9[%c0_856] : memref<4xf32, #tpu.memory_space<smem>>
    %cst_857 = arith.constant 0.000000e+00 : f32
    %1660 = vector.broadcast %cst_857 : f32 to vector<16x38xf32>
    %1661 = arith.cmpf ogt, %1658, %1660 : vector<16x38xf32>
    %1662 = vector.broadcast %1659 : f32 to vector<16x38xf32>
    %1663 = arith.mulf %1662, %1658 : vector<16x38xf32>
    %1664 = arith.select %1661, %1658, %1663 : vector<16x38xi1>, vector<16x38xf32>
    %c64_858 = arith.constant 64 : index
    %c0_859 = arith.constant 0 : index
    %1665 = vector.load %arg12[%c64_858, %c0_859] : memref<128x38xf32, #tpu.memory_space<vmem>>, vector<16x38xf32>
    tpu.vector_store %arg12[%c64_858, %c0_859], %1664 {strides = array<i32>} : memref<128x38xf32, #tpu.memory_space<vmem>>, vector<16x38xf32>,
    %1666 = vector.broadcast %1641 : vector<16x1xf32> to vector<16x38xf32>
    %1667 = arith.subf %1601, %1666 : vector<16x38xf32>
    %1668 = vector.broadcast %1650 : vector<16x1xf32> to vector<16x38xf32>
    %1669 = arith.mulf %1667, %1668 : vector<16x38xf32>
    %1670 = vector.broadcast %3 : vector<1x38xf32> to vector<16x38xf32>
    %1671 = arith.mulf %1669, %1670 : vector<16x38xf32>
    %1672 = vector.broadcast %4 : vector<1x38xf32> to vector<16x38xf32>
    %1673 = arith.addf %1671, %1672 : vector<16x38xf32>
    %c1_860 = arith.constant 1 : index
    %1674 = memref.load %arg9[%c1_860] : memref<4xf32, #tpu.memory_space<smem>>
    %cst_861 = arith.constant 0.000000e+00 : f32
    %1675 = vector.broadcast %cst_861 : f32 to vector<16x38xf32>
    %1676 = arith.cmpf ogt, %1673, %1675 : vector<16x38xf32>
    %1677 = vector.broadcast %1674 : f32 to vector<16x38xf32>
    %1678 = arith.mulf %1677, %1673 : vector<16x38xf32>
    %1679 = arith.select %1676, %1673, %1678 : vector<16x38xi1>, vector<16x38xf32>
    %c80_862 = arith.constant 80 : index
    %c0_863 = arith.constant 0 : index
    %1680 = vector.load %arg12[%c80_862, %c0_863] : memref<128x38xf32, #tpu.memory_space<vmem>>, vector<16x38xf32>
    tpu.vector_store %arg12[%c80_862, %c0_863], %1679 {strides = array<i32>} : memref<128x38xf32, #tpu.memory_space<vmem>>, vector<16x38xf32>,
    %1681 = vector.broadcast %1641 : vector<16x1xf32> to vector<16x38xf32>
    %1682 = arith.subf %1605, %1681 : vector<16x38xf32>
    %1683 = vector.broadcast %1650 : vector<16x1xf32> to vector<16x38xf32>
    %1684 = arith.mulf %1682, %1683 : vector<16x38xf32>
    %1685 = vector.broadcast %3 : vector<1x38xf32> to vector<16x38xf32>
    %1686 = arith.mulf %1684, %1685 : vector<16x38xf32>
    %1687 = vector.broadcast %4 : vector<1x38xf32> to vector<16x38xf32>
    %1688 = arith.addf %1686, %1687 : vector<16x38xf32>
    %c2_864 = arith.constant 2 : index
    %1689 = memref.load %arg9[%c2_864] : memref<4xf32, #tpu.memory_space<smem>>
    %cst_865 = arith.constant 0.000000e+00 : f32
    %1690 = vector.broadcast %cst_865 : f32 to vector<16x38xf32>
    %1691 = arith.cmpf ogt, %1688, %1690 : vector<16x38xf32>
    %1692 = vector.broadcast %1689 : f32 to vector<16x38xf32>
    %1693 = arith.mulf %1692, %1688 : vector<16x38xf32>
    %1694 = arith.select %1691, %1688, %1693 : vector<16x38xi1>, vector<16x38xf32>
    %c96_866 = arith.constant 96 : index
    %c0_867 = arith.constant 0 : index
    %1695 = vector.load %arg12[%c96_866, %c0_867] : memref<128x38xf32, #tpu.memory_space<vmem>>, vector<16x38xf32>
    tpu.vector_store %arg12[%c96_866, %c0_867], %1694 {strides = array<i32>} : memref<128x38xf32, #tpu.memory_space<vmem>>, vector<16x38xf32>,
    %1696 = vector.broadcast %1641 : vector<16x1xf32> to vector<16x38xf32>
    %1697 = arith.subf %1609, %1696 : vector<16x38xf32>
    %1698 = vector.broadcast %1650 : vector<16x1xf32> to vector<16x38xf32>
    %1699 = arith.mulf %1697, %1698 : vector<16x38xf32>
    %1700 = vector.broadcast %3 : vector<1x38xf32> to vector<16x38xf32>
    %1701 = arith.mulf %1699, %1700 : vector<16x38xf32>
    %1702 = vector.broadcast %4 : vector<1x38xf32> to vector<16x38xf32>
    %1703 = arith.addf %1701, %1702 : vector<16x38xf32>
    %c3_868 = arith.constant 3 : index
    %1704 = memref.load %arg9[%c3_868] : memref<4xf32, #tpu.memory_space<smem>>
    %cst_869 = arith.constant 0.000000e+00 : f32
    %1705 = vector.broadcast %cst_869 : f32 to vector<16x38xf32>
    %1706 = arith.cmpf ogt, %1703, %1705 : vector<16x38xf32>
    %1707 = vector.broadcast %1704 : f32 to vector<16x38xf32>
    %1708 = arith.mulf %1707, %1703 : vector<16x38xf32>
    %1709 = arith.select %1706, %1703, %1708 : vector<16x38xi1>, vector<16x38xf32>
    %c112_870 = arith.constant 112 : index
    %c0_871 = arith.constant 0 : index
    %1710 = vector.load %arg12[%c112_870, %c0_871] : memref<128x38xf32, #tpu.memory_space<vmem>>, vector<16x38xf32>
    tpu.vector_store %arg12[%c112_870, %c0_871], %1709 {strides = array<i32>} : memref<128x38xf32, #tpu.memory_space<vmem>>, vector<16x38xf32>,
    %c0_872 = arith.constant 0 : index
    %c0_873 = arith.constant 0 : index
    %1711 = vector.load %arg12[%c0_872, %c0_873] : memref<128x38xf32, #tpu.memory_space<vmem>>, vector<128x38xf32>
    %c0_874 = arith.constant 0 : index
    %c0_875 = arith.constant 0 : index
    %1712 = vector.load %arg7[%c0_874, %c0_875] : memref<38x32xf32, #tpu.memory_space<vmem>>, vector<38x32xf32>
    %cst_876 = arith.constant dense<0.000000e+00> : vector<128x32xf32>
    %1713 = tpu.matmul %1711, %1712, %cst_876 {dimension_numbers = #tpu.dot_dimension_numbers<[1], [0], [0], [1], [0, 0, 1, 1], [], []>} : vector<128x38xf32>, vector<38x32xf32>, vector<128x32xf32> -> vector<128x32xf32>
    %c0_877 = arith.constant 0 : index
    %c0_878 = arith.constant 0 : index
    %1714 = vector.load %arg10[%c0_877, %c0_878] : memref<128x32xf32, #tpu.memory_space<vmem>>, vector<128x32xf32>
    tpu.vector_store %arg10[%c0_877, %c0_878], %1713 {strides = array<i32>} : memref<128x32xf32, #tpu.memory_space<vmem>>, vector<128x32xf32>,
    return
  }
  func.func @transform_0(%arg0: i32) -> (i32, i32) {
    %c0_i32 = arith.constant 0 : i32
    %c0_i32_0 = arith.constant 0 : i32
    return %arg0, %c0_i32 : i32, i32
  }
  func.func @transform_1(%arg0: i32) -> (i32, i32) {
    %c0_i32 = arith.constant 0 : i32
    %c0_i32_0 = arith.constant 0 : i32
    %c0_i32_1 = arith.constant 0 : i32
    return %c0_i32, %c0_i32_0 : i32, i32
  }
  func.func @transform_2(%arg0: i32) -> (i32, i32) {
    %c0_i32 = arith.constant 0 : i32
    %c0_i32_0 = arith.constant 0 : i32
    %c0_i32_1 = arith.constant 0 : i32
    return %c0_i32, %c0_i32_0 : i32, i32
  }
  func.func @transform_3(%arg0: i32) -> (i32, i32) {
    %c0_i32 = arith.constant 0 : i32
    %c0_i32_0 = arith.constant 0 : i32
    %c0_i32_1 = arith.constant 0 : i32
    return %c0_i32, %c0_i32_0 : i32, i32
  }
  func.func @transform_4(%arg0: i32) -> (i32, i32) {
    %c0_i32 = arith.constant 0 : i32
    %c0_i32_0 = arith.constant 0 : i32
    %c0_i32_1 = arith.constant 0 : i32
    return %c0_i32, %c0_i32_0 : i32, i32
  }
  func.func @transform_5(%arg0: i32) -> (i32, i32) {
    %c0_i32 = arith.constant 0 : i32
    %c0_i32_0 = arith.constant 0 : i32
    %c0_i32_1 = arith.constant 0 : i32
    return %c0_i32, %c0_i32_0 : i32, i32
  }
  func.func @transform_6(%arg0: i32) -> (i32, i32) {
    %c0_i32 = arith.constant 0 : i32
    %c0_i32_0 = arith.constant 0 : i32
    %c0_i32_1 = arith.constant 0 : i32
    return %c0_i32, %c0_i32_0 : i32, i32
  }
  func.func @transform_7(%arg0: i32) -> i32 {
    %c0_i32 = arith.constant 0 : i32
    %c0_i32_0 = arith.constant 0 : i32
    return %c0_i32 : i32
  }
  func.func @transform_8(%arg0: i32) -> i32 {
    %c0_i32 = arith.constant 0 : i32
    %c0_i32_0 = arith.constant 0 : i32
    return %c0_i32 : i32
  }
  func.func @transform_9(%arg0: i32) -> (i32, i32) {
    %c0_i32 = arith.constant 0 : i32
    %c0_i32_0 = arith.constant 0 : i32
    return %arg0, %c0_i32 : i32, i32
  }
}

</mosaic_0001>

<llo_original>
// kernel: tpu_custom_call.1
$region0: #{tpu_custom_call.1}
  #allocation0 [shape = 'u32[]', space=smem, size = 0x4, offset = 0x4, fixed_abs, tag = 'smem constant byte address 0x4 - core index']
  #allocation1 [shape = 'u32[144,128]{1,0:T(1,128)}', space=vmem, size = 0x12000, scoped, tag = 'internal scratch']
  #allocation2 [shape = 'f32[4,18,40]{2,1,0:T(8,128)}', space=vmem, size = 0xc000, scoped, tag = 'scratch operand']
  #allocation3 [shape = 'f32[128,38]{1,0:T(8,128)}', space=vmem, size = 0x10000, scoped, tag = 'scratch operand']
  %s0 = inlined_call_operand.vmem [shape: f32[256,16], index: 0, kind: input, shape index: {}]
  %s1 = inlined_call_operand.vmem [shape: f32[144,38], index: 1, kind: input, shape index: {}]
  %s2 = inlined_call_operand.vmem [shape: f32[4,38], index: 2, kind: input, shape index: {}]
  %s3 = inlined_call_operand.vmem [shape: f32[1,38], index: 3, kind: input, shape index: {}]
  %s4 = inlined_call_operand.vmem [shape: f32[1,38], index: 4, kind: input, shape index: {}]
  %s5 = inlined_call_operand.vmem [shape: f32[1,38], index: 5, kind: input, shape index: {}]
  %s6 = inlined_call_operand.vmem [shape: f32[38,32], index: 6, kind: input, shape index: {}]
  %s7 = inlined_call_operand.vmem [shape: f32[16], index: 7, kind: input, shape index: {}]
  %s8 = inlined_call_operand.vmem [shape: f32[4], index: 8, kind: input, shape index: {}]
  %s9 = inlined_call_operand.vmem [shape: f32[256,32], index: 9, kind: output, shape index: {}]
  %s10 = sld [smem:[#allocation0]]
  $region77: #{tpu_custom_call.1} parent=0
    _
  %s12 = ssub.s32 1, %s10
  %s13 = scalar_select 0, %s12, %s10
  $region1: #{tpu_custom_call.1} parent=0
    #allocation4 [shape = 'u8[512]{0}', space=smem, size = 0x200, scoped, tag = 'input window, operand 7, single buffered']
    #allocation5 [shape = 's32[2]{0}', space=sflag, size = 0x8, scoped, tag = 'scoped memory for tpu_custom_call.1']
    #allocation6 [shape = 'u8[512]{0}', space=smem, size = 0x200, scoped, tag = 'input window, operand 8, single buffered']
    #allocation7 [shape = 's32[1]{0}', space=sflag, size = 0x4, scoped, tag = 'scoped memory for tpu_custom_call.1']
    %14 = vsyncpa [#allocation5], 0
    %15 = vsyncpa [#allocation7], 0
    loop: start=0, step=1, limit=4
    $region2: #{tpu_custom_call.1} parent=1 // loop_pre_header
      _
    $region3: #{tpu_custom_call.1} parent=1 // loop_header
      %s17 = sphi 0, %s21
      %p18 = scmp.ge.s32.totalorder %s17, 4
      %s27 = sphi 0, %s29
      %s30 = sphi 0, %s27
      %s31 = sphi 0, %s30
      %s47 = sphi 0, %s31
      %s51 = sphi 0, %s51
      %s53 = sphi 0, %s51
      %s54 = sphi 0, %s53
      %s68 = sphi 0, %s54
      %s72 = sphi 0, %s72
      %s74 = sphi 0, %s72
      %s75 = sphi 0, %s74
      %s89 = sphi 0, %s75
      %s93 = sphi 0, %s93
      %s95 = sphi 0, %s93
      %s96 = sphi 0, %s95
      %s110 = sphi 0, %s96
      %s114 = sphi 0, %s114
      %s116 = sphi 0, %s114
      %s117 = sphi 0, %s116
      %s131 = sphi 0, %s117
      %s135 = sphi 0, %s135
      %s137 = sphi 0, %s135
      %s138 = sphi 0, %s137
      %s152 = sphi 0, %s138
      %s156 = sphi 0, %s156
      %s158 = sphi 0, %s156
      %s159 = sphi 0, %s158
      %s173 = sphi 0, %s159
      %s177 = sphi 0, %s177
      %s179 = sphi 0, %s177
      %s180 = sphi 0, %s179
      %s194 = sphi 0, %s180
      %s198 = sphi 0, %s198
      %s200 = sphi 0, %s198
      %s201 = sphi 0, %s200
      %s215 = sphi 0, %s201
      %s221 = sphi 0, %s223
      %s224 = sphi 0, %s221
      %s225 = sphi 0, %s224
      %s241 = sphi 0, %s225
    $region4: #{tpu_custom_call.1} parent=1 // loop_header_branch
      %20 = sbr.rel (%p18) target = $region8
    $region5: #{tpu_custom_call.1} parent=1 // loop_body
      %s22 = ssub.s32 %s17, 1
      %s23 = ssub.s32 %s17, 2
      %s24 = sadd.s32 %s17, 1
      %s25 = ssub.s32 %s17, %s24
      %p26 = scmp.eq.s32.totalorder %s25, 0
      %s28 = sadd.s32 %s27, 1
      %s29 = scalar_select %p26, %s27, %s28
      %p32 = pneg %p26
      %p33 = scmp.eq.s32.totalorder %s17, 1
      %p34 = por %p32, %p33
      %p35 = scmp.ne.s32.totalorder %s27, %s30
      %p36 = scmp.eq.s32.totalorder %s17, 0
      %p37 = por %p35, %p36
      %p38 = scmp.ne.s32.totalorder %s27, %s30
      %p39 = scmp.eq.s32.totalorder %s22, 1
      %p40 = por %p38, %p39
      %p41 = scmp.ne.s32.totalorder %s30, %s31
      %p42 = scmp.eq.s32.totalorder %s22, 0
      %p43 = por %p41, %p42
      %p44 = scmp.ne.s32.totalorder %s30, %s31
      %p45 = scmp.eq.s32.totalorder %s23, 1
      %p46 = por %p44, %p45
      %p48 = scmp.ne.s32.totalorder %s31, %s47
      %p49 = scmp.eq.s32.totalorder %s23, 0
      %p50 = por %p48, %p49
      %s52 = sadd.s32 %s51, 1
      %p55 = scmp.eq.s32.totalorder %s17, 1
      %p56 = scmp.ne.s32.totalorder %s51, %s53
      %p57 = scmp.eq.s32.totalorder %s17, 0
      %p58 = por %p56, %p57
      %p59 = scmp.ne.s32.totalorder %s51, %s53
      %p60 = scmp.eq.s32.totalorder %s22, 1
      %p61 = por %p59, %p60
      %p62 = scmp.ne.s32.totalorder %s53, %s54
      %p63 = scmp.eq.s32.totalorder %s22, 0
      %p64 = por %p62, %p63
      %p65 = scmp.ne.s32.totalorder %s53, %s54
      %p66 = scmp.eq.s32.totalorder %s23, 1
      %p67 = por %p65, %p66
      %p69 = scmp.ne.s32.totalorder %s54, %s68
      %p70 = scmp.eq.s32.totalorder %s23, 0
      %p71 = por %p69, %p70
      %s73 = sadd.s32 %s72, 1
      %p76 = scmp.eq.s32.totalorder %s17, 1
      %p77 = scmp.ne.s32.totalorder %s72, %s74
      %p78 = scmp.eq.s32.totalorder %s17, 0
      %p79 = por %p77, %p78
      %p80 = scmp.ne.s32.totalorder %s72, %s74
      %p81 = scmp.eq.s32.totalorder %s22, 1
      %p82 = por %p80, %p81
      %p83 = scmp.ne.s32.totalorder %s74, %s75
      %p84 = scmp.eq.s32.totalorder %s22, 0
      %p85 = por %p83, %p84
      %p86 = scmp.ne.s32.totalorder %s74, %s75
      %p87 = scmp.eq.s32.totalorder %s23, 1
      %p88 = por %p86, %p87
      %p90 = scmp.ne.s32.totalorder %s75, %s89
      %p91 = scmp.eq.s32.totalorder %s23, 0
      %p92 = por %p90, %p91
      %s94 = sadd.s32 %s93, 1
      %p97 = scmp.eq.s32.totalorder %s17, 1
      %p98 = scmp.ne.s32.totalorder %s93, %s95
      %p99 = scmp.eq.s32.totalorder %s17, 0
      %p100 = por %p98, %p99
      %p101 = scmp.ne.s32.totalorder %s93, %s95
      %p102 = scmp.eq.s32.totalorder %s22, 1
      %p103 = por %p101, %p102
      %p104 = scmp.ne.s32.totalorder %s95, %s96
      %p105 = scmp.eq.s32.totalorder %s22, 0
      %p106 = por %p104, %p105
      %p107 = scmp.ne.s32.totalorder %s95, %s96
      %p108 = scmp.eq.s32.totalorder %s23, 1
      %p109 = por %p107, %p108
      %p111 = scmp.ne.s32.totalorder %s96, %s110
      %p112 = scmp.eq.s32.totalorder %s23, 0
      %p113 = por %p111, %p112
      %s115 = sadd.s32 %s114, 1
      %p118 = scmp.eq.s32.totalorder %s17, 1
      %p119 = scmp.ne.s32.totalorder %s114, %s116
      %p120 = scmp.eq.s32.totalorder %s17, 0
      %p121 = por %p119, %p120
      %p122 = scmp.ne.s32.totalorder %s114, %s116
      %p123 = scmp.eq.s32.totalorder %s22, 1
      %p124 = por %p122, %p123
      %p125 = scmp.ne.s32.totalorder %s116, %s117
      %p126 = scmp.eq.s32.totalorder %s22, 0
      %p127 = por %p125, %p126
      %p128 = scmp.ne.s32.totalorder %s116, %s117
      %p129 = scmp.eq.s32.totalorder %s23, 1
      %p130 = por %p128, %p129
      %p132 = scmp.ne.s32.totalorder %s117, %s131
      %p133 = scmp.eq.s32.totalorder %s23, 0
      %p134 = por %p132, %p133
      %s136 = sadd.s32 %s135, 1
      %p139 = scmp.eq.s32.totalorder %s17, 1
      %p140 = scmp.ne.s32.totalorder %s135, %s137
      %p141 = scmp.eq.s32.totalorder %s17, 0
      %p142 = por %p140, %p141
      %p143 = scmp.ne.s32.totalorder %s135, %s137
      %p144 = scmp.eq.s32.totalorder %s22, 1
      %p145 = por %p143, %p144
      %p146 = scmp.ne.s32.totalorder %s137, %s138
      %p147 = scmp.eq.s32.totalorder %s22, 0
      %p148 = por %p146, %p147
      %p149 = scmp.ne.s32.totalorder %s137, %s138
      %p150 = scmp.eq.s32.totalorder %s23, 1
      %p151 = por %p149, %p150
      %p153 = scmp.ne.s32.totalorder %s138, %s152
      %p154 = scmp.eq.s32.totalorder %s23, 0
      %p155 = por %p153, %p154
      %s157 = sadd.s32 %s156, 1
      %p160 = scmp.eq.s32.totalorder %s17, 1
      %p161 = scmp.ne.s32.totalorder %s156, %s158
      %p162 = scmp.eq.s32.totalorder %s17, 0
      %p163 = por %p161, %p162
      %p164 = scmp.ne.s32.totalorder %s156, %s158
      %p165 = scmp.eq.s32.totalorder %s22, 1
      %p166 = por %p164, %p165
      %p167 = scmp.ne.s32.totalorder %s158, %s159
      %p168 = scmp.eq.s32.totalorder %s22, 0
      %p169 = por %p167, %p168
      %p170 = scmp.ne.s32.totalorder %s158, %s159
      %p171 = scmp.eq.s32.totalorder %s23, 1
      %p172 = por %p170, %p171
      %p174 = scmp.ne.s32.totalorder %s159, %s173
      %p175 = scmp.eq.s32.totalorder %s23, 0
      %p176 = por %p174, %p175
      %s178 = sadd.s32 %s177, 1
      %p181 = scmp.eq.s32.totalorder %s17, 1
      %p182 = scmp.ne.s32.totalorder %s177, %s179
      %p183 = scmp.eq.s32.totalorder %s17, 0
      %p184 = por %p182, %p183
      %p185 = scmp.ne.s32.totalorder %s177, %s179
      %p186 = scmp.eq.s32.totalorder %s22, 1
      %p187 = por %p185, %p186
      %p188 = scmp.ne.s32.totalorder %s179, %s180
      %p189 = scmp.eq.s32.totalorder %s22, 0
      %p190 = por %p188, %p189
      %p191 = scmp.ne.s32.totalorder %s179, %s180
      %p192 = scmp.eq.s32.totalorder %s23, 1
      %p193 = por %p191, %p192
      %p195 = scmp.ne.s32.totalorder %s180, %s194
      %p196 = scmp.eq.s32.totalorder %s23, 0
      %p197 = por %p195, %p196
      %s199 = sadd.s32 %s198, 1
      %p202 = scmp.eq.s32.totalorder %s17, 1
      %p203 = scmp.ne.s32.totalorder %s198, %s200
      %p204 = scmp.eq.s32.totalorder %s17, 0
      %p205 = por %p203, %p204
      %p206 = scmp.ne.s32.totalorder %s198, %s200
      %p207 = scmp.eq.s32.totalorder %s22, 1
      %p208 = por %p206, %p207
      %p209 = scmp.ne.s32.totalorder %s200, %s201
      %p210 = scmp.eq.s32.totalorder %s22, 0
      %p211 = por %p209, %p210
      %p212 = scmp.ne.s32.totalorder %s200, %s201
      %p213 = scmp.eq.s32.totalorder %s23, 1
      %p214 = por %p212, %p213
      %p216 = scmp.ne.s32.totalorder %s201, %s215
      %p217 = scmp.eq.s32.totalorder %s23, 0
      %p218 = por %p216, %p217
      %s219 = ssub.s32 %s17, %s24
      %p220 = scmp.eq.s32.totalorder %s219, 0
      %s222 = sadd.s32 %s221, 1
      %s223 = scalar_select %p220, %s221, %s222
      %p226 = pneg %p220
      %p227 = scmp.eq.s32.totalorder %s17, 1
      %p228 = por %p226, %p227
      %p229 = scmp.ne.s32.totalorder %s221, %s224
      %p230 = scmp.eq.s32.totalorder %s17, 0
      %p231 = por %p229, %p230
      %p232 = scmp.ne.s32.totalorder %s221, %s224
      %p233 = scmp.eq.s32.totalorder %s22, 1
      %p234 = por %p232, %p233
      %p235 = scmp.ne.s32.totalorder %s224, %s225
      %p236 = scmp.eq.s32.totalorder %s22, 0
      %p237 = por %p235, %p236
      %p238 = scmp.ne.s32.totalorder %s224, %s225
      %p239 = scmp.eq.s32.totalorder %s23, 1
      %p240 = por %p238, %p239
      %p242 = scmp.ne.s32.totalorder %s225, %s241
      %p243 = scmp.eq.s32.totalorder %s23, 0
      %p244 = por %p242, %p243
      %p245 = scmp.le.s32.totalorder 1, %s17
      %p246 = scmp.lt.s32.totalorder %s17, 3
      %p247 = pnand %p245, %p246
      %p248 = pneg %p247
      // Predicated region
      $region9: #{tpu_custom_call.1} parent=5 // pred_check
        _
      $region10: #{tpu_custom_call.1} parent=5 // pred_check_branch
        %250 = sbr.rel (%p247) target = $region12
      $region11: #{tpu_custom_call.1} parent=5 // pred_region
        %s251 = ssub.s32 %s17, 1
        // Predicated region
        $region13: #{tpu_custom_call.1} parent=11 // pred_check
          %p252 = pneg %p64
        $region14: #{tpu_custom_call.1} parent=11 // pred_check_branch
          %254 = sbr.rel (%p252) target = $region16
        $region15: #{tpu_custom_call.1} parent=11 // pred_region
          _
        $region16: #{tpu_custom_call.1} parent=11 // pred_fallthru
          _
        // Predicated region
        $region17: #{tpu_custom_call.1} parent=11 // pred_check
          %p255 = pneg %p85
        $region18: #{tpu_custom_call.1} parent=11 // pred_check_branch
          %257 = sbr.rel (%p255) target = $region20
        $region19: #{tpu_custom_call.1} parent=11 // pred_region
          _
        $region20: #{tpu_custom_call.1} parent=11 // pred_fallthru
          _
        // Predicated region
        $region21: #{tpu_custom_call.1} parent=11 // pred_check
          %p258 = pneg %p106
        $region22: #{tpu_custom_call.1} parent=11 // pred_check_branch
          %260 = sbr.rel (%p258) target = $region24
        $region23: #{tpu_custom_call.1} parent=11 // pred_region
          _
        $region24: #{tpu_custom_call.1} parent=11 // pred_fallthru
          _
        // Predicated region
        $region25: #{tpu_custom_call.1} parent=11 // pred_check
          %p261 = pneg %p127
        $region26: #{tpu_custom_call.1} parent=11 // pred_check_branch
          %263 = sbr.rel (%p261) target = $region28
        $region27: #{tpu_custom_call.1} parent=11 // pred_region
          _
        $region28: #{tpu_custom_call.1} parent=11 // pred_fallthru
          _
        // Predicated region
        $region29: #{tpu_custom_call.1} parent=11 // pred_check
          %p264 = pneg %p148
        $region30: #{tpu_custom_call.1} parent=11 // pred_check_branch
          %266 = sbr.rel (%p264) target = $region32
        $region31: #{tpu_custom_call.1} parent=11 // pred_region
          _
        $region32: #{tpu_custom_call.1} parent=11 // pred_fallthru
          _
        // Predicated region
        $region33: #{tpu_custom_call.1} parent=11 // pred_check
          %p267 = pneg %p169
        $region34: #{tpu_custom_call.1} parent=11 // pred_check_branch
          %269 = sbr.rel (%p267) target = $region36
        $region35: #{tpu_custom_call.1} parent=11 // pred_region
          _
        $region36: #{tpu_custom_call.1} parent=11 // pred_fallthru
          _
        // Predicated region
        $region37: #{tpu_custom_call.1} parent=11 // pred_check
          %p270 = pneg %p190
        $region38: #{tpu_custom_call.1} parent=11 // pred_check_branch
          %272 = sbr.rel (%p270) target = $region40
        $region39: #{tpu_custom_call.1} parent=11 // pred_region
          %s274 = ssub.s32 16, 16
          %275 = vsyncadd [#allocation5], %s274
          %s277 = sshll.u32 %s7, 4
          %s278 = int_to_ptr.vmem [resolvable:$true] %s277
          %280 = dma.vmem_to_smem %s278, 16, [#allocation4], [#allocation5]
        $region40: #{tpu_custom_call.1} parent=11 // pred_fallthru
          _
        // Predicated region
        $region41: #{tpu_custom_call.1} parent=11 // pred_check
          %p281 = pneg %p211
        $region42: #{tpu_custom_call.1} parent=11 // pred_check_branch
          %283 = sbr.rel (%p281) target = $region44
        $region43: #{tpu_custom_call.1} parent=11 // pred_region
          %s285 = ssub.s32 16, 16
          %286 = vsyncadd [#allocation7], %s285
          %s288 = sshll.u32 %s8, 4
          %s289 = int_to_ptr.vmem [resolvable:$true] %s288
          %291 = dma.vmem_to_smem %s289, 16, [#allocation6], [#allocation7]
        $region44: #{tpu_custom_call.1} parent=11 // pred_fallthru
          _
      $region12: #{tpu_custom_call.1} parent=5 // pred_fallthru
        _
      %p292 = scmp.lt.s32.totalorder %s17, 2
      // Predicated region
      $region45: #{tpu_custom_call.1} parent=5 // pred_check
        %p293 = pneg %p292
      $region46: #{tpu_custom_call.1} parent=5 // pred_check_branch
        %295 = sbr.rel (%p293) target = $region48
      $region47: #{tpu_custom_call.1} parent=5 // pred_region
        // Predicated region
        $region49: #{tpu_custom_call.1} parent=47 // pred_check
          %p296 = pneg %p37
        $region50: #{tpu_custom_call.1} parent=47 // pred_check_branch
          %298 = sbr.rel (%p296) target = $region52
        $region51: #{tpu_custom_call.1} parent=47 // pred_region
          %s299 = smul.u32 16, %s17
          %p300 = scmp.lt.s32.totalorder %s299, 31
          %s301 = scalar_select %p300, %s299, 31
          %s302 = smul.addr %s301, 8
          %s303 = scalar_lea.vmem %s0, %s302
          %s304 = smul.u32 16, %s17
        $region52: #{tpu_custom_call.1} parent=47 // pred_fallthru
          _
      $region48: #{tpu_custom_call.1} parent=5 // pred_fallthru
        _
      %p305 = scmp.le.s32.totalorder 1, %s17
      %p306 = scmp.lt.s32.totalorder %s17, 3
      %p307 = pnand %p305, %p306
      %p308 = pneg %p307
      // Predicated region
      $region53: #{tpu_custom_call.1} parent=5 // pred_check
        _
      $region54: #{tpu_custom_call.1} parent=5 // pred_check_branch
        %310 = sbr.rel (%p307) target = $region56
      $region55: #{tpu_custom_call.1} parent=5 // pred_region
        %s311 = ssub.s32 %s17, 1
        // Predicated region
        $region57: #{tpu_custom_call.1} parent=55 // pred_check
          %p312 = pneg %p190
        $region58: #{tpu_custom_call.1} parent=55 // pred_check_branch
          %314 = sbr.rel (%p312) target = $region60
        $region59: #{tpu_custom_call.1} parent=55 // pred_region
          %315 = dma.done [#allocation5], 16
        $region60: #{tpu_custom_call.1} parent=55 // pred_fallthru
          _
        // Predicated region
        $region61: #{tpu_custom_call.1} parent=55 // pred_check
          %p316 = pneg %p211
        $region62: #{tpu_custom_call.1} parent=55 // pred_check_branch
          %318 = sbr.rel (%p316) target = $region64
        $region63: #{tpu_custom_call.1} parent=55 // pred_region
          %319 = dma.done [#allocation7], 16
        $region64: #{tpu_custom_call.1} parent=55 // pred_fallthru
          _
        %320 = sfence
        %s321 = smul.u32 16, %s22
        %p322 = scmp.lt.s32.totalorder %s321, 31
        %s323 = scalar_select %p322, %s321, 31
        %s324 = smul.addr %s323, 8
        %s325 = scalar_lea.vmem %s0, %s324
        %p326 = pneg %p43
        %p327 = pneg %p40
        %p328 = pneg %p64
        %p329 = pneg %p61
        %p330 = pneg %p85
        %p331 = pneg %p82
        %p332 = pneg %p106
        %p333 = pneg %p103
        %p334 = pneg %p127
        %p335 = pneg %p124
        %p336 = pneg %p148
        %p337 = pneg %p145
        %p338 = pneg %p169
        %p339 = pneg %p166
        %p340 = pneg %p190
        %p341 = pneg %p187
        %p342 = pneg %p211
        %p343 = pneg %p208
        %p344 = pneg %p237
        %p345 = pneg %p234
        %s346 = smul.u32 16, %s22
        %p347 = scmp.lt.s32.totalorder %s346, 31
        %s348 = scalar_select %p347, %s346, 31
        %s349 = smul.addr %s348, 8
        %s350 = scalar_lea.vmem %s9, %s349
        %s351 = smul.u32 16, %s22
        %p352 = scmp.lt.s32.totalorder %s351, 31
        %s353 = scalar_select %p352, %s351, 31
        %s354 = smul.addr %s353, 8
        %s355 = scalar_lea.vmem %s0, %s354
        %s356 = smul.u32 16, %s22
        %s357 = smul.u32 16, %s22
        %p358 = scmp.lt.s32.totalorder %s357, 31
        %s359 = scalar_select %p358, %s357, 31
        %s360 = smul.addr %s359, 8
        %s361 = scalar_lea.vmem %s9, %s360
        %s362 = smul.u32 16, %s22
        %vm363 = vcmask 326656
        %364 = vst.msk [vmem:[#allocation2] sm:$0xff] %vm363, 0.0
        %365 = vst.msk [vmem:[#allocation2 + $0x8] sm:$0xff] %vm363, 0.0
        %vm366 = vcmask 320512
        %367 = vst.msk [vmem:[#allocation2 + $0x10] sm:$0x3] %vm366, 0.0
        %368 = vst.msk [vmem:[#allocation2 + $0x18] sm:$0xff] %vm363, 0.0
        %369 = vst.msk [vmem:[#allocation2 + $0x20] sm:$0xff] %vm363, 0.0
        %370 = vst.msk [vmem:[#allocation2 + $0x28] sm:$0x3] %vm366, 0.0
        %371 = vst.msk [vmem:[#allocation2 + $0x30] sm:$0xff] %vm363, 0.0
        %372 = vst.msk [vmem:[#allocation2 + $0x38] sm:$0xff] %vm363, 0.0
        %373 = vst.msk [vmem:[#allocation2 + $0x40] sm:$0x3] %vm366, 0.0
        %374 = vst.msk [vmem:[#allocation2 + $0x48] sm:$0xff] %vm363, 0.0
        %375 = vst.msk [vmem:[#allocation2 + $0x50] sm:$0xff] %vm363, 0.0
        %376 = vst.msk [vmem:[#allocation2 + $0x58] sm:$0x3] %vm366, 0.0
        %v377 = vld [vmem:[%s3] sm:$0x1]
        %v378 = vld [vmem:[%s4] sm:$0x1]
        %v379 = vld [vmem:[%s5] sm:$0x1]
        %v380 = vld [vmem:[%s355] sm:$0xff]
        %v381 = vld [vmem:[%s355 + $0x8] sm:$0xff]
        %384 = vrot.lane.b32.xlu0 %v380, 1
        %v385 = vpop.permute.xlu0 %384
        %386 = vrot.lane.b32.xlu0 %v381, 1
        %v387 = vpop.permute.xlu0 %386
        %vm390 = vcmask 72712
        %391 = vst.msk [vmem:[#allocation2 + $0x1] sm:$0xff] %vm390, %v385
        %392 = vst.msk [vmem:[#allocation2 + $0x9] sm:$0xff] %vm390, %v387
        %393 = vrot.lane.b32.xlu0 %v380, 3
        %v394 = vpop.permute.xlu0 %393
        %395 = vrot.lane.b32.xlu0 %v381, 3
        %v396 = vpop.permute.xlu0 %395
        %vm399 = vcmask 154712
        %400 = vst.msk [vmem:[#allocation2 + $0x1] sm:$0xff] %vm399, %v394
        %401 = vst.msk [vmem:[#allocation2 + $0x9] sm:$0xff] %vm399, %v396
        %402 = vrot.lane.b32.xlu0 %v380, 13
        %v403 = vpop.permute.xlu0 %402
        %404 = vrot.lane.b32.xlu0 %v381, 13
        %v405 = vpop.permute.xlu0 %404
        %vm408 = vcmask 236712
        %409 = vst.msk [vmem:[#allocation2 + $0x1] sm:$0xff] %vm408, %v403
        %410 = vst.msk [vmem:[#allocation2 + $0x9] sm:$0xff] %vm408, %v405
        %411 = vrot.lane.b32.xlu0 %v380, 23
        %v412 = vpop.permute.xlu0 %411
        %413 = vrot.lane.b32.xlu0 %v381, 23
        %v414 = vpop.permute.xlu0 %413
        %vm417 = vcmask 318712
        %418 = vst.msk [vmem:[#allocation2 + $0x1] sm:$0xff] %vm417, %v412
        %419 = vst.msk [vmem:[#allocation2 + $0x9] sm:$0xff] %vm417, %v414
        %v420 = vld [vmem:[%s355 + $0x10] sm:$0xff]
        %v421 = vld [vmem:[%s355 + $0x18] sm:$0xff]
        %424 = vrot.lane.b32.xlu0 %v420, 1
        %v425 = vpop.permute.xlu0 %424
        %426 = vrot.lane.b32.xlu0 %v421, 1
        %v427 = vpop.permute.xlu0 %426
        %s430 = scalar_lea.vmem [#allocation2], 24
        %431 = vst.msk [vmem:[%s430 + $0x1] sm:$0xff] %vm390, %v425
        %432 = vst.msk [vmem:[%s430 + $0x9] sm:$0xff] %vm390, %v427
        %433 = vrot.lane.b32.xlu0 %v420, 3
        %v434 = vpop.permute.xlu0 %433
        %435 = vrot.lane.b32.xlu0 %v421, 3
        %v436 = vpop.permute.xlu0 %435
        %439 = vst.msk [vmem:[%s430 + $0x1] sm:$0xff] %vm399, %v434
        %440 = vst.msk [vmem:[%s430 + $0x9] sm:$0xff] %vm399, %v436
        %441 = vrot.lane.b32.xlu0 %v420, 13
        %v442 = vpop.permute.xlu0 %441
        %443 = vrot.lane.b32.xlu0 %v421, 13
        %v444 = vpop.permute.xlu0 %443
        %447 = vst.msk [vmem:[%s430 + $0x1] sm:$0xff] %vm408, %v442
        %448 = vst.msk [vmem:[%s430 + $0x9] sm:$0xff] %vm408, %v444
        %449 = vrot.lane.b32.xlu0 %v420, 23
        %v450 = vpop.permute.xlu0 %449
        %451 = vrot.lane.b32.xlu0 %v421, 23
        %v452 = vpop.permute.xlu0 %451
        %455 = vst.msk [vmem:[%s430 + $0x1] sm:$0xff] %vm417, %v450
        %456 = vst.msk [vmem:[%s430 + $0x9] sm:$0xff] %vm417, %v452
        %v457 = vld [vmem:[%s355 + $0x20] sm:$0xff]
        %v458 = vld [vmem:[%s355 + $0x28] sm:$0xff]
        %461 = vrot.lane.b32.xlu0 %v457, 1
        %v462 = vpop.permute.xlu0 %461
        %463 = vrot.lane.b32.xlu0 %v458, 1
        %v464 = vpop.permute.xlu0 %463
        %s467 = scalar_lea.vmem [#allocation2], 48
        %468 = vst.msk [vmem:[%s467 + $0x1] sm:$0xff] %vm390, %v462
        %469 = vst.msk [vmem:[%s467 + $0x9] sm:$0xff] %vm390, %v464
        %470 = vrot.lane.b32.xlu0 %v457, 3
        %v471 = vpop.permute.xlu0 %470
        %472 = vrot.lane.b32.xlu0 %v458, 3
        %v473 = vpop.permute.xlu0 %472
        %476 = vst.msk [vmem:[%s467 + $0x1] sm:$0xff] %vm399, %v471
        %477 = vst.msk [vmem:[%s467 + $0x9] sm:$0xff] %vm399, %v473
        %478 = vrot.lane.b32.xlu0 %v457, 13
        %v479 = vpop.permute.xlu0 %478
        %480 = vrot.lane.b32.xlu0 %v458, 13
        %v481 = vpop.permute.xlu0 %480
        %484 = vst.msk [vmem:[%s467 + $0x1] sm:$0xff] %vm408, %v479
        %485 = vst.msk [vmem:[%s467 + $0x9] sm:$0xff] %vm408, %v481
        %486 = vrot.lane.b32.xlu0 %v457, 23
        %v487 = vpop.permute.xlu0 %486
        %488 = vrot.lane.b32.xlu0 %v458, 23
        %v489 = vpop.permute.xlu0 %488
        %492 = vst.msk [vmem:[%s467 + $0x1] sm:$0xff] %vm417, %v487
        %493 = vst.msk [vmem:[%s467 + $0x9] sm:$0xff] %vm417, %v489
        %v494 = vld [vmem:[%s355 + $0x30] sm:$0xff]
        %v495 = vld [vmem:[%s355 + $0x38] sm:$0xff]
        %498 = vrot.lane.b32.xlu0 %v494, 1
        %v499 = vpop.permute.xlu0 %498
        %500 = vrot.lane.b32.xlu0 %v495, 1
        %v501 = vpop.permute.xlu0 %500
        %s504 = scalar_lea.vmem [#allocation2], 72
        %505 = vst.msk [vmem:[%s504 + $0x1] sm:$0xff] %vm390, %v499
        %506 = vst.msk [vmem:[%s504 + $0x9] sm:$0xff] %vm390, %v501
        %507 = vrot.lane.b32.xlu0 %v494, 3
        %v508 = vpop.permute.xlu0 %507
        %509 = vrot.lane.b32.xlu0 %v495, 3
        %v510 = vpop.permute.xlu0 %509
        %513 = vst.msk [vmem:[%s504 + $0x1] sm:$0xff] %vm399, %v508
        %514 = vst.msk [vmem:[%s504 + $0x9] sm:$0xff] %vm399, %v510
        %515 = vrot.lane.b32.xlu0 %v494, 13
        %v516 = vpop.permute.xlu0 %515
        %517 = vrot.lane.b32.xlu0 %v495, 13
        %v518 = vpop.permute.xlu0 %517
        %521 = vst.msk [vmem:[%s504 + $0x1] sm:$0xff] %vm408, %v516
        %522 = vst.msk [vmem:[%s504 + $0x9] sm:$0xff] %vm408, %v518
        %523 = vrot.lane.b32.xlu0 %v494, 23
        %v524 = vpop.permute.xlu0 %523
        %525 = vrot.lane.b32.xlu0 %v495, 23
        %v526 = vpop.permute.xlu0 %525
        %529 = vst.msk [vmem:[%s504 + $0x1] sm:$0xff] %vm417, %v524
        %530 = vst.msk [vmem:[%s504 + $0x9] sm:$0xff] %vm417, %v526
        %s531 = smul.u32 %s22, 8
        %s532 = sld [smem:[#allocation4 + %s531]]
        %v533 = vld [vmem:[%s2] sm:$0x1]
        %v534 = vstv %s532
        %v535 = vmul.f32 %v534, %v377
        %v536 = vadd.f32 %v533, %v535
        %s537 = sadd.s32 %s531, 1
        %s538 = sld [smem:[#allocation4 + %s537]]
        %v539 = vld [vmem:[%s2 + $0x1] sm:$0x1]
        %v540 = vstv %s538
        %v541 = vmul.f32 %v540, %v377
        %v542 = vadd.f32 %v539, %v541
        %s543 = sadd.s32 %s531, 2
        %s544 = sld [smem:[#allocation4 + %s543]]
        %v545 = vld [vmem:[%s2 + $0x2] sm:$0x1]
        %v546 = vstv %s544
        %v547 = vmul.f32 %v546, %v377
        %v548 = vadd.f32 %v545, %v547
        %s549 = sadd.s32 %s531, 3
        %s550 = sld [smem:[#allocation4 + %s549]]
        %v551 = vld [vmem:[%s2 + $0x3] sm:$0x1]
        %v552 = vstv %s550
        %v553 = vmul.f32 %v552, %v377
        %v554 = vadd.f32 %v551, %v553
        %v555 = vld [vmem:[#allocation2] sm:$0xff]
        %v556 = vld [vmem:[#allocation2 + $0x8] sm:$0xff]
        %v557 = vld [vmem:[%s1] sm:$0x1]
        %v558 = vlaneseq
        %v559 = vshrl.u32 %v558, 7
        %v560 = vsub.s32 0, %v559
        %v561 = vrot.slane %v557, %v560
        %v562 = vmul.f32 %v555, %v561
        %v563 = vmul.f32 %v556, %v561
        %v564 = vlaneseq
        %v565 = vshrl.u32 %v564, 7
        %v566 = vsub.s32 0, %v565
        %v567 = vrot.slane %v536, %v566
        %v568 = vadd.f32 %v567, %v562
        %v569 = vadd.f32 %v567, %v563
        %v570 = vld [vmem:[%s1 + $0x24] sm:$0x1]
        %v571 = vlaneseq
        %v572 = vshrl.u32 %v571, 7
        %v573 = vsub.s32 0, %v572
        %v574 = vrot.slane %v570, %v573
        %v575 = vmul.f32 %v555, %v574
        %v576 = vmul.f32 %v556, %v574
        %v577 = vlaneseq
        %v578 = vshrl.u32 %v577, 7
        %v579 = vsub.s32 0, %v578
        %v580 = vrot.slane %v542, %v579
        %v581 = vadd.f32 %v580, %v575
        %v582 = vadd.f32 %v580, %v576
        %v583 = vld [vmem:[%s1 + $0x48] sm:$0x1]
        %v584 = vlaneseq
        %v585 = vshrl.u32 %v584, 7
        %v586 = vsub.s32 0, %v585
        %v587 = vrot.slane %v583, %v586
        %v588 = vmul.f32 %v555, %v587
        %v589 = vmul.f32 %v556, %v587
        %v590 = vlaneseq
        %v591 = vshrl.u32 %v590, 7
        %v592 = vsub.s32 0, %v591
        %v593 = vrot.slane %v548, %v592
        %v594 = vadd.f32 %v593, %v588
        %v595 = vadd.f32 %v593, %v589
        %v596 = vld [vmem:[%s1 + $0x6c] sm:$0x1]
        %v597 = vlaneseq
        %v598 = vshrl.u32 %v597, 7
        %v599 = vsub.s32 0, %v598
        %v600 = vrot.slane %v596, %v599
        %v601 = vmul.f32 %v555, %v600
        %v602 = vmul.f32 %v556, %v600
        %v603 = vlaneseq
        %v604 = vshrl.u32 %v603, 7
        %v605 = vsub.s32 0, %v604
        %v606 = vrot.slane %v554, %v605
        %v607 = vadd.f32 %v606, %v601
        %v608 = vadd.f32 %v606, %v602
        %v609 = vld [vmem:[%s1 + $0x1] sm:$0x1]
        %v610 = vlaneseq
        %v611 = vshrl.u32 %v610, 7
        %v612 = vsub.s32 0, %v611
        %v613 = vrot.slane %v609, %v612
        %615 = vrot.lane.b32.xlu0 %v613, 1
        %v616 = vpop.permute.xlu0 %615
        %v618 = vmul.f32 %v555, %v616
        %v619 = vmul.f32 %v556, %v616
        %622 = vrot.lane.b32.xlu0 %v618, 127
        %v623 = vpop.permute.xlu0 %622
        %624 = vrot.lane.b32.xlu0 %v619, 127
        %v625 = vpop.permute.xlu0 %624
        %v628 = vadd.f32 %v568, %v623
        %v629 = vadd.f32 %v569, %v625
        %v630 = vld [vmem:[%s1 + $0x25] sm:$0x1]
        %v631 = vlaneseq
        %v632 = vshrl.u32 %v631, 7
        %v633 = vsub.s32 0, %v632
        %v634 = vrot.slane %v630, %v633
        %636 = vrot.lane.b32.xlu0 %v634, 1
        %v637 = vpop.permute.xlu0 %636
        %v639 = vmul.f32 %v555, %v637
        %v640 = vmul.f32 %v556, %v637
        %643 = vrot.lane.b32.xlu0 %v639, 127
        %v644 = vpop.permute.xlu0 %643
        %645 = vrot.lane.b32.xlu0 %v640, 127
        %v646 = vpop.permute.xlu0 %645
        %v649 = vadd.f32 %v581, %v644
        %v650 = vadd.f32 %v582, %v646
        %v651 = vld [vmem:[%s1 + $0x49] sm:$0x1]
        %v652 = vlaneseq
        %v653 = vshrl.u32 %v652, 7
        %v654 = vsub.s32 0, %v653
        %v655 = vrot.slane %v651, %v654
        %657 = vrot.lane.b32.xlu0 %v655, 1
        %v658 = vpop.permute.xlu0 %657
        %v660 = vmul.f32 %v555, %v658
        %v661 = vmul.f32 %v556, %v658
        %664 = vrot.lane.b32.xlu0 %v660, 127
        %v665 = vpop.permute.xlu0 %664
        %666 = vrot.lane.b32.xlu0 %v661, 127
        %v667 = vpop.permute.xlu0 %666
        %v670 = vadd.f32 %v594, %v665
        %v671 = vadd.f32 %v595, %v667
        %v672 = vld [vmem:[%s1 + $0x6d] sm:$0x1]
        %v673 = vlaneseq
        %v674 = vshrl.u32 %v673, 7
        %v675 = vsub.s32 0, %v674
        %v676 = vrot.slane %v672, %v675
        %678 = vrot.lane.b32.xlu0 %v676, 1
        %v679 = vpop.permute.xlu0 %678
        %v681 = vmul.f32 %v555, %v679
        %v682 = vmul.f32 %v556, %v679
        %685 = vrot.lane.b32.xlu0 %v681, 127
        %v686 = vpop.permute.xlu0 %685
        %687 = vrot.lane.b32.xlu0 %v682, 127
        %v688 = vpop.permute.xlu0 %687
        %v691 = vadd.f32 %v607, %v686
        %v692 = vadd.f32 %v608, %v688
        %v693 = vld [vmem:[%s1 + $0x2] sm:$0x1]
        %v694 = vlaneseq
        %v695 = vshrl.u32 %v694, 7
        %v696 = vsub.s32 0, %v695
        %v697 = vrot.slane %v693, %v696
        %699 = vrot.lane.b32.xlu0 %v697, 2
        %v700 = vpop.permute.xlu0 %699
        %v702 = vmul.f32 %v555, %v700
        %v703 = vmul.f32 %v556, %v700
        %706 = vrot.lane.b32.xlu0 %v702, 126
        %v707 = vpop.permute.xlu0 %706
        %708 = vrot.lane.b32.xlu0 %v703, 126
        %v709 = vpop.permute.xlu0 %708
        %v712 = vadd.f32 %v628, %v707
        %v713 = vadd.f32 %v629, %v709
        %v714 = vld [vmem:[%s1 + $0x26] sm:$0x1]
        %v715 = vlaneseq
        %v716 = vshrl.u32 %v715, 7
        %v717 = vsub.s32 0, %v716
        %v718 = vrot.slane %v714, %v717
        %720 = vrot.lane.b32.xlu0 %v718, 2
        %v721 = vpop.permute.xlu0 %720
        %v723 = vmul.f32 %v555, %v721
        %v724 = vmul.f32 %v556, %v721
        %727 = vrot.lane.b32.xlu0 %v723, 126
        %v728 = vpop.permute.xlu0 %727
        %729 = vrot.lane.b32.xlu0 %v724, 126
        %v730 = vpop.permute.xlu0 %729
        %v733 = vadd.f32 %v649, %v728
        %v734 = vadd.f32 %v650, %v730
        %v735 = vld [vmem:[%s1 + $0x4a] sm:$0x1]
        %v736 = vlaneseq
        %v737 = vshrl.u32 %v736, 7
        %v738 = vsub.s32 0, %v737
        %v739 = vrot.slane %v735, %v738
        %741 = vrot.lane.b32.xlu0 %v739, 2
        %v742 = vpop.permute.xlu0 %741
        %v744 = vmul.f32 %v555, %v742
        %v745 = vmul.f32 %v556, %v742
        %748 = vrot.lane.b32.xlu0 %v744, 126
        %v749 = vpop.permute.xlu0 %748
        %750 = vrot.lane.b32.xlu0 %v745, 126
        %v751 = vpop.permute.xlu0 %750
        %v754 = vadd.f32 %v670, %v749
        %v755 = vadd.f32 %v671, %v751
        %v756 = vld [vmem:[%s1 + $0x6e] sm:$0x1]
        %v757 = vlaneseq
        %v758 = vshrl.u32 %v757, 7
        %v759 = vsub.s32 0, %v758
        %v760 = vrot.slane %v756, %v759
        %762 = vrot.lane.b32.xlu0 %v760, 2
        %v763 = vpop.permute.xlu0 %762
        %v765 = vmul.f32 %v555, %v763
        %v766 = vmul.f32 %v556, %v763
        %769 = vrot.lane.b32.xlu0 %v765, 126
        %v770 = vpop.permute.xlu0 %769
        %771 = vrot.lane.b32.xlu0 %v766, 126
        %v772 = vpop.permute.xlu0 %771
        %v775 = vadd.f32 %v691, %v770
        %v776 = vadd.f32 %v692, %v772
        %v777 = vld [vmem:[#allocation2 + $0x1] sm:$0xff]
        %v778 = vld [vmem:[#allocation2 + $0x9] sm:$0xff]
        %v779 = vld [vmem:[%s1 + $0x3] sm:$0x1]
        %v780 = vlaneseq
        %v781 = vshrl.u32 %v780, 7
        %v782 = vsub.s32 0, %v781
        %v783 = vrot.slane %v779, %v782
        %v784 = vmul.f32 %v777, %v783
        %v785 = vmul.f32 %v778, %v783
        %v786 = vadd.f32 %v712, %v784
        %v787 = vadd.f32 %v713, %v785
        %v788 = vld [vmem:[%s1 + $0x27] sm:$0x1]
        %v789 = vlaneseq
        %v790 = vshrl.u32 %v789, 7
        %v791 = vsub.s32 0, %v790
        %v792 = vrot.slane %v788, %v791
        %v793 = vmul.f32 %v777, %v792
        %v794 = vmul.f32 %v778, %v792
        %v795 = vadd.f32 %v733, %v793
        %v796 = vadd.f32 %v734, %v794
        %v797 = vld [vmem:[%s1 + $0x4b] sm:$0x1]
        %v798 = vlaneseq
        %v799 = vshrl.u32 %v798, 7
        %v800 = vsub.s32 0, %v799
        %v801 = vrot.slane %v797, %v800
        %v802 = vmul.f32 %v777, %v801
        %v803 = vmul.f32 %v778, %v801
        %v804 = vadd.f32 %v754, %v802
        %v805 = vadd.f32 %v755, %v803
        %v806 = vld [vmem:[%s1 + $0x6f] sm:$0x1]
        %v807 = vlaneseq
        %v808 = vshrl.u32 %v807, 7
        %v809 = vsub.s32 0, %v808
        %v810 = vrot.slane %v806, %v809
        %v811 = vmul.f32 %v777, %v810
        %v812 = vmul.f32 %v778, %v810
        %v813 = vadd.f32 %v775, %v811
        %v814 = vadd.f32 %v776, %v812
        %v815 = vld [vmem:[%s1 + $0x4] sm:$0x1]
        %v816 = vlaneseq
        %v817 = vshrl.u32 %v816, 7
        %v818 = vsub.s32 0, %v817
        %v819 = vrot.slane %v815, %v818
        %821 = vrot.lane.b32.xlu0 %v819, 1
        %v822 = vpop.permute.xlu0 %821
        %v824 = vmul.f32 %v777, %v822
        %v825 = vmul.f32 %v778, %v822
        %828 = vrot.lane.b32.xlu0 %v824, 127
        %v829 = vpop.permute.xlu0 %828
        %830 = vrot.lane.b32.xlu0 %v825, 127
        %v831 = vpop.permute.xlu0 %830
        %v834 = vadd.f32 %v786, %v829
        %v835 = vadd.f32 %v787, %v831
        %v836 = vld [vmem:[%s1 + $0x28] sm:$0x1]
        %v837 = vlaneseq
        %v838 = vshrl.u32 %v837, 7
        %v839 = vsub.s32 0, %v838
        %v840 = vrot.slane %v836, %v839
        %842 = vrot.lane.b32.xlu0 %v840, 1
        %v843 = vpop.permute.xlu0 %842
        %v845 = vmul.f32 %v777, %v843
        %v846 = vmul.f32 %v778, %v843
        %849 = vrot.lane.b32.xlu0 %v845, 127
        %v850 = vpop.permute.xlu0 %849
        %851 = vrot.lane.b32.xlu0 %v846, 127
        %v852 = vpop.permute.xlu0 %851
        %v855 = vadd.f32 %v795, %v850
        %v856 = vadd.f32 %v796, %v852
        %v857 = vld [vmem:[%s1 + $0x4c] sm:$0x1]
        %v858 = vlaneseq
        %v859 = vshrl.u32 %v858, 7
        %v860 = vsub.s32 0, %v859
        %v861 = vrot.slane %v857, %v860
        %863 = vrot.lane.b32.xlu0 %v861, 1
        %v864 = vpop.permute.xlu0 %863
        %v866 = vmul.f32 %v777, %v864
        %v867 = vmul.f32 %v778, %v864
        %870 = vrot.lane.b32.xlu0 %v866, 127
        %v871 = vpop.permute.xlu0 %870
        %872 = vrot.lane.b32.xlu0 %v867, 127
        %v873 = vpop.permute.xlu0 %872
        %v876 = vadd.f32 %v804, %v871
        %v877 = vadd.f32 %v805, %v873
        %v878 = vld [vmem:[%s1 + $0x70] sm:$0x1]
        %v879 = vlaneseq
        %v880 = vshrl.u32 %v879, 7
        %v881 = vsub.s32 0, %v880
        %v882 = vrot.slane %v878, %v881
        %884 = vrot.lane.b32.xlu0 %v882, 1
        %v885 = vpop.permute.xlu0 %884
        %v887 = vmul.f32 %v777, %v885
        %v888 = vmul.f32 %v778, %v885
        %891 = vrot.lane.b32.xlu0 %v887, 127
        %v892 = vpop.permute.xlu0 %891
        %893 = vrot.lane.b32.xlu0 %v888, 127
        %v894 = vpop.permute.xlu0 %893
        %v897 = vadd.f32 %v813, %v892
        %v898 = vadd.f32 %v814, %v894
        %v899 = vld [vmem:[%s1 + $0x5] sm:$0x1]
        %v900 = vlaneseq
        %v901 = vshrl.u32 %v900, 7
        %v902 = vsub.s32 0, %v901
        %v903 = vrot.slane %v899, %v902
        %905 = vrot.lane.b32.xlu0 %v903, 2
        %v906 = vpop.permute.xlu0 %905
        %v908 = vmul.f32 %v777, %v906
        %v909 = vmul.f32 %v778, %v906
        %912 = vrot.lane.b32.xlu0 %v908, 126
        %v913 = vpop.permute.xlu0 %912
        %914 = vrot.lane.b32.xlu0 %v909, 126
        %v915 = vpop.permute.xlu0 %914
        %v918 = vadd.f32 %v834, %v913
        %v919 = vadd.f32 %v835, %v915
        %v920 = vld [vmem:[%s1 + $0x29] sm:$0x1]
        %v921 = vlaneseq
        %v922 = vshrl.u32 %v921, 7
        %v923 = vsub.s32 0, %v922
        %v924 = vrot.slane %v920, %v923
        %926 = vrot.lane.b32.xlu0 %v924, 2
        %v927 = vpop.permute.xlu0 %926
        %v929 = vmul.f32 %v777, %v927
        %v930 = vmul.f32 %v778, %v927
        %933 = vrot.lane.b32.xlu0 %v929, 126
        %v934 = vpop.permute.xlu0 %933
        %935 = vrot.lane.b32.xlu0 %v930, 126
        %v936 = vpop.permute.xlu0 %935
        %v939 = vadd.f32 %v855, %v934
        %v940 = vadd.f32 %v856, %v936
        %v941 = vld [vmem:[%s1 + $0x4d] sm:$0x1]
        %v942 = vlaneseq
        %v943 = vshrl.u32 %v942, 7
        %v944 = vsub.s32 0, %v943
        %v945 = vrot.slane %v941, %v944
        %947 = vrot.lane.b32.xlu0 %v945, 2
        %v948 = vpop.permute.xlu0 %947
        %v950 = vmul.f32 %v777, %v948
        %v951 = vmul.f32 %v778, %v948
        %954 = vrot.lane.b32.xlu0 %v950, 126
        %v955 = vpop.permute.xlu0 %954
        %956 = vrot.lane.b32.xlu0 %v951, 126
        %v957 = vpop.permute.xlu0 %956
        %v960 = vadd.f32 %v876, %v955
        %v961 = vadd.f32 %v877, %v957
        %v962 = vld [vmem:[%s1 + $0x71] sm:$0x1]
        %v963 = vlaneseq
        %v964 = vshrl.u32 %v963, 7
        %v965 = vsub.s32 0, %v964
        %v966 = vrot.slane %v962, %v965
        %968 = vrot.lane.b32.xlu0 %v966, 2
        %v969 = vpop.permute.xlu0 %968
        %v971 = vmul.f32 %v777, %v969
        %v972 = vmul.f32 %v778, %v969
        %975 = vrot.lane.b32.xlu0 %v971, 126
        %v976 = vpop.permute.xlu0 %975
        %977 = vrot.lane.b32.xlu0 %v972, 126
        %v978 = vpop.permute.xlu0 %977
        %v981 = vadd.f32 %v897, %v976
        %v982 = vadd.f32 %v898, %v978
        %v983 = vld [vmem:[#allocation2 + $0x2] sm:$0xff]
        %v984 = vld [vmem:[#allocation2 + $0xa] sm:$0xff]
        %v985 = vld [vmem:[%s1 + $0x6] sm:$0x1]
        %v986 = vlaneseq
        %v987 = vshrl.u32 %v986, 7
        %v988 = vsub.s32 0, %v987
        %v989 = vrot.slane %v985, %v988
        %v990 = vmul.f32 %v983, %v989
        %v991 = vmul.f32 %v984, %v989
        %v992 = vadd.f32 %v918, %v990
        %v993 = vadd.f32 %v919, %v991
        %v994 = vld [vmem:[%s1 + $0x2a] sm:$0x1]
        %v995 = vlaneseq
        %v996 = vshrl.u32 %v995, 7
        %v997 = vsub.s32 0, %v996
        %v998 = vrot.slane %v994, %v997
        %v999 = vmul.f32 %v983, %v998
        %v1000 = vmul.f32 %v984, %v998
        %v1001 = vadd.f32 %v939, %v999
        %v1002 = vadd.f32 %v940, %v1000
        %v1003 = vld [vmem:[%s1 + $0x4e] sm:$0x1]
        %v1004 = vlaneseq
        %v1005 = vshrl.u32 %v1004, 7
        %v1006 = vsub.s32 0, %v1005
        %v1007 = vrot.slane %v1003, %v1006
        %v1008 = vmul.f32 %v983, %v1007
        %v1009 = vmul.f32 %v984, %v1007
        %v1010 = vadd.f32 %v960, %v1008
        %v1011 = vadd.f32 %v961, %v1009
        %v1012 = vld [vmem:[%s1 + $0x72] sm:$0x1]
        %v1013 = vlaneseq
        %v1014 = vshrl.u32 %v1013, 7
        %v1015 = vsub.s32 0, %v1014
        %v1016 = vrot.slane %v1012, %v1015
        %v1017 = vmul.f32 %v983, %v1016
        %v1018 = vmul.f32 %v984, %v1016
        %v1019 = vadd.f32 %v981, %v1017
        %v1020 = vadd.f32 %v982, %v1018
        %v1021 = vld [vmem:[%s1 + $0x7] sm:$0x1]
        %v1022 = vlaneseq
        %v1023 = vshrl.u32 %v1022, 7
        %v1024 = vsub.s32 0, %v1023
        %v1025 = vrot.slane %v1021, %v1024
        %1027 = vrot.lane.b32.xlu0 %v1025, 1
        %v1028 = vpop.permute.xlu0 %1027
        %v1030 = vmul.f32 %v983, %v1028
        %v1031 = vmul.f32 %v984, %v1028
        %1034 = vrot.lane.b32.xlu0 %v1030, 127
        %v1035 = vpop.permute.xlu0 %1034
        %1036 = vrot.lane.b32.xlu0 %v1031, 127
        %v1037 = vpop.permute.xlu0 %1036
        %v1040 = vadd.f32 %v992, %v1035
        %v1041 = vadd.f32 %v993, %v1037
        %v1042 = vld [vmem:[%s1 + $0x2b] sm:$0x1]
        %v1043 = vlaneseq
        %v1044 = vshrl.u32 %v1043, 7
        %v1045 = vsub.s32 0, %v1044
        %v1046 = vrot.slane %v1042, %v1045
        %1048 = vrot.lane.b32.xlu0 %v1046, 1
        %v1049 = vpop.permute.xlu0 %1048
        %v1051 = vmul.f32 %v983, %v1049
        %v1052 = vmul.f32 %v984, %v1049
        %1055 = vrot.lane.b32.xlu0 %v1051, 127
        %v1056 = vpop.permute.xlu0 %1055
        %1057 = vrot.lane.b32.xlu0 %v1052, 127
        %v1058 = vpop.permute.xlu0 %1057
        %v1061 = vadd.f32 %v1001, %v1056
        %v1062 = vadd.f32 %v1002, %v1058
        %v1063 = vld [vmem:[%s1 + $0x4f] sm:$0x1]
        %v1064 = vlaneseq
        %v1065 = vshrl.u32 %v1064, 7
        %v1066 = vsub.s32 0, %v1065
        %v1067 = vrot.slane %v1063, %v1066
        %1069 = vrot.lane.b32.xlu0 %v1067, 1
        %v1070 = vpop.permute.xlu0 %1069
        %v1072 = vmul.f32 %v983, %v1070
        %v1073 = vmul.f32 %v984, %v1070
        %1076 = vrot.lane.b32.xlu0 %v1072, 127
        %v1077 = vpop.permute.xlu0 %1076
        %1078 = vrot.lane.b32.xlu0 %v1073, 127
        %v1079 = vpop.permute.xlu0 %1078
        %v1082 = vadd.f32 %v1010, %v1077
        %v1083 = vadd.f32 %v1011, %v1079
        %v1084 = vld [vmem:[%s1 + $0x73] sm:$0x1]
        %v1085 = vlaneseq
        %v1086 = vshrl.u32 %v1085, 7
        %v1087 = vsub.s32 0, %v1086
        %v1088 = vrot.slane %v1084, %v1087
        %1090 = vrot.lane.b32.xlu0 %v1088, 1
        %v1091 = vpop.permute.xlu0 %1090
        %v1093 = vmul.f32 %v983, %v1091
        %v1094 = vmul.f32 %v984, %v1091
        %1097 = vrot.lane.b32.xlu0 %v1093, 127
        %v1098 = vpop.permute.xlu0 %1097
        %1099 = vrot.lane.b32.xlu0 %v1094, 127
        %v1100 = vpop.permute.xlu0 %1099
        %v1103 = vadd.f32 %v1019, %v1098
        %v1104 = vadd.f32 %v1020, %v1100
        %v1105 = vld [vmem:[%s1 + $0x8] sm:$0x1]
        %v1106 = vlaneseq
        %v1107 = vshrl.u32 %v1106, 7
        %v1108 = vsub.s32 0, %v1107
        %v1109 = vrot.slane %v1105, %v1108
        %1111 = vrot.lane.b32.xlu0 %v1109, 2
        %v1112 = vpop.permute.xlu0 %1111
        %v1114 = vmul.f32 %v983, %v1112
        %v1115 = vmul.f32 %v984, %v1112
        %1118 = vrot.lane.b32.xlu0 %v1114, 126
        %v1119 = vpop.permute.xlu0 %1118
        %1120 = vrot.lane.b32.xlu0 %v1115, 126
        %v1121 = vpop.permute.xlu0 %1120
        %v1124 = vadd.f32 %v1040, %v1119
        %v1125 = vadd.f32 %v1041, %v1121
        %v1126 = vld [vmem:[%s1 + $0x2c] sm:$0x1]
        %v1127 = vlaneseq
        %v1128 = vshrl.u32 %v1127, 7
        %v1129 = vsub.s32 0, %v1128
        %v1130 = vrot.slane %v1126, %v1129
        %1132 = vrot.lane.b32.xlu0 %v1130, 2
        %v1133 = vpop.permute.xlu0 %1132
        %v1135 = vmul.f32 %v983, %v1133
        %v1136 = vmul.f32 %v984, %v1133
        %1139 = vrot.lane.b32.xlu0 %v1135, 126
        %v1140 = vpop.permute.xlu0 %1139
        %1141 = vrot.lane.b32.xlu0 %v1136, 126
        %v1142 = vpop.permute.xlu0 %1141
        %v1145 = vadd.f32 %v1061, %v1140
        %v1146 = vadd.f32 %v1062, %v1142
        %v1147 = vld [vmem:[%s1 + $0x50] sm:$0x1]
        %v1148 = vlaneseq
        %v1149 = vshrl.u32 %v1148, 7
        %v1150 = vsub.s32 0, %v1149
        %v1151 = vrot.slane %v1147, %v1150
        %1153 = vrot.lane.b32.xlu0 %v1151, 2
        %v1154 = vpop.permute.xlu0 %1153
        %v1156 = vmul.f32 %v983, %v1154
        %v1157 = vmul.f32 %v984, %v1154
        %1160 = vrot.lane.b32.xlu0 %v1156, 126
        %v1161 = vpop.permute.xlu0 %1160
        %1162 = vrot.lane.b32.xlu0 %v1157, 126
        %v1163 = vpop.permute.xlu0 %1162
        %v1166 = vadd.f32 %v1082, %v1161
        %v1167 = vadd.f32 %v1083, %v1163
        %v1168 = vld [vmem:[%s1 + $0x74] sm:$0x1]
        %v1169 = vlaneseq
        %v1170 = vshrl.u32 %v1169, 7
        %v1171 = vsub.s32 0, %v1170
        %v1172 = vrot.slane %v1168, %v1171
        %1174 = vrot.lane.b32.xlu0 %v1172, 2
        %v1175 = vpop.permute.xlu0 %1174
        %v1177 = vmul.f32 %v983, %v1175
        %v1178 = vmul.f32 %v984, %v1175
        %1181 = vrot.lane.b32.xlu0 %v1177, 126
        %v1182 = vpop.permute.xlu0 %1181
        %1183 = vrot.lane.b32.xlu0 %v1178, 126
        %v1184 = vpop.permute.xlu0 %1183
        %v1187 = vadd.f32 %v1103, %v1182
        %v1188 = vadd.f32 %v1104, %v1184
        %v1189 = vld [vmem:[%s430] sm:$0xff]
        %v1190 = vld [vmem:[%s430 + $0x8] sm:$0xff]
        %v1191 = vld [vmem:[%s1 + $0x9] sm:$0x1]
        %v1192 = vlaneseq
        %v1193 = vshrl.u32 %v1192, 7
        %v1194 = vsub.s32 0, %v1193
        %v1195 = vrot.slane %v1191, %v1194
        %v1196 = vmul.f32 %v1189, %v1195
        %v1197 = vmul.f32 %v1190, %v1195
        %v1198 = vadd.f32 %v1124, %v1196
        %v1199 = vadd.f32 %v1125, %v1197
        %v1200 = vld [vmem:[%s1 + $0x2d] sm:$0x1]
        %v1201 = vlaneseq
        %v1202 = vshrl.u32 %v1201, 7
        %v1203 = vsub.s32 0, %v1202
        %v1204 = vrot.slane %v1200, %v1203
        %v1205 = vmul.f32 %v1189, %v1204
        %v1206 = vmul.f32 %v1190, %v1204
        %v1207 = vadd.f32 %v1145, %v1205
        %v1208 = vadd.f32 %v1146, %v1206
        %v1209 = vld [vmem:[%s1 + $0x51] sm:$0x1]
        %v1210 = vlaneseq
        %v1211 = vshrl.u32 %v1210, 7
        %v1212 = vsub.s32 0, %v1211
        %v1213 = vrot.slane %v1209, %v1212
        %v1214 = vmul.f32 %v1189, %v1213
        %v1215 = vmul.f32 %v1190, %v1213
        %v1216 = vadd.f32 %v1166, %v1214
        %v1217 = vadd.f32 %v1167, %v1215
        %v1218 = vld [vmem:[%s1 + $0x75] sm:$0x1]
        %v1219 = vlaneseq
        %v1220 = vshrl.u32 %v1219, 7
        %v1221 = vsub.s32 0, %v1220
        %v1222 = vrot.slane %v1218, %v1221
        %v1223 = vmul.f32 %v1189, %v1222
        %v1224 = vmul.f32 %v1190, %v1222
        %v1225 = vadd.f32 %v1187, %v1223
        %v1226 = vadd.f32 %v1188, %v1224
        %v1227 = vld [vmem:[%s1 + $0xa] sm:$0x1]
        %v1228 = vlaneseq
        %v1229 = vshrl.u32 %v1228, 7
        %v1230 = vsub.s32 0, %v1229
        %v1231 = vrot.slane %v1227, %v1230
        %1233 = vrot.lane.b32.xlu0 %v1231, 1
        %v1234 = vpop.permute.xlu0 %1233
        %v1236 = vmul.f32 %v1189, %v1234
        %v1237 = vmul.f32 %v1190, %v1234
        %1240 = vrot.lane.b32.xlu0 %v1236, 127
        %v1241 = vpop.permute.xlu0 %1240
        %1242 = vrot.lane.b32.xlu0 %v1237, 127
        %v1243 = vpop.permute.xlu0 %1242
        %v1246 = vadd.f32 %v1198, %v1241
        %v1247 = vadd.f32 %v1199, %v1243
        %v1248 = vld [vmem:[%s1 + $0x2e] sm:$0x1]
        %v1249 = vlaneseq
        %v1250 = vshrl.u32 %v1249, 7
        %v1251 = vsub.s32 0, %v1250
        %v1252 = vrot.slane %v1248, %v1251
        %1254 = vrot.lane.b32.xlu0 %v1252, 1
        %v1255 = vpop.permute.xlu0 %1254
        %v1257 = vmul.f32 %v1189, %v1255
        %v1258 = vmul.f32 %v1190, %v1255
        %1261 = vrot.lane.b32.xlu0 %v1257, 127
        %v1262 = vpop.permute.xlu0 %1261
        %1263 = vrot.lane.b32.xlu0 %v1258, 127
        %v1264 = vpop.permute.xlu0 %1263
        %v1267 = vadd.f32 %v1207, %v1262
        %v1268 = vadd.f32 %v1208, %v1264
        %v1269 = vld [vmem:[%s1 + $0x52] sm:$0x1]
        %v1270 = vlaneseq
        %v1271 = vshrl.u32 %v1270, 7
        %v1272 = vsub.s32 0, %v1271
        %v1273 = vrot.slane %v1269, %v1272
        %1275 = vrot.lane.b32.xlu0 %v1273, 1
        %v1276 = vpop.permute.xlu0 %1275
        %v1278 = vmul.f32 %v1189, %v1276
        %v1279 = vmul.f32 %v1190, %v1276
        %1282 = vrot.lane.b32.xlu0 %v1278, 127
        %v1283 = vpop.permute.xlu0 %1282
        %1284 = vrot.lane.b32.xlu0 %v1279, 127
        %v1285 = vpop.permute.xlu0 %1284
        %v1288 = vadd.f32 %v1216, %v1283
        %v1289 = vadd.f32 %v1217, %v1285
        %v1290 = vld [vmem:[%s1 + $0x76] sm:$0x1]
        %v1291 = vlaneseq
        %v1292 = vshrl.u32 %v1291, 7
        %v1293 = vsub.s32 0, %v1292
        %v1294 = vrot.slane %v1290, %v1293
        %1296 = vrot.lane.b32.xlu0 %v1294, 1
        %v1297 = vpop.permute.xlu0 %1296
        %v1299 = vmul.f32 %v1189, %v1297
        %v1300 = vmul.f32 %v1190, %v1297
        %1303 = vrot.lane.b32.xlu0 %v1299, 127
        %v1304 = vpop.permute.xlu0 %1303
        %1305 = vrot.lane.b32.xlu0 %v1300, 127
        %v1306 = vpop.permute.xlu0 %1305
        %v1309 = vadd.f32 %v1225, %v1304
        %v1310 = vadd.f32 %v1226, %v1306
        %v1311 = vld [vmem:[%s1 + $0xb] sm:$0x1]
        %v1312 = vlaneseq
        %v1313 = vshrl.u32 %v1312, 7
        %v1314 = vsub.s32 0, %v1313
        %v1315 = vrot.slane %v1311, %v1314
        %1317 = vrot.lane.b32.xlu0 %v1315, 2
        %v1318 = vpop.permute.xlu0 %1317
        %v1320 = vmul.f32 %v1189, %v1318
        %v1321 = vmul.f32 %v1190, %v1318
        %1324 = vrot.lane.b32.xlu0 %v1320, 126
        %v1325 = vpop.permute.xlu0 %1324
        %1326 = vrot.lane.b32.xlu0 %v1321, 126
        %v1327 = vpop.permute.xlu0 %1326
        %v1330 = vadd.f32 %v1246, %v1325
        %v1331 = vadd.f32 %v1247, %v1327
        %v1332 = vld [vmem:[%s1 + $0x2f] sm:$0x1]
        %v1333 = vlaneseq
        %v1334 = vshrl.u32 %v1333, 7
        %v1335 = vsub.s32 0, %v1334
        %v1336 = vrot.slane %v1332, %v1335
        %1338 = vrot.lane.b32.xlu0 %v1336, 2
        %v1339 = vpop.permute.xlu0 %1338
        %v1341 = vmul.f32 %v1189, %v1339
        %v1342 = vmul.f32 %v1190, %v1339
        %1345 = vrot.lane.b32.xlu0 %v1341, 126
        %v1346 = vpop.permute.xlu0 %1345
        %1347 = vrot.lane.b32.xlu0 %v1342, 126
        %v1348 = vpop.permute.xlu0 %1347
        %v1351 = vadd.f32 %v1267, %v1346
        %v1352 = vadd.f32 %v1268, %v1348
        %v1353 = vld [vmem:[%s1 + $0x53] sm:$0x1]
        %v1354 = vlaneseq
        %v1355 = vshrl.u32 %v1354, 7
        %v1356 = vsub.s32 0, %v1355
        %v1357 = vrot.slane %v1353, %v1356
        %1359 = vrot.lane.b32.xlu0 %v1357, 2
        %v1360 = vpop.permute.xlu0 %1359
        %v1362 = vmul.f32 %v1189, %v1360
        %v1363 = vmul.f32 %v1190, %v1360
        %1366 = vrot.lane.b32.xlu0 %v1362, 126
        %v1367 = vpop.permute.xlu0 %1366
        %1368 = vrot.lane.b32.xlu0 %v1363, 126
        %v1369 = vpop.permute.xlu0 %1368
        %v1372 = vadd.f32 %v1288, %v1367
        %v1373 = vadd.f32 %v1289, %v1369
        %v1374 = vld [vmem:[%s1 + $0x77] sm:$0x1]
        %v1375 = vlaneseq
        %v1376 = vshrl.u32 %v1375, 7
        %v1377 = vsub.s32 0, %v1376
        %v1378 = vrot.slane %v1374, %v1377
        %1380 = vrot.lane.b32.xlu0 %v1378, 2
        %v1381 = vpop.permute.xlu0 %1380
        %v1383 = vmul.f32 %v1189, %v1381
        %v1384 = vmul.f32 %v1190, %v1381
        %1387 = vrot.lane.b32.xlu0 %v1383, 126
        %v1388 = vpop.permute.xlu0 %1387
        %1389 = vrot.lane.b32.xlu0 %v1384, 126
        %v1390 = vpop.permute.xlu0 %1389
        %v1393 = vadd.f32 %v1309, %v1388
        %v1394 = vadd.f32 %v1310, %v1390
        %v1395 = vld [vmem:[%s430 + $0x1] sm:$0xff]
        %v1396 = vld [vmem:[%s430 + $0x9] sm:$0xff]
        %v1397 = vld [vmem:[%s1 + $0xc] sm:$0x1]
        %v1398 = vlaneseq
        %v1399 = vshrl.u32 %v1398, 7
        %v1400 = vsub.s32 0, %v1399
        %v1401 = vrot.slane %v1397, %v1400
        %v1402 = vmul.f32 %v1395, %v1401
        %v1403 = vmul.f32 %v1396, %v1401
        %v1404 = vadd.f32 %v1330, %v1402
        %v1405 = vadd.f32 %v1331, %v1403
        %v1406 = vld [vmem:[%s1 + $0x30] sm:$0x1]
        %v1407 = vlaneseq
        %v1408 = vshrl.u32 %v1407, 7
        %v1409 = vsub.s32 0, %v1408
        %v1410 = vrot.slane %v1406, %v1409
        %v1411 = vmul.f32 %v1395, %v1410
        %v1412 = vmul.f32 %v1396, %v1410
        %v1413 = vadd.f32 %v1351, %v1411
        %v1414 = vadd.f32 %v1352, %v1412
        %v1415 = vld [vmem:[%s1 + $0x54] sm:$0x1]
        %v1416 = vlaneseq
        %v1417 = vshrl.u32 %v1416, 7
        %v1418 = vsub.s32 0, %v1417
        %v1419 = vrot.slane %v1415, %v1418
        %v1420 = vmul.f32 %v1395, %v1419
        %v1421 = vmul.f32 %v1396, %v1419
        %v1422 = vadd.f32 %v1372, %v1420
        %v1423 = vadd.f32 %v1373, %v1421
        %v1424 = vld [vmem:[%s1 + $0x78] sm:$0x1]
        %v1425 = vlaneseq
        %v1426 = vshrl.u32 %v1425, 7
        %v1427 = vsub.s32 0, %v1426
        %v1428 = vrot.slane %v1424, %v1427
        %v1429 = vmul.f32 %v1395, %v1428
        %v1430 = vmul.f32 %v1396, %v1428
        %v1431 = vadd.f32 %v1393, %v1429
        %v1432 = vadd.f32 %v1394, %v1430
        %v1433 = vld [vmem:[%s1 + $0xd] sm:$0x1]
        %v1434 = vlaneseq
        %v1435 = vshrl.u32 %v1434, 7
        %v1436 = vsub.s32 0, %v1435
        %v1437 = vrot.slane %v1433, %v1436
        %1439 = vrot.lane.b32.xlu0 %v1437, 1
        %v1440 = vpop.permute.xlu0 %1439
        %v1442 = vmul.f32 %v1395, %v1440
        %v1443 = vmul.f32 %v1396, %v1440
        %1446 = vrot.lane.b32.xlu0 %v1442, 127
        %v1447 = vpop.permute.xlu0 %1446
        %1448 = vrot.lane.b32.xlu0 %v1443, 127
        %v1449 = vpop.permute.xlu0 %1448
        %v1452 = vadd.f32 %v1404, %v1447
        %v1453 = vadd.f32 %v1405, %v1449
        %v1454 = vld [vmem:[%s1 + $0x31] sm:$0x1]
        %v1455 = vlaneseq
        %v1456 = vshrl.u32 %v1455, 7
        %v1457 = vsub.s32 0, %v1456
        %v1458 = vrot.slane %v1454, %v1457
        %1460 = vrot.lane.b32.xlu0 %v1458, 1
        %v1461 = vpop.permute.xlu0 %1460
        %v1463 = vmul.f32 %v1395, %v1461
        %v1464 = vmul.f32 %v1396, %v1461
        %1467 = vrot.lane.b32.xlu0 %v1463, 127
        %v1468 = vpop.permute.xlu0 %1467
        %1469 = vrot.lane.b32.xlu0 %v1464, 127
        %v1470 = vpop.permute.xlu0 %1469
        %v1473 = vadd.f32 %v1413, %v1468
        %v1474 = vadd.f32 %v1414, %v1470
        %v1475 = vld [vmem:[%s1 + $0x55] sm:$0x1]
        %v1476 = vlaneseq
        %v1477 = vshrl.u32 %v1476, 7
        %v1478 = vsub.s32 0, %v1477
        %v1479 = vrot.slane %v1475, %v1478
        %1481 = vrot.lane.b32.xlu0 %v1479, 1
        %v1482 = vpop.permute.xlu0 %1481
        %v1484 = vmul.f32 %v1395, %v1482
        %v1485 = vmul.f32 %v1396, %v1482
        %1488 = vrot.lane.b32.xlu0 %v1484, 127
        %v1489 = vpop.permute.xlu0 %1488
        %1490 = vrot.lane.b32.xlu0 %v1485, 127
        %v1491 = vpop.permute.xlu0 %1490
        %v1494 = vadd.f32 %v1422, %v1489
        %v1495 = vadd.f32 %v1423, %v1491
        %v1496 = vld [vmem:[%s1 + $0x79] sm:$0x1]
        %v1497 = vlaneseq
        %v1498 = vshrl.u32 %v1497, 7
        %v1499 = vsub.s32 0, %v1498
        %v1500 = vrot.slane %v1496, %v1499
        %1502 = vrot.lane.b32.xlu0 %v1500, 1
        %v1503 = vpop.permute.xlu0 %1502
        %v1505 = vmul.f32 %v1395, %v1503
        %v1506 = vmul.f32 %v1396, %v1503
        %1509 = vrot.lane.b32.xlu0 %v1505, 127
        %v1510 = vpop.permute.xlu0 %1509
        %1511 = vrot.lane.b32.xlu0 %v1506, 127
        %v1512 = vpop.permute.xlu0 %1511
        %v1515 = vadd.f32 %v1431, %v1510
        %v1516 = vadd.f32 %v1432, %v1512
        %v1517 = vld [vmem:[%s1 + $0xe] sm:$0x1]
        %v1518 = vlaneseq
        %v1519 = vshrl.u32 %v1518, 7
        %v1520 = vsub.s32 0, %v1519
        %v1521 = vrot.slane %v1517, %v1520
        %1523 = vrot.lane.b32.xlu0 %v1521, 2
        %v1524 = vpop.permute.xlu0 %1523
        %v1526 = vmul.f32 %v1395, %v1524
        %v1527 = vmul.f32 %v1396, %v1524
        %1530 = vrot.lane.b32.xlu0 %v1526, 126
        %v1531 = vpop.permute.xlu0 %1530
        %1532 = vrot.lane.b32.xlu0 %v1527, 126
        %v1533 = vpop.permute.xlu0 %1532
        %v1536 = vadd.f32 %v1452, %v1531
        %v1537 = vadd.f32 %v1453, %v1533
        %v1538 = vld [vmem:[%s1 + $0x32] sm:$0x1]
        %v1539 = vlaneseq
        %v1540 = vshrl.u32 %v1539, 7
        %v1541 = vsub.s32 0, %v1540
        %v1542 = vrot.slane %v1538, %v1541
        %1544 = vrot.lane.b32.xlu0 %v1542, 2
        %v1545 = vpop.permute.xlu0 %1544
        %v1547 = vmul.f32 %v1395, %v1545
        %v1548 = vmul.f32 %v1396, %v1545
        %1551 = vrot.lane.b32.xlu0 %v1547, 126
        %v1552 = vpop.permute.xlu0 %1551
        %1553 = vrot.lane.b32.xlu0 %v1548, 126
        %v1554 = vpop.permute.xlu0 %1553
        %v1557 = vadd.f32 %v1473, %v1552
        %v1558 = vadd.f32 %v1474, %v1554
        %v1559 = vld [vmem:[%s1 + $0x56] sm:$0x1]
        %v1560 = vlaneseq
        %v1561 = vshrl.u32 %v1560, 7
        %v1562 = vsub.s32 0, %v1561
        %v1563 = vrot.slane %v1559, %v1562
        %1565 = vrot.lane.b32.xlu0 %v1563, 2
        %v1566 = vpop.permute.xlu0 %1565
        %v1568 = vmul.f32 %v1395, %v1566
        %v1569 = vmul.f32 %v1396, %v1566
        %1572 = vrot.lane.b32.xlu0 %v1568, 126
        %v1573 = vpop.permute.xlu0 %1572
        %1574 = vrot.lane.b32.xlu0 %v1569, 126
        %v1575 = vpop.permute.xlu0 %1574
        %v1578 = vadd.f32 %v1494, %v1573
        %v1579 = vadd.f32 %v1495, %v1575
        %v1580 = vld [vmem:[%s1 + $0x7a] sm:$0x1]
        %v1581 = vlaneseq
        %v1582 = vshrl.u32 %v1581, 7
        %v1583 = vsub.s32 0, %v1582
        %v1584 = vrot.slane %v1580, %v1583
        %1586 = vrot.lane.b32.xlu0 %v1584, 2
        %v1587 = vpop.permute.xlu0 %1586
        %v1589 = vmul.f32 %v1395, %v1587
        %v1590 = vmul.f32 %v1396, %v1587
        %1593 = vrot.lane.b32.xlu0 %v1589, 126
        %v1594 = vpop.permute.xlu0 %1593
        %1595 = vrot.lane.b32.xlu0 %v1590, 126
        %v1596 = vpop.permute.xlu0 %1595
        %v1599 = vadd.f32 %v1515, %v1594
        %v1600 = vadd.f32 %v1516, %v1596
        %v1601 = vld [vmem:[%s430 + $0x2] sm:$0xff]
        %v1602 = vld [vmem:[%s430 + $0xa] sm:$0xff]
        %v1603 = vld [vmem:[%s1 + $0xf] sm:$0x1]
        %v1604 = vlaneseq
        %v1605 = vshrl.u32 %v1604, 7
        %v1606 = vsub.s32 0, %v1605
        %v1607 = vrot.slane %v1603, %v1606
        %v1608 = vmul.f32 %v1601, %v1607
        %v1609 = vmul.f32 %v1602, %v1607
        %v1610 = vadd.f32 %v1536, %v1608
        %v1611 = vadd.f32 %v1537, %v1609
        %v1612 = vld [vmem:[%s1 + $0x33] sm:$0x1]
        %v1613 = vlaneseq
        %v1614 = vshrl.u32 %v1613, 7
        %v1615 = vsub.s32 0, %v1614
        %v1616 = vrot.slane %v1612, %v1615
        %v1617 = vmul.f32 %v1601, %v1616
        %v1618 = vmul.f32 %v1602, %v1616
        %v1619 = vadd.f32 %v1557, %v1617
        %v1620 = vadd.f32 %v1558, %v1618
        %v1621 = vld [vmem:[%s1 + $0x57] sm:$0x1]
        %v1622 = vlaneseq
        %v1623 = vshrl.u32 %v1622, 7
        %v1624 = vsub.s32 0, %v1623
        %v1625 = vrot.slane %v1621, %v1624
        %v1626 = vmul.f32 %v1601, %v1625
        %v1627 = vmul.f32 %v1602, %v1625
        %v1628 = vadd.f32 %v1578, %v1626
        %v1629 = vadd.f32 %v1579, %v1627
        %v1630 = vld [vmem:[%s1 + $0x7b] sm:$0x1]
        %v1631 = vlaneseq
        %v1632 = vshrl.u32 %v1631, 7
        %v1633 = vsub.s32 0, %v1632
        %v1634 = vrot.slane %v1630, %v1633
        %v1635 = vmul.f32 %v1601, %v1634
        %v1636 = vmul.f32 %v1602, %v1634
        %v1637 = vadd.f32 %v1599, %v1635
        %v1638 = vadd.f32 %v1600, %v1636
        %v1639 = vld [vmem:[%s1 + $0x10] sm:$0x1]
        %v1640 = vlaneseq
        %v1641 = vshrl.u32 %v1640, 7
        %v1642 = vsub.s32 0, %v1641
        %v1643 = vrot.slane %v1639, %v1642
        %1645 = vrot.lane.b32.xlu0 %v1643, 1
        %v1646 = vpop.permute.xlu0 %1645
        %v1648 = vmul.f32 %v1601, %v1646
        %v1649 = vmul.f32 %v1602, %v1646
        %1652 = vrot.lane.b32.xlu0 %v1648, 127
        %v1653 = vpop.permute.xlu0 %1652
        %1654 = vrot.lane.b32.xlu0 %v1649, 127
        %v1655 = vpop.permute.xlu0 %1654
        %v1658 = vadd.f32 %v1610, %v1653
        %v1659 = vadd.f32 %v1611, %v1655
        %v1660 = vld [vmem:[%s1 + $0x34] sm:$0x1]
        %v1661 = vlaneseq
        %v1662 = vshrl.u32 %v1661, 7
        %v1663 = vsub.s32 0, %v1662
        %v1664 = vrot.slane %v1660, %v1663
        %1666 = vrot.lane.b32.xlu0 %v1664, 1
        %v1667 = vpop.permute.xlu0 %1666
        %v1669 = vmul.f32 %v1601, %v1667
        %v1670 = vmul.f32 %v1602, %v1667
        %1673 = vrot.lane.b32.xlu0 %v1669, 127
        %v1674 = vpop.permute.xlu0 %1673
        %1675 = vrot.lane.b32.xlu0 %v1670, 127
        %v1676 = vpop.permute.xlu0 %1675
        %v1679 = vadd.f32 %v1619, %v1674
        %v1680 = vadd.f32 %v1620, %v1676
        %v1681 = vld [vmem:[%s1 + $0x58] sm:$0x1]
        %v1682 = vlaneseq
        %v1683 = vshrl.u32 %v1682, 7
        %v1684 = vsub.s32 0, %v1683
        %v1685 = vrot.slane %v1681, %v1684
        %1687 = vrot.lane.b32.xlu0 %v1685, 1
        %v1688 = vpop.permute.xlu0 %1687
        %v1690 = vmul.f32 %v1601, %v1688
        %v1691 = vmul.f32 %v1602, %v1688
        %1694 = vrot.lane.b32.xlu0 %v1690, 127
        %v1695 = vpop.permute.xlu0 %1694
        %1696 = vrot.lane.b32.xlu0 %v1691, 127
        %v1697 = vpop.permute.xlu0 %1696
        %v1700 = vadd.f32 %v1628, %v1695
        %v1701 = vadd.f32 %v1629, %v1697
        %v1702 = vld [vmem:[%s1 + $0x7c] sm:$0x1]
        %v1703 = vlaneseq
        %v1704 = vshrl.u32 %v1703, 7
        %v1705 = vsub.s32 0, %v1704
        %v1706 = vrot.slane %v1702, %v1705
        %1708 = vrot.lane.b32.xlu0 %v1706, 1
        %v1709 = vpop.permute.xlu0 %1708
        %v1711 = vmul.f32 %v1601, %v1709
        %v1712 = vmul.f32 %v1602, %v1709
        %1715 = vrot.lane.b32.xlu0 %v1711, 127
        %v1716 = vpop.permute.xlu0 %1715
        %1717 = vrot.lane.b32.xlu0 %v1712, 127
        %v1718 = vpop.permute.xlu0 %1717
        %v1721 = vadd.f32 %v1637, %v1716
        %v1722 = vadd.f32 %v1638, %v1718
        %v1723 = vld [vmem:[%s1 + $0x11] sm:$0x1]
        %v1724 = vlaneseq
        %v1725 = vshrl.u32 %v1724, 7
        %v1726 = vsub.s32 0, %v1725
        %v1727 = vrot.slane %v1723, %v1726
        %1729 = vrot.lane.b32.xlu0 %v1727, 2
        %v1730 = vpop.permute.xlu0 %1729
        %v1732 = vmul.f32 %v1601, %v1730
        %v1733 = vmul.f32 %v1602, %v1730
        %1736 = vrot.lane.b32.xlu0 %v1732, 126
        %v1737 = vpop.permute.xlu0 %1736
        %1738 = vrot.lane.b32.xlu0 %v1733, 126
        %v1739 = vpop.permute.xlu0 %1738
        %v1742 = vadd.f32 %v1658, %v1737
        %v1743 = vadd.f32 %v1659, %v1739
        %v1744 = vld [vmem:[%s1 + $0x35] sm:$0x1]
        %v1745 = vlaneseq
        %v1746 = vshrl.u32 %v1745, 7
        %v1747 = vsub.s32 0, %v1746
        %v1748 = vrot.slane %v1744, %v1747
        %1750 = vrot.lane.b32.xlu0 %v1748, 2
        %v1751 = vpop.permute.xlu0 %1750
        %v1753 = vmul.f32 %v1601, %v1751
        %v1754 = vmul.f32 %v1602, %v1751
        %1757 = vrot.lane.b32.xlu0 %v1753, 126
        %v1758 = vpop.permute.xlu0 %1757
        %1759 = vrot.lane.b32.xlu0 %v1754, 126
        %v1760 = vpop.permute.xlu0 %1759
        %v1763 = vadd.f32 %v1679, %v1758
        %v1764 = vadd.f32 %v1680, %v1760
        %v1765 = vld [vmem:[%s1 + $0x59] sm:$0x1]
        %v1766 = vlaneseq
        %v1767 = vshrl.u32 %v1766, 7
        %v1768 = vsub.s32 0, %v1767
        %v1769 = vrot.slane %v1765, %v1768
        %1771 = vrot.lane.b32.xlu0 %v1769, 2
        %v1772 = vpop.permute.xlu0 %1771
        %v1774 = vmul.f32 %v1601, %v1772
        %v1775 = vmul.f32 %v1602, %v1772
        %1778 = vrot.lane.b32.xlu0 %v1774, 126
        %v1779 = vpop.permute.xlu0 %1778
        %1780 = vrot.lane.b32.xlu0 %v1775, 126
        %v1781 = vpop.permute.xlu0 %1780
        %v1784 = vadd.f32 %v1700, %v1779
        %v1785 = vadd.f32 %v1701, %v1781
        %v1786 = vld [vmem:[%s1 + $0x7d] sm:$0x1]
        %v1787 = vlaneseq
        %v1788 = vshrl.u32 %v1787, 7
        %v1789 = vsub.s32 0, %v1788
        %v1790 = vrot.slane %v1786, %v1789
        %1792 = vrot.lane.b32.xlu0 %v1790, 2
        %v1793 = vpop.permute.xlu0 %1792
        %v1795 = vmul.f32 %v1601, %v1793
        %v1796 = vmul.f32 %v1602, %v1793
        %1799 = vrot.lane.b32.xlu0 %v1795, 126
        %v1800 = vpop.permute.xlu0 %1799
        %1801 = vrot.lane.b32.xlu0 %v1796, 126
        %v1802 = vpop.permute.xlu0 %1801
        %v1805 = vadd.f32 %v1721, %v1800
        %v1806 = vadd.f32 %v1722, %v1802
        %v1807 = vld [vmem:[%s467] sm:$0xff]
        %v1808 = vld [vmem:[%s467 + $0x8] sm:$0xff]
        %v1809 = vld [vmem:[%s1 + $0x12] sm:$0x1]
        %v1810 = vlaneseq
        %v1811 = vshrl.u32 %v1810, 7
        %v1812 = vsub.s32 0, %v1811
        %v1813 = vrot.slane %v1809, %v1812
        %v1814 = vmul.f32 %v1807, %v1813
        %v1815 = vmul.f32 %v1808, %v1813
        %v1816 = vadd.f32 %v1742, %v1814
        %v1817 = vadd.f32 %v1743, %v1815
        %v1818 = vld [vmem:[%s1 + $0x36] sm:$0x1]
        %v1819 = vlaneseq
        %v1820 = vshrl.u32 %v1819, 7
        %v1821 = vsub.s32 0, %v1820
        %v1822 = vrot.slane %v1818, %v1821
        %v1823 = vmul.f32 %v1807, %v1822
        %v1824 = vmul.f32 %v1808, %v1822
        %v1825 = vadd.f32 %v1763, %v1823
        %v1826 = vadd.f32 %v1764, %v1824
        %v1827 = vld [vmem:[%s1 + $0x5a] sm:$0x1]
        %v1828 = vlaneseq
        %v1829 = vshrl.u32 %v1828, 7
        %v1830 = vsub.s32 0, %v1829
        %v1831 = vrot.slane %v1827, %v1830
        %v1832 = vmul.f32 %v1807, %v1831
        %v1833 = vmul.f32 %v1808, %v1831
        %v1834 = vadd.f32 %v1784, %v1832
        %v1835 = vadd.f32 %v1785, %v1833
        %v1836 = vld [vmem:[%s1 + $0x7e] sm:$0x1]
        %v1837 = vlaneseq
        %v1838 = vshrl.u32 %v1837, 7
        %v1839 = vsub.s32 0, %v1838
        %v1840 = vrot.slane %v1836, %v1839
        %v1841 = vmul.f32 %v1807, %v1840
        %v1842 = vmul.f32 %v1808, %v1840
        %v1843 = vadd.f32 %v1805, %v1841
        %v1844 = vadd.f32 %v1806, %v1842
        %v1845 = vld [vmem:[%s1 + $0x13] sm:$0x1]
        %v1846 = vlaneseq
        %v1847 = vshrl.u32 %v1846, 7
        %v1848 = vsub.s32 0, %v1847
        %v1849 = vrot.slane %v1845, %v1848
        %1851 = vrot.lane.b32.xlu0 %v1849, 1
        %v1852 = vpop.permute.xlu0 %1851
        %v1854 = vmul.f32 %v1807, %v1852
        %v1855 = vmul.f32 %v1808, %v1852
        %1858 = vrot.lane.b32.xlu0 %v1854, 127
        %v1859 = vpop.permute.xlu0 %1858
        %1860 = vrot.lane.b32.xlu0 %v1855, 127
        %v1861 = vpop.permute.xlu0 %1860
        %v1864 = vadd.f32 %v1816, %v1859
        %v1865 = vadd.f32 %v1817, %v1861
        %v1866 = vld [vmem:[%s1 + $0x37] sm:$0x1]
        %v1867 = vlaneseq
        %v1868 = vshrl.u32 %v1867, 7
        %v1869 = vsub.s32 0, %v1868
        %v1870 = vrot.slane %v1866, %v1869
        %1872 = vrot.lane.b32.xlu0 %v1870, 1
        %v1873 = vpop.permute.xlu0 %1872
        %v1875 = vmul.f32 %v1807, %v1873
        %v1876 = vmul.f32 %v1808, %v1873
        %1879 = vrot.lane.b32.xlu0 %v1875, 127
        %v1880 = vpop.permute.xlu0 %1879
        %1881 = vrot.lane.b32.xlu0 %v1876, 127
        %v1882 = vpop.permute.xlu0 %1881
        %v1885 = vadd.f32 %v1825, %v1880
        %v1886 = vadd.f32 %v1826, %v1882
        %v1887 = vld [vmem:[%s1 + $0x5b] sm:$0x1]
        %v1888 = vlaneseq
        %v1889 = vshrl.u32 %v1888, 7
        %v1890 = vsub.s32 0, %v1889
        %v1891 = vrot.slane %v1887, %v1890
        %1893 = vrot.lane.b32.xlu0 %v1891, 1
        %v1894 = vpop.permute.xlu0 %1893
        %v1896 = vmul.f32 %v1807, %v1894
        %v1897 = vmul.f32 %v1808, %v1894
        %1900 = vrot.lane.b32.xlu0 %v1896, 127
        %v1901 = vpop.permute.xlu0 %1900
        %1902 = vrot.lane.b32.xlu0 %v1897, 127
        %v1903 = vpop.permute.xlu0 %1902
        %v1906 = vadd.f32 %v1834, %v1901
        %v1907 = vadd.f32 %v1835, %v1903
        %v1908 = vld [vmem:[%s1 + $0x7f] sm:$0x1]
        %v1909 = vlaneseq
        %v1910 = vshrl.u32 %v1909, 7
        %v1911 = vsub.s32 0, %v1910
        %v1912 = vrot.slane %v1908, %v1911
        %1914 = vrot.lane.b32.xlu0 %v1912, 1
        %v1915 = vpop.permute.xlu0 %1914
        %v1917 = vmul.f32 %v1807, %v1915
        %v1918 = vmul.f32 %v1808, %v1915
        %1921 = vrot.lane.b32.xlu0 %v1917, 127
        %v1922 = vpop.permute.xlu0 %1921
        %1923 = vrot.lane.b32.xlu0 %v1918, 127
        %v1924 = vpop.permute.xlu0 %1923
        %v1927 = vadd.f32 %v1843, %v1922
        %v1928 = vadd.f32 %v1844, %v1924
        %v1929 = vld [vmem:[%s1 + $0x14] sm:$0x1]
        %v1930 = vlaneseq
        %v1931 = vshrl.u32 %v1930, 7
        %v1932 = vsub.s32 0, %v1931
        %v1933 = vrot.slane %v1929, %v1932
        %1935 = vrot.lane.b32.xlu0 %v1933, 2
        %v1936 = vpop.permute.xlu0 %1935
        %v1938 = vmul.f32 %v1807, %v1936
        %v1939 = vmul.f32 %v1808, %v1936
        %1942 = vrot.lane.b32.xlu0 %v1938, 126
        %v1943 = vpop.permute.xlu0 %1942
        %1944 = vrot.lane.b32.xlu0 %v1939, 126
        %v1945 = vpop.permute.xlu0 %1944
        %v1948 = vadd.f32 %v1864, %v1943
        %v1949 = vadd.f32 %v1865, %v1945
        %v1950 = vld [vmem:[%s1 + $0x38] sm:$0x1]
        %v1951 = vlaneseq
        %v1952 = vshrl.u32 %v1951, 7
        %v1953 = vsub.s32 0, %v1952
        %v1954 = vrot.slane %v1950, %v1953
        %1956 = vrot.lane.b32.xlu0 %v1954, 2
        %v1957 = vpop.permute.xlu0 %1956
        %v1959 = vmul.f32 %v1807, %v1957
        %v1960 = vmul.f32 %v1808, %v1957
        %1963 = vrot.lane.b32.xlu0 %v1959, 126
        %v1964 = vpop.permute.xlu0 %1963
        %1965 = vrot.lane.b32.xlu0 %v1960, 126
        %v1966 = vpop.permute.xlu0 %1965
        %v1969 = vadd.f32 %v1885, %v1964
        %v1970 = vadd.f32 %v1886, %v1966
        %v1971 = vld [vmem:[%s1 + $0x5c] sm:$0x1]
        %v1972 = vlaneseq
        %v1973 = vshrl.u32 %v1972, 7
        %v1974 = vsub.s32 0, %v1973
        %v1975 = vrot.slane %v1971, %v1974
        %1977 = vrot.lane.b32.xlu0 %v1975, 2
        %v1978 = vpop.permute.xlu0 %1977
        %v1980 = vmul.f32 %v1807, %v1978
        %v1981 = vmul.f32 %v1808, %v1978
        %1984 = vrot.lane.b32.xlu0 %v1980, 126
        %v1985 = vpop.permute.xlu0 %1984
        %1986 = vrot.lane.b32.xlu0 %v1981, 126
        %v1987 = vpop.permute.xlu0 %1986
        %v1990 = vadd.f32 %v1906, %v1985
        %v1991 = vadd.f32 %v1907, %v1987
        %v1992 = vld [vmem:[%s1 + $0x80] sm:$0x1]
        %v1993 = vlaneseq
        %v1994 = vshrl.u32 %v1993, 7
        %v1995 = vsub.s32 0, %v1994
        %v1996 = vrot.slane %v1992, %v1995
        %1998 = vrot.lane.b32.xlu0 %v1996, 2
        %v1999 = vpop.permute.xlu0 %1998
        %v2001 = vmul.f32 %v1807, %v1999
        %v2002 = vmul.f32 %v1808, %v1999
        %2005 = vrot.lane.b32.xlu0 %v2001, 126
        %v2006 = vpop.permute.xlu0 %2005
        %2007 = vrot.lane.b32.xlu0 %v2002, 126
        %v2008 = vpop.permute.xlu0 %2007
        %v2011 = vadd.f32 %v1927, %v2006
        %v2012 = vadd.f32 %v1928, %v2008
        %v2013 = vld [vmem:[%s467 + $0x1] sm:$0xff]
        %v2014 = vld [vmem:[%s467 + $0x9] sm:$0xff]
        %v2015 = vld [vmem:[%s1 + $0x15] sm:$0x1]
        %v2016 = vlaneseq
        %v2017 = vshrl.u32 %v2016, 7
        %v2018 = vsub.s32 0, %v2017
        %v2019 = vrot.slane %v2015, %v2018
        %v2020 = vmul.f32 %v2013, %v2019
        %v2021 = vmul.f32 %v2014, %v2019
        %v2022 = vadd.f32 %v1948, %v2020
        %v2023 = vadd.f32 %v1949, %v2021
        %v2024 = vld [vmem:[%s1 + $0x39] sm:$0x1]
        %v2025 = vlaneseq
        %v2026 = vshrl.u32 %v2025, 7
        %v2027 = vsub.s32 0, %v2026
        %v2028 = vrot.slane %v2024, %v2027
        %v2029 = vmul.f32 %v2013, %v2028
        %v2030 = vmul.f32 %v2014, %v2028
        %v2031 = vadd.f32 %v1969, %v2029
        %v2032 = vadd.f32 %v1970, %v2030
        %v2033 = vld [vmem:[%s1 + $0x5d] sm:$0x1]
        %v2034 = vlaneseq
        %v2035 = vshrl.u32 %v2034, 7
        %v2036 = vsub.s32 0, %v2035
        %v2037 = vrot.slane %v2033, %v2036
        %v2038 = vmul.f32 %v2013, %v2037
        %v2039 = vmul.f32 %v2014, %v2037
        %v2040 = vadd.f32 %v1990, %v2038
        %v2041 = vadd.f32 %v1991, %v2039
        %v2042 = vld [vmem:[%s1 + $0x81] sm:$0x1]
        %v2043 = vlaneseq
        %v2044 = vshrl.u32 %v2043, 7
        %v2045 = vsub.s32 0, %v2044
        %v2046 = vrot.slane %v2042, %v2045
        %v2047 = vmul.f32 %v2013, %v2046
        %v2048 = vmul.f32 %v2014, %v2046
        %v2049 = vadd.f32 %v2011, %v2047
        %v2050 = vadd.f32 %v2012, %v2048
        %v2051 = vld [vmem:[%s1 + $0x16] sm:$0x1]
        %v2052 = vlaneseq
        %v2053 = vshrl.u32 %v2052, 7
        %v2054 = vsub.s32 0, %v2053
        %v2055 = vrot.slane %v2051, %v2054
        %2057 = vrot.lane.b32.xlu0 %v2055, 1
        %v2058 = vpop.permute.xlu0 %2057
        %v2060 = vmul.f32 %v2013, %v2058
        %v2061 = vmul.f32 %v2014, %v2058
        %2064 = vrot.lane.b32.xlu0 %v2060, 127
        %v2065 = vpop.permute.xlu0 %2064
        %2066 = vrot.lane.b32.xlu0 %v2061, 127
        %v2067 = vpop.permute.xlu0 %2066
        %v2070 = vadd.f32 %v2022, %v2065
        %v2071 = vadd.f32 %v2023, %v2067
        %v2072 = vld [vmem:[%s1 + $0x3a] sm:$0x1]
        %v2073 = vlaneseq
        %v2074 = vshrl.u32 %v2073, 7
        %v2075 = vsub.s32 0, %v2074
        %v2076 = vrot.slane %v2072, %v2075
        %2078 = vrot.lane.b32.xlu0 %v2076, 1
        %v2079 = vpop.permute.xlu0 %2078
        %v2081 = vmul.f32 %v2013, %v2079
        %v2082 = vmul.f32 %v2014, %v2079
        %2085 = vrot.lane.b32.xlu0 %v2081, 127
        %v2086 = vpop.permute.xlu0 %2085
        %2087 = vrot.lane.b32.xlu0 %v2082, 127
        %v2088 = vpop.permute.xlu0 %2087
        %v2091 = vadd.f32 %v2031, %v2086
        %v2092 = vadd.f32 %v2032, %v2088
        %v2093 = vld [vmem:[%s1 + $0x5e] sm:$0x1]
        %v2094 = vlaneseq
        %v2095 = vshrl.u32 %v2094, 7
        %v2096 = vsub.s32 0, %v2095
        %v2097 = vrot.slane %v2093, %v2096
        %2099 = vrot.lane.b32.xlu0 %v2097, 1
        %v2100 = vpop.permute.xlu0 %2099
        %v2102 = vmul.f32 %v2013, %v2100
        %v2103 = vmul.f32 %v2014, %v2100
        %2106 = vrot.lane.b32.xlu0 %v2102, 127
        %v2107 = vpop.permute.xlu0 %2106
        %2108 = vrot.lane.b32.xlu0 %v2103, 127
        %v2109 = vpop.permute.xlu0 %2108
        %v2112 = vadd.f32 %v2040, %v2107
        %v2113 = vadd.f32 %v2041, %v2109
        %v2114 = vld [vmem:[%s1 + $0x82] sm:$0x1]
        %v2115 = vlaneseq
        %v2116 = vshrl.u32 %v2115, 7
        %v2117 = vsub.s32 0, %v2116
        %v2118 = vrot.slane %v2114, %v2117
        %2120 = vrot.lane.b32.xlu0 %v2118, 1
        %v2121 = vpop.permute.xlu0 %2120
        %v2123 = vmul.f32 %v2013, %v2121
        %v2124 = vmul.f32 %v2014, %v2121
        %2127 = vrot.lane.b32.xlu0 %v2123, 127
        %v2128 = vpop.permute.xlu0 %2127
        %2129 = vrot.lane.b32.xlu0 %v2124, 127
        %v2130 = vpop.permute.xlu0 %2129
        %v2133 = vadd.f32 %v2049, %v2128
        %v2134 = vadd.f32 %v2050, %v2130
        %v2135 = vld [vmem:[%s1 + $0x17] sm:$0x1]
        %v2136 = vlaneseq
        %v2137 = vshrl.u32 %v2136, 7
        %v2138 = vsub.s32 0, %v2137
        %v2139 = vrot.slane %v2135, %v2138
        %2141 = vrot.lane.b32.xlu0 %v2139, 2
        %v2142 = vpop.permute.xlu0 %2141
        %v2144 = vmul.f32 %v2013, %v2142
        %v2145 = vmul.f32 %v2014, %v2142
        %2148 = vrot.lane.b32.xlu0 %v2144, 126
        %v2149 = vpop.permute.xlu0 %2148
        %2150 = vrot.lane.b32.xlu0 %v2145, 126
        %v2151 = vpop.permute.xlu0 %2150
        %v2154 = vadd.f32 %v2070, %v2149
        %v2155 = vadd.f32 %v2071, %v2151
        %v2156 = vld [vmem:[%s1 + $0x3b] sm:$0x1]
        %v2157 = vlaneseq
        %v2158 = vshrl.u32 %v2157, 7
        %v2159 = vsub.s32 0, %v2158
        %v2160 = vrot.slane %v2156, %v2159
        %2162 = vrot.lane.b32.xlu0 %v2160, 2
        %v2163 = vpop.permute.xlu0 %2162
        %v2165 = vmul.f32 %v2013, %v2163
        %v2166 = vmul.f32 %v2014, %v2163
        %2169 = vrot.lane.b32.xlu0 %v2165, 126
        %v2170 = vpop.permute.xlu0 %2169
        %2171 = vrot.lane.b32.xlu0 %v2166, 126
        %v2172 = vpop.permute.xlu0 %2171
        %v2175 = vadd.f32 %v2091, %v2170
        %v2176 = vadd.f32 %v2092, %v2172
        %v2177 = vld [vmem:[%s1 + $0x5f] sm:$0x1]
        %v2178 = vlaneseq
        %v2179 = vshrl.u32 %v2178, 7
        %v2180 = vsub.s32 0, %v2179
        %v2181 = vrot.slane %v2177, %v2180
        %2183 = vrot.lane.b32.xlu0 %v2181, 2
        %v2184 = vpop.permute.xlu0 %2183
        %v2186 = vmul.f32 %v2013, %v2184
        %v2187 = vmul.f32 %v2014, %v2184
        %2190 = vrot.lane.b32.xlu0 %v2186, 126
        %v2191 = vpop.permute.xlu0 %2190
        %2192 = vrot.lane.b32.xlu0 %v2187, 126
        %v2193 = vpop.permute.xlu0 %2192
        %v2196 = vadd.f32 %v2112, %v2191
        %v2197 = vadd.f32 %v2113, %v2193
        %v2198 = vld [vmem:[%s1 + $0x83] sm:$0x1]
        %v2199 = vlaneseq
        %v2200 = vshrl.u32 %v2199, 7
        %v2201 = vsub.s32 0, %v2200
        %v2202 = vrot.slane %v2198, %v2201
        %2204 = vrot.lane.b32.xlu0 %v2202, 2
        %v2205 = vpop.permute.xlu0 %2204
        %v2207 = vmul.f32 %v2013, %v2205
        %v2208 = vmul.f32 %v2014, %v2205
        %2211 = vrot.lane.b32.xlu0 %v2207, 126
        %v2212 = vpop.permute.xlu0 %2211
        %2213 = vrot.lane.b32.xlu0 %v2208, 126
        %v2214 = vpop.permute.xlu0 %2213
        %v2217 = vadd.f32 %v2133, %v2212
        %v2218 = vadd.f32 %v2134, %v2214
        %v2219 = vld [vmem:[%s467 + $0x2] sm:$0xff]
        %v2220 = vld [vmem:[%s467 + $0xa] sm:$0xff]
        %v2221 = vld [vmem:[%s1 + $0x18] sm:$0x1]
        %v2222 = vlaneseq
        %v2223 = vshrl.u32 %v2222, 7
        %v2224 = vsub.s32 0, %v2223
        %v2225 = vrot.slane %v2221, %v2224
        %v2226 = vmul.f32 %v2219, %v2225
        %v2227 = vmul.f32 %v2220, %v2225
        %v2228 = vadd.f32 %v2154, %v2226
        %v2229 = vadd.f32 %v2155, %v2227
        %v2230 = vld [vmem:[%s1 + $0x3c] sm:$0x1]
        %v2231 = vlaneseq
        %v2232 = vshrl.u32 %v2231, 7
        %v2233 = vsub.s32 0, %v2232
        %v2234 = vrot.slane %v2230, %v2233
        %v2235 = vmul.f32 %v2219, %v2234
        %v2236 = vmul.f32 %v2220, %v2234
        %v2237 = vadd.f32 %v2175, %v2235
        %v2238 = vadd.f32 %v2176, %v2236
        %v2239 = vld [vmem:[%s1 + $0x60] sm:$0x1]
        %v2240 = vlaneseq
        %v2241 = vshrl.u32 %v2240, 7
        %v2242 = vsub.s32 0, %v2241
        %v2243 = vrot.slane %v2239, %v2242
        %v2244 = vmul.f32 %v2219, %v2243
        %v2245 = vmul.f32 %v2220, %v2243
        %v2246 = vadd.f32 %v2196, %v2244
        %v2247 = vadd.f32 %v2197, %v2245
        %v2248 = vld [vmem:[%s1 + $0x84] sm:$0x1]
        %v2249 = vlaneseq
        %v2250 = vshrl.u32 %v2249, 7
        %v2251 = vsub.s32 0, %v2250
        %v2252 = vrot.slane %v2248, %v2251
        %v2253 = vmul.f32 %v2219, %v2252
        %v2254 = vmul.f32 %v2220, %v2252
        %v2255 = vadd.f32 %v2217, %v2253
        %v2256 = vadd.f32 %v2218, %v2254
        %v2257 = vld [vmem:[%s1 + $0x19] sm:$0x1]
        %v2258 = vlaneseq
        %v2259 = vshrl.u32 %v2258, 7
        %v2260 = vsub.s32 0, %v2259
        %v2261 = vrot.slane %v2257, %v2260
        %2263 = vrot.lane.b32.xlu0 %v2261, 1
        %v2264 = vpop.permute.xlu0 %2263
        %v2266 = vmul.f32 %v2219, %v2264
        %v2267 = vmul.f32 %v2220, %v2264
        %2270 = vrot.lane.b32.xlu0 %v2266, 127
        %v2271 = vpop.permute.xlu0 %2270
        %2272 = vrot.lane.b32.xlu0 %v2267, 127
        %v2273 = vpop.permute.xlu0 %2272
        %v2276 = vadd.f32 %v2228, %v2271
        %v2277 = vadd.f32 %v2229, %v2273
        %v2278 = vld [vmem:[%s1 + $0x3d] sm:$0x1]
        %v2279 = vlaneseq
        %v2280 = vshrl.u32 %v2279, 7
        %v2281 = vsub.s32 0, %v2280
        %v2282 = vrot.slane %v2278, %v2281
        %2284 = vrot.lane.b32.xlu0 %v2282, 1
        %v2285 = vpop.permute.xlu0 %2284
        %v2287 = vmul.f32 %v2219, %v2285
        %v2288 = vmul.f32 %v2220, %v2285
        %2291 = vrot.lane.b32.xlu0 %v2287, 127
        %v2292 = vpop.permute.xlu0 %2291
        %2293 = vrot.lane.b32.xlu0 %v2288, 127
        %v2294 = vpop.permute.xlu0 %2293
        %v2297 = vadd.f32 %v2237, %v2292
        %v2298 = vadd.f32 %v2238, %v2294
        %v2299 = vld [vmem:[%s1 + $0x61] sm:$0x1]
        %v2300 = vlaneseq
        %v2301 = vshrl.u32 %v2300, 7
        %v2302 = vsub.s32 0, %v2301
        %v2303 = vrot.slane %v2299, %v2302
        %2305 = vrot.lane.b32.xlu0 %v2303, 1
        %v2306 = vpop.permute.xlu0 %2305
        %v2308 = vmul.f32 %v2219, %v2306
        %v2309 = vmul.f32 %v2220, %v2306
        %2312 = vrot.lane.b32.xlu0 %v2308, 127
        %v2313 = vpop.permute.xlu0 %2312
        %2314 = vrot.lane.b32.xlu0 %v2309, 127
        %v2315 = vpop.permute.xlu0 %2314
        %v2318 = vadd.f32 %v2246, %v2313
        %v2319 = vadd.f32 %v2247, %v2315
        %v2320 = vld [vmem:[%s1 + $0x85] sm:$0x1]
        %v2321 = vlaneseq
        %v2322 = vshrl.u32 %v2321, 7
        %v2323 = vsub.s32 0, %v2322
        %v2324 = vrot.slane %v2320, %v2323
        %2326 = vrot.lane.b32.xlu0 %v2324, 1
        %v2327 = vpop.permute.xlu0 %2326
        %v2329 = vmul.f32 %v2219, %v2327
        %v2330 = vmul.f32 %v2220, %v2327
        %2333 = vrot.lane.b32.xlu0 %v2329, 127
        %v2334 = vpop.permute.xlu0 %2333
        %2335 = vrot.lane.b32.xlu0 %v2330, 127
        %v2336 = vpop.permute.xlu0 %2335
        %v2339 = vadd.f32 %v2255, %v2334
        %v2340 = vadd.f32 %v2256, %v2336
        %v2341 = vld [vmem:[%s1 + $0x1a] sm:$0x1]
        %v2342 = vlaneseq
        %v2343 = vshrl.u32 %v2342, 7
        %v2344 = vsub.s32 0, %v2343
        %v2345 = vrot.slane %v2341, %v2344
        %2347 = vrot.lane.b32.xlu0 %v2345, 2
        %v2348 = vpop.permute.xlu0 %2347
        %v2350 = vmul.f32 %v2219, %v2348
        %v2351 = vmul.f32 %v2220, %v2348
        %2354 = vrot.lane.b32.xlu0 %v2350, 126
        %v2355 = vpop.permute.xlu0 %2354
        %2356 = vrot.lane.b32.xlu0 %v2351, 126
        %v2357 = vpop.permute.xlu0 %2356
        %v2360 = vadd.f32 %v2276, %v2355
        %v2361 = vadd.f32 %v2277, %v2357
        %v2362 = vld [vmem:[%s1 + $0x3e] sm:$0x1]
        %v2363 = vlaneseq
        %v2364 = vshrl.u32 %v2363, 7
        %v2365 = vsub.s32 0, %v2364
        %v2366 = vrot.slane %v2362, %v2365
        %2368 = vrot.lane.b32.xlu0 %v2366, 2
        %v2369 = vpop.permute.xlu0 %2368
        %v2371 = vmul.f32 %v2219, %v2369
        %v2372 = vmul.f32 %v2220, %v2369
        %2375 = vrot.lane.b32.xlu0 %v2371, 126
        %v2376 = vpop.permute.xlu0 %2375
        %2377 = vrot.lane.b32.xlu0 %v2372, 126
        %v2378 = vpop.permute.xlu0 %2377
        %v2381 = vadd.f32 %v2297, %v2376
        %v2382 = vadd.f32 %v2298, %v2378
        %v2383 = vld [vmem:[%s1 + $0x62] sm:$0x1]
        %v2384 = vlaneseq
        %v2385 = vshrl.u32 %v2384, 7
        %v2386 = vsub.s32 0, %v2385
        %v2387 = vrot.slane %v2383, %v2386
        %2389 = vrot.lane.b32.xlu0 %v2387, 2
        %v2390 = vpop.permute.xlu0 %2389
        %v2392 = vmul.f32 %v2219, %v2390
        %v2393 = vmul.f32 %v2220, %v2390
        %2396 = vrot.lane.b32.xlu0 %v2392, 126
        %v2397 = vpop.permute.xlu0 %2396
        %2398 = vrot.lane.b32.xlu0 %v2393, 126
        %v2399 = vpop.permute.xlu0 %2398
        %v2402 = vadd.f32 %v2318, %v2397
        %v2403 = vadd.f32 %v2319, %v2399
        %v2404 = vld [vmem:[%s1 + $0x86] sm:$0x1]
        %v2405 = vlaneseq
        %v2406 = vshrl.u32 %v2405, 7
        %v2407 = vsub.s32 0, %v2406
        %v2408 = vrot.slane %v2404, %v2407
        %2410 = vrot.lane.b32.xlu0 %v2408, 2
        %v2411 = vpop.permute.xlu0 %2410
        %v2413 = vmul.f32 %v2219, %v2411
        %v2414 = vmul.f32 %v2220, %v2411
        %2417 = vrot.lane.b32.xlu0 %v2413, 126
        %v2418 = vpop.permute.xlu0 %2417
        %2419 = vrot.lane.b32.xlu0 %v2414, 126
        %v2420 = vpop.permute.xlu0 %2419
        %v2423 = vadd.f32 %v2339, %v2418
        %v2424 = vadd.f32 %v2340, %v2420
        %v2425 = vld [vmem:[%s504] sm:$0xff]
        %v2426 = vld [vmem:[%s504 + $0x8] sm:$0xff]
        %v2427 = vld [vmem:[%s1 + $0x1b] sm:$0x1]
        %v2428 = vlaneseq
        %v2429 = vshrl.u32 %v2428, 7
        %v2430 = vsub.s32 0, %v2429
        %v2431 = vrot.slane %v2427, %v2430
        %v2432 = vmul.f32 %v2425, %v2431
        %v2433 = vmul.f32 %v2426, %v2431
        %v2434 = vadd.f32 %v2360, %v2432
        %v2435 = vadd.f32 %v2361, %v2433
        %v2436 = vld [vmem:[%s1 + $0x3f] sm:$0x1]
        %v2437 = vlaneseq
        %v2438 = vshrl.u32 %v2437, 7
        %v2439 = vsub.s32 0, %v2438
        %v2440 = vrot.slane %v2436, %v2439
        %v2441 = vmul.f32 %v2425, %v2440
        %v2442 = vmul.f32 %v2426, %v2440
        %v2443 = vadd.f32 %v2381, %v2441
        %v2444 = vadd.f32 %v2382, %v2442
        %v2445 = vld [vmem:[%s1 + $0x63] sm:$0x1]
        %v2446 = vlaneseq
        %v2447 = vshrl.u32 %v2446, 7
        %v2448 = vsub.s32 0, %v2447
        %v2449 = vrot.slane %v2445, %v2448
        %v2450 = vmul.f32 %v2425, %v2449
        %v2451 = vmul.f32 %v2426, %v2449
        %v2452 = vadd.f32 %v2402, %v2450
        %v2453 = vadd.f32 %v2403, %v2451
        %v2454 = vld [vmem:[%s1 + $0x87] sm:$0x1]
        %v2455 = vlaneseq
        %v2456 = vshrl.u32 %v2455, 7
        %v2457 = vsub.s32 0, %v2456
        %v2458 = vrot.slane %v2454, %v2457
        %v2459 = vmul.f32 %v2425, %v2458
        %v2460 = vmul.f32 %v2426, %v2458
        %v2461 = vadd.f32 %v2423, %v2459
        %v2462 = vadd.f32 %v2424, %v2460
        %v2463 = vld [vmem:[%s1 + $0x1c] sm:$0x1]
        %v2464 = vlaneseq
        %v2465 = vshrl.u32 %v2464, 7
        %v2466 = vsub.s32 0, %v2465
        %v2467 = vrot.slane %v2463, %v2466
        %2469 = vrot.lane.b32.xlu0 %v2467, 1
        %v2470 = vpop.permute.xlu0 %2469
        %v2472 = vmul.f32 %v2425, %v2470
        %v2473 = vmul.f32 %v2426, %v2470
        %2476 = vrot.lane.b32.xlu0 %v2472, 127
        %v2477 = vpop.permute.xlu0 %2476
        %2478 = vrot.lane.b32.xlu0 %v2473, 127
        %v2479 = vpop.permute.xlu0 %2478
        %v2482 = vadd.f32 %v2434, %v2477
        %v2483 = vadd.f32 %v2435, %v2479
        %v2484 = vld [vmem:[%s1 + $0x40] sm:$0x1]
        %v2485 = vlaneseq
        %v2486 = vshrl.u32 %v2485, 7
        %v2487 = vsub.s32 0, %v2486
        %v2488 = vrot.slane %v2484, %v2487
        %2490 = vrot.lane.b32.xlu0 %v2488, 1
        %v2491 = vpop.permute.xlu0 %2490
        %v2493 = vmul.f32 %v2425, %v2491
        %v2494 = vmul.f32 %v2426, %v2491
        %2497 = vrot.lane.b32.xlu0 %v2493, 127
        %v2498 = vpop.permute.xlu0 %2497
        %2499 = vrot.lane.b32.xlu0 %v2494, 127
        %v2500 = vpop.permute.xlu0 %2499
        %v2503 = vadd.f32 %v2443, %v2498
        %v2504 = vadd.f32 %v2444, %v2500
        %v2505 = vld [vmem:[%s1 + $0x64] sm:$0x1]
        %v2506 = vlaneseq
        %v2507 = vshrl.u32 %v2506, 7
        %v2508 = vsub.s32 0, %v2507
        %v2509 = vrot.slane %v2505, %v2508
        %2511 = vrot.lane.b32.xlu0 %v2509, 1
        %v2512 = vpop.permute.xlu0 %2511
        %v2514 = vmul.f32 %v2425, %v2512
        %v2515 = vmul.f32 %v2426, %v2512
        %2518 = vrot.lane.b32.xlu0 %v2514, 127
        %v2519 = vpop.permute.xlu0 %2518
        %2520 = vrot.lane.b32.xlu0 %v2515, 127
        %v2521 = vpop.permute.xlu0 %2520
        %v2524 = vadd.f32 %v2452, %v2519
        %v2525 = vadd.f32 %v2453, %v2521
        %v2526 = vld [vmem:[%s1 + $0x88] sm:$0x1]
        %v2527 = vlaneseq
        %v2528 = vshrl.u32 %v2527, 7
        %v2529 = vsub.s32 0, %v2528
        %v2530 = vrot.slane %v2526, %v2529
        %2532 = vrot.lane.b32.xlu0 %v2530, 1
        %v2533 = vpop.permute.xlu0 %2532
        %v2535 = vmul.f32 %v2425, %v2533
        %v2536 = vmul.f32 %v2426, %v2533
        %2539 = vrot.lane.b32.xlu0 %v2535, 127
        %v2540 = vpop.permute.xlu0 %2539
        %2541 = vrot.lane.b32.xlu0 %v2536, 127
        %v2542 = vpop.permute.xlu0 %2541
        %v2545 = vadd.f32 %v2461, %v2540
        %v2546 = vadd.f32 %v2462, %v2542
        %v2547 = vld [vmem:[%s1 + $0x1d] sm:$0x1]
        %v2548 = vlaneseq
        %v2549 = vshrl.u32 %v2548, 7
        %v2550 = vsub.s32 0, %v2549
        %v2551 = vrot.slane %v2547, %v2550
        %2553 = vrot.lane.b32.xlu0 %v2551, 2
        %v2554 = vpop.permute.xlu0 %2553
        %v2556 = vmul.f32 %v2425, %v2554
        %v2557 = vmul.f32 %v2426, %v2554
        %2560 = vrot.lane.b32.xlu0 %v2556, 126
        %v2561 = vpop.permute.xlu0 %2560
        %2562 = vrot.lane.b32.xlu0 %v2557, 126
        %v2563 = vpop.permute.xlu0 %2562
        %v2566 = vadd.f32 %v2482, %v2561
        %v2567 = vadd.f32 %v2483, %v2563
        %v2568 = vld [vmem:[%s1 + $0x41] sm:$0x1]
        %v2569 = vlaneseq
        %v2570 = vshrl.u32 %v2569, 7
        %v2571 = vsub.s32 0, %v2570
        %v2572 = vrot.slane %v2568, %v2571
        %2574 = vrot.lane.b32.xlu0 %v2572, 2
        %v2575 = vpop.permute.xlu0 %2574
        %v2577 = vmul.f32 %v2425, %v2575
        %v2578 = vmul.f32 %v2426, %v2575
        %2581 = vrot.lane.b32.xlu0 %v2577, 126
        %v2582 = vpop.permute.xlu0 %2581
        %2583 = vrot.lane.b32.xlu0 %v2578, 126
        %v2584 = vpop.permute.xlu0 %2583
        %v2587 = vadd.f32 %v2503, %v2582
        %v2588 = vadd.f32 %v2504, %v2584
        %v2589 = vld [vmem:[%s1 + $0x65] sm:$0x1]
        %v2590 = vlaneseq
        %v2591 = vshrl.u32 %v2590, 7
        %v2592 = vsub.s32 0, %v2591
        %v2593 = vrot.slane %v2589, %v2592
        %2595 = vrot.lane.b32.xlu0 %v2593, 2
        %v2596 = vpop.permute.xlu0 %2595
        %v2598 = vmul.f32 %v2425, %v2596
        %v2599 = vmul.f32 %v2426, %v2596
        %2602 = vrot.lane.b32.xlu0 %v2598, 126
        %v2603 = vpop.permute.xlu0 %2602
        %2604 = vrot.lane.b32.xlu0 %v2599, 126
        %v2605 = vpop.permute.xlu0 %2604
        %v2608 = vadd.f32 %v2524, %v2603
        %v2609 = vadd.f32 %v2525, %v2605
        %v2610 = vld [vmem:[%s1 + $0x89] sm:$0x1]
        %v2611 = vlaneseq
        %v2612 = vshrl.u32 %v2611, 7
        %v2613 = vsub.s32 0, %v2612
        %v2614 = vrot.slane %v2610, %v2613
        %2616 = vrot.lane.b32.xlu0 %v2614, 2
        %v2617 = vpop.permute.xlu0 %2616
        %v2619 = vmul.f32 %v2425, %v2617
        %v2620 = vmul.f32 %v2426, %v2617
        %2623 = vrot.lane.b32.xlu0 %v2619, 126
        %v2624 = vpop.permute.xlu0 %2623
        %2625 = vrot.lane.b32.xlu0 %v2620, 126
        %v2626 = vpop.permute.xlu0 %2625
        %v2629 = vadd.f32 %v2545, %v2624
        %v2630 = vadd.f32 %v2546, %v2626
        %v2631 = vld [vmem:[%s504 + $0x1] sm:$0xff]
        %v2632 = vld [vmem:[%s504 + $0x9] sm:$0xff]
        %v2633 = vld [vmem:[%s1 + $0x1e] sm:$0x1]
        %v2634 = vlaneseq
        %v2635 = vshrl.u32 %v2634, 7
        %v2636 = vsub.s32 0, %v2635
        %v2637 = vrot.slane %v2633, %v2636
        %v2638 = vmul.f32 %v2631, %v2637
        %v2639 = vmul.f32 %v2632, %v2637
        %v2640 = vadd.f32 %v2566, %v2638
        %v2641 = vadd.f32 %v2567, %v2639
        %v2642 = vld [vmem:[%s1 + $0x42] sm:$0x1]
        %v2643 = vlaneseq
        %v2644 = vshrl.u32 %v2643, 7
        %v2645 = vsub.s32 0, %v2644
        %v2646 = vrot.slane %v2642, %v2645
        %v2647 = vmul.f32 %v2631, %v2646
        %v2648 = vmul.f32 %v2632, %v2646
        %v2649 = vadd.f32 %v2587, %v2647
        %v2650 = vadd.f32 %v2588, %v2648
        %v2651 = vld [vmem:[%s1 + $0x66] sm:$0x1]
        %v2652 = vlaneseq
        %v2653 = vshrl.u32 %v2652, 7
        %v2654 = vsub.s32 0, %v2653
        %v2655 = vrot.slane %v2651, %v2654
        %v2656 = vmul.f32 %v2631, %v2655
        %v2657 = vmul.f32 %v2632, %v2655
        %v2658 = vadd.f32 %v2608, %v2656
        %v2659 = vadd.f32 %v2609, %v2657
        %v2660 = vld [vmem:[%s1 + $0x8a] sm:$0x1]
        %v2661 = vlaneseq
        %v2662 = vshrl.u32 %v2661, 7
        %v2663 = vsub.s32 0, %v2662
        %v2664 = vrot.slane %v2660, %v2663
        %v2665 = vmul.f32 %v2631, %v2664
        %v2666 = vmul.f32 %v2632, %v2664
        %v2667 = vadd.f32 %v2629, %v2665
        %v2668 = vadd.f32 %v2630, %v2666
        %v2669 = vld [vmem:[%s1 + $0x1f] sm:$0x1]
        %v2670 = vlaneseq
        %v2671 = vshrl.u32 %v2670, 7
        %v2672 = vsub.s32 0, %v2671
        %v2673 = vrot.slane %v2669, %v2672
        %2675 = vrot.lane.b32.xlu0 %v2673, 1
        %v2676 = vpop.permute.xlu0 %2675
        %v2678 = vmul.f32 %v2631, %v2676
        %v2679 = vmul.f32 %v2632, %v2676
        %2682 = vrot.lane.b32.xlu0 %v2678, 127
        %v2683 = vpop.permute.xlu0 %2682
        %2684 = vrot.lane.b32.xlu0 %v2679, 127
        %v2685 = vpop.permute.xlu0 %2684
        %v2688 = vadd.f32 %v2640, %v2683
        %v2689 = vadd.f32 %v2641, %v2685
        %v2690 = vld [vmem:[%s1 + $0x43] sm:$0x1]
        %v2691 = vlaneseq
        %v2692 = vshrl.u32 %v2691, 7
        %v2693 = vsub.s32 0, %v2692
        %v2694 = vrot.slane %v2690, %v2693
        %2696 = vrot.lane.b32.xlu0 %v2694, 1
        %v2697 = vpop.permute.xlu0 %2696
        %v2699 = vmul.f32 %v2631, %v2697
        %v2700 = vmul.f32 %v2632, %v2697
        %2703 = vrot.lane.b32.xlu0 %v2699, 127
        %v2704 = vpop.permute.xlu0 %2703
        %2705 = vrot.lane.b32.xlu0 %v2700, 127
        %v2706 = vpop.permute.xlu0 %2705
        %v2709 = vadd.f32 %v2649, %v2704
        %v2710 = vadd.f32 %v2650, %v2706
        %v2711 = vld [vmem:[%s1 + $0x67] sm:$0x1]
        %v2712 = vlaneseq
        %v2713 = vshrl.u32 %v2712, 7
        %v2714 = vsub.s32 0, %v2713
        %v2715 = vrot.slane %v2711, %v2714
        %2717 = vrot.lane.b32.xlu0 %v2715, 1
        %v2718 = vpop.permute.xlu0 %2717
        %v2720 = vmul.f32 %v2631, %v2718
        %v2721 = vmul.f32 %v2632, %v2718
        %2724 = vrot.lane.b32.xlu0 %v2720, 127
        %v2725 = vpop.permute.xlu0 %2724
        %2726 = vrot.lane.b32.xlu0 %v2721, 127
        %v2727 = vpop.permute.xlu0 %2726
        %v2730 = vadd.f32 %v2658, %v2725
        %v2731 = vadd.f32 %v2659, %v2727
        %v2732 = vld [vmem:[%s1 + $0x8b] sm:$0x1]
        %v2733 = vlaneseq
        %v2734 = vshrl.u32 %v2733, 7
        %v2735 = vsub.s32 0, %v2734
        %v2736 = vrot.slane %v2732, %v2735
        %2738 = vrot.lane.b32.xlu0 %v2736, 1
        %v2739 = vpop.permute.xlu0 %2738
        %v2741 = vmul.f32 %v2631, %v2739
        %v2742 = vmul.f32 %v2632, %v2739
        %2745 = vrot.lane.b32.xlu0 %v2741, 127
        %v2746 = vpop.permute.xlu0 %2745
        %2747 = vrot.lane.b32.xlu0 %v2742, 127
        %v2748 = vpop.permute.xlu0 %2747
        %v2751 = vadd.f32 %v2667, %v2746
        %v2752 = vadd.f32 %v2668, %v2748
        %v2753 = vld [vmem:[%s1 + $0x20] sm:$0x1]
        %v2754 = vlaneseq
        %v2755 = vshrl.u32 %v2754, 7
        %v2756 = vsub.s32 0, %v2755
        %v2757 = vrot.slane %v2753, %v2756
        %2759 = vrot.lane.b32.xlu0 %v2757, 2
        %v2760 = vpop.permute.xlu0 %2759
        %v2762 = vmul.f32 %v2631, %v2760
        %v2763 = vmul.f32 %v2632, %v2760
        %2766 = vrot.lane.b32.xlu0 %v2762, 126
        %v2767 = vpop.permute.xlu0 %2766
        %2768 = vrot.lane.b32.xlu0 %v2763, 126
        %v2769 = vpop.permute.xlu0 %2768
        %v2772 = vadd.f32 %v2688, %v2767
        %v2773 = vadd.f32 %v2689, %v2769
        %v2774 = vld [vmem:[%s1 + $0x44] sm:$0x1]
        %v2775 = vlaneseq
        %v2776 = vshrl.u32 %v2775, 7
        %v2777 = vsub.s32 0, %v2776
        %v2778 = vrot.slane %v2774, %v2777
        %2780 = vrot.lane.b32.xlu0 %v2778, 2
        %v2781 = vpop.permute.xlu0 %2780
        %v2783 = vmul.f32 %v2631, %v2781
        %v2784 = vmul.f32 %v2632, %v2781
        %2787 = vrot.lane.b32.xlu0 %v2783, 126
        %v2788 = vpop.permute.xlu0 %2787
        %2789 = vrot.lane.b32.xlu0 %v2784, 126
        %v2790 = vpop.permute.xlu0 %2789
        %v2793 = vadd.f32 %v2709, %v2788
        %v2794 = vadd.f32 %v2710, %v2790
        %v2795 = vld [vmem:[%s1 + $0x68] sm:$0x1]
        %v2796 = vlaneseq
        %v2797 = vshrl.u32 %v2796, 7
        %v2798 = vsub.s32 0, %v2797
        %v2799 = vrot.slane %v2795, %v2798
        %2801 = vrot.lane.b32.xlu0 %v2799, 2
        %v2802 = vpop.permute.xlu0 %2801
        %v2804 = vmul.f32 %v2631, %v2802
        %v2805 = vmul.f32 %v2632, %v2802
        %2808 = vrot.lane.b32.xlu0 %v2804, 126
        %v2809 = vpop.permute.xlu0 %2808
        %2810 = vrot.lane.b32.xlu0 %v2805, 126
        %v2811 = vpop.permute.xlu0 %2810
        %v2814 = vadd.f32 %v2730, %v2809
        %v2815 = vadd.f32 %v2731, %v2811
        %v2816 = vld [vmem:[%s1 + $0x8c] sm:$0x1]
        %v2817 = vlaneseq
        %v2818 = vshrl.u32 %v2817, 7
        %v2819 = vsub.s32 0, %v2818
        %v2820 = vrot.slane %v2816, %v2819
        %2822 = vrot.lane.b32.xlu0 %v2820, 2
        %v2823 = vpop.permute.xlu0 %2822
        %v2825 = vmul.f32 %v2631, %v2823
        %v2826 = vmul.f32 %v2632, %v2823
        %2829 = vrot.lane.b32.xlu0 %v2825, 126
        %v2830 = vpop.permute.xlu0 %2829
        %2831 = vrot.lane.b32.xlu0 %v2826, 126
        %v2832 = vpop.permute.xlu0 %2831
        %v2835 = vadd.f32 %v2751, %v2830
        %v2836 = vadd.f32 %v2752, %v2832
        %v2837 = vld [vmem:[%s504 + $0x2] sm:$0xff]
        %v2838 = vld [vmem:[%s504 + $0xa] sm:$0xff]
        %v2839 = vld [vmem:[%s1 + $0x21] sm:$0x1]
        %v2840 = vlaneseq
        %v2841 = vshrl.u32 %v2840, 7
        %v2842 = vsub.s32 0, %v2841
        %v2843 = vrot.slane %v2839, %v2842
        %v2844 = vmul.f32 %v2837, %v2843
        %v2845 = vmul.f32 %v2838, %v2843
        %v2846 = vadd.f32 %v2772, %v2844
        %v2847 = vadd.f32 %v2773, %v2845
        %v2848 = vld [vmem:[%s1 + $0x45] sm:$0x1]
        %v2849 = vlaneseq
        %v2850 = vshrl.u32 %v2849, 7
        %v2851 = vsub.s32 0, %v2850
        %v2852 = vrot.slane %v2848, %v2851
        %v2853 = vmul.f32 %v2837, %v2852
        %v2854 = vmul.f32 %v2838, %v2852
        %v2855 = vadd.f32 %v2793, %v2853
        %v2856 = vadd.f32 %v2794, %v2854
        %v2857 = vld [vmem:[%s1 + $0x69] sm:$0x1]
        %v2858 = vlaneseq
        %v2859 = vshrl.u32 %v2858, 7
        %v2860 = vsub.s32 0, %v2859
        %v2861 = vrot.slane %v2857, %v2860
        %v2862 = vmul.f32 %v2837, %v2861
        %v2863 = vmul.f32 %v2838, %v2861
        %v2864 = vadd.f32 %v2814, %v2862
        %v2865 = vadd.f32 %v2815, %v2863
        %v2866 = vld [vmem:[%s1 + $0x8d] sm:$0x1]
        %v2867 = vlaneseq
        %v2868 = vshrl.u32 %v2867, 7
        %v2869 = vsub.s32 0, %v2868
        %v2870 = vrot.slane %v2866, %v2869
        %v2871 = vmul.f32 %v2837, %v2870
        %v2872 = vmul.f32 %v2838, %v2870
        %v2873 = vadd.f32 %v2835, %v2871
        %v2874 = vadd.f32 %v2836, %v2872
        %v2875 = vld [vmem:[%s1 + $0x22] sm:$0x1]
        %v2876 = vlaneseq
        %v2877 = vshrl.u32 %v2876, 7
        %v2878 = vsub.s32 0, %v2877
        %v2879 = vrot.slane %v2875, %v2878
        %2881 = vrot.lane.b32.xlu0 %v2879, 1
        %v2882 = vpop.permute.xlu0 %2881
        %v2884 = vmul.f32 %v2837, %v2882
        %v2885 = vmul.f32 %v2838, %v2882
        %2888 = vrot.lane.b32.xlu0 %v2884, 127
        %v2889 = vpop.permute.xlu0 %2888
        %2890 = vrot.lane.b32.xlu0 %v2885, 127
        %v2891 = vpop.permute.xlu0 %2890
        %v2894 = vadd.f32 %v2846, %v2889
        %v2895 = vadd.f32 %v2847, %v2891
        %v2896 = vld [vmem:[%s1 + $0x46] sm:$0x1]
        %v2897 = vlaneseq
        %v2898 = vshrl.u32 %v2897, 7
        %v2899 = vsub.s32 0, %v2898
        %v2900 = vrot.slane %v2896, %v2899
        %2902 = vrot.lane.b32.xlu0 %v2900, 1
        %v2903 = vpop.permute.xlu0 %2902
        %v2905 = vmul.f32 %v2837, %v2903
        %v2906 = vmul.f32 %v2838, %v2903
        %2909 = vrot.lane.b32.xlu0 %v2905, 127
        %v2910 = vpop.permute.xlu0 %2909
        %2911 = vrot.lane.b32.xlu0 %v2906, 127
        %v2912 = vpop.permute.xlu0 %2911
        %v2915 = vadd.f32 %v2855, %v2910
        %v2916 = vadd.f32 %v2856, %v2912
        %v2917 = vld [vmem:[%s1 + $0x6a] sm:$0x1]
        %v2918 = vlaneseq
        %v2919 = vshrl.u32 %v2918, 7
        %v2920 = vsub.s32 0, %v2919
        %v2921 = vrot.slane %v2917, %v2920
        %2923 = vrot.lane.b32.xlu0 %v2921, 1
        %v2924 = vpop.permute.xlu0 %2923
        %v2926 = vmul.f32 %v2837, %v2924
        %v2927 = vmul.f32 %v2838, %v2924
        %2930 = vrot.lane.b32.xlu0 %v2926, 127
        %v2931 = vpop.permute.xlu0 %2930
        %2932 = vrot.lane.b32.xlu0 %v2927, 127
        %v2933 = vpop.permute.xlu0 %2932
        %v2936 = vadd.f32 %v2864, %v2931
        %v2937 = vadd.f32 %v2865, %v2933
        %v2938 = vld [vmem:[%s1 + $0x8e] sm:$0x1]
        %v2939 = vlaneseq
        %v2940 = vshrl.u32 %v2939, 7
        %v2941 = vsub.s32 0, %v2940
        %v2942 = vrot.slane %v2938, %v2941
        %2944 = vrot.lane.b32.xlu0 %v2942, 1
        %v2945 = vpop.permute.xlu0 %2944
        %v2947 = vmul.f32 %v2837, %v2945
        %v2948 = vmul.f32 %v2838, %v2945
        %2951 = vrot.lane.b32.xlu0 %v2947, 127
        %v2952 = vpop.permute.xlu0 %2951
        %2953 = vrot.lane.b32.xlu0 %v2948, 127
        %v2954 = vpop.permute.xlu0 %2953
        %v2957 = vadd.f32 %v2873, %v2952
        %v2958 = vadd.f32 %v2874, %v2954
        %v2959 = vld [vmem:[%s1 + $0x23] sm:$0x1]
        %v2960 = vlaneseq
        %v2961 = vshrl.u32 %v2960, 7
        %v2962 = vsub.s32 0, %v2961
        %v2963 = vrot.slane %v2959, %v2962
        %2965 = vrot.lane.b32.xlu0 %v2963, 2
        %v2966 = vpop.permute.xlu0 %2965
        %v2968 = vmul.f32 %v2837, %v2966
        %v2969 = vmul.f32 %v2838, %v2966
        %2972 = vrot.lane.b32.xlu0 %v2968, 126
        %v2973 = vpop.permute.xlu0 %2972
        %2974 = vrot.lane.b32.xlu0 %v2969, 126
        %v2975 = vpop.permute.xlu0 %2974
        %v2978 = vadd.f32 %v2894, %v2973
        %v2979 = vadd.f32 %v2895, %v2975
        %v2980 = vld [vmem:[%s1 + $0x47] sm:$0x1]
        %v2981 = vlaneseq
        %v2982 = vshrl.u32 %v2981, 7
        %v2983 = vsub.s32 0, %v2982
        %v2984 = vrot.slane %v2980, %v2983
        %2986 = vrot.lane.b32.xlu0 %v2984, 2
        %v2987 = vpop.permute.xlu0 %2986
        %v2989 = vmul.f32 %v2837, %v2987
        %v2990 = vmul.f32 %v2838, %v2987
        %2993 = vrot.lane.b32.xlu0 %v2989, 126
        %v2994 = vpop.permute.xlu0 %2993
        %2995 = vrot.lane.b32.xlu0 %v2990, 126
        %v2996 = vpop.permute.xlu0 %2995
        %v2999 = vadd.f32 %v2915, %v2994
        %v3000 = vadd.f32 %v2916, %v2996
        %v3001 = vld [vmem:[%s1 + $0x6b] sm:$0x1]
        %v3002 = vlaneseq
        %v3003 = vshrl.u32 %v3002, 7
        %v3004 = vsub.s32 0, %v3003
        %v3005 = vrot.slane %v3001, %v3004
        %3007 = vrot.lane.b32.xlu0 %v3005, 2
        %v3008 = vpop.permute.xlu0 %3007
        %v3010 = vmul.f32 %v2837, %v3008
        %v3011 = vmul.f32 %v2838, %v3008
        %3014 = vrot.lane.b32.xlu0 %v3010, 126
        %v3015 = vpop.permute.xlu0 %3014
        %3016 = vrot.lane.b32.xlu0 %v3011, 126
        %v3017 = vpop.permute.xlu0 %3016
        %v3020 = vadd.f32 %v2936, %v3015
        %v3021 = vadd.f32 %v2937, %v3017
        %v3022 = vld [vmem:[%s1 + $0x8f] sm:$0x1]
        %v3023 = vlaneseq
        %v3024 = vshrl.u32 %v3023, 7
        %v3025 = vsub.s32 0, %v3024
        %v3026 = vrot.slane %v3022, %v3025
        %3028 = vrot.lane.b32.xlu0 %v3026, 2
        %v3029 = vpop.permute.xlu0 %3028
        %v3031 = vmul.f32 %v2837, %v3029
        %v3032 = vmul.f32 %v2838, %v3029
        %3035 = vrot.lane.b32.xlu0 %v3031, 126
        %v3036 = vpop.permute.xlu0 %3035
        %3037 = vrot.lane.b32.xlu0 %v3032, 126
        %v3038 = vpop.permute.xlu0 %3037
        %v3041 = vadd.f32 %v2957, %v3036
        %v3042 = vadd.f32 %v2958, %v3038
        %vm3043 = vcmask 310272
        %v3044 = vsel %vm3043, %v2978, 0.0
        %3045 = vadd.xlane.f32.xlu0 %v3044
        %v3046 = vpop.xlane.xlu0 %3045
        %v3047 = vsel %vm3043, %v2979, 0.0
        %3048 = vadd.xlane.f32.xlu0 %v3047
        %v3049 = vpop.xlane.xlu0 %3048
        %v3050 = vadd.f32 %v3046, 0.0
        %v3051 = vadd.f32 %v3049, 0.0
        %v3052 = vmul.f32 %v2978, %v2978
        %v3053 = vmul.f32 %v2979, %v2979
        %v3054 = vsel %vm3043, %v3052, 0.0
        %3055 = vadd.xlane.f32.xlu0 %v3054
        %v3056 = vpop.xlane.xlu0 %3055
        %v3057 = vsel %vm3043, %v3053, 0.0
        %3058 = vadd.xlane.f32.xlu0 %v3057
        %v3059 = vpop.xlane.xlu0 %3058
        %v3060 = vadd.f32 %v3056, 0.0
        %v3061 = vadd.f32 %v3059, 0.0
        %v3062 = vsel %vm3043, %v2999, 0.0
        %3063 = vadd.xlane.f32.xlu0 %v3062
        %v3064 = vpop.xlane.xlu0 %3063
        %v3065 = vsel %vm3043, %v3000, 0.0
        %3066 = vadd.xlane.f32.xlu0 %v3065
        %v3067 = vpop.xlane.xlu0 %3066
        %v3068 = vadd.f32 %v3050, %v3064
        %v3069 = vadd.f32 %v3051, %v3067
        %v3070 = vmul.f32 %v2999, %v2999
        %v3071 = vmul.f32 %v3000, %v3000
        %v3072 = vsel %vm3043, %v3070, 0.0
        %3073 = vadd.xlane.f32.xlu0 %v3072
        %v3074 = vpop.xlane.xlu0 %3073
        %v3075 = vsel %vm3043, %v3071, 0.0
        %3076 = vadd.xlane.f32.xlu0 %v3075
        %v3077 = vpop.xlane.xlu0 %3076
        %v3078 = vadd.f32 %v3060, %v3074
        %v3079 = vadd.f32 %v3061, %v3077
        %v3080 = vsel %vm3043, %v3020, 0.0
        %3081 = vadd.xlane.f32.xlu0 %v3080
        %v3082 = vpop.xlane.xlu0 %3081
        %v3083 = vsel %vm3043, %v3021, 0.0
        %3084 = vadd.xlane.f32.xlu0 %v3083
        %v3085 = vpop.xlane.xlu0 %3084
        %v3086 = vadd.f32 %v3068, %v3082
        %v3087 = vadd.f32 %v3069, %v3085
        %v3088 = vmul.f32 %v3020, %v3020
        %v3089 = vmul.f32 %v3021, %v3021
        %v3090 = vsel %vm3043, %v3088, 0.0
        %3091 = vadd.xlane.f32.xlu0 %v3090
        %v3092 = vpop.xlane.xlu0 %3091
        %v3093 = vsel %vm3043, %v3089, 0.0
        %3094 = vadd.xlane.f32.xlu0 %v3093
        %v3095 = vpop.xlane.xlu0 %3094
        %v3096 = vadd.f32 %v3078, %v3092
        %v3097 = vadd.f32 %v3079, %v3095
        %v3098 = vsel %vm3043, %v3041, 0.0
        %3099 = vadd.xlane.f32.xlu0 %v3098
        %v3100 = vpop.xlane.xlu0 %3099
        %v3101 = vsel %vm3043, %v3042, 0.0
        %3102 = vadd.xlane.f32.xlu0 %v3101
        %v3103 = vpop.xlane.xlu0 %3102
        %v3104 = vadd.f32 %v3086, %v3100
        %v3105 = vadd.f32 %v3087, %v3103
        %v3106 = vmul.f32 %v3041, %v3041
        %v3107 = vmul.f32 %v3042, %v3042
        %v3108 = vsel %vm3043, %v3106, 0.0
        %3109 = vadd.xlane.f32.xlu0 %v3108
        %v3110 = vpop.xlane.xlu0 %3109
        %v3111 = vsel %vm3043, %v3107, 0.0
        %3112 = vadd.xlane.f32.xlu0 %v3111
        %v3113 = vpop.xlane.xlu0 %3112
        %v3114 = vadd.f32 %v3096, %v3110
        %v3115 = vadd.f32 %v3097, %v3113
        %v3116 = vmul.f32 %v3104, 0.0078125
        %v3117 = vmul.f32 %v3105, 0.0078125
        %v3118 = vmul.f32 %v3114, 0.0078125
        %v3119 = vmul.f32 %v3115, 0.0078125
        %v3120 = vmul.f32 %v3116, %v3116
        %v3121 = vmul.f32 %v3117, %v3117
        %v3122 = vsub.f32 %v3118, %v3120
        %v3123 = vsub.f32 %v3119, %v3121
        %v3124 = vmax.f32 %v3122, 0.0
        %v3125 = vmax.f32 %v3123, 0.0
        %v3126 = vadd.f32 %v3124, 1e-05
        %v3127 = vadd.f32 %v3125, 1e-05
        %v3128 = vrsqrt.pop %v3126
        %v3129 = vrsqrt.pop %v3127
        %v3130 = vsub.f32 %v2978, %v3116
        %v3131 = vsub.f32 %v2979, %v3117
        %v3132 = vmul.f32 %v3130, %v3128
        %v3133 = vmul.f32 %v3131, %v3129
        %v3135 = vlaneseq
        %v3136 = vshrl.u32 %v3135, 7
        %v3137 = vsub.s32 0, %v3136
        %v3138 = vrot.slane %v378, %v3137
        %v3140 = vmul.f32 %v3132, %v3138
        %v3141 = vmul.f32 %v3133, %v3138
        %v3143 = vlaneseq
        %v3144 = vshrl.u32 %v3143, 7
        %v3145 = vsub.s32 0, %v3144
        %v3146 = vrot.slane %v379, %v3145
        %v3148 = vadd.f32 %v3140, %v3146
        %v3149 = vadd.f32 %v3141, %v3146
        %s3150 = sld [smem:[#allocation6]]
        %vm3151 = vcmp.gt.f32.partialorder %v3148, 0.0
        %vm3152 = vcmp.gt.f32.partialorder %v3149, 0.0
        %v3153 = vstv %s3150
        %v3154 = vmul.f32 %v3153, %v3148
        %v3155 = vmul.f32 %v3153, %v3149
        %v3156 = vsel %vm3151, %v3148, %v3154
        %v3157 = vsel %vm3152, %v3149, %v3155
        %3158 = vst.msk [vmem:[#allocation3] sm:$0xff] %vm3043, %v3156
        %3159 = vst.msk [vmem:[#allocation3 + $0x8] sm:$0xff] %vm3043, %v3157
        %v3160 = vsub.f32 %v2999, %v3116
        %v3161 = vsub.f32 %v3000, %v3117
        %v3162 = vmul.f32 %v3160, %v3128
        %v3163 = vmul.f32 %v3161, %v3129
        %v3164 = vmul.f32 %v3162, %v3138
        %v3165 = vmul.f32 %v3163, %v3138
        %v3166 = vadd.f32 %v3164, %v3146
        %v3167 = vadd.f32 %v3165, %v3146
        %s3168 = sld [smem:[#allocation6 + $0x1]]
        %vm3169 = vcmp.gt.f32.partialorder %v3166, 0.0
        %vm3170 = vcmp.gt.f32.partialorder %v3167, 0.0
        %v3171 = vstv %s3168
        %v3172 = vmul.f32 %v3171, %v3166
        %v3173 = vmul.f32 %v3171, %v3167
        %v3174 = vsel %vm3169, %v3166, %v3172
        %v3175 = vsel %vm3170, %v3167, %v3173
        %3176 = vst.msk [vmem:[#allocation3 + $0x10] sm:$0xff] %vm3043, %v3174
        %3177 = vst.msk [vmem:[#allocation3 + $0x18] sm:$0xff] %vm3043, %v3175
        %v3178 = vsub.f32 %v3020, %v3116
        %v3179 = vsub.f32 %v3021, %v3117
        %v3180 = vmul.f32 %v3178, %v3128
        %v3181 = vmul.f32 %v3179, %v3129
        %v3182 = vmul.f32 %v3180, %v3138
        %v3183 = vmul.f32 %v3181, %v3138
        %v3184 = vadd.f32 %v3182, %v3146
        %v3185 = vadd.f32 %v3183, %v3146
        %s3186 = sld [smem:[#allocation6 + $0x2]]
        %vm3187 = vcmp.gt.f32.partialorder %v3184, 0.0
        %vm3188 = vcmp.gt.f32.partialorder %v3185, 0.0
        %v3189 = vstv %s3186
        %v3190 = vmul.f32 %v3189, %v3184
        %v3191 = vmul.f32 %v3189, %v3185
        %v3192 = vsel %vm3187, %v3184, %v3190
        %v3193 = vsel %vm3188, %v3185, %v3191
        %3194 = vst.msk [vmem:[#allocation3 + $0x20] sm:$0xff] %vm3043, %v3192
        %3195 = vst.msk [vmem:[#allocation3 + $0x28] sm:$0xff] %vm3043, %v3193
        %v3196 = vsub.f32 %v3041, %v3116
        %v3197 = vsub.f32 %v3042, %v3117
        %v3198 = vmul.f32 %v3196, %v3128
        %v3199 = vmul.f32 %v3197, %v3129
        %v3200 = vmul.f32 %v3198, %v3138
        %v3201 = vmul.f32 %v3199, %v3138
        %v3202 = vadd.f32 %v3200, %v3146
        %v3203 = vadd.f32 %v3201, %v3146
        %s3204 = sld [smem:[#allocation6 + $0x3]]
        %vm3205 = vcmp.gt.f32.partialorder %v3202, 0.0
        %vm3206 = vcmp.gt.f32.partialorder %v3203, 0.0
        %v3207 = vstv %s3204
        %v3208 = vmul.f32 %v3207, %v3202
        %v3209 = vmul.f32 %v3207, %v3203
        %v3210 = vsel %vm3205, %v3202, %v3208
        %v3211 = vsel %vm3206, %v3203, %v3209
        %3212 = vst.msk [vmem:[#allocation3 + $0x30] sm:$0xff] %vm3043, %v3210
        %3213 = vst.msk [vmem:[#allocation3 + $0x38] sm:$0xff] %vm3043, %v3211
        %v3214 = vld [vmem:[%s355 + $0x40] sm:$0xff]
        %v3215 = vld [vmem:[%s355 + $0x48] sm:$0xff]
        %3218 = vrot.lane.b32.xlu0 %v3214, 1
        %v3219 = vpop.permute.xlu0 %3218
        %3220 = vrot.lane.b32.xlu0 %v3215, 1
        %v3221 = vpop.permute.xlu0 %3220
        %3224 = vst.msk [vmem:[#allocation2 + $0x1] sm:$0xff] %vm390, %v3219
        %3225 = vst.msk [vmem:[#allocation2 + $0x9] sm:$0xff] %vm390, %v3221
        %3226 = vrot.lane.b32.xlu0 %v3214, 3
        %v3227 = vpop.permute.xlu0 %3226
        %3228 = vrot.lane.b32.xlu0 %v3215, 3
        %v3229 = vpop.permute.xlu0 %3228
        %3232 = vst.msk [vmem:[#allocation2 + $0x1] sm:$0xff] %vm399, %v3227
        %3233 = vst.msk [vmem:[#allocation2 + $0x9] sm:$0xff] %vm399, %v3229
        %3234 = vrot.lane.b32.xlu0 %v3214, 13
        %v3235 = vpop.permute.xlu0 %3234
        %3236 = vrot.lane.b32.xlu0 %v3215, 13
        %v3237 = vpop.permute.xlu0 %3236
        %3240 = vst.msk [vmem:[#allocation2 + $0x1] sm:$0xff] %vm408, %v3235
        %3241 = vst.msk [vmem:[#allocation2 + $0x9] sm:$0xff] %vm408, %v3237
        %3242 = vrot.lane.b32.xlu0 %v3214, 23
        %v3243 = vpop.permute.xlu0 %3242
        %3244 = vrot.lane.b32.xlu0 %v3215, 23
        %v3245 = vpop.permute.xlu0 %3244
        %3248 = vst.msk [vmem:[#allocation2 + $0x1] sm:$0xff] %vm417, %v3243
        %3249 = vst.msk [vmem:[#allocation2 + $0x9] sm:$0xff] %vm417, %v3245
        %v3250 = vld [vmem:[%s355 + $0x50] sm:$0xff]
        %v3251 = vld [vmem:[%s355 + $0x58] sm:$0xff]
        %3254 = vrot.lane.b32.xlu0 %v3250, 1
        %v3255 = vpop.permute.xlu0 %3254
        %3256 = vrot.lane.b32.xlu0 %v3251, 1
        %v3257 = vpop.permute.xlu0 %3256
        %3260 = vst.msk [vmem:[%s430 + $0x1] sm:$0xff] %vm390, %v3255
        %3261 = vst.msk [vmem:[%s430 + $0x9] sm:$0xff] %vm390, %v3257
        %3262 = vrot.lane.b32.xlu0 %v3250, 3
        %v3263 = vpop.permute.xlu0 %3262
        %3264 = vrot.lane.b32.xlu0 %v3251, 3
        %v3265 = vpop.permute.xlu0 %3264
        %3268 = vst.msk [vmem:[%s430 + $0x1] sm:$0xff] %vm399, %v3263
        %3269 = vst.msk [vmem:[%s430 + $0x9] sm:$0xff] %vm399, %v3265
        %3270 = vrot.lane.b32.xlu0 %v3250, 13
        %v3271 = vpop.permute.xlu0 %3270
        %3272 = vrot.lane.b32.xlu0 %v3251, 13
        %v3273 = vpop.permute.xlu0 %3272
        %3276 = vst.msk [vmem:[%s430 + $0x1] sm:$0xff] %vm408, %v3271
        %3277 = vst.msk [vmem:[%s430 + $0x9] sm:$0xff] %vm408, %v3273
        %3278 = vrot.lane.b32.xlu0 %v3250, 23
        %v3279 = vpop.permute.xlu0 %3278
        %3280 = vrot.lane.b32.xlu0 %v3251, 23
        %v3281 = vpop.permute.xlu0 %3280
        %3284 = vst.msk [vmem:[%s430 + $0x1] sm:$0xff] %vm417, %v3279
        %3285 = vst.msk [vmem:[%s430 + $0x9] sm:$0xff] %vm417, %v3281
        %v3286 = vld [vmem:[%s355 + $0x60] sm:$0xff]
        %v3287 = vld [vmem:[%s355 + $0x68] sm:$0xff]
        %3290 = vrot.lane.b32.xlu0 %v3286, 1
        %v3291 = vpop.permute.xlu0 %3290
        %3292 = vrot.lane.b32.xlu0 %v3287, 1
        %v3293 = vpop.permute.xlu0 %3292
        %3296 = vst.msk [vmem:[%s467 + $0x1] sm:$0xff] %vm390, %v3291
        %3297 = vst.msk [vmem:[%s467 + $0x9] sm:$0xff] %vm390, %v3293
        %3298 = vrot.lane.b32.xlu0 %v3286, 3
        %v3299 = vpop.permute.xlu0 %3298
        %3300 = vrot.lane.b32.xlu0 %v3287, 3
        %v3301 = vpop.permute.xlu0 %3300
        %3304 = vst.msk [vmem:[%s467 + $0x1] sm:$0xff] %vm399, %v3299
        %3305 = vst.msk [vmem:[%s467 + $0x9] sm:$0xff] %vm399, %v3301
        %3306 = vrot.lane.b32.xlu0 %v3286, 13
        %v3307 = vpop.permute.xlu0 %3306
        %3308 = vrot.lane.b32.xlu0 %v3287, 13
        %v3309 = vpop.permute.xlu0 %3308
        %3312 = vst.msk [vmem:[%s467 + $0x1] sm:$0xff] %vm408, %v3307
        %3313 = vst.msk [vmem:[%s467 + $0x9] sm:$0xff] %vm408, %v3309
        %3314 = vrot.lane.b32.xlu0 %v3286, 23
        %v3315 = vpop.permute.xlu0 %3314
        %3316 = vrot.lane.b32.xlu0 %v3287, 23
        %v3317 = vpop.permute.xlu0 %3316
        %3320 = vst.msk [vmem:[%s467 + $0x1] sm:$0xff] %vm417, %v3315
        %3321 = vst.msk [vmem:[%s467 + $0x9] sm:$0xff] %vm417, %v3317
        %v3322 = vld [vmem:[%s355 + $0x70] sm:$0xff]
        %v3323 = vld [vmem:[%s355 + $0x78] sm:$0xff]
        %3326 = vrot.lane.b32.xlu0 %v3322, 1
        %v3327 = vpop.permute.xlu0 %3326
        %3328 = vrot.lane.b32.xlu0 %v3323, 1
        %v3329 = vpop.permute.xlu0 %3328
        %3332 = vst.msk [vmem:[%s504 + $0x1] sm:$0xff] %vm390, %v3327
        %3333 = vst.msk [vmem:[%s504 + $0x9] sm:$0xff] %vm390, %v3329
        %3334 = vrot.lane.b32.xlu0 %v3322, 3
        %v3335 = vpop.permute.xlu0 %3334
        %3336 = vrot.lane.b32.xlu0 %v3323, 3
        %v3337 = vpop.permute.xlu0 %3336
        %3340 = vst.msk [vmem:[%s504 + $0x1] sm:$0xff] %vm399, %v3335
        %3341 = vst.msk [vmem:[%s504 + $0x9] sm:$0xff] %vm399, %v3337
        %3342 = vrot.lane.b32.xlu0 %v3322, 13
        %v3343 = vpop.permute.xlu0 %3342
        %3344 = vrot.lane.b32.xlu0 %v3323, 13
        %v3345 = vpop.permute.xlu0 %3344
        %3348 = vst.msk [vmem:[%s504 + $0x1] sm:$0xff] %vm408, %v3343
        %3349 = vst.msk [vmem:[%s504 + $0x9] sm:$0xff] %vm408, %v3345
        %3350 = vrot.lane.b32.xlu0 %v3322, 23
        %v3351 = vpop.permute.xlu0 %3350
        %3352 = vrot.lane.b32.xlu0 %v3323, 23
        %v3353 = vpop.permute.xlu0 %3352
        %3356 = vst.msk [vmem:[%s504 + $0x1] sm:$0xff] %vm417, %v3351
        %3357 = vst.msk [vmem:[%s504 + $0x9] sm:$0xff] %vm417, %v3353
        %s3358 = smul.u32 %s22, 2
        %s3359 = sadd.s32 %s3358, 1
        %s3360 = smul.u32 %s3359, 4
        %s3361 = sld [smem:[#allocation4 + %s3360]]
        %v3362 = vld [vmem:[%s2] sm:$0x1]
        %v3363 = vstv %s3361
        %v3364 = vmul.f32 %v3363, %v377
        %v3365 = vadd.f32 %v3362, %v3364
        %s3366 = sadd.s32 %s3360, 1
        %s3367 = sld [smem:[#allocation4 + %s3366]]
        %v3368 = vld [vmem:[%s2 + $0x1] sm:$0x1]
        %v3369 = vstv %s3367
        %v3370 = vmul.f32 %v3369, %v377
        %v3371 = vadd.f32 %v3368, %v3370
        %s3372 = sadd.s32 %s3360, 2
        %s3373 = sld [smem:[#allocation4 + %s3372]]
        %v3374 = vld [vmem:[%s2 + $0x2] sm:$0x1]
        %v3375 = vstv %s3373
        %v3376 = vmul.f32 %v3375, %v377
        %v3377 = vadd.f32 %v3374, %v3376
        %s3378 = sadd.s32 %s3360, 3
        %s3379 = sld [smem:[#allocation4 + %s3378]]
        %v3380 = vld [vmem:[%s2 + $0x3] sm:$0x1]
        %v3381 = vstv %s3379
        %v3382 = vmul.f32 %v3381, %v377
        %v3383 = vadd.f32 %v3380, %v3382
        %v3384 = vld [vmem:[#allocation2] sm:$0xff]
        %v3385 = vld [vmem:[#allocation2 + $0x8] sm:$0xff]
        %v3386 = vld [vmem:[%s1] sm:$0x1]
        %v3387 = vlaneseq
        %v3388 = vshrl.u32 %v3387, 7
        %v3389 = vsub.s32 0, %v3388
        %v3390 = vrot.slane %v3386, %v3389
        %v3391 = vmul.f32 %v3384, %v3390
        %v3392 = vmul.f32 %v3385, %v3390
        %v3393 = vlaneseq
        %v3394 = vshrl.u32 %v3393, 7
        %v3395 = vsub.s32 0, %v3394
        %v3396 = vrot.slane %v3365, %v3395
        %v3397 = vadd.f32 %v3396, %v3391
        %v3398 = vadd.f32 %v3396, %v3392
        %v3399 = vld [vmem:[%s1 + $0x24] sm:$0x1]
        %v3400 = vlaneseq
        %v3401 = vshrl.u32 %v3400, 7
        %v3402 = vsub.s32 0, %v3401
        %v3403 = vrot.slane %v3399, %v3402
        %v3404 = vmul.f32 %v3384, %v3403
        %v3405 = vmul.f32 %v3385, %v3403
        %v3406 = vlaneseq
        %v3407 = vshrl.u32 %v3406, 7
        %v3408 = vsub.s32 0, %v3407
        %v3409 = vrot.slane %v3371, %v3408
        %v3410 = vadd.f32 %v3409, %v3404
        %v3411 = vadd.f32 %v3409, %v3405
        %v3412 = vld [vmem:[%s1 + $0x48] sm:$0x1]
        %v3413 = vlaneseq
        %v3414 = vshrl.u32 %v3413, 7
        %v3415 = vsub.s32 0, %v3414
        %v3416 = vrot.slane %v3412, %v3415
        %v3417 = vmul.f32 %v3384, %v3416
        %v3418 = vmul.f32 %v3385, %v3416
        %v3419 = vlaneseq
        %v3420 = vshrl.u32 %v3419, 7
        %v3421 = vsub.s32 0, %v3420
        %v3422 = vrot.slane %v3377, %v3421
        %v3423 = vadd.f32 %v3422, %v3417
        %v3424 = vadd.f32 %v3422, %v3418
        %v3425 = vld [vmem:[%s1 + $0x6c] sm:$0x1]
        %v3426 = vlaneseq
        %v3427 = vshrl.u32 %v3426, 7
        %v3428 = vsub.s32 0, %v3427
        %v3429 = vrot.slane %v3425, %v3428
        %v3430 = vmul.f32 %v3384, %v3429
        %v3431 = vmul.f32 %v3385, %v3429
        %v3432 = vlaneseq
        %v3433 = vshrl.u32 %v3432, 7
        %v3434 = vsub.s32 0, %v3433
        %v3435 = vrot.slane %v3383, %v3434
        %v3436 = vadd.f32 %v3435, %v3430
        %v3437 = vadd.f32 %v3435, %v3431
        %v3438 = vld [vmem:[%s1 + $0x1] sm:$0x1]
        %v3439 = vlaneseq
        %v3440 = vshrl.u32 %v3439, 7
        %v3441 = vsub.s32 0, %v3440
        %v3442 = vrot.slane %v3438, %v3441
        %3444 = vrot.lane.b32.xlu0 %v3442, 1
        %v3445 = vpop.permute.xlu0 %3444
        %v3447 = vmul.f32 %v3384, %v3445
        %v3448 = vmul.f32 %v3385, %v3445
        %3451 = vrot.lane.b32.xlu0 %v3447, 127
        %v3452 = vpop.permute.xlu0 %3451
        %3453 = vrot.lane.b32.xlu0 %v3448, 127
        %v3454 = vpop.permute.xlu0 %3453
        %v3457 = vadd.f32 %v3397, %v3452
        %v3458 = vadd.f32 %v3398, %v3454
        %v3459 = vld [vmem:[%s1 + $0x25] sm:$0x1]
        %v3460 = vlaneseq
        %v3461 = vshrl.u32 %v3460, 7
        %v3462 = vsub.s32 0, %v3461
        %v3463 = vrot.slane %v3459, %v3462
        %3465 = vrot.lane.b32.xlu0 %v3463, 1
        %v3466 = vpop.permute.xlu0 %3465
        %v3468 = vmul.f32 %v3384, %v3466
        %v3469 = vmul.f32 %v3385, %v3466
        %3472 = vrot.lane.b32.xlu0 %v3468, 127
        %v3473 = vpop.permute.xlu0 %3472
        %3474 = vrot.lane.b32.xlu0 %v3469, 127
        %v3475 = vpop.permute.xlu0 %3474
        %v3478 = vadd.f32 %v3410, %v3473
        %v3479 = vadd.f32 %v3411, %v3475
        %v3480 = vld [vmem:[%s1 + $0x49] sm:$0x1]
        %v3481 = vlaneseq
        %v3482 = vshrl.u32 %v3481, 7
        %v3483 = vsub.s32 0, %v3482
        %v3484 = vrot.slane %v3480, %v3483
        %3486 = vrot.lane.b32.xlu0 %v3484, 1
        %v3487 = vpop.permute.xlu0 %3486
        %v3489 = vmul.f32 %v3384, %v3487
        %v3490 = vmul.f32 %v3385, %v3487
        %3493 = vrot.lane.b32.xlu0 %v3489, 127
        %v3494 = vpop.permute.xlu0 %3493
        %3495 = vrot.lane.b32.xlu0 %v3490, 127
        %v3496 = vpop.permute.xlu0 %3495
        %v3499 = vadd.f32 %v3423, %v3494
        %v3500 = vadd.f32 %v3424, %v3496
        %v3501 = vld [vmem:[%s1 + $0x6d] sm:$0x1]
        %v3502 = vlaneseq
        %v3503 = vshrl.u32 %v3502, 7
        %v3504 = vsub.s32 0, %v3503
        %v3505 = vrot.slane %v3501, %v3504
        %3507 = vrot.lane.b32.xlu0 %v3505, 1
        %v3508 = vpop.permute.xlu0 %3507
        %v3510 = vmul.f32 %v3384, %v3508
        %v3511 = vmul.f32 %v3385, %v3508
        %3514 = vrot.lane.b32.xlu0 %v3510, 127
        %v3515 = vpop.permute.xlu0 %3514
        %3516 = vrot.lane.b32.xlu0 %v3511, 127
        %v3517 = vpop.permute.xlu0 %3516
        %v3520 = vadd.f32 %v3436, %v3515
        %v3521 = vadd.f32 %v3437, %v3517
        %v3522 = vld [vmem:[%s1 + $0x2] sm:$0x1]
        %v3523 = vlaneseq
        %v3524 = vshrl.u32 %v3523, 7
        %v3525 = vsub.s32 0, %v3524
        %v3526 = vrot.slane %v3522, %v3525
        %3528 = vrot.lane.b32.xlu0 %v3526, 2
        %v3529 = vpop.permute.xlu0 %3528
        %v3531 = vmul.f32 %v3384, %v3529
        %v3532 = vmul.f32 %v3385, %v3529
        %3535 = vrot.lane.b32.xlu0 %v3531, 126
        %v3536 = vpop.permute.xlu0 %3535
        %3537 = vrot.lane.b32.xlu0 %v3532, 126
        %v3538 = vpop.permute.xlu0 %3537
        %v3541 = vadd.f32 %v3457, %v3536
        %v3542 = vadd.f32 %v3458, %v3538
        %v3543 = vld [vmem:[%s1 + $0x26] sm:$0x1]
        %v3544 = vlaneseq
        %v3545 = vshrl.u32 %v3544, 7
        %v3546 = vsub.s32 0, %v3545
        %v3547 = vrot.slane %v3543, %v3546
        %3549 = vrot.lane.b32.xlu0 %v3547, 2
        %v3550 = vpop.permute.xlu0 %3549
        %v3552 = vmul.f32 %v3384, %v3550
        %v3553 = vmul.f32 %v3385, %v3550
        %3556 = vrot.lane.b32.xlu0 %v3552, 126
        %v3557 = vpop.permute.xlu0 %3556
        %3558 = vrot.lane.b32.xlu0 %v3553, 126
        %v3559 = vpop.permute.xlu0 %3558
        %v3562 = vadd.f32 %v3478, %v3557
        %v3563 = vadd.f32 %v3479, %v3559
        %v3564 = vld [vmem:[%s1 + $0x4a] sm:$0x1]
        %v3565 = vlaneseq
        %v3566 = vshrl.u32 %v3565, 7
        %v3567 = vsub.s32 0, %v3566
        %v3568 = vrot.slane %v3564, %v3567
        %3570 = vrot.lane.b32.xlu0 %v3568, 2
        %v3571 = vpop.permute.xlu0 %3570
        %v3573 = vmul.f32 %v3384, %v3571
        %v3574 = vmul.f32 %v3385, %v3571
        %3577 = vrot.lane.b32.xlu0 %v3573, 126
        %v3578 = vpop.permute.xlu0 %3577
        %3579 = vrot.lane.b32.xlu0 %v3574, 126
        %v3580 = vpop.permute.xlu0 %3579
        %v3583 = vadd.f32 %v3499, %v3578
        %v3584 = vadd.f32 %v3500, %v3580
        %v3585 = vld [vmem:[%s1 + $0x6e] sm:$0x1]
        %v3586 = vlaneseq
        %v3587 = vshrl.u32 %v3586, 7
        %v3588 = vsub.s32 0, %v3587
        %v3589 = vrot.slane %v3585, %v3588
        %3591 = vrot.lane.b32.xlu0 %v3589, 2
        %v3592 = vpop.permute.xlu0 %3591
        %v3594 = vmul.f32 %v3384, %v3592
        %v3595 = vmul.f32 %v3385, %v3592
        %3598 = vrot.lane.b32.xlu0 %v3594, 126
        %v3599 = vpop.permute.xlu0 %3598
        %3600 = vrot.lane.b32.xlu0 %v3595, 126
        %v3601 = vpop.permute.xlu0 %3600
        %v3604 = vadd.f32 %v3520, %v3599
        %v3605 = vadd.f32 %v3521, %v3601
        %v3606 = vld [vmem:[#allocation2 + $0x1] sm:$0xff]
        %v3607 = vld [vmem:[#allocation2 + $0x9] sm:$0xff]
        %v3608 = vld [vmem:[%s1 + $0x3] sm:$0x1]
        %v3609 = vlaneseq
        %v3610 = vshrl.u32 %v3609, 7
        %v3611 = vsub.s32 0, %v3610
        %v3612 = vrot.slane %v3608, %v3611
        %v3613 = vmul.f32 %v3606, %v3612
        %v3614 = vmul.f32 %v3607, %v3612
        %v3615 = vadd.f32 %v3541, %v3613
        %v3616 = vadd.f32 %v3542, %v3614
        %v3617 = vld [vmem:[%s1 + $0x27] sm:$0x1]
        %v3618 = vlaneseq
        %v3619 = vshrl.u32 %v3618, 7
        %v3620 = vsub.s32 0, %v3619
        %v3621 = vrot.slane %v3617, %v3620
        %v3622 = vmul.f32 %v3606, %v3621
        %v3623 = vmul.f32 %v3607, %v3621
        %v3624 = vadd.f32 %v3562, %v3622
        %v3625 = vadd.f32 %v3563, %v3623
        %v3626 = vld [vmem:[%s1 + $0x4b] sm:$0x1]
        %v3627 = vlaneseq
        %v3628 = vshrl.u32 %v3627, 7
        %v3629 = vsub.s32 0, %v3628
        %v3630 = vrot.slane %v3626, %v3629
        %v3631 = vmul.f32 %v3606, %v3630
        %v3632 = vmul.f32 %v3607, %v3630
        %v3633 = vadd.f32 %v3583, %v3631
        %v3634 = vadd.f32 %v3584, %v3632
        %v3635 = vld [vmem:[%s1 + $0x6f] sm:$0x1]
        %v3636 = vlaneseq
        %v3637 = vshrl.u32 %v3636, 7
        %v3638 = vsub.s32 0, %v3637
        %v3639 = vrot.slane %v3635, %v3638
        %v3640 = vmul.f32 %v3606, %v3639
        %v3641 = vmul.f32 %v3607, %v3639
        %v3642 = vadd.f32 %v3604, %v3640
        %v3643 = vadd.f32 %v3605, %v3641
        %v3644 = vld [vmem:[%s1 + $0x4] sm:$0x1]
        %v3645 = vlaneseq
        %v3646 = vshrl.u32 %v3645, 7
        %v3647 = vsub.s32 0, %v3646
        %v3648 = vrot.slane %v3644, %v3647
        %3650 = vrot.lane.b32.xlu0 %v3648, 1
        %v3651 = vpop.permute.xlu0 %3650
        %v3653 = vmul.f32 %v3606, %v3651
        %v3654 = vmul.f32 %v3607, %v3651
        %3657 = vrot.lane.b32.xlu0 %v3653, 127
        %v3658 = vpop.permute.xlu0 %3657
        %3659 = vrot.lane.b32.xlu0 %v3654, 127
        %v3660 = vpop.permute.xlu0 %3659
        %v3663 = vadd.f32 %v3615, %v3658
        %v3664 = vadd.f32 %v3616, %v3660
        %v3665 = vld [vmem:[%s1 + $0x28] sm:$0x1]
        %v3666 = vlaneseq
        %v3667 = vshrl.u32 %v3666, 7
        %v3668 = vsub.s32 0, %v3667
        %v3669 = vrot.slane %v3665, %v3668
        %3671 = vrot.lane.b32.xlu0 %v3669, 1
        %v3672 = vpop.permute.xlu0 %3671
        %v3674 = vmul.f32 %v3606, %v3672
        %v3675 = vmul.f32 %v3607, %v3672
        %3678 = vrot.lane.b32.xlu0 %v3674, 127
        %v3679 = vpop.permute.xlu0 %3678
        %3680 = vrot.lane.b32.xlu0 %v3675, 127
        %v3681 = vpop.permute.xlu0 %3680
        %v3684 = vadd.f32 %v3624, %v3679
        %v3685 = vadd.f32 %v3625, %v3681
        %v3686 = vld [vmem:[%s1 + $0x4c] sm:$0x1]
        %v3687 = vlaneseq
        %v3688 = vshrl.u32 %v3687, 7
        %v3689 = vsub.s32 0, %v3688
        %v3690 = vrot.slane %v3686, %v3689
        %3692 = vrot.lane.b32.xlu0 %v3690, 1
        %v3693 = vpop.permute.xlu0 %3692
        %v3695 = vmul.f32 %v3606, %v3693
        %v3696 = vmul.f32 %v3607, %v3693
        %3699 = vrot.lane.b32.xlu0 %v3695, 127
        %v3700 = vpop.permute.xlu0 %3699
        %3701 = vrot.lane.b32.xlu0 %v3696, 127
        %v3702 = vpop.permute.xlu0 %3701
        %v3705 = vadd.f32 %v3633, %v3700
        %v3706 = vadd.f32 %v3634, %v3702
        %v3707 = vld [vmem:[%s1 + $0x70] sm:$0x1]
        %v3708 = vlaneseq
        %v3709 = vshrl.u32 %v3708, 7
        %v3710 = vsub.s32 0, %v3709
        %v3711 = vrot.slane %v3707, %v3710
        %3713 = vrot.lane.b32.xlu0 %v3711, 1
        %v3714 = vpop.permute.xlu0 %3713
        %v3716 = vmul.f32 %v3606, %v3714
        %v3717 = vmul.f32 %v3607, %v3714
        %3720 = vrot.lane.b32.xlu0 %v3716, 127
        %v3721 = vpop.permute.xlu0 %3720
        %3722 = vrot.lane.b32.xlu0 %v3717, 127
        %v3723 = vpop.permute.xlu0 %3722
        %v3726 = vadd.f32 %v3642, %v3721
        %v3727 = vadd.f32 %v3643, %v3723
        %v3728 = vld [vmem:[%s1 + $0x5] sm:$0x1]
        %v3729 = vlaneseq
        %v3730 = vshrl.u32 %v3729, 7
        %v3731 = vsub.s32 0, %v3730
        %v3732 = vrot.slane %v3728, %v3731
        %3734 = vrot.lane.b32.xlu0 %v3732, 2
        %v3735 = vpop.permute.xlu0 %3734
        %v3737 = vmul.f32 %v3606, %v3735
        %v3738 = vmul.f32 %v3607, %v3735
        %3741 = vrot.lane.b32.xlu0 %v3737, 126
        %v3742 = vpop.permute.xlu0 %3741
        %3743 = vrot.lane.b32.xlu0 %v3738, 126
        %v3744 = vpop.permute.xlu0 %3743
        %v3747 = vadd.f32 %v3663, %v3742
        %v3748 = vadd.f32 %v3664, %v3744
        %v3749 = vld [vmem:[%s1 + $0x29] sm:$0x1]
        %v3750 = vlaneseq
        %v3751 = vshrl.u32 %v3750, 7
        %v3752 = vsub.s32 0, %v3751
        %v3753 = vrot.slane %v3749, %v3752
        %3755 = vrot.lane.b32.xlu0 %v3753, 2
        %v3756 = vpop.permute.xlu0 %3755
        %v3758 = vmul.f32 %v3606, %v3756
        %v3759 = vmul.f32 %v3607, %v3756
        %3762 = vrot.lane.b32.xlu0 %v3758, 126
        %v3763 = vpop.permute.xlu0 %3762
        %3764 = vrot.lane.b32.xlu0 %v3759, 126
        %v3765 = vpop.permute.xlu0 %3764
        %v3768 = vadd.f32 %v3684, %v3763
        %v3769 = vadd.f32 %v3685, %v3765
        %v3770 = vld [vmem:[%s1 + $0x4d] sm:$0x1]
        %v3771 = vlaneseq
        %v3772 = vshrl.u32 %v3771, 7
        %v3773 = vsub.s32 0, %v3772
        %v3774 = vrot.slane %v3770, %v3773
        %3776 = vrot.lane.b32.xlu0 %v3774, 2
        %v3777 = vpop.permute.xlu0 %3776
        %v3779 = vmul.f32 %v3606, %v3777
        %v3780 = vmul.f32 %v3607, %v3777
        %3783 = vrot.lane.b32.xlu0 %v3779, 126
        %v3784 = vpop.permute.xlu0 %3783
        %3785 = vrot.lane.b32.xlu0 %v3780, 126
        %v3786 = vpop.permute.xlu0 %3785
        %v3789 = vadd.f32 %v3705, %v3784
        %v3790 = vadd.f32 %v3706, %v3786
        %v3791 = vld [vmem:[%s1 + $0x71] sm:$0x1]
        %v3792 = vlaneseq
        %v3793 = vshrl.u32 %v3792, 7
        %v3794 = vsub.s32 0, %v3793
        %v3795 = vrot.slane %v3791, %v3794
        %3797 = vrot.lane.b32.xlu0 %v3795, 2
        %v3798 = vpop.permute.xlu0 %3797
        %v3800 = vmul.f32 %v3606, %v3798
        %v3801 = vmul.f32 %v3607, %v3798
        %3804 = vrot.lane.b32.xlu0 %v3800, 126
        %v3805 = vpop.permute.xlu0 %3804
        %3806 = vrot.lane.b32.xlu0 %v3801, 126
        %v3807 = vpop.permute.xlu0 %3806
        %v3810 = vadd.f32 %v3726, %v3805
        %v3811 = vadd.f32 %v3727, %v3807
        %v3812 = vld [vmem:[#allocation2 + $0x2] sm:$0xff]
        %v3813 = vld [vmem:[#allocation2 + $0xa] sm:$0xff]
        %v3814 = vld [vmem:[%s1 + $0x6] sm:$0x1]
        %v3815 = vlaneseq
        %v3816 = vshrl.u32 %v3815, 7
        %v3817 = vsub.s32 0, %v3816
        %v3818 = vrot.slane %v3814, %v3817
        %v3819 = vmul.f32 %v3812, %v3818
        %v3820 = vmul.f32 %v3813, %v3818
        %v3821 = vadd.f32 %v3747, %v3819
        %v3822 = vadd.f32 %v3748, %v3820
        %v3823 = vld [vmem:[%s1 + $0x2a] sm:$0x1]
        %v3824 = vlaneseq
        %v3825 = vshrl.u32 %v3824, 7
        %v3826 = vsub.s32 0, %v3825
        %v3827 = vrot.slane %v3823, %v3826
        %v3828 = vmul.f32 %v3812, %v3827
        %v3829 = vmul.f32 %v3813, %v3827
        %v3830 = vadd.f32 %v3768, %v3828
        %v3831 = vadd.f32 %v3769, %v3829
        %v3832 = vld [vmem:[%s1 + $0x4e] sm:$0x1]
        %v3833 = vlaneseq
        %v3834 = vshrl.u32 %v3833, 7
        %v3835 = vsub.s32 0, %v3834
        %v3836 = vrot.slane %v3832, %v3835
        %v3837 = vmul.f32 %v3812, %v3836
        %v3838 = vmul.f32 %v3813, %v3836
        %v3839 = vadd.f32 %v3789, %v3837
        %v3840 = vadd.f32 %v3790, %v3838
        %v3841 = vld [vmem:[%s1 + $0x72] sm:$0x1]
        %v3842 = vlaneseq
        %v3843 = vshrl.u32 %v3842, 7
        %v3844 = vsub.s32 0, %v3843
        %v3845 = vrot.slane %v3841, %v3844
        %v3846 = vmul.f32 %v3812, %v3845
        %v3847 = vmul.f32 %v3813, %v3845
        %v3848 = vadd.f32 %v3810, %v3846
        %v3849 = vadd.f32 %v3811, %v3847
        %v3850 = vld [vmem:[%s1 + $0x7] sm:$0x1]
        %v3851 = vlaneseq
        %v3852 = vshrl.u32 %v3851, 7
        %v3853 = vsub.s32 0, %v3852
        %v3854 = vrot.slane %v3850, %v3853
        %3856 = vrot.lane.b32.xlu0 %v3854, 1
        %v3857 = vpop.permute.xlu0 %3856
        %v3859 = vmul.f32 %v3812, %v3857
        %v3860 = vmul.f32 %v3813, %v3857
        %3863 = vrot.lane.b32.xlu0 %v3859, 127
        %v3864 = vpop.permute.xlu0 %3863
        %3865 = vrot.lane.b32.xlu0 %v3860, 127
        %v3866 = vpop.permute.xlu0 %3865
        %v3869 = vadd.f32 %v3821, %v3864
        %v3870 = vadd.f32 %v3822, %v3866
        %v3871 = vld [vmem:[%s1 + $0x2b] sm:$0x1]
        %v3872 = vlaneseq
        %v3873 = vshrl.u32 %v3872, 7
        %v3874 = vsub.s32 0, %v3873
        %v3875 = vrot.slane %v3871, %v3874
        %3877 = vrot.lane.b32.xlu0 %v3875, 1
        %v3878 = vpop.permute.xlu0 %3877
        %v3880 = vmul.f32 %v3812, %v3878
        %v3881 = vmul.f32 %v3813, %v3878
        %3884 = vrot.lane.b32.xlu0 %v3880, 127
        %v3885 = vpop.permute.xlu0 %3884
        %3886 = vrot.lane.b32.xlu0 %v3881, 127
        %v3887 = vpop.permute.xlu0 %3886
        %v3890 = vadd.f32 %v3830, %v3885
        %v3891 = vadd.f32 %v3831, %v3887
        %v3892 = vld [vmem:[%s1 + $0x4f] sm:$0x1]
        %v3893 = vlaneseq
        %v3894 = vshrl.u32 %v3893, 7
        %v3895 = vsub.s32 0, %v3894
        %v3896 = vrot.slane %v3892, %v3895
        %3898 = vrot.lane.b32.xlu0 %v3896, 1
        %v3899 = vpop.permute.xlu0 %3898
        %v3901 = vmul.f32 %v3812, %v3899
        %v3902 = vmul.f32 %v3813, %v3899
        %3905 = vrot.lane.b32.xlu0 %v3901, 127
        %v3906 = vpop.permute.xlu0 %3905
        %3907 = vrot.lane.b32.xlu0 %v3902, 127
        %v3908 = vpop.permute.xlu0 %3907
        %v3911 = vadd.f32 %v3839, %v3906
        %v3912 = vadd.f32 %v3840, %v3908
        %v3913 = vld [vmem:[%s1 + $0x73] sm:$0x1]
        %v3914 = vlaneseq
        %v3915 = vshrl.u32 %v3914, 7
        %v3916 = vsub.s32 0, %v3915
        %v3917 = vrot.slane %v3913, %v3916
        %3919 = vrot.lane.b32.xlu0 %v3917, 1
        %v3920 = vpop.permute.xlu0 %3919
        %v3922 = vmul.f32 %v3812, %v3920
        %v3923 = vmul.f32 %v3813, %v3920
        %3926 = vrot.lane.b32.xlu0 %v3922, 127
        %v3927 = vpop.permute.xlu0 %3926
        %3928 = vrot.lane.b32.xlu0 %v3923, 127
        %v3929 = vpop.permute.xlu0 %3928
        %v3932 = vadd.f32 %v3848, %v3927
        %v3933 = vadd.f32 %v3849, %v3929
        %v3934 = vld [vmem:[%s1 + $0x8] sm:$0x1]
        %v3935 = vlaneseq
        %v3936 = vshrl.u32 %v3935, 7
        %v3937 = vsub.s32 0, %v3936
        %v3938 = vrot.slane %v3934, %v3937
        %3940 = vrot.lane.b32.xlu0 %v3938, 2
        %v3941 = vpop.permute.xlu0 %3940
        %v3943 = vmul.f32 %v3812, %v3941
        %v3944 = vmul.f32 %v3813, %v3941
        %3947 = vrot.lane.b32.xlu0 %v3943, 126
        %v3948 = vpop.permute.xlu0 %3947
        %3949 = vrot.lane.b32.xlu0 %v3944, 126
        %v3950 = vpop.permute.xlu0 %3949
        %v3953 = vadd.f32 %v3869, %v3948
        %v3954 = vadd.f32 %v3870, %v3950
        %v3955 = vld [vmem:[%s1 + $0x2c] sm:$0x1]
        %v3956 = vlaneseq
        %v3957 = vshrl.u32 %v3956, 7
        %v3958 = vsub.s32 0, %v3957
        %v3959 = vrot.slane %v3955, %v3958
        %3961 = vrot.lane.b32.xlu0 %v3959, 2
        %v3962 = vpop.permute.xlu0 %3961
        %v3964 = vmul.f32 %v3812, %v3962
        %v3965 = vmul.f32 %v3813, %v3962
        %3968 = vrot.lane.b32.xlu0 %v3964, 126
        %v3969 = vpop.permute.xlu0 %3968
        %3970 = vrot.lane.b32.xlu0 %v3965, 126
        %v3971 = vpop.permute.xlu0 %3970
        %v3974 = vadd.f32 %v3890, %v3969
        %v3975 = vadd.f32 %v3891, %v3971
        %v3976 = vld [vmem:[%s1 + $0x50] sm:$0x1]
        %v3977 = vlaneseq
        %v3978 = vshrl.u32 %v3977, 7
        %v3979 = vsub.s32 0, %v3978
        %v3980 = vrot.slane %v3976, %v3979
        %3982 = vrot.lane.b32.xlu0 %v3980, 2
        %v3983 = vpop.permute.xlu0 %3982
        %v3985 = vmul.f32 %v3812, %v3983
        %v3986 = vmul.f32 %v3813, %v3983
        %3989 = vrot.lane.b32.xlu0 %v3985, 126
        %v3990 = vpop.permute.xlu0 %3989
        %3991 = vrot.lane.b32.xlu0 %v3986, 126
        %v3992 = vpop.permute.xlu0 %3991
        %v3995 = vadd.f32 %v3911, %v3990
        %v3996 = vadd.f32 %v3912, %v3992
        %v3997 = vld [vmem:[%s1 + $0x74] sm:$0x1]
        %v3998 = vlaneseq
        %v3999 = vshrl.u32 %v3998, 7
        %v4000 = vsub.s32 0, %v3999
        %v4001 = vrot.slane %v3997, %v4000
        %4003 = vrot.lane.b32.xlu0 %v4001, 2
        %v4004 = vpop.permute.xlu0 %4003
        %v4006 = vmul.f32 %v3812, %v4004
        %v4007 = vmul.f32 %v3813, %v4004
        %4010 = vrot.lane.b32.xlu0 %v4006, 126
        %v4011 = vpop.permute.xlu0 %4010
        %4012 = vrot.lane.b32.xlu0 %v4007, 126
        %v4013 = vpop.permute.xlu0 %4012
        %v4016 = vadd.f32 %v3932, %v4011
        %v4017 = vadd.f32 %v3933, %v4013
        %v4018 = vld [vmem:[%s430] sm:$0xff]
        %v4019 = vld [vmem:[%s430 + $0x8] sm:$0xff]
        %v4020 = vld [vmem:[%s1 + $0x9] sm:$0x1]
        %v4021 = vlaneseq
        %v4022 = vshrl.u32 %v4021, 7
        %v4023 = vsub.s32 0, %v4022
        %v4024 = vrot.slane %v4020, %v4023
        %v4025 = vmul.f32 %v4018, %v4024
        %v4026 = vmul.f32 %v4019, %v4024
        %v4027 = vadd.f32 %v3953, %v4025
        %v4028 = vadd.f32 %v3954, %v4026
        %v4029 = vld [vmem:[%s1 + $0x2d] sm:$0x1]
        %v4030 = vlaneseq
        %v4031 = vshrl.u32 %v4030, 7
        %v4032 = vsub.s32 0, %v4031
        %v4033 = vrot.slane %v4029, %v4032
        %v4034 = vmul.f32 %v4018, %v4033
        %v4035 = vmul.f32 %v4019, %v4033
        %v4036 = vadd.f32 %v3974, %v4034
        %v4037 = vadd.f32 %v3975, %v4035
        %v4038 = vld [vmem:[%s1 + $0x51] sm:$0x1]
        %v4039 = vlaneseq
        %v4040 = vshrl.u32 %v4039, 7
        %v4041 = vsub.s32 0, %v4040
        %v4042 = vrot.slane %v4038, %v4041
        %v4043 = vmul.f32 %v4018, %v4042
        %v4044 = vmul.f32 %v4019, %v4042
        %v4045 = vadd.f32 %v3995, %v4043
        %v4046 = vadd.f32 %v3996, %v4044
        %v4047 = vld [vmem:[%s1 + $0x75] sm:$0x1]
        %v4048 = vlaneseq
        %v4049 = vshrl.u32 %v4048, 7
        %v4050 = vsub.s32 0, %v4049
        %v4051 = vrot.slane %v4047, %v4050
        %v4052 = vmul.f32 %v4018, %v4051
        %v4053 = vmul.f32 %v4019, %v4051
        %v4054 = vadd.f32 %v4016, %v4052
        %v4055 = vadd.f32 %v4017, %v4053
        %v4056 = vld [vmem:[%s1 + $0xa] sm:$0x1]
        %v4057 = vlaneseq
        %v4058 = vshrl.u32 %v4057, 7
        %v4059 = vsub.s32 0, %v4058
        %v4060 = vrot.slane %v4056, %v4059
        %4062 = vrot.lane.b32.xlu0 %v4060, 1
        %v4063 = vpop.permute.xlu0 %4062
        %v4065 = vmul.f32 %v4018, %v4063
        %v4066 = vmul.f32 %v4019, %v4063
        %4069 = vrot.lane.b32.xlu0 %v4065, 127
        %v4070 = vpop.permute.xlu0 %4069
        %4071 = vrot.lane.b32.xlu0 %v4066, 127
        %v4072 = vpop.permute.xlu0 %4071
        %v4075 = vadd.f32 %v4027, %v4070
        %v4076 = vadd.f32 %v4028, %v4072
        %v4077 = vld [vmem:[%s1 + $0x2e] sm:$0x1]
        %v4078 = vlaneseq
        %v4079 = vshrl.u32 %v4078, 7
        %v4080 = vsub.s32 0, %v4079
        %v4081 = vrot.slane %v4077, %v4080
        %4083 = vrot.lane.b32.xlu0 %v4081, 1
        %v4084 = vpop.permute.xlu0 %4083
        %v4086 = vmul.f32 %v4018, %v4084
        %v4087 = vmul.f32 %v4019, %v4084
        %4090 = vrot.lane.b32.xlu0 %v4086, 127
        %v4091 = vpop.permute.xlu0 %4090
        %4092 = vrot.lane.b32.xlu0 %v4087, 127
        %v4093 = vpop.permute.xlu0 %4092
        %v4096 = vadd.f32 %v4036, %v4091
        %v4097 = vadd.f32 %v4037, %v4093
        %v4098 = vld [vmem:[%s1 + $0x52] sm:$0x1]
        %v4099 = vlaneseq
        %v4100 = vshrl.u32 %v4099, 7
        %v4101 = vsub.s32 0, %v4100
        %v4102 = vrot.slane %v4098, %v4101
        %4104 = vrot.lane.b32.xlu0 %v4102, 1
        %v4105 = vpop.permute.xlu0 %4104
        %v4107 = vmul.f32 %v4018, %v4105
        %v4108 = vmul.f32 %v4019, %v4105
        %4111 = vrot.lane.b32.xlu0 %v4107, 127
        %v4112 = vpop.permute.xlu0 %4111
        %4113 = vrot.lane.b32.xlu0 %v4108, 127
        %v4114 = vpop.permute.xlu0 %4113
        %v4117 = vadd.f32 %v4045, %v4112
        %v4118 = vadd.f32 %v4046, %v4114
        %v4119 = vld [vmem:[%s1 + $0x76] sm:$0x1]
        %v4120 = vlaneseq
        %v4121 = vshrl.u32 %v4120, 7
        %v4122 = vsub.s32 0, %v4121
        %v4123 = vrot.slane %v4119, %v4122
        %4125 = vrot.lane.b32.xlu0 %v4123, 1
        %v4126 = vpop.permute.xlu0 %4125
        %v4128 = vmul.f32 %v4018, %v4126
        %v4129 = vmul.f32 %v4019, %v4126
        %4132 = vrot.lane.b32.xlu0 %v4128, 127
        %v4133 = vpop.permute.xlu0 %4132
        %4134 = vrot.lane.b32.xlu0 %v4129, 127
        %v4135 = vpop.permute.xlu0 %4134
        %v4138 = vadd.f32 %v4054, %v4133
        %v4139 = vadd.f32 %v4055, %v4135
        %v4140 = vld [vmem:[%s1 + $0xb] sm:$0x1]
        %v4141 = vlaneseq
        %v4142 = vshrl.u32 %v4141, 7
        %v4143 = vsub.s32 0, %v4142
        %v4144 = vrot.slane %v4140, %v4143
        %4146 = vrot.lane.b32.xlu0 %v4144, 2
        %v4147 = vpop.permute.xlu0 %4146
        %v4149 = vmul.f32 %v4018, %v4147
        %v4150 = vmul.f32 %v4019, %v4147
        %4153 = vrot.lane.b32.xlu0 %v4149, 126
        %v4154 = vpop.permute.xlu0 %4153
        %4155 = vrot.lane.b32.xlu0 %v4150, 126
        %v4156 = vpop.permute.xlu0 %4155
        %v4159 = vadd.f32 %v4075, %v4154
        %v4160 = vadd.f32 %v4076, %v4156
        %v4161 = vld [vmem:[%s1 + $0x2f] sm:$0x1]
        %v4162 = vlaneseq
        %v4163 = vshrl.u32 %v4162, 7
        %v4164 = vsub.s32 0, %v4163
        %v4165 = vrot.slane %v4161, %v4164
        %4167 = vrot.lane.b32.xlu0 %v4165, 2
        %v4168 = vpop.permute.xlu0 %4167
        %v4170 = vmul.f32 %v4018, %v4168
        %v4171 = vmul.f32 %v4019, %v4168
        %4174 = vrot.lane.b32.xlu0 %v4170, 126
        %v4175 = vpop.permute.xlu0 %4174
        %4176 = vrot.lane.b32.xlu0 %v4171, 126
        %v4177 = vpop.permute.xlu0 %4176
        %v4180 = vadd.f32 %v4096, %v4175
        %v4181 = vadd.f32 %v4097, %v4177
        %v4182 = vld [vmem:[%s1 + $0x53] sm:$0x1]
        %v4183 = vlaneseq
        %v4184 = vshrl.u32 %v4183, 7
        %v4185 = vsub.s32 0, %v4184
        %v4186 = vrot.slane %v4182, %v4185
        %4188 = vrot.lane.b32.xlu0 %v4186, 2
        %v4189 = vpop.permute.xlu0 %4188
        %v4191 = vmul.f32 %v4018, %v4189
        %v4192 = vmul.f32 %v4019, %v4189
        %4195 = vrot.lane.b32.xlu0 %v4191, 126
        %v4196 = vpop.permute.xlu0 %4195
        %4197 = vrot.lane.b32.xlu0 %v4192, 126
        %v4198 = vpop.permute.xlu0 %4197
        %v4201 = vadd.f32 %v4117, %v4196
        %v4202 = vadd.f32 %v4118, %v4198
        %v4203 = vld [vmem:[%s1 + $0x77] sm:$0x1]
        %v4204 = vlaneseq
        %v4205 = vshrl.u32 %v4204, 7
        %v4206 = vsub.s32 0, %v4205
        %v4207 = vrot.slane %v4203, %v4206
        %4209 = vrot.lane.b32.xlu0 %v4207, 2
        %v4210 = vpop.permute.xlu0 %4209
        %v4212 = vmul.f32 %v4018, %v4210
        %v4213 = vmul.f32 %v4019, %v4210
        %4216 = vrot.lane.b32.xlu0 %v4212, 126
        %v4217 = vpop.permute.xlu0 %4216
        %4218 = vrot.lane.b32.xlu0 %v4213, 126
        %v4219 = vpop.permute.xlu0 %4218
        %v4222 = vadd.f32 %v4138, %v4217
        %v4223 = vadd.f32 %v4139, %v4219
        %v4224 = vld [vmem:[%s430 + $0x1] sm:$0xff]
        %v4225 = vld [vmem:[%s430 + $0x9] sm:$0xff]
        %v4226 = vld [vmem:[%s1 + $0xc] sm:$0x1]
        %v4227 = vlaneseq
        %v4228 = vshrl.u32 %v4227, 7
        %v4229 = vsub.s32 0, %v4228
        %v4230 = vrot.slane %v4226, %v4229
        %v4231 = vmul.f32 %v4224, %v4230
        %v4232 = vmul.f32 %v4225, %v4230
        %v4233 = vadd.f32 %v4159, %v4231
        %v4234 = vadd.f32 %v4160, %v4232
        %v4235 = vld [vmem:[%s1 + $0x30] sm:$0x1]
        %v4236 = vlaneseq
        %v4237 = vshrl.u32 %v4236, 7
        %v4238 = vsub.s32 0, %v4237
        %v4239 = vrot.slane %v4235, %v4238
        %v4240 = vmul.f32 %v4224, %v4239
        %v4241 = vmul.f32 %v4225, %v4239
        %v4242 = vadd.f32 %v4180, %v4240
        %v4243 = vadd.f32 %v4181, %v4241
        %v4244 = vld [vmem:[%s1 + $0x54] sm:$0x1]
        %v4245 = vlaneseq
        %v4246 = vshrl.u32 %v4245, 7
        %v4247 = vsub.s32 0, %v4246
        %v4248 = vrot.slane %v4244, %v4247
        %v4249 = vmul.f32 %v4224, %v4248
        %v4250 = vmul.f32 %v4225, %v4248
        %v4251 = vadd.f32 %v4201, %v4249
        %v4252 = vadd.f32 %v4202, %v4250
        %v4253 = vld [vmem:[%s1 + $0x78] sm:$0x1]
        %v4254 = vlaneseq
        %v4255 = vshrl.u32 %v4254, 7
        %v4256 = vsub.s32 0, %v4255
        %v4257 = vrot.slane %v4253, %v4256
        %v4258 = vmul.f32 %v4224, %v4257
        %v4259 = vmul.f32 %v4225, %v4257
        %v4260 = vadd.f32 %v4222, %v4258
        %v4261 = vadd.f32 %v4223, %v4259
        %v4262 = vld [vmem:[%s1 + $0xd] sm:$0x1]
        %v4263 = vlaneseq
        %v4264 = vshrl.u32 %v4263, 7
        %v4265 = vsub.s32 0, %v4264
        %v4266 = vrot.slane %v4262, %v4265
        %4268 = vrot.lane.b32.xlu0 %v4266, 1
        %v4269 = vpop.permute.xlu0 %4268
        %v4271 = vmul.f32 %v4224, %v4269
        %v4272 = vmul.f32 %v4225, %v4269
        %4275 = vrot.lane.b32.xlu0 %v4271, 127
        %v4276 = vpop.permute.xlu0 %4275
        %4277 = vrot.lane.b32.xlu0 %v4272, 127
        %v4278 = vpop.permute.xlu0 %4277
        %v4281 = vadd.f32 %v4233, %v4276
        %v4282 = vadd.f32 %v4234, %v4278
        %v4283 = vld [vmem:[%s1 + $0x31] sm:$0x1]
        %v4284 = vlaneseq
        %v4285 = vshrl.u32 %v4284, 7
        %v4286 = vsub.s32 0, %v4285
        %v4287 = vrot.slane %v4283, %v4286
        %4289 = vrot.lane.b32.xlu0 %v4287, 1
        %v4290 = vpop.permute.xlu0 %4289
        %v4292 = vmul.f32 %v4224, %v4290
        %v4293 = vmul.f32 %v4225, %v4290
        %4296 = vrot.lane.b32.xlu0 %v4292, 127
        %v4297 = vpop.permute.xlu0 %4296
        %4298 = vrot.lane.b32.xlu0 %v4293, 127
        %v4299 = vpop.permute.xlu0 %4298
        %v4302 = vadd.f32 %v4242, %v4297
        %v4303 = vadd.f32 %v4243, %v4299
        %v4304 = vld [vmem:[%s1 + $0x55] sm:$0x1]
        %v4305 = vlaneseq
        %v4306 = vshrl.u32 %v4305, 7
        %v4307 = vsub.s32 0, %v4306
        %v4308 = vrot.slane %v4304, %v4307
        %4310 = vrot.lane.b32.xlu0 %v4308, 1
        %v4311 = vpop.permute.xlu0 %4310
        %v4313 = vmul.f32 %v4224, %v4311
        %v4314 = vmul.f32 %v4225, %v4311
        %4317 = vrot.lane.b32.xlu0 %v4313, 127
        %v4318 = vpop.permute.xlu0 %4317
        %4319 = vrot.lane.b32.xlu0 %v4314, 127
        %v4320 = vpop.permute.xlu0 %4319
        %v4323 = vadd.f32 %v4251, %v4318
        %v4324 = vadd.f32 %v4252, %v4320
        %v4325 = vld [vmem:[%s1 + $0x79] sm:$0x1]
        %v4326 = vlaneseq
        %v4327 = vshrl.u32 %v4326, 7
        %v4328 = vsub.s32 0, %v4327
        %v4329 = vrot.slane %v4325, %v4328
        %4331 = vrot.lane.b32.xlu0 %v4329, 1
        %v4332 = vpop.permute.xlu0 %4331
        %v4334 = vmul.f32 %v4224, %v4332
        %v4335 = vmul.f32 %v4225, %v4332
        %4338 = vrot.lane.b32.xlu0 %v4334, 127
        %v4339 = vpop.permute.xlu0 %4338
        %4340 = vrot.lane.b32.xlu0 %v4335, 127
        %v4341 = vpop.permute.xlu0 %4340
        %v4344 = vadd.f32 %v4260, %v4339
        %v4345 = vadd.f32 %v4261, %v4341
        %v4346 = vld [vmem:[%s1 + $0xe] sm:$0x1]
        %v4347 = vlaneseq
        %v4348 = vshrl.u32 %v4347, 7
        %v4349 = vsub.s32 0, %v4348
        %v4350 = vrot.slane %v4346, %v4349
        %4352 = vrot.lane.b32.xlu0 %v4350, 2
        %v4353 = vpop.permute.xlu0 %4352
        %v4355 = vmul.f32 %v4224, %v4353
        %v4356 = vmul.f32 %v4225, %v4353
        %4359 = vrot.lane.b32.xlu0 %v4355, 126
        %v4360 = vpop.permute.xlu0 %4359
        %4361 = vrot.lane.b32.xlu0 %v4356, 126
        %v4362 = vpop.permute.xlu0 %4361
        %v4365 = vadd.f32 %v4281, %v4360
        %v4366 = vadd.f32 %v4282, %v4362
        %v4367 = vld [vmem:[%s1 + $0x32] sm:$0x1]
        %v4368 = vlaneseq
        %v4369 = vshrl.u32 %v4368, 7
        %v4370 = vsub.s32 0, %v4369
        %v4371 = vrot.slane %v4367, %v4370
        %4373 = vrot.lane.b32.xlu0 %v4371, 2
        %v4374 = vpop.permute.xlu0 %4373
        %v4376 = vmul.f32 %v4224, %v4374
        %v4377 = vmul.f32 %v4225, %v4374
        %4380 = vrot.lane.b32.xlu0 %v4376, 126
        %v4381 = vpop.permute.xlu0 %4380
        %4382 = vrot.lane.b32.xlu0 %v4377, 126
        %v4383 = vpop.permute.xlu0 %4382
        %v4386 = vadd.f32 %v4302, %v4381
        %v4387 = vadd.f32 %v4303, %v4383
        %v4388 = vld [vmem:[%s1 + $0x56] sm:$0x1]
        %v4389 = vlaneseq
        %v4390 = vshrl.u32 %v4389, 7
        %v4391 = vsub.s32 0, %v4390
        %v4392 = vrot.slane %v4388, %v4391
        %4394 = vrot.lane.b32.xlu0 %v4392, 2
        %v4395 = vpop.permute.xlu0 %4394
        %v4397 = vmul.f32 %v4224, %v4395
        %v4398 = vmul.f32 %v4225, %v4395
        %4401 = vrot.lane.b32.xlu0 %v4397, 126
        %v4402 = vpop.permute.xlu0 %4401
        %4403 = vrot.lane.b32.xlu0 %v4398, 126
        %v4404 = vpop.permute.xlu0 %4403
        %v4407 = vadd.f32 %v4323, %v4402
        %v4408 = vadd.f32 %v4324, %v4404
        %v4409 = vld [vmem:[%s1 + $0x7a] sm:$0x1]
        %v4410 = vlaneseq
        %v4411 = vshrl.u32 %v4410, 7
        %v4412 = vsub.s32 0, %v4411
        %v4413 = vrot.slane %v4409, %v4412
        %4415 = vrot.lane.b32.xlu0 %v4413, 2
        %v4416 = vpop.permute.xlu0 %4415
        %v4418 = vmul.f32 %v4224, %v4416
        %v4419 = vmul.f32 %v4225, %v4416
        %4422 = vrot.lane.b32.xlu0 %v4418, 126
        %v4423 = vpop.permute.xlu0 %4422
        %4424 = vrot.lane.b32.xlu0 %v4419, 126
        %v4425 = vpop.permute.xlu0 %4424
        %v4428 = vadd.f32 %v4344, %v4423
        %v4429 = vadd.f32 %v4345, %v4425
        %v4430 = vld [vmem:[%s430 + $0x2] sm:$0xff]
        %v4431 = vld [vmem:[%s430 + $0xa] sm:$0xff]
        %v4432 = vld [vmem:[%s1 + $0xf] sm:$0x1]
        %v4433 = vlaneseq
        %v4434 = vshrl.u32 %v4433, 7
        %v4435 = vsub.s32 0, %v4434
        %v4436 = vrot.slane %v4432, %v4435
        %v4437 = vmul.f32 %v4430, %v4436
        %v4438 = vmul.f32 %v4431, %v4436
        %v4439 = vadd.f32 %v4365, %v4437
        %v4440 = vadd.f32 %v4366, %v4438
        %v4441 = vld [vmem:[%s1 + $0x33] sm:$0x1]
        %v4442 = vlaneseq
        %v4443 = vshrl.u32 %v4442, 7
        %v4444 = vsub.s32 0, %v4443
        %v4445 = vrot.slane %v4441, %v4444
        %v4446 = vmul.f32 %v4430, %v4445
        %v4447 = vmul.f32 %v4431, %v4445
        %v4448 = vadd.f32 %v4386, %v4446
        %v4449 = vadd.f32 %v4387, %v4447
        %v4450 = vld [vmem:[%s1 + $0x57] sm:$0x1]
        %v4451 = vlaneseq
        %v4452 = vshrl.u32 %v4451, 7
        %v4453 = vsub.s32 0, %v4452
        %v4454 = vrot.slane %v4450, %v4453
        %v4455 = vmul.f32 %v4430, %v4454
        %v4456 = vmul.f32 %v4431, %v4454
        %v4457 = vadd.f32 %v4407, %v4455
        %v4458 = vadd.f32 %v4408, %v4456
        %v4459 = vld [vmem:[%s1 + $0x7b] sm:$0x1]
        %v4460 = vlaneseq
        %v4461 = vshrl.u32 %v4460, 7
        %v4462 = vsub.s32 0, %v4461
        %v4463 = vrot.slane %v4459, %v4462
        %v4464 = vmul.f32 %v4430, %v4463
        %v4465 = vmul.f32 %v4431, %v4463
        %v4466 = vadd.f32 %v4428, %v4464
        %v4467 = vadd.f32 %v4429, %v4465
        %v4468 = vld [vmem:[%s1 + $0x10] sm:$0x1]
        %v4469 = vlaneseq
        %v4470 = vshrl.u32 %v4469, 7
        %v4471 = vsub.s32 0, %v4470
        %v4472 = vrot.slane %v4468, %v4471
        %4474 = vrot.lane.b32.xlu0 %v4472, 1
        %v4475 = vpop.permute.xlu0 %4474
        %v4477 = vmul.f32 %v4430, %v4475
        %v4478 = vmul.f32 %v4431, %v4475
        %4481 = vrot.lane.b32.xlu0 %v4477, 127
        %v4482 = vpop.permute.xlu0 %4481
        %4483 = vrot.lane.b32.xlu0 %v4478, 127
        %v4484 = vpop.permute.xlu0 %4483
        %v4487 = vadd.f32 %v4439, %v4482
        %v4488 = vadd.f32 %v4440, %v4484
        %v4489 = vld [vmem:[%s1 + $0x34] sm:$0x1]
        %v4490 = vlaneseq
        %v4491 = vshrl.u32 %v4490, 7
        %v4492 = vsub.s32 0, %v4491
        %v4493 = vrot.slane %v4489, %v4492
        %4495 = vrot.lane.b32.xlu0 %v4493, 1
        %v4496 = vpop.permute.xlu0 %4495
        %v4498 = vmul.f32 %v4430, %v4496
        %v4499 = vmul.f32 %v4431, %v4496
        %4502 = vrot.lane.b32.xlu0 %v4498, 127
        %v4503 = vpop.permute.xlu0 %4502
        %4504 = vrot.lane.b32.xlu0 %v4499, 127
        %v4505 = vpop.permute.xlu0 %4504
        %v4508 = vadd.f32 %v4448, %v4503
        %v4509 = vadd.f32 %v4449, %v4505
        %v4510 = vld [vmem:[%s1 + $0x58] sm:$0x1]
        %v4511 = vlaneseq
        %v4512 = vshrl.u32 %v4511, 7
        %v4513 = vsub.s32 0, %v4512
        %v4514 = vrot.slane %v4510, %v4513
        %4516 = vrot.lane.b32.xlu0 %v4514, 1
        %v4517 = vpop.permute.xlu0 %4516
        %v4519 = vmul.f32 %v4430, %v4517
        %v4520 = vmul.f32 %v4431, %v4517
        %4523 = vrot.lane.b32.xlu0 %v4519, 127
        %v4524 = vpop.permute.xlu0 %4523
        %4525 = vrot.lane.b32.xlu0 %v4520, 127
        %v4526 = vpop.permute.xlu0 %4525
        %v4529 = vadd.f32 %v4457, %v4524
        %v4530 = vadd.f32 %v4458, %v4526
        %v4531 = vld [vmem:[%s1 + $0x7c] sm:$0x1]
        %v4532 = vlaneseq
        %v4533 = vshrl.u32 %v4532, 7
        %v4534 = vsub.s32 0, %v4533
        %v4535 = vrot.slane %v4531, %v4534
        %4537 = vrot.lane.b32.xlu0 %v4535, 1
        %v4538 = vpop.permute.xlu0 %4537
        %v4540 = vmul.f32 %v4430, %v4538
        %v4541 = vmul.f32 %v4431, %v4538
        %4544 = vrot.lane.b32.xlu0 %v4540, 127
        %v4545 = vpop.permute.xlu0 %4544
        %4546 = vrot.lane.b32.xlu0 %v4541, 127
        %v4547 = vpop.permute.xlu0 %4546
        %v4550 = vadd.f32 %v4466, %v4545
        %v4551 = vadd.f32 %v4467, %v4547
        %v4552 = vld [vmem:[%s1 + $0x11] sm:$0x1]
        %v4553 = vlaneseq
        %v4554 = vshrl.u32 %v4553, 7
        %v4555 = vsub.s32 0, %v4554
        %v4556 = vrot.slane %v4552, %v4555
        %4558 = vrot.lane.b32.xlu0 %v4556, 2
        %v4559 = vpop.permute.xlu0 %4558
        %v4561 = vmul.f32 %v4430, %v4559
        %v4562 = vmul.f32 %v4431, %v4559
        %4565 = vrot.lane.b32.xlu0 %v4561, 126
        %v4566 = vpop.permute.xlu0 %4565
        %4567 = vrot.lane.b32.xlu0 %v4562, 126
        %v4568 = vpop.permute.xlu0 %4567
        %v4571 = vadd.f32 %v4487, %v4566
        %v4572 = vadd.f32 %v4488, %v4568
        %v4573 = vld [vmem:[%s1 + $0x35] sm:$0x1]
        %v4574 = vlaneseq
        %v4575 = vshrl.u32 %v4574, 7
        %v4576 = vsub.s32 0, %v4575
        %v4577 = vrot.slane %v4573, %v4576
        %4579 = vrot.lane.b32.xlu0 %v4577, 2
        %v4580 = vpop.permute.xlu0 %4579
        %v4582 = vmul.f32 %v4430, %v4580
        %v4583 = vmul.f32 %v4431, %v4580
        %4586 = vrot.lane.b32.xlu0 %v4582, 126
        %v4587 = vpop.permute.xlu0 %4586
        %4588 = vrot.lane.b32.xlu0 %v4583, 126
        %v4589 = vpop.permute.xlu0 %4588
        %v4592 = vadd.f32 %v4508, %v4587
        %v4593 = vadd.f32 %v4509, %v4589
        %v4594 = vld [vmem:[%s1 + $0x59] sm:$0x1]
        %v4595 = vlaneseq
        %v4596 = vshrl.u32 %v4595, 7
        %v4597 = vsub.s32 0, %v4596
        %v4598 = vrot.slane %v4594, %v4597
        %4600 = vrot.lane.b32.xlu0 %v4598, 2
        %v4601 = vpop.permute.xlu0 %4600
        %v4603 = vmul.f32 %v4430, %v4601
        %v4604 = vmul.f32 %v4431, %v4601
        %4607 = vrot.lane.b32.xlu0 %v4603, 126
        %v4608 = vpop.permute.xlu0 %4607
        %4609 = vrot.lane.b32.xlu0 %v4604, 126
        %v4610 = vpop.permute.xlu0 %4609
        %v4613 = vadd.f32 %v4529, %v4608
        %v4614 = vadd.f32 %v4530, %v4610
        %v4615 = vld [vmem:[%s1 + $0x7d] sm:$0x1]
        %v4616 = vlaneseq
        %v4617 = vshrl.u32 %v4616, 7
        %v4618 = vsub.s32 0, %v4617
        %v4619 = vrot.slane %v4615, %v4618
        %4621 = vrot.lane.b32.xlu0 %v4619, 2
        %v4622 = vpop.permute.xlu0 %4621
        %v4624 = vmul.f32 %v4430, %v4622
        %v4625 = vmul.f32 %v4431, %v4622
        %4628 = vrot.lane.b32.xlu0 %v4624, 126
        %v4629 = vpop.permute.xlu0 %4628
        %4630 = vrot.lane.b32.xlu0 %v4625, 126
        %v4631 = vpop.permute.xlu0 %4630
        %v4634 = vadd.f32 %v4550, %v4629
        %v4635 = vadd.f32 %v4551, %v4631
        %v4636 = vld [vmem:[%s467] sm:$0xff]
        %v4637 = vld [vmem:[%s467 + $0x8] sm:$0xff]
        %v4638 = vld [vmem:[%s1 + $0x12] sm:$0x1]
        %v4639 = vlaneseq
        %v4640 = vshrl.u32 %v4639, 7
        %v4641 = vsub.s32 0, %v4640
        %v4642 = vrot.slane %v4638, %v4641
        %v4643 = vmul.f32 %v4636, %v4642
        %v4644 = vmul.f32 %v4637, %v4642
        %v4645 = vadd.f32 %v4571, %v4643
        %v4646 = vadd.f32 %v4572, %v4644
        %v4647 = vld [vmem:[%s1 + $0x36] sm:$0x1]
        %v4648 = vlaneseq
        %v4649 = vshrl.u32 %v4648, 7
        %v4650 = vsub.s32 0, %v4649
        %v4651 = vrot.slane %v4647, %v4650
        %v4652 = vmul.f32 %v4636, %v4651
        %v4653 = vmul.f32 %v4637, %v4651
        %v4654 = vadd.f32 %v4592, %v4652
        %v4655 = vadd.f32 %v4593, %v4653
        %v4656 = vld [vmem:[%s1 + $0x5a] sm:$0x1]
        %v4657 = vlaneseq
        %v4658 = vshrl.u32 %v4657, 7
        %v4659 = vsub.s32 0, %v4658
        %v4660 = vrot.slane %v4656, %v4659
        %v4661 = vmul.f32 %v4636, %v4660
        %v4662 = vmul.f32 %v4637, %v4660
        %v4663 = vadd.f32 %v4613, %v4661
        %v4664 = vadd.f32 %v4614, %v4662
        %v4665 = vld [vmem:[%s1 + $0x7e] sm:$0x1]
        %v4666 = vlaneseq
        %v4667 = vshrl.u32 %v4666, 7
        %v4668 = vsub.s32 0, %v4667
        %v4669 = vrot.slane %v4665, %v4668
        %v4670 = vmul.f32 %v4636, %v4669
        %v4671 = vmul.f32 %v4637, %v4669
        %v4672 = vadd.f32 %v4634, %v4670
        %v4673 = vadd.f32 %v4635, %v4671
        %v4674 = vld [vmem:[%s1 + $0x13] sm:$0x1]
        %v4675 = vlaneseq
        %v4676 = vshrl.u32 %v4675, 7
        %v4677 = vsub.s32 0, %v4676
        %v4678 = vrot.slane %v4674, %v4677
        %4680 = vrot.lane.b32.xlu0 %v4678, 1
        %v4681 = vpop.permute.xlu0 %4680
        %v4683 = vmul.f32 %v4636, %v4681
        %v4684 = vmul.f32 %v4637, %v4681
        %4687 = vrot.lane.b32.xlu0 %v4683, 127
        %v4688 = vpop.permute.xlu0 %4687
        %4689 = vrot.lane.b32.xlu0 %v4684, 127
        %v4690 = vpop.permute.xlu0 %4689
        %v4693 = vadd.f32 %v4645, %v4688
        %v4694 = vadd.f32 %v4646, %v4690
        %v4695 = vld [vmem:[%s1 + $0x37] sm:$0x1]
        %v4696 = vlaneseq
        %v4697 = vshrl.u32 %v4696, 7
        %v4698 = vsub.s32 0, %v4697
        %v4699 = vrot.slane %v4695, %v4698
        %4701 = vrot.lane.b32.xlu0 %v4699, 1
        %v4702 = vpop.permute.xlu0 %4701
        %v4704 = vmul.f32 %v4636, %v4702
        %v4705 = vmul.f32 %v4637, %v4702
        %4708 = vrot.lane.b32.xlu0 %v4704, 127
        %v4709 = vpop.permute.xlu0 %4708
        %4710 = vrot.lane.b32.xlu0 %v4705, 127
        %v4711 = vpop.permute.xlu0 %4710
        %v4714 = vadd.f32 %v4654, %v4709
        %v4715 = vadd.f32 %v4655, %v4711
        %v4716 = vld [vmem:[%s1 + $0x5b] sm:$0x1]
        %v4717 = vlaneseq
        %v4718 = vshrl.u32 %v4717, 7
        %v4719 = vsub.s32 0, %v4718
        %v4720 = vrot.slane %v4716, %v4719
        %4722 = vrot.lane.b32.xlu0 %v4720, 1
        %v4723 = vpop.permute.xlu0 %4722
        %v4725 = vmul.f32 %v4636, %v4723
        %v4726 = vmul.f32 %v4637, %v4723
        %4729 = vrot.lane.b32.xlu0 %v4725, 127
        %v4730 = vpop.permute.xlu0 %4729
        %4731 = vrot.lane.b32.xlu0 %v4726, 127
        %v4732 = vpop.permute.xlu0 %4731
        %v4735 = vadd.f32 %v4663, %v4730
        %v4736 = vadd.f32 %v4664, %v4732
        %v4737 = vld [vmem:[%s1 + $0x7f] sm:$0x1]
        %v4738 = vlaneseq
        %v4739 = vshrl.u32 %v4738, 7
        %v4740 = vsub.s32 0, %v4739
        %v4741 = vrot.slane %v4737, %v4740
        %4743 = vrot.lane.b32.xlu0 %v4741, 1
        %v4744 = vpop.permute.xlu0 %4743
        %v4746 = vmul.f32 %v4636, %v4744
        %v4747 = vmul.f32 %v4637, %v4744
        %4750 = vrot.lane.b32.xlu0 %v4746, 127
        %v4751 = vpop.permute.xlu0 %4750
        %4752 = vrot.lane.b32.xlu0 %v4747, 127
        %v4753 = vpop.permute.xlu0 %4752
        %v4756 = vadd.f32 %v4672, %v4751
        %v4757 = vadd.f32 %v4673, %v4753
        %v4758 = vld [vmem:[%s1 + $0x14] sm:$0x1]
        %v4759 = vlaneseq
        %v4760 = vshrl.u32 %v4759, 7
        %v4761 = vsub.s32 0, %v4760
        %v4762 = vrot.slane %v4758, %v4761
        %4764 = vrot.lane.b32.xlu0 %v4762, 2
        %v4765 = vpop.permute.xlu0 %4764
        %v4767 = vmul.f32 %v4636, %v4765
        %v4768 = vmul.f32 %v4637, %v4765
        %4771 = vrot.lane.b32.xlu0 %v4767, 126
        %v4772 = vpop.permute.xlu0 %4771
        %4773 = vrot.lane.b32.xlu0 %v4768, 126
        %v4774 = vpop.permute.xlu0 %4773
        %v4777 = vadd.f32 %v4693, %v4772
        %v4778 = vadd.f32 %v4694, %v4774
        %v4779 = vld [vmem:[%s1 + $0x38] sm:$0x1]
        %v4780 = vlaneseq
        %v4781 = vshrl.u32 %v4780, 7
        %v4782 = vsub.s32 0, %v4781
        %v4783 = vrot.slane %v4779, %v4782
        %4785 = vrot.lane.b32.xlu0 %v4783, 2
        %v4786 = vpop.permute.xlu0 %4785
        %v4788 = vmul.f32 %v4636, %v4786
        %v4789 = vmul.f32 %v4637, %v4786
        %4792 = vrot.lane.b32.xlu0 %v4788, 126
        %v4793 = vpop.permute.xlu0 %4792
        %4794 = vrot.lane.b32.xlu0 %v4789, 126
        %v4795 = vpop.permute.xlu0 %4794
        %v4798 = vadd.f32 %v4714, %v4793
        %v4799 = vadd.f32 %v4715, %v4795
        %v4800 = vld [vmem:[%s1 + $0x5c] sm:$0x1]
        %v4801 = vlaneseq
        %v4802 = vshrl.u32 %v4801, 7
        %v4803 = vsub.s32 0, %v4802
        %v4804 = vrot.slane %v4800, %v4803
        %4806 = vrot.lane.b32.xlu0 %v4804, 2
        %v4807 = vpop.permute.xlu0 %4806
        %v4809 = vmul.f32 %v4636, %v4807
        %v4810 = vmul.f32 %v4637, %v4807
        %4813 = vrot.lane.b32.xlu0 %v4809, 126
        %v4814 = vpop.permute.xlu0 %4813
        %4815 = vrot.lane.b32.xlu0 %v4810, 126
        %v4816 = vpop.permute.xlu0 %4815
        %v4819 = vadd.f32 %v4735, %v4814
        %v4820 = vadd.f32 %v4736, %v4816
        %v4821 = vld [vmem:[%s1 + $0x80] sm:$0x1]
        %v4822 = vlaneseq
        %v4823 = vshrl.u32 %v4822, 7
        %v4824 = vsub.s32 0, %v4823
        %v4825 = vrot.slane %v4821, %v4824
        %4827 = vrot.lane.b32.xlu0 %v4825, 2
        %v4828 = vpop.permute.xlu0 %4827
        %v4830 = vmul.f32 %v4636, %v4828
        %v4831 = vmul.f32 %v4637, %v4828
        %4834 = vrot.lane.b32.xlu0 %v4830, 126
        %v4835 = vpop.permute.xlu0 %4834
        %4836 = vrot.lane.b32.xlu0 %v4831, 126
        %v4837 = vpop.permute.xlu0 %4836
        %v4840 = vadd.f32 %v4756, %v4835
        %v4841 = vadd.f32 %v4757, %v4837
        %v4842 = vld [vmem:[%s467 + $0x1] sm:$0xff]
        %v4843 = vld [vmem:[%s467 + $0x9] sm:$0xff]
        %v4844 = vld [vmem:[%s1 + $0x15] sm:$0x1]
        %v4845 = vlaneseq
        %v4846 = vshrl.u32 %v4845, 7
        %v4847 = vsub.s32 0, %v4846
        %v4848 = vrot.slane %v4844, %v4847
        %v4849 = vmul.f32 %v4842, %v4848
        %v4850 = vmul.f32 %v4843, %v4848
        %v4851 = vadd.f32 %v4777, %v4849
        %v4852 = vadd.f32 %v4778, %v4850
        %v4853 = vld [vmem:[%s1 + $0x39] sm:$0x1]
        %v4854 = vlaneseq
        %v4855 = vshrl.u32 %v4854, 7
        %v4856 = vsub.s32 0, %v4855
        %v4857 = vrot.slane %v4853, %v4856
        %v4858 = vmul.f32 %v4842, %v4857
        %v4859 = vmul.f32 %v4843, %v4857
        %v4860 = vadd.f32 %v4798, %v4858
        %v4861 = vadd.f32 %v4799, %v4859
        %v4862 = vld [vmem:[%s1 + $0x5d] sm:$0x1]
        %v4863 = vlaneseq
        %v4864 = vshrl.u32 %v4863, 7
        %v4865 = vsub.s32 0, %v4864
        %v4866 = vrot.slane %v4862, %v4865
        %v4867 = vmul.f32 %v4842, %v4866
        %v4868 = vmul.f32 %v4843, %v4866
        %v4869 = vadd.f32 %v4819, %v4867
        %v4870 = vadd.f32 %v4820, %v4868
        %v4871 = vld [vmem:[%s1 + $0x81] sm:$0x1]
        %v4872 = vlaneseq
        %v4873 = vshrl.u32 %v4872, 7
        %v4874 = vsub.s32 0, %v4873
        %v4875 = vrot.slane %v4871, %v4874
        %v4876 = vmul.f32 %v4842, %v4875
        %v4877 = vmul.f32 %v4843, %v4875
        %v4878 = vadd.f32 %v4840, %v4876
        %v4879 = vadd.f32 %v4841, %v4877
        %v4880 = vld [vmem:[%s1 + $0x16] sm:$0x1]
        %v4881 = vlaneseq
        %v4882 = vshrl.u32 %v4881, 7
        %v4883 = vsub.s32 0, %v4882
        %v4884 = vrot.slane %v4880, %v4883
        %4886 = vrot.lane.b32.xlu0 %v4884, 1
        %v4887 = vpop.permute.xlu0 %4886
        %v4889 = vmul.f32 %v4842, %v4887
        %v4890 = vmul.f32 %v4843, %v4887
        %4893 = vrot.lane.b32.xlu0 %v4889, 127
        %v4894 = vpop.permute.xlu0 %4893
        %4895 = vrot.lane.b32.xlu0 %v4890, 127
        %v4896 = vpop.permute.xlu0 %4895
        %v4899 = vadd.f32 %v4851, %v4894
        %v4900 = vadd.f32 %v4852, %v4896
        %v4901 = vld [vmem:[%s1 + $0x3a] sm:$0x1]
        %v4902 = vlaneseq
        %v4903 = vshrl.u32 %v4902, 7
        %v4904 = vsub.s32 0, %v4903
        %v4905 = vrot.slane %v4901, %v4904
        %4907 = vrot.lane.b32.xlu0 %v4905, 1
        %v4908 = vpop.permute.xlu0 %4907
        %v4910 = vmul.f32 %v4842, %v4908
        %v4911 = vmul.f32 %v4843, %v4908
        %4914 = vrot.lane.b32.xlu0 %v4910, 127
        %v4915 = vpop.permute.xlu0 %4914
        %4916 = vrot.lane.b32.xlu0 %v4911, 127
        %v4917 = vpop.permute.xlu0 %4916
        %v4920 = vadd.f32 %v4860, %v4915
        %v4921 = vadd.f32 %v4861, %v4917
        %v4922 = vld [vmem:[%s1 + $0x5e] sm:$0x1]
        %v4923 = vlaneseq
        %v4924 = vshrl.u32 %v4923, 7
        %v4925 = vsub.s32 0, %v4924
        %v4926 = vrot.slane %v4922, %v4925
        %4928 = vrot.lane.b32.xlu0 %v4926, 1
        %v4929 = vpop.permute.xlu0 %4928
        %v4931 = vmul.f32 %v4842, %v4929
        %v4932 = vmul.f32 %v4843, %v4929
        %4935 = vrot.lane.b32.xlu0 %v4931, 127
        %v4936 = vpop.permute.xlu0 %4935
        %4937 = vrot.lane.b32.xlu0 %v4932, 127
        %v4938 = vpop.permute.xlu0 %4937
        %v4941 = vadd.f32 %v4869, %v4936
        %v4942 = vadd.f32 %v4870, %v4938
        %v4943 = vld [vmem:[%s1 + $0x82] sm:$0x1]
        %v4944 = vlaneseq
        %v4945 = vshrl.u32 %v4944, 7
        %v4946 = vsub.s32 0, %v4945
        %v4947 = vrot.slane %v4943, %v4946
        %4949 = vrot.lane.b32.xlu0 %v4947, 1
        %v4950 = vpop.permute.xlu0 %4949
        %v4952 = vmul.f32 %v4842, %v4950
        %v4953 = vmul.f32 %v4843, %v4950
        %4956 = vrot.lane.b32.xlu0 %v4952, 127
        %v4957 = vpop.permute.xlu0 %4956
        %4958 = vrot.lane.b32.xlu0 %v4953, 127
        %v4959 = vpop.permute.xlu0 %4958
        %v4962 = vadd.f32 %v4878, %v4957
        %v4963 = vadd.f32 %v4879, %v4959
        %v4964 = vld [vmem:[%s1 + $0x17] sm:$0x1]
        %v4965 = vlaneseq
        %v4966 = vshrl.u32 %v4965, 7
        %v4967 = vsub.s32 0, %v4966
        %v4968 = vrot.slane %v4964, %v4967
        %4970 = vrot.lane.b32.xlu0 %v4968, 2
        %v4971 = vpop.permute.xlu0 %4970
        %v4973 = vmul.f32 %v4842, %v4971
        %v4974 = vmul.f32 %v4843, %v4971
        %4977 = vrot.lane.b32.xlu0 %v4973, 126
        %v4978 = vpop.permute.xlu0 %4977
        %4979 = vrot.lane.b32.xlu0 %v4974, 126
        %v4980 = vpop.permute.xlu0 %4979
        %v4983 = vadd.f32 %v4899, %v4978
        %v4984 = vadd.f32 %v4900, %v4980
        %v4985 = vld [vmem:[%s1 + $0x3b] sm:$0x1]
        %v4986 = vlaneseq
        %v4987 = vshrl.u32 %v4986, 7
        %v4988 = vsub.s32 0, %v4987
        %v4989 = vrot.slane %v4985, %v4988
        %4991 = vrot.lane.b32.xlu0 %v4989, 2
        %v4992 = vpop.permute.xlu0 %4991
        %v4994 = vmul.f32 %v4842, %v4992
        %v4995 = vmul.f32 %v4843, %v4992
        %4998 = vrot.lane.b32.xlu0 %v4994, 126
        %v4999 = vpop.permute.xlu0 %4998
        %5000 = vrot.lane.b32.xlu0 %v4995, 126
        %v5001 = vpop.permute.xlu0 %5000
        %v5004 = vadd.f32 %v4920, %v4999
        %v5005 = vadd.f32 %v4921, %v5001
        %v5006 = vld [vmem:[%s1 + $0x5f] sm:$0x1]
        %v5007 = vlaneseq
        %v5008 = vshrl.u32 %v5007, 7
        %v5009 = vsub.s32 0, %v5008
        %v5010 = vrot.slane %v5006, %v5009
        %5012 = vrot.lane.b32.xlu0 %v5010, 2
        %v5013 = vpop.permute.xlu0 %5012
        %v5015 = vmul.f32 %v4842, %v5013
        %v5016 = vmul.f32 %v4843, %v5013
        %5019 = vrot.lane.b32.xlu0 %v5015, 126
        %v5020 = vpop.permute.xlu0 %5019
        %5021 = vrot.lane.b32.xlu0 %v5016, 126
        %v5022 = vpop.permute.xlu0 %5021
        %v5025 = vadd.f32 %v4941, %v5020
        %v5026 = vadd.f32 %v4942, %v5022
        %v5027 = vld [vmem:[%s1 + $0x83] sm:$0x1]
        %v5028 = vlaneseq
        %v5029 = vshrl.u32 %v5028, 7
        %v5030 = vsub.s32 0, %v5029
        %v5031 = vrot.slane %v5027, %v5030
        %5033 = vrot.lane.b32.xlu0 %v5031, 2
        %v5034 = vpop.permute.xlu0 %5033
        %v5036 = vmul.f32 %v4842, %v5034
        %v5037 = vmul.f32 %v4843, %v5034
        %5040 = vrot.lane.b32.xlu0 %v5036, 126
        %v5041 = vpop.permute.xlu0 %5040
        %5042 = vrot.lane.b32.xlu0 %v5037, 126
        %v5043 = vpop.permute.xlu0 %5042
        %v5046 = vadd.f32 %v4962, %v5041
        %v5047 = vadd.f32 %v4963, %v5043
        %v5048 = vld [vmem:[%s467 + $0x2] sm:$0xff]
        %v5049 = vld [vmem:[%s467 + $0xa] sm:$0xff]
        %v5050 = vld [vmem:[%s1 + $0x18] sm:$0x1]
        %v5051 = vlaneseq
        %v5052 = vshrl.u32 %v5051, 7
        %v5053 = vsub.s32 0, %v5052
        %v5054 = vrot.slane %v5050, %v5053
        %v5055 = vmul.f32 %v5048, %v5054
        %v5056 = vmul.f32 %v5049, %v5054
        %v5057 = vadd.f32 %v4983, %v5055
        %v5058 = vadd.f32 %v4984, %v5056
        %v5059 = vld [vmem:[%s1 + $0x3c] sm:$0x1]
        %v5060 = vlaneseq
        %v5061 = vshrl.u32 %v5060, 7
        %v5062 = vsub.s32 0, %v5061
        %v5063 = vrot.slane %v5059, %v5062
        %v5064 = vmul.f32 %v5048, %v5063
        %v5065 = vmul.f32 %v5049, %v5063
        %v5066 = vadd.f32 %v5004, %v5064
        %v5067 = vadd.f32 %v5005, %v5065
        %v5068 = vld [vmem:[%s1 + $0x60] sm:$0x1]
        %v5069 = vlaneseq
        %v5070 = vshrl.u32 %v5069, 7
        %v5071 = vsub.s32 0, %v5070
        %v5072 = vrot.slane %v5068, %v5071
        %v5073 = vmul.f32 %v5048, %v5072
        %v5074 = vmul.f32 %v5049, %v5072
        %v5075 = vadd.f32 %v5025, %v5073
        %v5076 = vadd.f32 %v5026, %v5074
        %v5077 = vld [vmem:[%s1 + $0x84] sm:$0x1]
        %v5078 = vlaneseq
        %v5079 = vshrl.u32 %v5078, 7
        %v5080 = vsub.s32 0, %v5079
        %v5081 = vrot.slane %v5077, %v5080
        %v5082 = vmul.f32 %v5048, %v5081
        %v5083 = vmul.f32 %v5049, %v5081
        %v5084 = vadd.f32 %v5046, %v5082
        %v5085 = vadd.f32 %v5047, %v5083
        %v5086 = vld [vmem:[%s1 + $0x19] sm:$0x1]
        %v5087 = vlaneseq
        %v5088 = vshrl.u32 %v5087, 7
        %v5089 = vsub.s32 0, %v5088
        %v5090 = vrot.slane %v5086, %v5089
        %5092 = vrot.lane.b32.xlu0 %v5090, 1
        %v5093 = vpop.permute.xlu0 %5092
        %v5095 = vmul.f32 %v5048, %v5093
        %v5096 = vmul.f32 %v5049, %v5093
        %5099 = vrot.lane.b32.xlu0 %v5095, 127
        %v5100 = vpop.permute.xlu0 %5099
        %5101 = vrot.lane.b32.xlu0 %v5096, 127
        %v5102 = vpop.permute.xlu0 %5101
        %v5105 = vadd.f32 %v5057, %v5100
        %v5106 = vadd.f32 %v5058, %v5102
        %v5107 = vld [vmem:[%s1 + $0x3d] sm:$0x1]
        %v5108 = vlaneseq
        %v5109 = vshrl.u32 %v5108, 7
        %v5110 = vsub.s32 0, %v5109
        %v5111 = vrot.slane %v5107, %v5110
        %5113 = vrot.lane.b32.xlu0 %v5111, 1
        %v5114 = vpop.permute.xlu0 %5113
        %v5116 = vmul.f32 %v5048, %v5114
        %v5117 = vmul.f32 %v5049, %v5114
        %5120 = vrot.lane.b32.xlu0 %v5116, 127
        %v5121 = vpop.permute.xlu0 %5120
        %5122 = vrot.lane.b32.xlu0 %v5117, 127
        %v5123 = vpop.permute.xlu0 %5122
        %v5126 = vadd.f32 %v5066, %v5121
        %v5127 = vadd.f32 %v5067, %v5123
        %v5128 = vld [vmem:[%s1 + $0x61] sm:$0x1]
        %v5129 = vlaneseq
        %v5130 = vshrl.u32 %v5129, 7
        %v5131 = vsub.s32 0, %v5130
        %v5132 = vrot.slane %v5128, %v5131
        %5134 = vrot.lane.b32.xlu0 %v5132, 1
        %v5135 = vpop.permute.xlu0 %5134
        %v5137 = vmul.f32 %v5048, %v5135
        %v5138 = vmul.f32 %v5049, %v5135
        %5141 = vrot.lane.b32.xlu0 %v5137, 127
        %v5142 = vpop.permute.xlu0 %5141
        %5143 = vrot.lane.b32.xlu0 %v5138, 127
        %v5144 = vpop.permute.xlu0 %5143
        %v5147 = vadd.f32 %v5075, %v5142
        %v5148 = vadd.f32 %v5076, %v5144
        %v5149 = vld [vmem:[%s1 + $0x85] sm:$0x1]
        %v5150 = vlaneseq
        %v5151 = vshrl.u32 %v5150, 7
        %v5152 = vsub.s32 0, %v5151
        %v5153 = vrot.slane %v5149, %v5152
        %5155 = vrot.lane.b32.xlu0 %v5153, 1
        %v5156 = vpop.permute.xlu0 %5155
        %v5158 = vmul.f32 %v5048, %v5156
        %v5159 = vmul.f32 %v5049, %v5156
        %5162 = vrot.lane.b32.xlu0 %v5158, 127
        %v5163 = vpop.permute.xlu0 %5162
        %5164 = vrot.lane.b32.xlu0 %v5159, 127
        %v5165 = vpop.permute.xlu0 %5164
        %v5168 = vadd.f32 %v5084, %v5163
        %v5169 = vadd.f32 %v5085, %v5165
        %v5170 = vld [vmem:[%s1 + $0x1a] sm:$0x1]
        %v5171 = vlaneseq
        %v5172 = vshrl.u32 %v5171, 7
        %v5173 = vsub.s32 0, %v5172
        %v5174 = vrot.slane %v5170, %v5173
        %5176 = vrot.lane.b32.xlu0 %v5174, 2
        %v5177 = vpop.permute.xlu0 %5176
        %v5179 = vmul.f32 %v5048, %v5177
        %v5180 = vmul.f32 %v5049, %v5177
        %5183 = vrot.lane.b32.xlu0 %v5179, 126
        %v5184 = vpop.permute.xlu0 %5183
        %5185 = vrot.lane.b32.xlu0 %v5180, 126
        %v5186 = vpop.permute.xlu0 %5185
        %v5189 = vadd.f32 %v5105, %v5184
        %v5190 = vadd.f32 %v5106, %v5186
        %v5191 = vld [vmem:[%s1 + $0x3e] sm:$0x1]
        %v5192 = vlaneseq
        %v5193 = vshrl.u32 %v5192, 7
        %v5194 = vsub.s32 0, %v5193
        %v5195 = vrot.slane %v5191, %v5194
        %5197 = vrot.lane.b32.xlu0 %v5195, 2
        %v5198 = vpop.permute.xlu0 %5197
        %v5200 = vmul.f32 %v5048, %v5198
        %v5201 = vmul.f32 %v5049, %v5198
        %5204 = vrot.lane.b32.xlu0 %v5200, 126
        %v5205 = vpop.permute.xlu0 %5204
        %5206 = vrot.lane.b32.xlu0 %v5201, 126
        %v5207 = vpop.permute.xlu0 %5206
        %v5210 = vadd.f32 %v5126, %v5205
        %v5211 = vadd.f32 %v5127, %v5207
        %v5212 = vld [vmem:[%s1 + $0x62] sm:$0x1]
        %v5213 = vlaneseq
        %v5214 = vshrl.u32 %v5213, 7
        %v5215 = vsub.s32 0, %v5214
        %v5216 = vrot.slane %v5212, %v5215
        %5218 = vrot.lane.b32.xlu0 %v5216, 2
        %v5219 = vpop.permute.xlu0 %5218
        %v5221 = vmul.f32 %v5048, %v5219
        %v5222 = vmul.f32 %v5049, %v5219
        %5225 = vrot.lane.b32.xlu0 %v5221, 126
        %v5226 = vpop.permute.xlu0 %5225
        %5227 = vrot.lane.b32.xlu0 %v5222, 126
        %v5228 = vpop.permute.xlu0 %5227
        %v5231 = vadd.f32 %v5147, %v5226
        %v5232 = vadd.f32 %v5148, %v5228
        %v5233 = vld [vmem:[%s1 + $0x86] sm:$0x1]
        %v5234 = vlaneseq
        %v5235 = vshrl.u32 %v5234, 7
        %v5236 = vsub.s32 0, %v5235
        %v5237 = vrot.slane %v5233, %v5236
        %5239 = vrot.lane.b32.xlu0 %v5237, 2
        %v5240 = vpop.permute.xlu0 %5239
        %v5242 = vmul.f32 %v5048, %v5240
        %v5243 = vmul.f32 %v5049, %v5240
        %5246 = vrot.lane.b32.xlu0 %v5242, 126
        %v5247 = vpop.permute.xlu0 %5246
        %5248 = vrot.lane.b32.xlu0 %v5243, 126
        %v5249 = vpop.permute.xlu0 %5248
        %v5252 = vadd.f32 %v5168, %v5247
        %v5253 = vadd.f32 %v5169, %v5249
        %v5254 = vld [vmem:[%s504] sm:$0xff]
        %v5255 = vld [vmem:[%s504 + $0x8] sm:$0xff]
        %v5256 = vld [vmem:[%s1 + $0x1b] sm:$0x1]
        %v5257 = vlaneseq
        %v5258 = vshrl.u32 %v5257, 7
        %v5259 = vsub.s32 0, %v5258
        %v5260 = vrot.slane %v5256, %v5259
        %v5261 = vmul.f32 %v5254, %v5260
        %v5262 = vmul.f32 %v5255, %v5260
        %v5263 = vadd.f32 %v5189, %v5261
        %v5264 = vadd.f32 %v5190, %v5262
        %v5265 = vld [vmem:[%s1 + $0x3f] sm:$0x1]
        %v5266 = vlaneseq
        %v5267 = vshrl.u32 %v5266, 7
        %v5268 = vsub.s32 0, %v5267
        %v5269 = vrot.slane %v5265, %v5268
        %v5270 = vmul.f32 %v5254, %v5269
        %v5271 = vmul.f32 %v5255, %v5269
        %v5272 = vadd.f32 %v5210, %v5270
        %v5273 = vadd.f32 %v5211, %v5271
        %v5274 = vld [vmem:[%s1 + $0x63] sm:$0x1]
        %v5275 = vlaneseq
        %v5276 = vshrl.u32 %v5275, 7
        %v5277 = vsub.s32 0, %v5276
        %v5278 = vrot.slane %v5274, %v5277
        %v5279 = vmul.f32 %v5254, %v5278
        %v5280 = vmul.f32 %v5255, %v5278
        %v5281 = vadd.f32 %v5231, %v5279
        %v5282 = vadd.f32 %v5232, %v5280
        %v5283 = vld [vmem:[%s1 + $0x87] sm:$0x1]
        %v5284 = vlaneseq
        %v5285 = vshrl.u32 %v5284, 7
        %v5286 = vsub.s32 0, %v5285
        %v5287 = vrot.slane %v5283, %v5286
        %v5288 = vmul.f32 %v5254, %v5287
        %v5289 = vmul.f32 %v5255, %v5287
        %v5290 = vadd.f32 %v5252, %v5288
        %v5291 = vadd.f32 %v5253, %v5289
        %v5292 = vld [vmem:[%s1 + $0x1c] sm:$0x1]
        %v5293 = vlaneseq
        %v5294 = vshrl.u32 %v5293, 7
        %v5295 = vsub.s32 0, %v5294
        %v5296 = vrot.slane %v5292, %v5295
        %5298 = vrot.lane.b32.xlu0 %v5296, 1
        %v5299 = vpop.permute.xlu0 %5298
        %v5301 = vmul.f32 %v5254, %v5299
        %v5302 = vmul.f32 %v5255, %v5299
        %5305 = vrot.lane.b32.xlu0 %v5301, 127
        %v5306 = vpop.permute.xlu0 %5305
        %5307 = vrot.lane.b32.xlu0 %v5302, 127
        %v5308 = vpop.permute.xlu0 %5307
        %v5311 = vadd.f32 %v5263, %v5306
        %v5312 = vadd.f32 %v5264, %v5308
        %v5313 = vld [vmem:[%s1 + $0x40] sm:$0x1]
        %v5314 = vlaneseq
        %v5315 = vshrl.u32 %v5314, 7
        %v5316 = vsub.s32 0, %v5315
        %v5317 = vrot.slane %v5313, %v5316
        %5319 = vrot.lane.b32.xlu0 %v5317, 1
        %v5320 = vpop.permute.xlu0 %5319
        %v5322 = vmul.f32 %v5254, %v5320
        %v5323 = vmul.f32 %v5255, %v5320
        %5326 = vrot.lane.b32.xlu0 %v5322, 127
        %v5327 = vpop.permute.xlu0 %5326
        %5328 = vrot.lane.b32.xlu0 %v5323, 127
        %v5329 = vpop.permute.xlu0 %5328
        %v5332 = vadd.f32 %v5272, %v5327
        %v5333 = vadd.f32 %v5273, %v5329
        %v5334 = vld [vmem:[%s1 + $0x64] sm:$0x1]
        %v5335 = vlaneseq
        %v5336 = vshrl.u32 %v5335, 7
        %v5337 = vsub.s32 0, %v5336
        %v5338 = vrot.slane %v5334, %v5337
        %5340 = vrot.lane.b32.xlu0 %v5338, 1
        %v5341 = vpop.permute.xlu0 %5340
        %v5343 = vmul.f32 %v5254, %v5341
        %v5344 = vmul.f32 %v5255, %v5341
        %5347 = vrot.lane.b32.xlu0 %v5343, 127
        %v5348 = vpop.permute.xlu0 %5347
        %5349 = vrot.lane.b32.xlu0 %v5344, 127
        %v5350 = vpop.permute.xlu0 %5349
        %v5353 = vadd.f32 %v5281, %v5348
        %v5354 = vadd.f32 %v5282, %v5350
        %v5355 = vld [vmem:[%s1 + $0x88] sm:$0x1]
        %v5356 = vlaneseq
        %v5357 = vshrl.u32 %v5356, 7
        %v5358 = vsub.s32 0, %v5357
        %v5359 = vrot.slane %v5355, %v5358
        %5361 = vrot.lane.b32.xlu0 %v5359, 1
        %v5362 = vpop.permute.xlu0 %5361
        %v5364 = vmul.f32 %v5254, %v5362
        %v5365 = vmul.f32 %v5255, %v5362
        %5368 = vrot.lane.b32.xlu0 %v5364, 127
        %v5369 = vpop.permute.xlu0 %5368
        %5370 = vrot.lane.b32.xlu0 %v5365, 127
        %v5371 = vpop.permute.xlu0 %5370
        %v5374 = vadd.f32 %v5290, %v5369
        %v5375 = vadd.f32 %v5291, %v5371
        %v5376 = vld [vmem:[%s1 + $0x1d] sm:$0x1]
        %v5377 = vlaneseq
        %v5378 = vshrl.u32 %v5377, 7
        %v5379 = vsub.s32 0, %v5378
        %v5380 = vrot.slane %v5376, %v5379
        %5382 = vrot.lane.b32.xlu0 %v5380, 2
        %v5383 = vpop.permute.xlu0 %5382
        %v5385 = vmul.f32 %v5254, %v5383
        %v5386 = vmul.f32 %v5255, %v5383
        %5389 = vrot.lane.b32.xlu0 %v5385, 126
        %v5390 = vpop.permute.xlu0 %5389
        %5391 = vrot.lane.b32.xlu0 %v5386, 126
        %v5392 = vpop.permute.xlu0 %5391
        %v5395 = vadd.f32 %v5311, %v5390
        %v5396 = vadd.f32 %v5312, %v5392
        %v5397 = vld [vmem:[%s1 + $0x41] sm:$0x1]
        %v5398 = vlaneseq
        %v5399 = vshrl.u32 %v5398, 7
        %v5400 = vsub.s32 0, %v5399
        %v5401 = vrot.slane %v5397, %v5400
        %5403 = vrot.lane.b32.xlu0 %v5401, 2
        %v5404 = vpop.permute.xlu0 %5403
        %v5406 = vmul.f32 %v5254, %v5404
        %v5407 = vmul.f32 %v5255, %v5404
        %5410 = vrot.lane.b32.xlu0 %v5406, 126
        %v5411 = vpop.permute.xlu0 %5410
        %5412 = vrot.lane.b32.xlu0 %v5407, 126
        %v5413 = vpop.permute.xlu0 %5412
        %v5416 = vadd.f32 %v5332, %v5411
        %v5417 = vadd.f32 %v5333, %v5413
        %v5418 = vld [vmem:[%s1 + $0x65] sm:$0x1]
        %v5419 = vlaneseq
        %v5420 = vshrl.u32 %v5419, 7
        %v5421 = vsub.s32 0, %v5420
        %v5422 = vrot.slane %v5418, %v5421
        %5424 = vrot.lane.b32.xlu0 %v5422, 2
        %v5425 = vpop.permute.xlu0 %5424
        %v5427 = vmul.f32 %v5254, %v5425
        %v5428 = vmul.f32 %v5255, %v5425
        %5431 = vrot.lane.b32.xlu0 %v5427, 126
        %v5432 = vpop.permute.xlu0 %5431
        %5433 = vrot.lane.b32.xlu0 %v5428, 126
        %v5434 = vpop.permute.xlu0 %5433
        %v5437 = vadd.f32 %v5353, %v5432
        %v5438 = vadd.f32 %v5354, %v5434
        %v5439 = vld [vmem:[%s1 + $0x89] sm:$0x1]
        %v5440 = vlaneseq
        %v5441 = vshrl.u32 %v5440, 7
        %v5442 = vsub.s32 0, %v5441
        %v5443 = vrot.slane %v5439, %v5442
        %5445 = vrot.lane.b32.xlu0 %v5443, 2
        %v5446 = vpop.permute.xlu0 %5445
        %v5448 = vmul.f32 %v5254, %v5446
        %v5449 = vmul.f32 %v5255, %v5446
        %5452 = vrot.lane.b32.xlu0 %v5448, 126
        %v5453 = vpop.permute.xlu0 %5452
        %5454 = vrot.lane.b32.xlu0 %v5449, 126
        %v5455 = vpop.permute.xlu0 %5454
        %v5458 = vadd.f32 %v5374, %v5453
        %v5459 = vadd.f32 %v5375, %v5455
        %v5460 = vld [vmem:[%s504 + $0x1] sm:$0xff]
        %v5461 = vld [vmem:[%s504 + $0x9] sm:$0xff]
        %v5462 = vld [vmem:[%s1 + $0x1e] sm:$0x1]
        %v5463 = vlaneseq
        %v5464 = vshrl.u32 %v5463, 7
        %v5465 = vsub.s32 0, %v5464
        %v5466 = vrot.slane %v5462, %v5465
        %v5467 = vmul.f32 %v5460, %v5466
        %v5468 = vmul.f32 %v5461, %v5466
        %v5469 = vadd.f32 %v5395, %v5467
        %v5470 = vadd.f32 %v5396, %v5468
        %v5471 = vld [vmem:[%s1 + $0x42] sm:$0x1]
        %v5472 = vlaneseq
        %v5473 = vshrl.u32 %v5472, 7
        %v5474 = vsub.s32 0, %v5473
        %v5475 = vrot.slane %v5471, %v5474
        %v5476 = vmul.f32 %v5460, %v5475
        %v5477 = vmul.f32 %v5461, %v5475
        %v5478 = vadd.f32 %v5416, %v5476
        %v5479 = vadd.f32 %v5417, %v5477
        %v5480 = vld [vmem:[%s1 + $0x66] sm:$0x1]
        %v5481 = vlaneseq
        %v5482 = vshrl.u32 %v5481, 7
        %v5483 = vsub.s32 0, %v5482
        %v5484 = vrot.slane %v5480, %v5483
        %v5485 = vmul.f32 %v5460, %v5484
        %v5486 = vmul.f32 %v5461, %v5484
        %v5487 = vadd.f32 %v5437, %v5485
        %v5488 = vadd.f32 %v5438, %v5486
        %v5489 = vld [vmem:[%s1 + $0x8a] sm:$0x1]
        %v5490 = vlaneseq
        %v5491 = vshrl.u32 %v5490, 7
        %v5492 = vsub.s32 0, %v5491
        %v5493 = vrot.slane %v5489, %v5492
        %v5494 = vmul.f32 %v5460, %v5493
        %v5495 = vmul.f32 %v5461, %v5493
        %v5496 = vadd.f32 %v5458, %v5494
        %v5497 = vadd.f32 %v5459, %v5495
        %v5498 = vld [vmem:[%s1 + $0x1f] sm:$0x1]
        %v5499 = vlaneseq
        %v5500 = vshrl.u32 %v5499, 7
        %v5501 = vsub.s32 0, %v5500
        %v5502 = vrot.slane %v5498, %v5501
        %5504 = vrot.lane.b32.xlu0 %v5502, 1
        %v5505 = vpop.permute.xlu0 %5504
        %v5507 = vmul.f32 %v5460, %v5505
        %v5508 = vmul.f32 %v5461, %v5505
        %5511 = vrot.lane.b32.xlu0 %v5507, 127
        %v5512 = vpop.permute.xlu0 %5511
        %5513 = vrot.lane.b32.xlu0 %v5508, 127
        %v5514 = vpop.permute.xlu0 %5513
        %v5517 = vadd.f32 %v5469, %v5512
        %v5518 = vadd.f32 %v5470, %v5514
        %v5519 = vld [vmem:[%s1 + $0x43] sm:$0x1]
        %v5520 = vlaneseq
        %v5521 = vshrl.u32 %v5520, 7
        %v5522 = vsub.s32 0, %v5521
        %v5523 = vrot.slane %v5519, %v5522
        %5525 = vrot.lane.b32.xlu0 %v5523, 1
        %v5526 = vpop.permute.xlu0 %5525
        %v5528 = vmul.f32 %v5460, %v5526
        %v5529 = vmul.f32 %v5461, %v5526
        %5532 = vrot.lane.b32.xlu0 %v5528, 127
        %v5533 = vpop.permute.xlu0 %5532
        %5534 = vrot.lane.b32.xlu0 %v5529, 127
        %v5535 = vpop.permute.xlu0 %5534
        %v5538 = vadd.f32 %v5478, %v5533
        %v5539 = vadd.f32 %v5479, %v5535
        %v5540 = vld [vmem:[%s1 + $0x67] sm:$0x1]
        %v5541 = vlaneseq
        %v5542 = vshrl.u32 %v5541, 7
        %v5543 = vsub.s32 0, %v5542
        %v5544 = vrot.slane %v5540, %v5543
        %5546 = vrot.lane.b32.xlu0 %v5544, 1
        %v5547 = vpop.permute.xlu0 %5546
        %v5549 = vmul.f32 %v5460, %v5547
        %v5550 = vmul.f32 %v5461, %v5547
        %5553 = vrot.lane.b32.xlu0 %v5549, 127
        %v5554 = vpop.permute.xlu0 %5553
        %5555 = vrot.lane.b32.xlu0 %v5550, 127
        %v5556 = vpop.permute.xlu0 %5555
        %v5559 = vadd.f32 %v5487, %v5554
        %v5560 = vadd.f32 %v5488, %v5556
        %v5561 = vld [vmem:[%s1 + $0x8b] sm:$0x1]
        %v5562 = vlaneseq
        %v5563 = vshrl.u32 %v5562, 7
        %v5564 = vsub.s32 0, %v5563
        %v5565 = vrot.slane %v5561, %v5564
        %5567 = vrot.lane.b32.xlu0 %v5565, 1
        %v5568 = vpop.permute.xlu0 %5567
        %v5570 = vmul.f32 %v5460, %v5568
        %v5571 = vmul.f32 %v5461, %v5568
        %5574 = vrot.lane.b32.xlu0 %v5570, 127
        %v5575 = vpop.permute.xlu0 %5574
        %5576 = vrot.lane.b32.xlu0 %v5571, 127
        %v5577 = vpop.permute.xlu0 %5576
        %v5580 = vadd.f32 %v5496, %v5575
        %v5581 = vadd.f32 %v5497, %v5577
        %v5582 = vld [vmem:[%s1 + $0x20] sm:$0x1]
        %v5583 = vlaneseq
        %v5584 = vshrl.u32 %v5583, 7
        %v5585 = vsub.s32 0, %v5584
        %v5586 = vrot.slane %v5582, %v5585
        %5588 = vrot.lane.b32.xlu0 %v5586, 2
        %v5589 = vpop.permute.xlu0 %5588
        %v5591 = vmul.f32 %v5460, %v5589
        %v5592 = vmul.f32 %v5461, %v5589
        %5595 = vrot.lane.b32.xlu0 %v5591, 126
        %v5596 = vpop.permute.xlu0 %5595
        %5597 = vrot.lane.b32.xlu0 %v5592, 126
        %v5598 = vpop.permute.xlu0 %5597
        %v5601 = vadd.f32 %v5517, %v5596
        %v5602 = vadd.f32 %v5518, %v5598
        %v5603 = vld [vmem:[%s1 + $0x44] sm:$0x1]
        %v5604 = vlaneseq
        %v5605 = vshrl.u32 %v5604, 7
        %v5606 = vsub.s32 0, %v5605
        %v5607 = vrot.slane %v5603, %v5606
        %5609 = vrot.lane.b32.xlu0 %v5607, 2
        %v5610 = vpop.permute.xlu0 %5609
        %v5612 = vmul.f32 %v5460, %v5610
        %v5613 = vmul.f32 %v5461, %v5610
        %5616 = vrot.lane.b32.xlu0 %v5612, 126
        %v5617 = vpop.permute.xlu0 %5616
        %5618 = vrot.lane.b32.xlu0 %v5613, 126
        %v5619 = vpop.permute.xlu0 %5618
        %v5622 = vadd.f32 %v5538, %v5617
        %v5623 = vadd.f32 %v5539, %v5619
        %v5624 = vld [vmem:[%s1 + $0x68] sm:$0x1]
        %v5625 = vlaneseq
        %v5626 = vshrl.u32 %v5625, 7
        %v5627 = vsub.s32 0, %v5626
        %v5628 = vrot.slane %v5624, %v5627
        %5630 = vrot.lane.b32.xlu0 %v5628, 2
        %v5631 = vpop.permute.xlu0 %5630
        %v5633 = vmul.f32 %v5460, %v5631
        %v5634 = vmul.f32 %v5461, %v5631
        %5637 = vrot.lane.b32.xlu0 %v5633, 126
        %v5638 = vpop.permute.xlu0 %5637
        %5639 = vrot.lane.b32.xlu0 %v5634, 126
        %v5640 = vpop.permute.xlu0 %5639
        %v5643 = vadd.f32 %v5559, %v5638
        %v5644 = vadd.f32 %v5560, %v5640
        %v5645 = vld [vmem:[%s1 + $0x8c] sm:$0x1]
        %v5646 = vlaneseq
        %v5647 = vshrl.u32 %v5646, 7
        %v5648 = vsub.s32 0, %v5647
        %v5649 = vrot.slane %v5645, %v5648
        %5651 = vrot.lane.b32.xlu0 %v5649, 2
        %v5652 = vpop.permute.xlu0 %5651
        %v5654 = vmul.f32 %v5460, %v5652
        %v5655 = vmul.f32 %v5461, %v5652
        %5658 = vrot.lane.b32.xlu0 %v5654, 126
        %v5659 = vpop.permute.xlu0 %5658
        %5660 = vrot.lane.b32.xlu0 %v5655, 126
        %v5661 = vpop.permute.xlu0 %5660
        %v5664 = vadd.f32 %v5580, %v5659
        %v5665 = vadd.f32 %v5581, %v5661
        %v5666 = vld [vmem:[%s504 + $0x2] sm:$0xff]
        %v5667 = vld [vmem:[%s504 + $0xa] sm:$0xff]
        %v5668 = vld [vmem:[%s1 + $0x21] sm:$0x1]
        %v5669 = vlaneseq
        %v5670 = vshrl.u32 %v5669, 7
        %v5671 = vsub.s32 0, %v5670
        %v5672 = vrot.slane %v5668, %v5671
        %v5673 = vmul.f32 %v5666, %v5672
        %v5674 = vmul.f32 %v5667, %v5672
        %v5675 = vadd.f32 %v5601, %v5673
        %v5676 = vadd.f32 %v5602, %v5674
        %v5677 = vld [vmem:[%s1 + $0x45] sm:$0x1]
        %v5678 = vlaneseq
        %v5679 = vshrl.u32 %v5678, 7
        %v5680 = vsub.s32 0, %v5679
        %v5681 = vrot.slane %v5677, %v5680
        %v5682 = vmul.f32 %v5666, %v5681
        %v5683 = vmul.f32 %v5667, %v5681
        %v5684 = vadd.f32 %v5622, %v5682
        %v5685 = vadd.f32 %v5623, %v5683
        %v5686 = vld [vmem:[%s1 + $0x69] sm:$0x1]
        %v5687 = vlaneseq
        %v5688 = vshrl.u32 %v5687, 7
        %v5689 = vsub.s32 0, %v5688
        %v5690 = vrot.slane %v5686, %v5689
        %v5691 = vmul.f32 %v5666, %v5690
        %v5692 = vmul.f32 %v5667, %v5690
        %v5693 = vadd.f32 %v5643, %v5691
        %v5694 = vadd.f32 %v5644, %v5692
        %v5695 = vld [vmem:[%s1 + $0x8d] sm:$0x1]
        %v5696 = vlaneseq
        %v5697 = vshrl.u32 %v5696, 7
        %v5698 = vsub.s32 0, %v5697
        %v5699 = vrot.slane %v5695, %v5698
        %v5700 = vmul.f32 %v5666, %v5699
        %v5701 = vmul.f32 %v5667, %v5699
        %v5702 = vadd.f32 %v5664, %v5700
        %v5703 = vadd.f32 %v5665, %v5701
        %v5704 = vld [vmem:[%s1 + $0x22] sm:$0x1]
        %v5705 = vlaneseq
        %v5706 = vshrl.u32 %v5705, 7
        %v5707 = vsub.s32 0, %v5706
        %v5708 = vrot.slane %v5704, %v5707
        %5710 = vrot.lane.b32.xlu0 %v5708, 1
        %v5711 = vpop.permute.xlu0 %5710
        %v5713 = vmul.f32 %v5666, %v5711
        %v5714 = vmul.f32 %v5667, %v5711
        %5717 = vrot.lane.b32.xlu0 %v5713, 127
        %v5718 = vpop.permute.xlu0 %5717
        %5719 = vrot.lane.b32.xlu0 %v5714, 127
        %v5720 = vpop.permute.xlu0 %5719
        %v5723 = vadd.f32 %v5675, %v5718
        %v5724 = vadd.f32 %v5676, %v5720
        %v5725 = vld [vmem:[%s1 + $0x46] sm:$0x1]
        %v5726 = vlaneseq
        %v5727 = vshrl.u32 %v5726, 7
        %v5728 = vsub.s32 0, %v5727
        %v5729 = vrot.slane %v5725, %v5728
        %5731 = vrot.lane.b32.xlu0 %v5729, 1
        %v5732 = vpop.permute.xlu0 %5731
        %v5734 = vmul.f32 %v5666, %v5732
        %v5735 = vmul.f32 %v5667, %v5732
        %5738 = vrot.lane.b32.xlu0 %v5734, 127
        %v5739 = vpop.permute.xlu0 %5738
        %5740 = vrot.lane.b32.xlu0 %v5735, 127
        %v5741 = vpop.permute.xlu0 %5740
        %v5744 = vadd.f32 %v5684, %v5739
        %v5745 = vadd.f32 %v5685, %v5741
        %v5746 = vld [vmem:[%s1 + $0x6a] sm:$0x1]
        %v5747 = vlaneseq
        %v5748 = vshrl.u32 %v5747, 7
        %v5749 = vsub.s32 0, %v5748
        %v5750 = vrot.slane %v5746, %v5749
        %5752 = vrot.lane.b32.xlu0 %v5750, 1
        %v5753 = vpop.permute.xlu0 %5752
        %v5755 = vmul.f32 %v5666, %v5753
        %v5756 = vmul.f32 %v5667, %v5753
        %5759 = vrot.lane.b32.xlu0 %v5755, 127
        %v5760 = vpop.permute.xlu0 %5759
        %5761 = vrot.lane.b32.xlu0 %v5756, 127
        %v5762 = vpop.permute.xlu0 %5761
        %v5765 = vadd.f32 %v5693, %v5760
        %v5766 = vadd.f32 %v5694, %v5762
        %v5767 = vld [vmem:[%s1 + $0x8e] sm:$0x1]
        %v5768 = vlaneseq
        %v5769 = vshrl.u32 %v5768, 7
        %v5770 = vsub.s32 0, %v5769
        %v5771 = vrot.slane %v5767, %v5770
        %5773 = vrot.lane.b32.xlu0 %v5771, 1
        %v5774 = vpop.permute.xlu0 %5773
        %v5776 = vmul.f32 %v5666, %v5774
        %v5777 = vmul.f32 %v5667, %v5774
        %5780 = vrot.lane.b32.xlu0 %v5776, 127
        %v5781 = vpop.permute.xlu0 %5780
        %5782 = vrot.lane.b32.xlu0 %v5777, 127
        %v5783 = vpop.permute.xlu0 %5782
        %v5786 = vadd.f32 %v5702, %v5781
        %v5787 = vadd.f32 %v5703, %v5783
        %v5788 = vld [vmem:[%s1 + $0x23] sm:$0x1]
        %v5789 = vlaneseq
        %v5790 = vshrl.u32 %v5789, 7
        %v5791 = vsub.s32 0, %v5790
        %v5792 = vrot.slane %v5788, %v5791
        %5794 = vrot.lane.b32.xlu0 %v5792, 2
        %v5795 = vpop.permute.xlu0 %5794
        %v5797 = vmul.f32 %v5666, %v5795
        %v5798 = vmul.f32 %v5667, %v5795
        %5801 = vrot.lane.b32.xlu0 %v5797, 126
        %v5802 = vpop.permute.xlu0 %5801
        %5803 = vrot.lane.b32.xlu0 %v5798, 126
        %v5804 = vpop.permute.xlu0 %5803
        %v5807 = vadd.f32 %v5723, %v5802
        %v5808 = vadd.f32 %v5724, %v5804
        %v5809 = vld [vmem:[%s1 + $0x47] sm:$0x1]
        %v5810 = vlaneseq
        %v5811 = vshrl.u32 %v5810, 7
        %v5812 = vsub.s32 0, %v5811
        %v5813 = vrot.slane %v5809, %v5812
        %5815 = vrot.lane.b32.xlu0 %v5813, 2
        %v5816 = vpop.permute.xlu0 %5815
        %v5818 = vmul.f32 %v5666, %v5816
        %v5819 = vmul.f32 %v5667, %v5816
        %5822 = vrot.lane.b32.xlu0 %v5818, 126
        %v5823 = vpop.permute.xlu0 %5822
        %5824 = vrot.lane.b32.xlu0 %v5819, 126
        %v5825 = vpop.permute.xlu0 %5824
        %v5828 = vadd.f32 %v5744, %v5823
        %v5829 = vadd.f32 %v5745, %v5825
        %v5830 = vld [vmem:[%s1 + $0x6b] sm:$0x1]
        %v5831 = vlaneseq
        %v5832 = vshrl.u32 %v5831, 7
        %v5833 = vsub.s32 0, %v5832
        %v5834 = vrot.slane %v5830, %v5833
        %5836 = vrot.lane.b32.xlu0 %v5834, 2
        %v5837 = vpop.permute.xlu0 %5836
        %v5839 = vmul.f32 %v5666, %v5837
        %v5840 = vmul.f32 %v5667, %v5837
        %5843 = vrot.lane.b32.xlu0 %v5839, 126
        %v5844 = vpop.permute.xlu0 %5843
        %5845 = vrot.lane.b32.xlu0 %v5840, 126
        %v5846 = vpop.permute.xlu0 %5845
        %v5849 = vadd.f32 %v5765, %v5844
        %v5850 = vadd.f32 %v5766, %v5846
        %v5851 = vld [vmem:[%s1 + $0x8f] sm:$0x1]
        %v5852 = vlaneseq
        %v5853 = vshrl.u32 %v5852, 7
        %v5854 = vsub.s32 0, %v5853
        %v5855 = vrot.slane %v5851, %v5854
        %5857 = vrot.lane.b32.xlu0 %v5855, 2
        %v5858 = vpop.permute.xlu0 %5857
        %v5860 = vmul.f32 %v5666, %v5858
        %v5861 = vmul.f32 %v5667, %v5858
        %5864 = vrot.lane.b32.xlu0 %v5860, 126
        %v5865 = vpop.permute.xlu0 %5864
        %5866 = vrot.lane.b32.xlu0 %v5861, 126
        %v5867 = vpop.permute.xlu0 %5866
        %v5870 = vadd.f32 %v5786, %v5865
        %v5871 = vadd.f32 %v5787, %v5867
        %v5872 = vsel %vm3043, %v5807, 0.0
        %5873 = vadd.xlane.f32.xlu0 %v5872
        %v5874 = vpop.xlane.xlu0 %5873
        %v5875 = vsel %vm3043, %v5808, 0.0
        %5876 = vadd.xlane.f32.xlu0 %v5875
        %v5877 = vpop.xlane.xlu0 %5876
        %v5878 = vadd.f32 %v5874, 0.0
        %v5879 = vadd.f32 %v5877, 0.0
        %v5880 = vmul.f32 %v5807, %v5807
        %v5881 = vmul.f32 %v5808, %v5808
        %v5882 = vsel %vm3043, %v5880, 0.0
        %5883 = vadd.xlane.f32.xlu0 %v5882
        %v5884 = vpop.xlane.xlu0 %5883
        %v5885 = vsel %vm3043, %v5881, 0.0
        %5886 = vadd.xlane.f32.xlu0 %v5885
        %v5887 = vpop.xlane.xlu0 %5886
        %v5888 = vadd.f32 %v5884, 0.0
        %v5889 = vadd.f32 %v5887, 0.0
        %v5890 = vsel %vm3043, %v5828, 0.0
        %5891 = vadd.xlane.f32.xlu0 %v5890
        %v5892 = vpop.xlane.xlu0 %5891
        %v5893 = vsel %vm3043, %v5829, 0.0
        %5894 = vadd.xlane.f32.xlu0 %v5893
        %v5895 = vpop.xlane.xlu0 %5894
        %v5896 = vadd.f32 %v5878, %v5892
        %v5897 = vadd.f32 %v5879, %v5895
        %v5898 = vmul.f32 %v5828, %v5828
        %v5899 = vmul.f32 %v5829, %v5829
        %v5900 = vsel %vm3043, %v5898, 0.0
        %5901 = vadd.xlane.f32.xlu0 %v5900
        %v5902 = vpop.xlane.xlu0 %5901
        %v5903 = vsel %vm3043, %v5899, 0.0
        %5904 = vadd.xlane.f32.xlu0 %v5903
        %v5905 = vpop.xlane.xlu0 %5904
        %v5906 = vadd.f32 %v5888, %v5902
        %v5907 = vadd.f32 %v5889, %v5905
        %v5908 = vsel %vm3043, %v5849, 0.0
        %5909 = vadd.xlane.f32.xlu0 %v5908
        %v5910 = vpop.xlane.xlu0 %5909
        %v5911 = vsel %vm3043, %v5850, 0.0
        %5912 = vadd.xlane.f32.xlu0 %v5911
        %v5913 = vpop.xlane.xlu0 %5912
        %v5914 = vadd.f32 %v5896, %v5910
        %v5915 = vadd.f32 %v5897, %v5913
        %v5916 = vmul.f32 %v5849, %v5849
        %v5917 = vmul.f32 %v5850, %v5850
        %v5918 = vsel %vm3043, %v5916, 0.0
        %5919 = vadd.xlane.f32.xlu0 %v5918
        %v5920 = vpop.xlane.xlu0 %5919
        %v5921 = vsel %vm3043, %v5917, 0.0
        %5922 = vadd.xlane.f32.xlu0 %v5921
        %v5923 = vpop.xlane.xlu0 %5922
        %v5924 = vadd.f32 %v5906, %v5920
        %v5925 = vadd.f32 %v5907, %v5923
        %v5926 = vsel %vm3043, %v5870, 0.0
        %5927 = vadd.xlane.f32.xlu0 %v5926
        %v5928 = vpop.xlane.xlu0 %5927
        %v5929 = vsel %vm3043, %v5871, 0.0
        %5930 = vadd.xlane.f32.xlu0 %v5929
        %v5931 = vpop.xlane.xlu0 %5930
        %v5932 = vadd.f32 %v5914, %v5928
        %v5933 = vadd.f32 %v5915, %v5931
        %v5934 = vmul.f32 %v5870, %v5870
        %v5935 = vmul.f32 %v5871, %v5871
        %v5936 = vsel %vm3043, %v5934, 0.0
        %5937 = vadd.xlane.f32.xlu0 %v5936
        %v5938 = vpop.xlane.xlu0 %5937
        %v5939 = vsel %vm3043, %v5935, 0.0
        %5940 = vadd.xlane.f32.xlu0 %v5939
        %v5941 = vpop.xlane.xlu0 %5940
        %v5942 = vadd.f32 %v5924, %v5938
        %v5943 = vadd.f32 %v5925, %v5941
        %v5944 = vmul.f32 %v5932, 0.0078125
        %v5945 = vmul.f32 %v5933, 0.0078125
        %v5946 = vmul.f32 %v5942, 0.0078125
        %v5947 = vmul.f32 %v5943, 0.0078125
        %v5948 = vmul.f32 %v5944, %v5944
        %v5949 = vmul.f32 %v5945, %v5945
        %v5950 = vsub.f32 %v5946, %v5948
        %v5951 = vsub.f32 %v5947, %v5949
        %v5952 = vmax.f32 %v5950, 0.0
        %v5953 = vmax.f32 %v5951, 0.0
        %v5954 = vadd.f32 %v5952, 1e-05
        %v5955 = vadd.f32 %v5953, 1e-05
        %v5956 = vrsqrt.pop %v5954
        %v5957 = vrsqrt.pop %v5955
        %v5958 = vsub.f32 %v5807, %v5944
        %v5959 = vsub.f32 %v5808, %v5945
        %v5960 = vmul.f32 %v5958, %v5956
        %v5961 = vmul.f32 %v5959, %v5957
        %v5962 = vmul.f32 %v5960, %v3138
        %v5963 = vmul.f32 %v5961, %v3138
        %v5964 = vadd.f32 %v5962, %v3146
        %v5965 = vadd.f32 %v5963, %v3146
        %s5966 = sld [smem:[#allocation6]]
        %vm5967 = vcmp.gt.f32.partialorder %v5964, 0.0
        %vm5968 = vcmp.gt.f32.partialorder %v5965, 0.0
        %v5969 = vstv %s5966
        %v5970 = vmul.f32 %v5969, %v5964
        %v5971 = vmul.f32 %v5969, %v5965
        %v5972 = vsel %vm5967, %v5964, %v5970
        %v5973 = vsel %vm5968, %v5965, %v5971
        %5974 = vst.msk [vmem:[#allocation3 + $0x40] sm:$0xff] %vm3043, %v5972
        %5975 = vst.msk [vmem:[#allocation3 + $0x48] sm:$0xff] %vm3043, %v5973
        %v5976 = vsub.f32 %v5828, %v5944
        %v5977 = vsub.f32 %v5829, %v5945
        %v5978 = vmul.f32 %v5976, %v5956
        %v5979 = vmul.f32 %v5977, %v5957
        %v5980 = vmul.f32 %v5978, %v3138
        %v5981 = vmul.f32 %v5979, %v3138
        %v5982 = vadd.f32 %v5980, %v3146
        %v5983 = vadd.f32 %v5981, %v3146
        %s5984 = sld [smem:[#allocation6 + $0x1]]
        %vm5985 = vcmp.gt.f32.partialorder %v5982, 0.0
        %vm5986 = vcmp.gt.f32.partialorder %v5983, 0.0
        %v5987 = vstv %s5984
        %v5988 = vmul.f32 %v5987, %v5982
        %v5989 = vmul.f32 %v5987, %v5983
        %v5990 = vsel %vm5985, %v5982, %v5988
        %v5991 = vsel %vm5986, %v5983, %v5989
        %5992 = vst.msk [vmem:[#allocation3 + $0x50] sm:$0xff] %vm3043, %v5990
        %5993 = vst.msk [vmem:[#allocation3 + $0x58] sm:$0xff] %vm3043, %v5991
        %v5994 = vsub.f32 %v5849, %v5944
        %v5995 = vsub.f32 %v5850, %v5945
        %v5996 = vmul.f32 %v5994, %v5956
        %v5997 = vmul.f32 %v5995, %v5957
        %v5998 = vmul.f32 %v5996, %v3138
        %v5999 = vmul.f32 %v5997, %v3138
        %v6000 = vadd.f32 %v5998, %v3146
        %v6001 = vadd.f32 %v5999, %v3146
        %s6002 = sld [smem:[#allocation6 + $0x2]]
        %vm6003 = vcmp.gt.f32.partialorder %v6000, 0.0
        %vm6004 = vcmp.gt.f32.partialorder %v6001, 0.0
        %v6005 = vstv %s6002
        %v6006 = vmul.f32 %v6005, %v6000
        %v6007 = vmul.f32 %v6005, %v6001
        %v6008 = vsel %vm6003, %v6000, %v6006
        %v6009 = vsel %vm6004, %v6001, %v6007
        %6010 = vst.msk [vmem:[#allocation3 + $0x60] sm:$0xff] %vm3043, %v6008
        %6011 = vst.msk [vmem:[#allocation3 + $0x68] sm:$0xff] %vm3043, %v6009
        %v6012 = vsub.f32 %v5870, %v5944
        %v6013 = vsub.f32 %v5871, %v5945
        %v6014 = vmul.f32 %v6012, %v5956
        %v6015 = vmul.f32 %v6013, %v5957
        %v6016 = vmul.f32 %v6014, %v3138
        %v6017 = vmul.f32 %v6015, %v3138
        %v6018 = vadd.f32 %v6016, %v3146
        %v6019 = vadd.f32 %v6017, %v3146
        %s6020 = sld [smem:[#allocation6 + $0x3]]
        %vm6021 = vcmp.gt.f32.partialorder %v6018, 0.0
        %vm6022 = vcmp.gt.f32.partialorder %v6019, 0.0
        %v6023 = vstv %s6020
        %v6024 = vmul.f32 %v6023, %v6018
        %v6025 = vmul.f32 %v6023, %v6019
        %v6026 = vsel %vm6021, %v6018, %v6024
        %v6027 = vsel %vm6022, %v6019, %v6025
        %6028 = vst.msk [vmem:[#allocation3 + $0x70] sm:$0xff] %vm3043, %v6026
        %6029 = vst.msk [vmem:[#allocation3 + $0x78] sm:$0xff] %vm3043, %v6027
        %v6030 = vld [vmem:[#allocation3] sm:$0xff]
        %v6031 = vld [vmem:[#allocation3 + $0x8] sm:$0xff]
        %v6032 = vld [vmem:[#allocation3 + $0x10] sm:$0xff]
        %v6033 = vld [vmem:[#allocation3 + $0x18] sm:$0xff]
        %v6034 = vld [vmem:[#allocation3 + $0x20] sm:$0xff]
        %v6035 = vld [vmem:[#allocation3 + $0x28] sm:$0xff]
        %v6036 = vld [vmem:[#allocation3 + $0x30] sm:$0xff]
        %v6037 = vld [vmem:[#allocation3 + $0x38] sm:$0xff]
        %v6038 = vld [vmem:[#allocation3 + $0x40] sm:$0xff]
        %v6039 = vld [vmem:[#allocation3 + $0x48] sm:$0xff]
        %v6040 = vld [vmem:[#allocation3 + $0x50] sm:$0xff]
        %v6041 = vld [vmem:[#allocation3 + $0x58] sm:$0xff]
        %v6042 = vld [vmem:[#allocation3 + $0x60] sm:$0xff]
        %v6043 = vld [vmem:[#allocation3 + $0x68] sm:$0xff]
        %v6044 = vld [vmem:[#allocation3 + $0x70] sm:$0xff]
        %v6045 = vld [vmem:[#allocation3 + $0x78] sm:$0xff]
        %v6046 = vld [vmem:[%s6] sm:$0xff]
        %v6047 = vld [vmem:[%s6 + $0x8] sm:$0xff]
        %v6048 = vld [vmem:[%s6 + $0x10] sm:$0xff]
        %v6049 = vld [vmem:[%s6 + $0x18] sm:$0xff]
        %v6050 = vld [vmem:[%s6 + $0x20] sm:$0x3f]
        %v6052 = vsel %vm3043, %v6030, 0
        %v6055 = vsel %vm3043, %v6031, 0
        %v6058 = vsel %vm3043, %v6032, 0
        %v6061 = vsel %vm3043, %v6033, 0
        %v6064 = vsel %vm3043, %v6034, 0
        %v6067 = vsel %vm3043, %v6035, 0
        %v6070 = vsel %vm3043, %v6036, 0
        %v6073 = vsel %vm3043, %v6037, 0
        %v6076 = vsel %vm3043, %v6038, 0
        %v6079 = vsel %vm3043, %v6039, 0
        %v6082 = vsel %vm3043, %v6040, 0
        %v6085 = vsel %vm3043, %v6041, 0
        %v6088 = vsel %vm3043, %v6042, 0
        %v6091 = vsel %vm3043, %v6043, 0
        %v6094 = vsel %vm3043, %v6044, 0
        %v6097 = vsel %vm3043, %v6045, 0
        %vm6099 = vcmask 1045504
        %v6101 = vsel %vm6099, %v6050, 0
        %6103 = vmatprep.subr.mxu0 0.0
        %6104 = vmatpush1.msra.mxu0 %v6046
        %6105 = vmatprep.subr.mxu0 0.0
        %6106 = vmatpush1.msra.mxu0 %v6047
        %6107 = vmatprep.subr.mxu0 0.0
        %6108 = vmatpush1.msra.mxu0 %v6048
        %6109 = vmatprep.subr.mxu0 0.0
        %6110 = vmatpush1.msra.mxu0 %v6049
        %6111 = vmatprep.subr.mxu0 0.0
        %6112 = vmatpush1.msra.mxu0 %v6101
        %6113 = vmatprep.subr.mxu0 0.0
        %6114 = vmatpush1.msra.mxu0 0.0
        %6115 = vmatprep.subr.mxu0 0.0
        %6116 = vmatpush1.msra.mxu0 0.0
        %6117 = vmatprep.subr.mxu0 0.0
        %6118 = vmatpush1.msra.mxu0 0.0
        %6119 = vmatprep.subr.mxu0 0.0
        %6120 = vmatpush1.msra.mxu0 0.0
        %6121 = vmatprep.subr.mxu0 0.0
        %6122 = vmatpush1.msra.mxu0 0.0
        %6123 = vmatprep.subr.mxu0 0.0
        %6124 = vmatpush1.msra.mxu0 0.0
        %6125 = vmatprep.subr.mxu0 0.0
        %6126 = vmatpush1.msra.mxu0 0.0
        %6127 = vmatprep.subr.mxu0 0.0
        %6128 = vmatpush1.msra.mxu0 0.0
        %6129 = vmatprep.subr.mxu0 0.0
        %6130 = vmatpush1.msra.mxu0 0.0
        %6131 = vmatprep.subr.mxu0 0.0
        %6132 = vmatpush1.msra.mxu0 0.0
        %6133 = vmatprep.subr.mxu0 0.0
        %6134 = vmatpush1.msra.mxu0 0.0
        %6135 = vmatprep.subr.mxu0 0.0
        %6136 = vmatpush1.msra.mxu0 0.0
        %6137 = vmatprep.subr.mxu0 0.0
        %6138 = vmatpush1.msra.mxu0 0.0
        %6139 = vmatprep.subr.mxu0 0.0
        %6140 = vmatpush1.msra.mxu0 0.0
        %6141 = vmatprep.subr.mxu0 0.0
        %6142 = vmatpush1.msra.mxu0 0.0
        %6143 = vmatprep.subr.mxu0 0.0
        %6144 = vmatpush1.msra.mxu0 0.0
        %6145 = vmatprep.subr.mxu0 0.0
        %6146 = vmatpush1.msra.mxu0 0.0
        %6147 = vmatprep.subr.mxu0 0.0
        %6148 = vmatpush1.msra.mxu0 0.0
        %6149 = vmatprep.subr.mxu0 0.0
        %6150 = vmatpush1.msra.mxu0 0.0
        %6151 = vmatprep.subr.mxu0 0.0
        %6152 = vmatpush1.msra.mxu0 0.0
        %6153 = vmatprep.subr.mxu0 0.0
        %6154 = vmatpush1.msra.mxu0 0.0
        %6155 = vmatprep.subr.mxu0 0.0
        %6156 = vmatpush1.msra.mxu0 0.0
        %6157 = vmatprep.subr.mxu0 0.0
        %6158 = vmatpush1.msra.mxu0 0.0
        %6159 = vmatprep.subr.mxu0 0.0
        %6160 = vmatpush1.msra.mxu0 0.0
        %6161 = vmatprep.subr.mxu0 0.0
        %6162 = vmatpush1.msra.mxu0 0.0
        %6163 = vmatprep.subr.mxu0 0.0
        %6164 = vmatpush1.msra.mxu0 0.0
        %6165 = vmatprep.subr.mxu0 0.0
        %6166 = vmatpush1.msra.mxu0 0.0
        %6167 = vmatprep.mubr.f32.mxu0 0.0
        %6168 = vmatmul.mubr.f32.gmra.mrb[0].mxu0 %v6052
        %v6169 = vpop.f32.mrb[0].mxu0
        %v6170 = vadd.f32 0.0, %v6169
        %v6171 = vpop.f32.mrb[0].mxu0
        %6172 = vmatprep.mubr.f32.mxu0 0.0
        %6173 = vmatmul.mubr.f32.gmra.mrb[0].mxu0 %v6055
        %v6174 = vpop.f32.mrb[0].mxu0
        %v6175 = vadd.f32 0.0, %v6174
        %v6176 = vpop.f32.mrb[0].mxu0
        %6177 = vmatprep.mubr.f32.mxu0 0.0
        %6178 = vmatmul.mubr.f32.gmra.mrb[0].mxu0 %v6058
        %v6179 = vpop.f32.mrb[0].mxu0
        %v6180 = vadd.f32 0.0, %v6179
        %v6181 = vpop.f32.mrb[0].mxu0
        %6182 = vmatprep.mubr.f32.mxu0 0.0
        %6183 = vmatmul.mubr.f32.gmra.mrb[0].mxu0 %v6061
        %v6184 = vpop.f32.mrb[0].mxu0
        %v6185 = vadd.f32 0.0, %v6184
        %v6186 = vpop.f32.mrb[0].mxu0
        %6187 = vmatprep.mubr.f32.mxu0 0.0
        %6188 = vmatmul.mubr.f32.gmra.mrb[0].mxu0 %v6064
        %v6189 = vpop.f32.mrb[0].mxu0
        %v6190 = vadd.f32 0.0, %v6189
        %v6191 = vpop.f32.mrb[0].mxu0
        %6192 = vmatprep.mubr.f32.mxu0 0.0
        %6193 = vmatmul.mubr.f32.gmra.mrb[0].mxu0 %v6067
        %v6194 = vpop.f32.mrb[0].mxu0
        %v6195 = vadd.f32 0.0, %v6194
        %v6196 = vpop.f32.mrb[0].mxu0
        %6197 = vmatprep.mubr.f32.mxu0 0.0
        %6198 = vmatmul.mubr.f32.gmra.mrb[0].mxu0 %v6070
        %v6199 = vpop.f32.mrb[0].mxu0
        %v6200 = vadd.f32 0.0, %v6199
        %v6201 = vpop.f32.mrb[0].mxu0
        %6202 = vmatprep.mubr.f32.mxu0 0.0
        %6203 = vmatmul.mubr.f32.gmra.mrb[0].mxu0 %v6073
        %v6204 = vpop.f32.mrb[0].mxu0
        %v6205 = vadd.f32 0.0, %v6204
        %v6206 = vpop.f32.mrb[0].mxu0
        %6207 = vmatprep.mubr.f32.mxu0 0.0
        %6208 = vmatmul.mubr.f32.gmra.mrb[0].mxu0 %v6076
        %v6209 = vpop.f32.mrb[0].mxu0
        %v6210 = vadd.f32 0.0, %v6209
        %v6211 = vpop.f32.mrb[0].mxu0
        %6212 = vmatprep.mubr.f32.mxu0 0.0
        %6213 = vmatmul.mubr.f32.gmra.mrb[0].mxu0 %v6079
        %v6214 = vpop.f32.mrb[0].mxu0
        %v6215 = vadd.f32 0.0, %v6214
        %v6216 = vpop.f32.mrb[0].mxu0
        %6217 = vmatprep.mubr.f32.mxu0 0.0
        %6218 = vmatmul.mubr.f32.gmra.mrb[0].mxu0 %v6082
        %v6219 = vpop.f32.mrb[0].mxu0
        %v6220 = vadd.f32 0.0, %v6219
        %v6221 = vpop.f32.mrb[0].mxu0
        %6222 = vmatprep.mubr.f32.mxu0 0.0
        %6223 = vmatmul.mubr.f32.gmra.mrb[0].mxu0 %v6085
        %v6224 = vpop.f32.mrb[0].mxu0
        %v6225 = vadd.f32 0.0, %v6224
        %v6226 = vpop.f32.mrb[0].mxu0
        %6227 = vmatprep.mubr.f32.mxu0 0.0
        %6228 = vmatmul.mubr.f32.gmra.mrb[0].mxu0 %v6088
        %v6229 = vpop.f32.mrb[0].mxu0
        %v6230 = vadd.f32 0.0, %v6229
        %v6231 = vpop.f32.mrb[0].mxu0
        %6232 = vmatprep.mubr.f32.mxu0 0.0
        %6233 = vmatmul.mubr.f32.gmra.mrb[0].mxu0 %v6091
        %v6234 = vpop.f32.mrb[0].mxu0
        %v6235 = vadd.f32 0.0, %v6234
        %v6236 = vpop.f32.mrb[0].mxu0
        %6237 = vmatprep.mubr.f32.mxu0 0.0
        %6238 = vmatmul.mubr.f32.gmra.mrb[0].mxu0 %v6094
        %v6239 = vpop.f32.mrb[0].mxu0
        %v6240 = vadd.f32 0.0, %v6239
        %v6241 = vpop.f32.mrb[0].mxu0
        %6242 = vmatprep.mubr.f32.mxu0 0.0
        %6243 = vmatmul.mubr.f32.gmra.mrb[0].mxu0 %v6097
        %v6244 = vpop.f32.mrb[0].mxu0
        %v6245 = vadd.f32 0.0, %v6244
        %v6246 = vpop.f32.mrb[0].mxu0
        %6247 = vdwg.mxu0
        %vm6248 = vcmask 261120
        %6249 = vst.msk [vmem:[%s361] sm:$0xff] %vm6248, %v6170
        %6250 = vst.msk [vmem:[%s361 + $0x8] sm:$0xff] %vm6248, %v6175
        %6251 = vst.msk [vmem:[%s361 + $0x10] sm:$0xff] %vm6248, %v6180
        %6252 = vst.msk [vmem:[%s361 + $0x18] sm:$0xff] %vm6248, %v6185
        %6253 = vst.msk [vmem:[%s361 + $0x20] sm:$0xff] %vm6248, %v6190
        %6254 = vst.msk [vmem:[%s361 + $0x28] sm:$0xff] %vm6248, %v6195
        %6255 = vst.msk [vmem:[%s361 + $0x30] sm:$0xff] %vm6248, %v6200
        %6256 = vst.msk [vmem:[%s361 + $0x38] sm:$0xff] %vm6248, %v6205
        %6257 = vst.msk [vmem:[%s361 + $0x40] sm:$0xff] %vm6248, %v6210
        %6258 = vst.msk [vmem:[%s361 + $0x48] sm:$0xff] %vm6248, %v6215
        %6259 = vst.msk [vmem:[%s361 + $0x50] sm:$0xff] %vm6248, %v6220
        %6260 = vst.msk [vmem:[%s361 + $0x58] sm:$0xff] %vm6248, %v6225
        %6261 = vst.msk [vmem:[%s361 + $0x60] sm:$0xff] %vm6248, %v6230
        %6262 = vst.msk [vmem:[%s361 + $0x68] sm:$0xff] %vm6248, %v6235
        %6263 = vst.msk [vmem:[%s361 + $0x70] sm:$0xff] %vm6248, %v6240
        %6264 = vst.msk [vmem:[%s361 + $0x78] sm:$0xff] %vm6248, %v6245
        %s6265 = smul.u32 16, %s22
        %p6266 = scmp.lt.s32.totalorder %s6265, 31
        %s6267 = scalar_select %p6266, %s6265, 31
        %s6268 = smul.addr %s6267, 8
        %s6269 = scalar_lea.vmem %s9, %s6268
        // Predicated region
        $region65: #{tpu_custom_call.1} parent=55 // pred_check
          %p6270 = pneg %p234
        $region66: #{tpu_custom_call.1} parent=55 // pred_check_branch
          %6272 = sbr.rel (%p6270) target = $region68
        $region67: #{tpu_custom_call.1} parent=55 // pred_region
          %s6273 = smul.u32 16, %s22
        $region68: #{tpu_custom_call.1} parent=55 // pred_fallthru
          _
      $region56: #{tpu_custom_call.1} parent=5 // pred_fallthru
        _
      %p6274 = scmp.le.s32.totalorder 2, %s17
      // Predicated region
      $region69: #{tpu_custom_call.1} parent=5 // pred_check
        %p6275 = pneg %p6274
      $region70: #{tpu_custom_call.1} parent=5 // pred_check_branch
        %6277 = sbr.rel (%p6275) target = $region72
      $region71: #{tpu_custom_call.1} parent=5 // pred_region
        %s6278 = ssub.s32 %s17, 2
        // Predicated region
        $region73: #{tpu_custom_call.1} parent=71 // pred_check
          %p6279 = pneg %p240
        $region74: #{tpu_custom_call.1} parent=71 // pred_check_branch
          %6281 = sbr.rel (%p6279) target = $region76
        $region75: #{tpu_custom_call.1} parent=71 // pred_region
          %s6282 = smul.u32 16, %s23
          %p6283 = scmp.lt.s32.totalorder %s6282, 31
          %s6284 = scalar_select %p6283, %s6282, 31
          %s6285 = smul.addr %s6284, 8
          %s6286 = scalar_lea.vmem %s9, %s6285
        $region76: #{tpu_custom_call.1} parent=71 // pred_fallthru
          _
      $region72: #{tpu_custom_call.1} parent=5 // pred_fallthru
        _
    $region6: #{tpu_custom_call.1} parent=1 // loop_footer
      %s21 = sadd.s32 1, %s17
    $region7: #{tpu_custom_call.1} parent=1 // loop_footer_branch
      %16 = sbr.rel target = $region3
    $region8: #{tpu_custom_call.1} parent=1 // loop_exit
      _
    %6287 = vsyncpa [#allocation5], 1
    %s6288 = scalar_lea.sflag [#allocation5], 1
    %6289 = vsyncpa %s6288, 1
    %6290 = vsyncpa [#allocation7], 1

</llo_original>
